<compile_context>
chip_gen: v6e
topology: v6e:2x2x1
jax: 0.10.0
libtpu: 0.0.40
codegen_flags: <defaults>
</compile_context>

<pallas_src>
import jax
import jax.numpy as jnp
from jax import lax
from jax.experimental import pallas as pl
from jax.experimental.pallas import tpu as pltpu

Z_DIM = 42
IM_DIM = 42
HIDDEN = 128
EPS = 1e-5

Z_PAD = 128     # lane-dense padded noise width
OUT_PAD = 128   # lane-dense padded output width

# Toggled off automatically if this JAX build rejects pl.Buffered(1).
_SINGLE_BUFFER_WEIGHTS = True


def _make_generator_kernel(g_blk, batch):
    """Kernel closure over the static (g_blk, batch) block shape."""
    m = g_blk * batch

    def kernel(x_ref,
               w1_ref, b1_ref, g1_ref, be1_ref,
               w2_ref, b2_ref, g2_ref, be2_ref,
               w3_ref, b3_ref, g3_ref, be3_ref,
               w4_ref, b4_ref, g4_ref, be4_ref,
               w5_ref, b5_ref,
               out_ref):

        def gen_block(h, w_ref, b_ref, g_ref, be_ref):
            w = w_ref[...]
            # Linear on the flattened (g_blk*B, din) activation: big MXU M,
            # bf16 (or f32) inputs, f32 accumulate.
            y = jnp.dot(h.astype(w.dtype), w,
                        preferred_element_type=jnp.float32) + b_ref[...]
            dout = y.shape[-1]
            # Per-mini-batch BatchNorm statistics (training mode), two-pass
            # variance for numerical robustness, folded into one scale/shift.
            y3 = y.reshape(g_blk, batch, dout)
            mu = jnp.mean(y3, axis=1, keepdims=True)            # (g_blk,1,dout)
            var = jnp.mean(jnp.square(y3 - mu), axis=1, keepdims=True)
            scale = g_ref[...] * lax.rsqrt(var + EPS)           # (g_blk,1,dout)
            shift = be_ref[...] - mu * scale
            h3 = jnp.maximum(y3 * scale + shift, 0.0)           # ReLU
            return h3.reshape(m, dout)

        h = x_ref[...].astype(jnp.float32).reshape(m, Z_PAD)
        h = gen_block(h, w1_ref, b1_ref, g1_ref, be1_ref)
        h = gen_block(h, w2_ref, b2_ref, g2_ref, be2_ref)
        h = gen_block(h, w3_ref, b3_ref, g3_ref, be3_ref)
        h = gen_block(h, w4_ref, b4_ref, g4_ref, be4_ref)

        w5 = w5_ref[...]
        logits = jnp.dot(h.astype(w5.dtype), w5,
                         preferred_element_type=jnp.float32) + b5_ref[...]
        # Sigmoid via tanh identity: transcendental rides the EUP slot.
        out = 0.5 * (jnp.tanh(0.5 * logits) + 1.0)
        out_ref[...] = out.reshape(g_blk, batch, OUT_PAD).astype(out_ref.dtype)

    return kernel


def prepare_params(params, weight_dtype=jnp.bfloat16):
    """One-time parameter preparation: lane-dense zero-padding of the first /
    last layer and weight dtype cast.  Biases / gamma / beta stay f32."""
    (w1, b1, g1, be1,
     w2, b2, g2, be2,
     w3, b3, g3, be3,
     w4, b4, g4, be4,
     w5, b5) = params

    f32 = lambda v: v.astype(jnp.float32)
    wc = lambda w: w.astype(weight_dtype)

    w1p = jnp.pad(w1, ((0, Z_PAD - Z_DIM), (0, 0))).astype(weight_dtype)
    w5p = jnp.pad(w5, ((0, 0), (0, OUT_PAD - IM_DIM))).astype(weight_dtype)
    b5p = jnp.pad(b5, ((0, 0), (0, OUT_PAD - IM_DIM))).astype(jnp.float32)

    return [w1p, f32(b1), f32(g1), f32(be1),
            wc(w2), f32(b2), f32(g2), f32(be2),
            wc(w3), f32(b3), f32(g3), f32(be3),
            wc(w4), f32(b4), f32(g4), f32(be4),
            w5p, b5p]


def _auto_g_blk(num_groups, batch, target_m=256):
    """Largest divisor of num_groups with g_blk*batch <= target_m, preferring
    to keep >=2 grid steps so the 'parallel' axis can split across v7x TCs."""
    best = 1
    for d in range(1, num_groups + 1):
        if num_groups % d:
            continue
        if d * batch > target_m:
            continue
        if num_groups > 1 and num_groups // d < 2:
            continue
        best = max(best, d)
    return best


def generator_forward(noise, prepared_params, g_blk=None):
    """noise: [B, Z_DIM] (one mini-batch) or [G, B, Z_DIM] (G independent
    mini-batches, each with its own BatchNorm statistics -- identical to
    calling the PyTorch module once per mini-batch).
    prepared_params: output of prepare_params()."""
    global _SINGLE_BUFFER_WEIGHTS

    squeeze = noise.ndim == 2
    if squeeze:
        noise = noise[None]
    G, B, zdim = noise.shape
    assert zdim == Z_DIM

    if g_blk is None:
        g_blk = _auto_g_blk(G, B)
    assert G % g_blk == 0, "g_blk must divide the number of mini-batches"

    # Lane-dense zero-padding of the noise (zeros -> numerically identical;
    # w1 rows beyond Z_DIM are zero as well).
    noise_p = jnp.pad(noise, ((0, 0), (0, 0), (0, Z_PAD - Z_DIM)))
    mats = list(prepared_params)

    def run(single_buffer):
        def const_spec(shape):
            nd = len(shape)
            kw = {}
            if single_buffer:
                # Weights never change block index -> single buffer saves VMEM.
                kw["pipeline_mode"] = pl.Buffered(1)
            return pl.BlockSpec(shape, lambda g, _n=nd: (0,) * _n, **kw)

        in_specs = ([pl.BlockSpec((g_blk, B, Z_PAD), lambda g: (g, 0, 0))]
                    + [const_spec(m.shape) for m in mats])
        out_spec = pl.BlockSpec((g_blk, B, OUT_PAD), lambda g: (g, 0, 0))

        out = pl.pallas_call(
            _make_generator_kernel(g_blk, B),
            out_shape=jax.ShapeDtypeStruct((G, B, OUT_PAD), jnp.float32),
            grid_spec=pl.GridSpec(
                grid=(G // g_blk,),
                in_specs=in_specs,
                out_specs=out_spec,
            ),
            compiler_params=pltpu.CompilerParams(
                dimension_semantics=("parallel",),   # independent groups -> megacore
                vmem_limit_bytes=32 * 1024 * 1024,
            ),
        )(noise_p, *mats)
        return jax.block_until_ready(out)

    if _SINGLE_BUFFER_WEIGHTS:
        try:
            out = run(True)
        except Exception:
            _SINGLE_BUFFER_WEIGHTS = False
            out = run(False)
    else:
        out = run(False)

    out = out[..., :IM_DIM]
    if squeeze:
        out = out[0]
    return out


def init_params(key):
    """Deterministic init mimicking PyTorch defaults (U(-1/sqrt(fan_in), ...))."""
    layer_dims = [
        (Z_DIM, HIDDEN),
        (HIDDEN, HIDDEN * 2),
        (HIDDEN * 2, HIDDEN * 4),
        (HIDDEN * 4, HIDDEN * 8),
    ]
    params = []
    for (din, dout) in layer_dims:
        key, kw, kb = jax.random.split(key, 3)
        bound = 1.0 / (din ** 0.5)
        w = jax.random.uniform(kw, (din, dout), jnp.float32, -bound, bound)
        b = jax.random.uniform(kb, (1, dout), jnp.float32, -bound, bound)
        gamma = jnp.ones((1, dout), jnp.float32)
        beta = jnp.zeros((1, dout), jnp.float32)
        params += [w, b, gamma, beta]
    # final Linear(hidden*8 -> im_dim)
    din, dout = HIDDEN * 8, IM_DIM
    key, kw, kb = jax.random.split(key, 3)
    bound = 1.0 / (din ** 0.5)
    w5 = jax.random.uniform(kw, (din, dout), jnp.float32, -bound, bound)
    b5 = jax.random.uniform(kb, (1, dout), jnp.float32, -bound, bound)
    params += [w5, b5]
    return params


def generator_reference(noise, params):
    """Pure-JAX f32 reference mirroring the PyTorch forward (one mini-batch)."""
    (w1, b1, g1, be1,
     w2, b2, g2, be2,
     w3, b3, g3, be3,
     w4, b4, g4, be4,
     w5, b5) = params

    def block(h, w, b, g, be):
        y = h @ w + b
        mu = jnp.mean(y, axis=0, keepdims=True)
        var = jnp.mean(jnp.square(y - mu), axis=0, keepdims=True)
        return jnp.maximum((y - mu) / jnp.sqrt(var + EPS) * g + be, 0.0)

    h = noise
    h = block(h, w1, b1, g1, be1)
    h = block(h, w2, b2, g2, be2)
    h = block(h, w3, b3, g3, be3)
    h = block(h, w4, b4, g4, be4)
    return jax.nn.sigmoid(h @ w5 + b5)


if __name__ == "__main__":
    key = jax.random.PRNGKey(0)
    key, knoise, kparams = jax.random.split(key, 3)

    params = init_params(kparams)

    batch = 8
    num_batches = 4   # exercises the blocked grid axis (auto g_blk=2 -> 2 steps)
    noise = jax.random.normal(knoise, (num_batches, batch, Z_DIM), jnp.float32)
    ref = jnp.stack([generator_reference(noise[g], params)
                     for g in range(num_batches)])

    # --- f32-weight path: exact-semantics check -----------------------------
    params_f32 = prepare_params(params, weight_dtype=jnp.float32)
    out_f32 = jax.block_until_ready(generator_forward(noise, params_f32))
    assert out_f32.shape == (num_batches, batch, IM_DIM)
    assert jnp.allclose(out_f32, ref, atol=1e-4, rtol=1e-4), \
        "mismatch vs reference (f32 weights)"

    # --- bf16-weight fast path (half the weight HBM traffic, native MXU) ----
    params_bf16 = prepare_params(params, weight_dtype=jnp.bfloat16)
    out_bf16 = jax.block_until_ready(generator_forward(noise, params_bf16))
    assert out_bf16.shape == (num_batches, batch, IM_DIM)
    assert jnp.allclose(out_bf16, ref, atol=4e-2, rtol=0.0), \
        "mismatch vs reference (bf16 weights)"

    # --- single mini-batch (2D) path, matches one PyTorch module call -------
    out1 = jax.block_until_ready(generator_forward(noise[0], params_f32))
    assert out1.shape == (batch, IM_DIM)
    assert jnp.allclose(out1, ref[0], atol=1e-4, rtol=1e-4), \
        "mismatch vs reference (single mini-batch)"

    print("KERNEL_OK")
</pallas_src>

<mosaic_0001>
module attributes {stable_mosaic.version = 11 : i64} {
  func.func @kernel(%arg0: i32, %arg1: memref<2x8x128xf32, #tpu.memory_space<vmem>>, %arg2: memref<128x128xf32, #tpu.memory_space<vmem>>, %arg3: memref<1x128xf32, #tpu.memory_space<vmem>>, %arg4: memref<1x128xf32, #tpu.memory_space<vmem>>, %arg5: memref<1x128xf32, #tpu.memory_space<vmem>>, %arg6: memref<128x256xf32, #tpu.memory_space<vmem>>, %arg7: memref<1x256xf32, #tpu.memory_space<vmem>>, %arg8: memref<1x256xf32, #tpu.memory_space<vmem>>, %arg9: memref<1x256xf32, #tpu.memory_space<vmem>>, %arg10: memref<256x512xf32, #tpu.memory_space<vmem>>, %arg11: memref<1x512xf32, #tpu.memory_space<vmem>>, %arg12: memref<1x512xf32, #tpu.memory_space<vmem>>, %arg13: memref<1x512xf32, #tpu.memory_space<vmem>>, %arg14: memref<512x1024xf32, #tpu.memory_space<vmem>>, %arg15: memref<1x1024xf32, #tpu.memory_space<vmem>>, %arg16: memref<1x1024xf32, #tpu.memory_space<vmem>>, %arg17: memref<1x1024xf32, #tpu.memory_space<vmem>>, %arg18: memref<1024x128xf32, #tpu.memory_space<vmem>>, %arg19: memref<1x128xf32, #tpu.memory_space<vmem>>, %arg20: memref<2x8x128xf32, #tpu.memory_space<vmem>>) attributes {dimension_semantics = [#tpu.dimension_semantics<parallel>], iteration_bounds = array<i64: 2>, scalar_prefetch = 0 : i64, scratch_operands = 0 : i64, tpu.core_type = #tpu.core_type<tc>, window_params = [{transform_indices = @transform_0, window_bounds = array<i64: 2, 8, 128>}, {pipeline_mode = #tpu.pipeline_mode<synchronous>, transform_indices = @transform_1, window_bounds = array<i64: 128, 128>}, {pipeline_mode = #tpu.pipeline_mode<synchronous>, transform_indices = @transform_2, window_bounds = array<i64: 1, 128>}, {pipeline_mode = #tpu.pipeline_mode<synchronous>, transform_indices = @transform_3, window_bounds = array<i64: 1, 128>}, {pipeline_mode = #tpu.pipeline_mode<synchronous>, transform_indices = @transform_4, window_bounds = array<i64: 1, 128>}, {pipeline_mode = #tpu.pipeline_mode<synchronous>, transform_indices = @transform_5, window_bounds = array<i64: 128, 256>}, {pipeline_mode = #tpu.pipeline_mode<synchronous>, transform_indices = @transform_6, window_bounds = array<i64: 1, 256>}, {pipeline_mode = #tpu.pipeline_mode<synchronous>, transform_indices = @transform_7, window_bounds = array<i64: 1, 256>}, {pipeline_mode = #tpu.pipeline_mode<synchronous>, transform_indices = @transform_8, window_bounds = array<i64: 1, 256>}, {pipeline_mode = #tpu.pipeline_mode<synchronous>, transform_indices = @transform_9, window_bounds = array<i64: 256, 512>}, {pipeline_mode = #tpu.pipeline_mode<synchronous>, transform_indices = @transform_10, window_bounds = array<i64: 1, 512>}, {pipeline_mode = #tpu.pipeline_mode<synchronous>, transform_indices = @transform_11, window_bounds = array<i64: 1, 512>}, {pipeline_mode = #tpu.pipeline_mode<synchronous>, transform_indices = @transform_12, window_bounds = array<i64: 1, 512>}, {pipeline_mode = #tpu.pipeline_mode<synchronous>, transform_indices = @transform_13, window_bounds = array<i64: 512, 1024>}, {pipeline_mode = #tpu.pipeline_mode<synchronous>, transform_indices = @transform_14, window_bounds = array<i64: 1, 1024>}, {pipeline_mode = #tpu.pipeline_mode<synchronous>, transform_indices = @transform_15, window_bounds = array<i64: 1, 1024>}, {pipeline_mode = #tpu.pipeline_mode<synchronous>, transform_indices = @transform_16, window_bounds = array<i64: 1, 1024>}, {pipeline_mode = #tpu.pipeline_mode<synchronous>, transform_indices = @transform_17, window_bounds = array<i64: 1024, 128>}, {pipeline_mode = #tpu.pipeline_mode<synchronous>, transform_indices = @transform_18, window_bounds = array<i64: 1, 128>}, {transform_indices = @transform_19, window_bounds = array<i64: 2, 8, 128>}]} {
    %c0 = arith.constant 0 : index
    %c0_0 = arith.constant 0 : index
    %c0_1 = arith.constant 0 : index
    %0 = vector.load %arg1[%c0, %c0_0, %c0_1] : memref<2x8x128xf32, #tpu.memory_space<vmem>>, vector<2x8x128xf32>
    %1 = vector.shape_cast %0 : vector<2x8x128xf32> to vector<16x128xf32>
    %c0_2 = arith.constant 0 : index
    %c0_3 = arith.constant 0 : index
    %2 = vector.load %arg2[%c0_2, %c0_3] : memref<128x128xf32, #tpu.memory_space<vmem>>, vector<128x128xf32>
    %cst = arith.constant dense<0.000000e+00> : vector<16x128xf32>
    %3 = tpu.matmul %1, %2, %cst {dimension_numbers = #tpu.dot_dimension_numbers<[1], [0], [0], [1], [0, 0, 1, 1], [], []>} : vector<16x128xf32>, vector<128x128xf32>, vector<16x128xf32> -> vector<16x128xf32>
    %c0_4 = arith.constant 0 : index
    %c0_5 = arith.constant 0 : index
    %4 = vector.load %arg3[%c0_4, %c0_5] : memref<1x128xf32, #tpu.memory_space<vmem>>, vector<1x128xf32>
    %5 = vector.broadcast %4 : vector<1x128xf32> to vector<16x128xf32>
    %6 = arith.addf %3, %5 : vector<16x128xf32>
    %7 = vector.shape_cast %6 : vector<16x128xf32> to vector<2x8x128xf32>
    %cst_6 = arith.constant dense<0.000000e+00> : vector<2x128xf32>
    %8 = vector.multi_reduction <add>, %7, %cst_6 [1] : vector<2x8x128xf32> to vector<2x128xf32>
    %9 = vector.shape_cast %8 : vector<2x128xf32> to vector<2x1x128xf32>
    %cst_7 = arith.constant 8.000000e+00 : f32
    %10 = vector.broadcast %cst_7 : f32 to vector<2x1x128xf32>
    %11 = arith.divf %9, %10 : vector<2x1x128xf32>
    %12 = vector.broadcast %11 : vector<2x1x128xf32> to vector<2x8x128xf32>
    %13 = arith.subf %7, %12 : vector<2x8x128xf32>
    %14 = arith.mulf %13, %13 : vector<2x8x128xf32>
    %cst_8 = arith.constant dense<0.000000e+00> : vector<2x128xf32>
    %15 = vector.multi_reduction <add>, %14, %cst_8 [1] : vector<2x8x128xf32> to vector<2x128xf32>
    %16 = vector.shape_cast %15 : vector<2x128xf32> to vector<2x1x128xf32>
    %cst_9 = arith.constant 8.000000e+00 : f32
    %17 = vector.broadcast %cst_9 : f32 to vector<2x1x128xf32>
    %18 = arith.divf %16, %17 : vector<2x1x128xf32>
    %c0_10 = arith.constant 0 : index
    %c0_11 = arith.constant 0 : index
    %19 = vector.load %arg4[%c0_10, %c0_11] : memref<1x128xf32, #tpu.memory_space<vmem>>, vector<1x128xf32>
    %cst_12 = arith.constant 9.99999974E-6 : f32
    %20 = vector.broadcast %cst_12 : f32 to vector<2x1x128xf32>
    %21 = arith.addf %18, %20 : vector<2x1x128xf32>
    %22 = math.rsqrt %21 : vector<2x1x128xf32>
    %23 = vector.shape_cast %19 : vector<1x128xf32> to vector<1x1x128xf32>
    %24 = vector.broadcast %23 : vector<1x1x128xf32> to vector<2x1x128xf32>
    %25 = arith.mulf %24, %22 : vector<2x1x128xf32>
    %c0_13 = arith.constant 0 : index
    %c0_14 = arith.constant 0 : index
    %26 = vector.load %arg5[%c0_13, %c0_14] : memref<1x128xf32, #tpu.memory_space<vmem>>, vector<1x128xf32>
    %27 = arith.mulf %11, %25 : vector<2x1x128xf32>
    %28 = vector.shape_cast %26 : vector<1x128xf32> to vector<1x1x128xf32>
    %29 = vector.broadcast %28 : vector<1x1x128xf32> to vector<2x1x128xf32>
    %30 = arith.subf %29, %27 : vector<2x1x128xf32>
    %31 = vector.broadcast %25 : vector<2x1x128xf32> to vector<2x8x128xf32>
    %32 = arith.mulf %7, %31 : vector<2x8x128xf32>
    %33 = vector.broadcast %30 : vector<2x1x128xf32> to vector<2x8x128xf32>
    %34 = arith.addf %32, %33 : vector<2x8x128xf32>
    %cst_15 = arith.constant 0.000000e+00 : f32
    %35 = vector.broadcast %cst_15 : f32 to vector<2x8x128xf32>
    %36 = arith.maximumf %34, %35 : vector<2x8x128xf32>
    %37 = vector.shape_cast %36 : vector<2x8x128xf32> to vector<16x128xf32>
    %c0_16 = arith.constant 0 : index
    %c0_17 = arith.constant 0 : index
    %38 = vector.load %arg6[%c0_16, %c0_17] : memref<128x256xf32, #tpu.memory_space<vmem>>, vector<128x256xf32>
    %cst_18 = arith.constant dense<0.000000e+00> : vector<16x256xf32>
    %39 = tpu.matmul %37, %38, %cst_18 {dimension_numbers = #tpu.dot_dimension_numbers<[1], [0], [0], [1], [0, 0, 1, 1], [], []>} : vector<16x128xf32>, vector<128x256xf32>, vector<16x256xf32> -> vector<16x256xf32>
    %c0_19 = arith.constant 0 : index
    %c0_20 = arith.constant 0 : index
    %40 = vector.load %arg7[%c0_19, %c0_20] : memref<1x256xf32, #tpu.memory_space<vmem>>, vector<1x256xf32>
    %41 = vector.broadcast %40 : vector<1x256xf32> to vector<16x256xf32>
    %42 = arith.addf %39, %41 : vector<16x256xf32>
    %43 = vector.shape_cast %42 : vector<16x256xf32> to vector<2x8x256xf32>
    %cst_21 = arith.constant dense<0.000000e+00> : vector<2x256xf32>
    %44 = vector.multi_reduction <add>, %43, %cst_21 [1] : vector<2x8x256xf32> to vector<2x256xf32>
    %45 = vector.shape_cast %44 : vector<2x256xf32> to vector<2x1x256xf32>
    %cst_22 = arith.constant 8.000000e+00 : f32
    %46 = vector.broadcast %cst_22 : f32 to vector<2x1x256xf32>
    %47 = arith.divf %45, %46 : vector<2x1x256xf32>
    %48 = vector.broadcast %47 : vector<2x1x256xf32> to vector<2x8x256xf32>
    %49 = arith.subf %43, %48 : vector<2x8x256xf32>
    %50 = arith.mulf %49, %49 : vector<2x8x256xf32>
    %cst_23 = arith.constant dense<0.000000e+00> : vector<2x256xf32>
    %51 = vector.multi_reduction <add>, %50, %cst_23 [1] : vector<2x8x256xf32> to vector<2x256xf32>
    %52 = vector.shape_cast %51 : vector<2x256xf32> to vector<2x1x256xf32>
    %cst_24 = arith.constant 8.000000e+00 : f32
    %53 = vector.broadcast %cst_24 : f32 to vector<2x1x256xf32>
    %54 = arith.divf %52, %53 : vector<2x1x256xf32>
    %c0_25 = arith.constant 0 : index
    %c0_26 = arith.constant 0 : index
    %55 = vector.load %arg8[%c0_25, %c0_26] : memref<1x256xf32, #tpu.memory_space<vmem>>, vector<1x256xf32>
    %cst_27 = arith.constant 9.99999974E-6 : f32
    %56 = vector.broadcast %cst_27 : f32 to vector<2x1x256xf32>
    %57 = arith.addf %54, %56 : vector<2x1x256xf32>
    %58 = math.rsqrt %57 : vector<2x1x256xf32>
    %59 = vector.shape_cast %55 : vector<1x256xf32> to vector<1x1x256xf32>
    %60 = vector.broadcast %59 : vector<1x1x256xf32> to vector<2x1x256xf32>
    %61 = arith.mulf %60, %58 : vector<2x1x256xf32>
    %c0_28 = arith.constant 0 : index
    %c0_29 = arith.constant 0 : index
    %62 = vector.load %arg9[%c0_28, %c0_29] : memref<1x256xf32, #tpu.memory_space<vmem>>, vector<1x256xf32>
    %63 = arith.mulf %47, %61 : vector<2x1x256xf32>
    %64 = vector.shape_cast %62 : vector<1x256xf32> to vector<1x1x256xf32>
    %65 = vector.broadcast %64 : vector<1x1x256xf32> to vector<2x1x256xf32>
    %66 = arith.subf %65, %63 : vector<2x1x256xf32>
    %67 = vector.broadcast %61 : vector<2x1x256xf32> to vector<2x8x256xf32>
    %68 = arith.mulf %43, %67 : vector<2x8x256xf32>
    %69 = vector.broadcast %66 : vector<2x1x256xf32> to vector<2x8x256xf32>
    %70 = arith.addf %68, %69 : vector<2x8x256xf32>
    %cst_30 = arith.constant 0.000000e+00 : f32
    %71 = vector.broadcast %cst_30 : f32 to vector<2x8x256xf32>
    %72 = arith.maximumf %70, %71 : vector<2x8x256xf32>
    %73 = vector.shape_cast %72 : vector<2x8x256xf32> to vector<16x256xf32>
    %c0_31 = arith.constant 0 : index
    %c0_32 = arith.constant 0 : index
    %74 = vector.load %arg10[%c0_31, %c0_32] : memref<256x512xf32, #tpu.memory_space<vmem>>, vector<256x512xf32>
    %cst_33 = arith.constant dense<0.000000e+00> : vector<16x512xf32>
    %75 = tpu.matmul %73, %74, %cst_33 {dimension_numbers = #tpu.dot_dimension_numbers<[1], [0], [0], [1], [0, 0, 1, 1], [], []>} : vector<16x256xf32>, vector<256x512xf32>, vector<16x512xf32> -> vector<16x512xf32>
    %c0_34 = arith.constant 0 : index
    %c0_35 = arith.constant 0 : index
    %76 = vector.load %arg11[%c0_34, %c0_35] : memref<1x512xf32, #tpu.memory_space<vmem>>, vector<1x512xf32>
    %77 = vector.broadcast %76 : vector<1x512xf32> to vector<16x512xf32>
    %78 = arith.addf %75, %77 : vector<16x512xf32>
    %79 = vector.shape_cast %78 : vector<16x512xf32> to vector<2x8x512xf32>
    %cst_36 = arith.constant dense<0.000000e+00> : vector<2x512xf32>
    %80 = vector.multi_reduction <add>, %79, %cst_36 [1] : vector<2x8x512xf32> to vector<2x512xf32>
    %81 = vector.shape_cast %80 : vector<2x512xf32> to vector<2x1x512xf32>
    %cst_37 = arith.constant 8.000000e+00 : f32
    %82 = vector.broadcast %cst_37 : f32 to vector<2x1x512xf32>
    %83 = arith.divf %81, %82 : vector<2x1x512xf32>
    %84 = vector.broadcast %83 : vector<2x1x512xf32> to vector<2x8x512xf32>
    %85 = arith.subf %79, %84 : vector<2x8x512xf32>
    %86 = arith.mulf %85, %85 : vector<2x8x512xf32>
    %cst_38 = arith.constant dense<0.000000e+00> : vector<2x512xf32>
    %87 = vector.multi_reduction <add>, %86, %cst_38 [1] : vector<2x8x512xf32> to vector<2x512xf32>
    %88 = vector.shape_cast %87 : vector<2x512xf32> to vector<2x1x512xf32>
    %cst_39 = arith.constant 8.000000e+00 : f32
    %89 = vector.broadcast %cst_39 : f32 to vector<2x1x512xf32>
    %90 = arith.divf %88, %89 : vector<2x1x512xf32>
    %c0_40 = arith.constant 0 : index
    %c0_41 = arith.constant 0 : index
    %91 = vector.load %arg12[%c0_40, %c0_41] : memref<1x512xf32, #tpu.memory_space<vmem>>, vector<1x512xf32>
    %cst_42 = arith.constant 9.99999974E-6 : f32
    %92 = vector.broadcast %cst_42 : f32 to vector<2x1x512xf32>
    %93 = arith.addf %90, %92 : vector<2x1x512xf32>
    %94 = math.rsqrt %93 : vector<2x1x512xf32>
    %95 = vector.shape_cast %91 : vector<1x512xf32> to vector<1x1x512xf32>
    %96 = vector.broadcast %95 : vector<1x1x512xf32> to vector<2x1x512xf32>
    %97 = arith.mulf %96, %94 : vector<2x1x512xf32>
    %c0_43 = arith.constant 0 : index
    %c0_44 = arith.constant 0 : index
    %98 = vector.load %arg13[%c0_43, %c0_44] : memref<1x512xf32, #tpu.memory_space<vmem>>, vector<1x512xf32>
    %99 = arith.mulf %83, %97 : vector<2x1x512xf32>
    %100 = vector.shape_cast %98 : vector<1x512xf32> to vector<1x1x512xf32>
    %101 = vector.broadcast %100 : vector<1x1x512xf32> to vector<2x1x512xf32>
    %102 = arith.subf %101, %99 : vector<2x1x512xf32>
    %103 = vector.broadcast %97 : vector<2x1x512xf32> to vector<2x8x512xf32>
    %104 = arith.mulf %79, %103 : vector<2x8x512xf32>
    %105 = vector.broadcast %102 : vector<2x1x512xf32> to vector<2x8x512xf32>
    %106 = arith.addf %104, %105 : vector<2x8x512xf32>
    %cst_45 = arith.constant 0.000000e+00 : f32
    %107 = vector.broadcast %cst_45 : f32 to vector<2x8x512xf32>
    %108 = arith.maximumf %106, %107 : vector<2x8x512xf32>
    %109 = vector.shape_cast %108 : vector<2x8x512xf32> to vector<16x512xf32>
    %c0_46 = arith.constant 0 : index
    %c0_47 = arith.constant 0 : index
    %110 = vector.load %arg14[%c0_46, %c0_47] : memref<512x1024xf32, #tpu.memory_space<vmem>>, vector<512x1024xf32>
    %cst_48 = arith.constant dense<0.000000e+00> : vector<16x1024xf32>
    %111 = tpu.matmul %109, %110, %cst_48 {dimension_numbers = #tpu.dot_dimension_numbers<[1], [0], [0], [1], [0, 0, 1, 1], [], []>} : vector<16x512xf32>, vector<512x1024xf32>, vector<16x1024xf32> -> vector<16x1024xf32>
    %c0_49 = arith.constant 0 : index
    %c0_50 = arith.constant 0 : index
    %112 = vector.load %arg15[%c0_49, %c0_50] : memref<1x1024xf32, #tpu.memory_space<vmem>>, vector<1x1024xf32>
    %113 = vector.broadcast %112 : vector<1x1024xf32> to vector<16x1024xf32>
    %114 = arith.addf %111, %113 : vector<16x1024xf32>
    %115 = vector.shape_cast %114 : vector<16x1024xf32> to vector<2x8x1024xf32>
    %cst_51 = arith.constant dense<0.000000e+00> : vector<2x1024xf32>
    %116 = vector.multi_reduction <add>, %115, %cst_51 [1] : vector<2x8x1024xf32> to vector<2x1024xf32>
    %117 = vector.shape_cast %116 : vector<2x1024xf32> to vector<2x1x1024xf32>
    %cst_52 = arith.constant 8.000000e+00 : f32
    %118 = vector.broadcast %cst_52 : f32 to vector<2x1x1024xf32>
    %119 = arith.divf %117, %118 : vector<2x1x1024xf32>
    %120 = vector.broadcast %119 : vector<2x1x1024xf32> to vector<2x8x1024xf32>
    %121 = arith.subf %115, %120 : vector<2x8x1024xf32>
    %122 = arith.mulf %121, %121 : vector<2x8x1024xf32>
    %cst_53 = arith.constant dense<0.000000e+00> : vector<2x1024xf32>
    %123 = vector.multi_reduction <add>, %122, %cst_53 [1] : vector<2x8x1024xf32> to vector<2x1024xf32>
    %124 = vector.shape_cast %123 : vector<2x1024xf32> to vector<2x1x1024xf32>
    %cst_54 = arith.constant 8.000000e+00 : f32
    %125 = vector.broadcast %cst_54 : f32 to vector<2x1x1024xf32>
    %126 = arith.divf %124, %125 : vector<2x1x1024xf32>
    %c0_55 = arith.constant 0 : index
    %c0_56 = arith.constant 0 : index
    %127 = vector.load %arg16[%c0_55, %c0_56] : memref<1x1024xf32, #tpu.memory_space<vmem>>, vector<1x1024xf32>
    %cst_57 = arith.constant 9.99999974E-6 : f32
    %128 = vector.broadcast %cst_57 : f32 to vector<2x1x1024xf32>
    %129 = arith.addf %126, %128 : vector<2x1x1024xf32>
    %130 = math.rsqrt %129 : vector<2x1x1024xf32>
    %131 = vector.shape_cast %127 : vector<1x1024xf32> to vector<1x1x1024xf32>
    %132 = vector.broadcast %131 : vector<1x1x1024xf32> to vector<2x1x1024xf32>
    %133 = arith.mulf %132, %130 : vector<2x1x1024xf32>
    %c0_58 = arith.constant 0 : index
    %c0_59 = arith.constant 0 : index
    %134 = vector.load %arg17[%c0_58, %c0_59] : memref<1x1024xf32, #tpu.memory_space<vmem>>, vector<1x1024xf32>
    %135 = arith.mulf %119, %133 : vector<2x1x1024xf32>
    %136 = vector.shape_cast %134 : vector<1x1024xf32> to vector<1x1x1024xf32>
    %137 = vector.broadcast %136 : vector<1x1x1024xf32> to vector<2x1x1024xf32>
    %138 = arith.subf %137, %135 : vector<2x1x1024xf32>
    %139 = vector.broadcast %133 : vector<2x1x1024xf32> to vector<2x8x1024xf32>
    %140 = arith.mulf %115, %139 : vector<2x8x1024xf32>
    %141 = vector.broadcast %138 : vector<2x1x1024xf32> to vector<2x8x1024xf32>
    %142 = arith.addf %140, %141 : vector<2x8x1024xf32>
    %cst_60 = arith.constant 0.000000e+00 : f32
    %143 = vector.broadcast %cst_60 : f32 to vector<2x8x1024xf32>
    %144 = arith.maximumf %142, %143 : vector<2x8x1024xf32>
    %145 = vector.shape_cast %144 : vector<2x8x1024xf32> to vector<16x1024xf32>
    %c0_61 = arith.constant 0 : index
    %c0_62 = arith.constant 0 : index
    %146 = vector.load %arg18[%c0_61, %c0_62] : memref<1024x128xf32, #tpu.memory_space<vmem>>, vector<1024x128xf32>
    %cst_63 = arith.constant dense<0.000000e+00> : vector<16x128xf32>
    %147 = tpu.matmul %145, %146, %cst_63 {dimension_numbers = #tpu.dot_dimension_numbers<[1], [0], [0], [1], [0, 0, 1, 1], [], []>} : vector<16x1024xf32>, vector<1024x128xf32>, vector<16x128xf32> -> vector<16x128xf32>
    %c0_64 = arith.constant 0 : index
    %c0_65 = arith.constant 0 : index
    %148 = vector.load %arg19[%c0_64, %c0_65] : memref<1x128xf32, #tpu.memory_space<vmem>>, vector<1x128xf32>
    %149 = vector.broadcast %148 : vector<1x128xf32> to vector<16x128xf32>
    %150 = arith.addf %147, %149 : vector<16x128xf32>
    %cst_66 = arith.constant 5.000000e-01 : f32
    %151 = vector.broadcast %cst_66 : f32 to vector<16x128xf32>
    %152 = arith.mulf %151, %150 : vector<16x128xf32>
    %153 = math.tanh %152 : vector<16x128xf32>
    %cst_67 = arith.constant 1.000000e+00 : f32
    %154 = vector.broadcast %cst_67 : f32 to vector<16x128xf32>
    %155 = arith.addf %153, %154 : vector<16x128xf32>
    %cst_68 = arith.constant 5.000000e-01 : f32
    %156 = vector.broadcast %cst_68 : f32 to vector<16x128xf32>
    %157 = arith.mulf %156, %155 : vector<16x128xf32>
    %158 = vector.shape_cast %157 : vector<16x128xf32> to vector<2x8x128xf32>
    %c0_69 = arith.constant 0 : index
    %c0_70 = arith.constant 0 : index
    %c0_71 = arith.constant 0 : index
    %159 = vector.load %arg20[%c0_69, %c0_70, %c0_71] : memref<2x8x128xf32, #tpu.memory_space<vmem>>, vector<2x8x128xf32>
    tpu.vector_store %arg20[%c0_69, %c0_70, %c0_71], %158 {strides = array<i32>} : memref<2x8x128xf32, #tpu.memory_space<vmem>>, vector<2x8x128xf32>,
    return
  }
  func.func @transform_0(%arg0: i32) -> (i32, i32, i32) {
    %c0_i32 = arith.constant 0 : i32
    %c0_i32_0 = arith.constant 0 : i32
    %c0_i32_1 = arith.constant 0 : i32
    return %arg0, %c0_i32, %c0_i32_0 : i32, i32, i32
  }
  func.func @transform_1(%arg0: i32) -> (i32, i32) {
    %c0_i32 = arith.constant 0 : i32
    %c0_i32_0 = arith.constant 0 : i32
    %c0_i32_1 = arith.constant 0 : i32
    return %c0_i32, %c0_i32_0 : i32, i32
  }
  func.func @transform_2(%arg0: i32) -> (i32, i32) {
    %c0_i32 = arith.constant 0 : i32
    %c0_i32_0 = arith.constant 0 : i32
    %c0_i32_1 = arith.constant 0 : i32
    return %c0_i32, %c0_i32_0 : i32, i32
  }
  func.func @transform_3(%arg0: i32) -> (i32, i32) {
    %c0_i32 = arith.constant 0 : i32
    %c0_i32_0 = arith.constant 0 : i32
    %c0_i32_1 = arith.constant 0 : i32
    return %c0_i32, %c0_i32_0 : i32, i32
  }
  func.func @transform_4(%arg0: i32) -> (i32, i32) {
    %c0_i32 = arith.constant 0 : i32
    %c0_i32_0 = arith.constant 0 : i32
    %c0_i32_1 = arith.constant 0 : i32
    return %c0_i32, %c0_i32_0 : i32, i32
  }
  func.func @transform_5(%arg0: i32) -> (i32, i32) {
    %c0_i32 = arith.constant 0 : i32
    %c0_i32_0 = arith.constant 0 : i32
    %c0_i32_1 = arith.constant 0 : i32
    return %c0_i32, %c0_i32_0 : i32, i32
  }
  func.func @transform_6(%arg0: i32) -> (i32, i32) {
    %c0_i32 = arith.constant 0 : i32
    %c0_i32_0 = arith.constant 0 : i32
    %c0_i32_1 = arith.constant 0 : i32
    return %c0_i32, %c0_i32_0 : i32, i32
  }
  func.func @transform_7(%arg0: i32) -> (i32, i32) {
    %c0_i32 = arith.constant 0 : i32
    %c0_i32_0 = arith.constant 0 : i32
    %c0_i32_1 = arith.constant 0 : i32
    return %c0_i32, %c0_i32_0 : i32, i32
  }
  func.func @transform_8(%arg0: i32) -> (i32, i32) {
    %c0_i32 = arith.constant 0 : i32
    %c0_i32_0 = arith.constant 0 : i32
    %c0_i32_1 = arith.constant 0 : i32
    return %c0_i32, %c0_i32_0 : i32, i32
  }
  func.func @transform_9(%arg0: i32) -> (i32, i32) {
    %c0_i32 = arith.constant 0 : i32
    %c0_i32_0 = arith.constant 0 : i32
    %c0_i32_1 = arith.constant 0 : i32
    return %c0_i32, %c0_i32_0 : i32, i32
  }
  func.func @transform_10(%arg0: i32) -> (i32, i32) {
    %c0_i32 = arith.constant 0 : i32
    %c0_i32_0 = arith.constant 0 : i32
    %c0_i32_1 = arith.constant 0 : i32
    return %c0_i32, %c0_i32_0 : i32, i32
  }
  func.func @transform_11(%arg0: i32) -> (i32, i32) {
    %c0_i32 = arith.constant 0 : i32
    %c0_i32_0 = arith.constant 0 : i32
    %c0_i32_1 = arith.constant 0 : i32
    return %c0_i32, %c0_i32_0 : i32, i32
  }
  func.func @transform_12(%arg0: i32) -> (i32, i32) {
    %c0_i32 = arith.constant 0 : i32
    %c0_i32_0 = arith.constant 0 : i32
    %c0_i32_1 = arith.constant 0 : i32
    return %c0_i32, %c0_i32_0 : i32, i32
  }
  func.func @transform_13(%arg0: i32) -> (i32, i32) {
    %c0_i32 = arith.constant 0 : i32
    %c0_i32_0 = arith.constant 0 : i32
    %c0_i32_1 = arith.constant 0 : i32
    return %c0_i32, %c0_i32_0 : i32, i32
  }
  func.func @transform_14(%arg0: i32) -> (i32, i32) {
    %c0_i32 = arith.constant 0 : i32
    %c0_i32_0 = arith.constant 0 : i32
    %c0_i32_1 = arith.constant 0 : i32
    return %c0_i32, %c0_i32_0 : i32, i32
  }
  func.func @transform_15(%arg0: i32) -> (i32, i32) {
    %c0_i32 = arith.constant 0 : i32
    %c0_i32_0 = arith.constant 0 : i32
    %c0_i32_1 = arith.constant 0 : i32
    return %c0_i32, %c0_i32_0 : i32, i32
  }
  func.func @transform_16(%arg0: i32) -> (i32, i32) {
    %c0_i32 = arith.constant 0 : i32
    %c0_i32_0 = arith.constant 0 : i32
    %c0_i32_1 = arith.constant 0 : i32
    return %c0_i32, %c0_i32_0 : i32, i32
  }
  func.func @transform_17(%arg0: i32) -> (i32, i32) {
    %c0_i32 = arith.constant 0 : i32
    %c0_i32_0 = arith.constant 0 : i32
    %c0_i32_1 = arith.constant 0 : i32
    return %c0_i32, %c0_i32_0 : i32, i32
  }
  func.func @transform_18(%arg0: i32) -> (i32, i32) {
    %c0_i32 = arith.constant 0 : i32
    %c0_i32_0 = arith.constant 0 : i32
    %c0_i32_1 = arith.constant 0 : i32
    return %c0_i32, %c0_i32_0 : i32, i32
  }
  func.func @transform_19(%arg0: i32) -> (i32, i32, i32) {
    %c0_i32 = arith.constant 0 : i32
    %c0_i32_0 = arith.constant 0 : i32
    %c0_i32_1 = arith.constant 0 : i32
    return %arg0, %c0_i32, %c0_i32_0 : i32, i32, i32
  }
}

module attributes {stable_mosaic.version = 11 : i64} {
  func.func @kernel(%arg0: i32, %arg1: memref<2x8x128xf32, #tpu.memory_space<vmem>>, %arg2: memref<128x128xf32, #tpu.memory_space<vmem>>, %arg3: memref<1x128xf32, #tpu.memory_space<vmem>>, %arg4: memref<1x128xf32, #tpu.memory_space<vmem>>, %arg5: memref<1x128xf32, #tpu.memory_space<vmem>>, %arg6: memref<128x256xf32, #tpu.memory_space<vmem>>, %arg7: memref<1x256xf32, #tpu.memory_space<vmem>>, %arg8: memref<1x256xf32, #tpu.memory_space<vmem>>, %arg9: memref<1x256xf32, #tpu.memory_space<vmem>>, %arg10: memref<256x512xf32, #tpu.memory_space<vmem>>, %arg11: memref<1x512xf32, #tpu.memory_space<vmem>>, %arg12: memref<1x512xf32, #tpu.memory_space<vmem>>, %arg13: memref<1x512xf32, #tpu.memory_space<vmem>>, %arg14: memref<512x1024xf32, #tpu.memory_space<vmem>>, %arg15: memref<1x1024xf32, #tpu.memory_space<vmem>>, %arg16: memref<1x1024xf32, #tpu.memory_space<vmem>>, %arg17: memref<1x1024xf32, #tpu.memory_space<vmem>>, %arg18: memref<1024x128xf32, #tpu.memory_space<vmem>>, %arg19: memref<1x128xf32, #tpu.memory_space<vmem>>, %arg20: memref<2x8x128xf32, #tpu.memory_space<vmem>>) attributes {dimension_semantics = [#tpu.dimension_semantics<parallel>], iteration_bounds = array<i64: 2>, scalar_prefetch = 0 : i64, scratch_operands = 0 : i64, tpu.core_type = #tpu.core_type<tc>, window_params = [{transform_indices = @transform_0, window_bounds = array<i64: 2, 8, 128>}, {pipeline_mode = #tpu.pipeline_mode<synchronous>, transform_indices = @transform_1, window_bounds = array<i64: 128, 128>}, {pipeline_mode = #tpu.pipeline_mode<synchronous>, transform_indices = @transform_2, window_bounds = array<i64: 1, 128>}, {pipeline_mode = #tpu.pipeline_mode<synchronous>, transform_indices = @transform_3, window_bounds = array<i64: 1, 128>}, {pipeline_mode = #tpu.pipeline_mode<synchronous>, transform_indices = @transform_4, window_bounds = array<i64: 1, 128>}, {pipeline_mode = #tpu.pipeline_mode<synchronous>, transform_indices = @transform_5, window_bounds = array<i64: 128, 256>}, {pipeline_mode = #tpu.pipeline_mode<synchronous>, transform_indices = @transform_6, window_bounds = array<i64: 1, 256>}, {pipeline_mode = #tpu.pipeline_mode<synchronous>, transform_indices = @transform_7, window_bounds = array<i64: 1, 256>}, {pipeline_mode = #tpu.pipeline_mode<synchronous>, transform_indices = @transform_8, window_bounds = array<i64: 1, 256>}, {pipeline_mode = #tpu.pipeline_mode<synchronous>, transform_indices = @transform_9, window_bounds = array<i64: 256, 512>}, {pipeline_mode = #tpu.pipeline_mode<synchronous>, transform_indices = @transform_10, window_bounds = array<i64: 1, 512>}, {pipeline_mode = #tpu.pipeline_mode<synchronous>, transform_indices = @transform_11, window_bounds = array<i64: 1, 512>}, {pipeline_mode = #tpu.pipeline_mode<synchronous>, transform_indices = @transform_12, window_bounds = array<i64: 1, 512>}, {pipeline_mode = #tpu.pipeline_mode<synchronous>, transform_indices = @transform_13, window_bounds = array<i64: 512, 1024>}, {pipeline_mode = #tpu.pipeline_mode<synchronous>, transform_indices = @transform_14, window_bounds = array<i64: 1, 1024>}, {pipeline_mode = #tpu.pipeline_mode<synchronous>, transform_indices = @transform_15, window_bounds = array<i64: 1, 1024>}, {pipeline_mode = #tpu.pipeline_mode<synchronous>, transform_indices = @transform_16, window_bounds = array<i64: 1, 1024>}, {pipeline_mode = #tpu.pipeline_mode<synchronous>, transform_indices = @transform_17, window_bounds = array<i64: 1024, 128>}, {pipeline_mode = #tpu.pipeline_mode<synchronous>, transform_indices = @transform_18, window_bounds = array<i64: 1, 128>}, {transform_indices = @transform_19, window_bounds = array<i64: 2, 8, 128>}]} {
    %c0 = arith.constant 0 : index
    %c0_0 = arith.constant 0 : index
    %c0_1 = arith.constant 0 : index
    %0 = vector.load %arg1[%c0, %c0_0, %c0_1] : memref<2x8x128xf32, #tpu.memory_space<vmem>>, vector<2x8x128xf32>
    %1 = vector.shape_cast %0 : vector<2x8x128xf32> to vector<16x128xf32>
    %c0_2 = arith.constant 0 : index
    %c0_3 = arith.constant 0 : index
    %2 = vector.load %arg2[%c0_2, %c0_3] : memref<128x128xf32, #tpu.memory_space<vmem>>, vector<128x128xf32>
    %cst = arith.constant dense<0.000000e+00> : vector<16x128xf32>
    %3 = tpu.matmul %1, %2, %cst {dimension_numbers = #tpu.dot_dimension_numbers<[1], [0], [0], [1], [0, 0, 1, 1], [], []>} : vector<16x128xf32>, vector<128x128xf32>, vector<16x128xf32> -> vector<16x128xf32>
    %c0_4 = arith.constant 0 : index
    %c0_5 = arith.constant 0 : index
    %4 = vector.load %arg3[%c0_4, %c0_5] : memref<1x128xf32, #tpu.memory_space<vmem>>, vector<1x128xf32>
    %5 = vector.broadcast %4 : vector<1x128xf32> to vector<16x128xf32>
    %6 = arith.addf %3, %5 : vector<16x128xf32>
    %7 = vector.shape_cast %6 : vector<16x128xf32> to vector<2x8x128xf32>
    %cst_6 = arith.constant dense<0.000000e+00> : vector<2x128xf32>
    %8 = vector.multi_reduction <add>, %7, %cst_6 [1] : vector<2x8x128xf32> to vector<2x128xf32>
    %9 = vector.shape_cast %8 : vector<2x128xf32> to vector<2x1x128xf32>
    %cst_7 = arith.constant 8.000000e+00 : f32
    %10 = vector.broadcast %cst_7 : f32 to vector<2x1x128xf32>
    %11 = arith.divf %9, %10 : vector<2x1x128xf32>
    %12 = vector.broadcast %11 : vector<2x1x128xf32> to vector<2x8x128xf32>
    %13 = arith.subf %7, %12 : vector<2x8x128xf32>
    %14 = arith.mulf %13, %13 : vector<2x8x128xf32>
    %cst_8 = arith.constant dense<0.000000e+00> : vector<2x128xf32>
    %15 = vector.multi_reduction <add>, %14, %cst_8 [1] : vector<2x8x128xf32> to vector<2x128xf32>
    %16 = vector.shape_cast %15 : vector<2x128xf32> to vector<2x1x128xf32>
    %cst_9 = arith.constant 8.000000e+00 : f32
    %17 = vector.broadcast %cst_9 : f32 to vector<2x1x128xf32>
    %18 = arith.divf %16, %17 : vector<2x1x128xf32>
    %c0_10 = arith.constant 0 : index
    %c0_11 = arith.constant 0 : index
    %19 = vector.load %arg4[%c0_10, %c0_11] : memref<1x128xf32, #tpu.memory_space<vmem>>, vector<1x128xf32>
    %cst_12 = arith.constant 9.99999974E-6 : f32
    %20 = vector.broadcast %cst_12 : f32 to vector<2x1x128xf32>
    %21 = arith.addf %18, %20 : vector<2x1x128xf32>
    %22 = math.rsqrt %21 : vector<2x1x128xf32>
    %23 = vector.shape_cast %19 : vector<1x128xf32> to vector<1x1x128xf32>
    %24 = vector.broadcast %23 : vector<1x1x128xf32> to vector<2x1x128xf32>
    %25 = arith.mulf %24, %22 : vector<2x1x128xf32>
    %c0_13 = arith.constant 0 : index
    %c0_14 = arith.constant 0 : index
    %26 = vector.load %arg5[%c0_13, %c0_14] : memref<1x128xf32, #tpu.memory_space<vmem>>, vector<1x128xf32>
    %27 = arith.mulf %11, %25 : vector<2x1x128xf32>
    %28 = vector.shape_cast %26 : vector<1x128xf32> to vector<1x1x128xf32>
    %29 = vector.broadcast %28 : vector<1x1x128xf32> to vector<2x1x128xf32>
    %30 = arith.subf %29, %27 : vector<2x1x128xf32>
    %31 = vector.broadcast %25 : vector<2x1x128xf32> to vector<2x8x128xf32>
    %32 = arith.mulf %7, %31 : vector<2x8x128xf32>
    %33 = vector.broadcast %30 : vector<2x1x128xf32> to vector<2x8x128xf32>
    %34 = arith.addf %32, %33 : vector<2x8x128xf32>
    %cst_15 = arith.constant 0.000000e+00 : f32
    %35 = vector.broadcast %cst_15 : f32 to vector<2x8x128xf32>
    %36 = arith.maximumf %34, %35 : vector<2x8x128xf32>
    %37 = vector.shape_cast %36 : vector<2x8x128xf32> to vector<16x128xf32>
    %c0_16 = arith.constant 0 : index
    %c0_17 = arith.constant 0 : index
    %38 = vector.load %arg6[%c0_16, %c0_17] : memref<128x256xf32, #tpu.memory_space<vmem>>, vector<128x256xf32>
    %cst_18 = arith.constant dense<0.000000e+00> : vector<16x256xf32>
    %39 = tpu.matmul %37, %38, %cst_18 {dimension_numbers = #tpu.dot_dimension_numbers<[1], [0], [0], [1], [0, 0, 1, 1], [], []>} : vector<16x128xf32>, vector<128x256xf32>, vector<16x256xf32> -> vector<16x256xf32>
    %c0_19 = arith.constant 0 : index
    %c0_20 = arith.constant 0 : index
    %40 = vector.load %arg7[%c0_19, %c0_20] : memref<1x256xf32, #tpu.memory_space<vmem>>, vector<1x256xf32>
    %41 = vector.broadcast %40 : vector<1x256xf32> to vector<16x256xf32>
    %42 = arith.addf %39, %41 : vector<16x256xf32>
    %43 = vector.shape_cast %42 : vector<16x256xf32> to vector<2x8x256xf32>
    %cst_21 = arith.constant dense<0.000000e+00> : vector<2x256xf32>
    %44 = vector.multi_reduction <add>, %43, %cst_21 [1] : vector<2x8x256xf32> to vector<2x256xf32>
    %45 = vector.shape_cast %44 : vector<2x256xf32> to vector<2x1x256xf32>
    %cst_22 = arith.constant 8.000000e+00 : f32
    %46 = vector.broadcast %cst_22 : f32 to vector<2x1x256xf32>
    %47 = arith.divf %45, %46 : vector<2x1x256xf32>
    %48 = vector.broadcast %47 : vector<2x1x256xf32> to vector<2x8x256xf32>
    %49 = arith.subf %43, %48 : vector<2x8x256xf32>
    %50 = arith.mulf %49, %49 : vector<2x8x256xf32>
    %cst_23 = arith.constant dense<0.000000e+00> : vector<2x256xf32>
    %51 = vector.multi_reduction <add>, %50, %cst_23 [1] : vector<2x8x256xf32> to vector<2x256xf32>
    %52 = vector.shape_cast %51 : vector<2x256xf32> to vector<2x1x256xf32>
    %cst_24 = arith.constant 8.000000e+00 : f32
    %53 = vector.broadcast %cst_24 : f32 to vector<2x1x256xf32>
    %54 = arith.divf %52, %53 : vector<2x1x256xf32>
    %c0_25 = arith.constant 0 : index
    %c0_26 = arith.constant 0 : index
    %55 = vector.load %arg8[%c0_25, %c0_26] : memref<1x256xf32, #tpu.memory_space<vmem>>, vector<1x256xf32>
    %cst_27 = arith.constant 9.99999974E-6 : f32
    %56 = vector.broadcast %cst_27 : f32 to vector<2x1x256xf32>
    %57 = arith.addf %54, %56 : vector<2x1x256xf32>
    %58 = math.rsqrt %57 : vector<2x1x256xf32>
    %59 = vector.shape_cast %55 : vector<1x256xf32> to vector<1x1x256xf32>
    %60 = vector.broadcast %59 : vector<1x1x256xf32> to vector<2x1x256xf32>
    %61 = arith.mulf %60, %58 : vector<2x1x256xf32>
    %c0_28 = arith.constant 0 : index
    %c0_29 = arith.constant 0 : index
    %62 = vector.load %arg9[%c0_28, %c0_29] : memref<1x256xf32, #tpu.memory_space<vmem>>, vector<1x256xf32>
    %63 = arith.mulf %47, %61 : vector<2x1x256xf32>
    %64 = vector.shape_cast %62 : vector<1x256xf32> to vector<1x1x256xf32>
    %65 = vector.broadcast %64 : vector<1x1x256xf32> to vector<2x1x256xf32>
    %66 = arith.subf %65, %63 : vector<2x1x256xf32>
    %67 = vector.broadcast %61 : vector<2x1x256xf32> to vector<2x8x256xf32>
    %68 = arith.mulf %43, %67 : vector<2x8x256xf32>
    %69 = vector.broadcast %66 : vector<2x1x256xf32> to vector<2x8x256xf32>
    %70 = arith.addf %68, %69 : vector<2x8x256xf32>
    %cst_30 = arith.constant 0.000000e+00 : f32
    %71 = vector.broadcast %cst_30 : f32 to vector<2x8x256xf32>
    %72 = arith.maximumf %70, %71 : vector<2x8x256xf32>
    %73 = vector.shape_cast %72 : vector<2x8x256xf32> to vector<16x256xf32>
    %c0_31 = arith.constant 0 : index
    %c0_32 = arith.constant 0 : index
    %74 = vector.load %arg10[%c0_31, %c0_32] : memref<256x512xf32, #tpu.memory_space<vmem>>, vector<256x512xf32>
    %cst_33 = arith.constant dense<0.000000e+00> : vector<16x512xf32>
    %75 = tpu.matmul %73, %74, %cst_33 {dimension_numbers = #tpu.dot_dimension_numbers<[1], [0], [0], [1], [0, 0, 1, 1], [], []>} : vector<16x256xf32>, vector<256x512xf32>, vector<16x512xf32> -> vector<16x512xf32>
    %c0_34 = arith.constant 0 : index
    %c0_35 = arith.constant 0 : index
    %76 = vector.load %arg11[%c0_34, %c0_35] : memref<1x512xf32, #tpu.memory_space<vmem>>, vector<1x512xf32>
    %77 = vector.broadcast %76 : vector<1x512xf32> to vector<16x512xf32>
    %78 = arith.addf %75, %77 : vector<16x512xf32>
    %79 = vector.shape_cast %78 : vector<16x512xf32> to vector<2x8x512xf32>
    %cst_36 = arith.constant dense<0.000000e+00> : vector<2x512xf32>
    %80 = vector.multi_reduction <add>, %79, %cst_36 [1] : vector<2x8x512xf32> to vector<2x512xf32>
    %81 = vector.shape_cast %80 : vector<2x512xf32> to vector<2x1x512xf32>
    %cst_37 = arith.constant 8.000000e+00 : f32
    %82 = vector.broadcast %cst_37 : f32 to vector<2x1x512xf32>
    %83 = arith.divf %81, %82 : vector<2x1x512xf32>
    %84 = vector.broadcast %83 : vector<2x1x512xf32> to vector<2x8x512xf32>
    %85 = arith.subf %79, %84 : vector<2x8x512xf32>
    %86 = arith.mulf %85, %85 : vector<2x8x512xf32>
    %cst_38 = arith.constant dense<0.000000e+00> : vector<2x512xf32>
    %87 = vector.multi_reduction <add>, %86, %cst_38 [1] : vector<2x8x512xf32> to vector<2x512xf32>
    %88 = vector.shape_cast %87 : vector<2x512xf32> to vector<2x1x512xf32>
    %cst_39 = arith.constant 8.000000e+00 : f32
    %89 = vector.broadcast %cst_39 : f32 to vector<2x1x512xf32>
    %90 = arith.divf %88, %89 : vector<2x1x512xf32>
    %c0_40 = arith.constant 0 : index
    %c0_41 = arith.constant 0 : index
    %91 = vector.load %arg12[%c0_40, %c0_41] : memref<1x512xf32, #tpu.memory_space<vmem>>, vector<1x512xf32>
    %cst_42 = arith.constant 9.99999974E-6 : f32
    %92 = vector.broadcast %cst_42 : f32 to vector<2x1x512xf32>
    %93 = arith.addf %90, %92 : vector<2x1x512xf32>
    %94 = math.rsqrt %93 : vector<2x1x512xf32>
    %95 = vector.shape_cast %91 : vector<1x512xf32> to vector<1x1x512xf32>
    %96 = vector.broadcast %95 : vector<1x1x512xf32> to vector<2x1x512xf32>
    %97 = arith.mulf %96, %94 : vector<2x1x512xf32>
    %c0_43 = arith.constant 0 : index
    %c0_44 = arith.constant 0 : index
    %98 = vector.load %arg13[%c0_43, %c0_44] : memref<1x512xf32, #tpu.memory_space<vmem>>, vector<1x512xf32>
    %99 = arith.mulf %83, %97 : vector<2x1x512xf32>
    %100 = vector.shape_cast %98 : vector<1x512xf32> to vector<1x1x512xf32>
    %101 = vector.broadcast %100 : vector<1x1x512xf32> to vector<2x1x512xf32>
    %102 = arith.subf %101, %99 : vector<2x1x512xf32>
    %103 = vector.broadcast %97 : vector<2x1x512xf32> to vector<2x8x512xf32>
    %104 = arith.mulf %79, %103 : vector<2x8x512xf32>
    %105 = vector.broadcast %102 : vector<2x1x512xf32> to vector<2x8x512xf32>
    %106 = arith.addf %104, %105 : vector<2x8x512xf32>
    %cst_45 = arith.constant 0.000000e+00 : f32
    %107 = vector.broadcast %cst_45 : f32 to vector<2x8x512xf32>
    %108 = arith.maximumf %106, %107 : vector<2x8x512xf32>
    %109 = vector.shape_cast %108 : vector<2x8x512xf32> to vector<16x512xf32>
    %c0_46 = arith.constant 0 : index
    %c0_47 = arith.constant 0 : index
    %110 = vector.load %arg14[%c0_46, %c0_47] : memref<512x1024xf32, #tpu.memory_space<vmem>>, vector<512x1024xf32>
    %cst_48 = arith.constant dense<0.000000e+00> : vector<16x1024xf32>
    %111 = tpu.matmul %109, %110, %cst_48 {dimension_numbers = #tpu.dot_dimension_numbers<[1], [0], [0], [1], [0, 0, 1, 1], [], []>} : vector<16x512xf32>, vector<512x1024xf32>, vector<16x1024xf32> -> vector<16x1024xf32>
    %c0_49 = arith.constant 0 : index
    %c0_50 = arith.constant 0 : index
    %112 = vector.load %arg15[%c0_49, %c0_50] : memref<1x1024xf32, #tpu.memory_space<vmem>>, vector<1x1024xf32>
    %113 = vector.broadcast %112 : vector<1x1024xf32> to vector<16x1024xf32>
    %114 = arith.addf %111, %113 : vector<16x1024xf32>
    %115 = vector.shape_cast %114 : vector<16x1024xf32> to vector<2x8x1024xf32>
    %cst_51 = arith.constant dense<0.000000e+00> : vector<2x1024xf32>
    %116 = vector.multi_reduction <add>, %115, %cst_51 [1] : vector<2x8x1024xf32> to vector<2x1024xf32>
    %117 = vector.shape_cast %116 : vector<2x1024xf32> to vector<2x1x1024xf32>
    %cst_52 = arith.constant 8.000000e+00 : f32
    %118 = vector.broadcast %cst_52 : f32 to vector<2x1x1024xf32>
    %119 = arith.divf %117, %118 : vector<2x1x1024xf32>
    %120 = vector.broadcast %119 : vector<2x1x1024xf32> to vector<2x8x1024xf32>
    %121 = arith.subf %115, %120 : vector<2x8x1024xf32>
    %122 = arith.mulf %121, %121 : vector<2x8x1024xf32>
    %cst_53 = arith.constant dense<0.000000e+00> : vector<2x1024xf32>
    %123 = vector.multi_reduction <add>, %122, %cst_53 [1] : vector<2x8x1024xf32> to vector<2x1024xf32>
    %124 = vector.shape_cast %123 : vector<2x1024xf32> to vector<2x1x1024xf32>
    %cst_54 = arith.constant 8.000000e+00 : f32
    %125 = vector.broadcast %cst_54 : f32 to vector<2x1x1024xf32>
    %126 = arith.divf %124, %125 : vector<2x1x1024xf32>
    %c0_55 = arith.constant 0 : index
    %c0_56 = arith.constant 0 : index
    %127 = vector.load %arg16[%c0_55, %c0_56] : memref<1x1024xf32, #tpu.memory_space<vmem>>, vector<1x1024xf32>
    %cst_57 = arith.constant 9.99999974E-6 : f32
    %128 = vector.broadcast %cst_57 : f32 to vector<2x1x1024xf32>
    %129 = arith.addf %126, %128 : vector<2x1x1024xf32>
    %130 = math.rsqrt %129 : vector<2x1x1024xf32>
    %131 = vector.shape_cast %127 : vector<1x1024xf32> to vector<1x1x1024xf32>
    %132 = vector.broadcast %131 : vector<1x1x1024xf32> to vector<2x1x1024xf32>
    %133 = arith.mulf %132, %130 : vector<2x1x1024xf32>
    %c0_58 = arith.constant 0 : index
    %c0_59 = arith.constant 0 : index
    %134 = vector.load %arg17[%c0_58, %c0_59] : memref<1x1024xf32, #tpu.memory_space<vmem>>, vector<1x1024xf32>
    %135 = arith.mulf %119, %133 : vector<2x1x1024xf32>
    %136 = vector.shape_cast %134 : vector<1x1024xf32> to vector<1x1x1024xf32>
    %137 = vector.broadcast %136 : vector<1x1x1024xf32> to vector<2x1x1024xf32>
    %138 = arith.subf %137, %135 : vector<2x1x1024xf32>
    %139 = vector.broadcast %133 : vector<2x1x1024xf32> to vector<2x8x1024xf32>
    %140 = arith.mulf %115, %139 : vector<2x8x1024xf32>
    %141 = vector.broadcast %138 : vector<2x1x1024xf32> to vector<2x8x1024xf32>
    %142 = arith.addf %140, %141 : vector<2x8x1024xf32>
    %cst_60 = arith.constant 0.000000e+00 : f32
    %143 = vector.broadcast %cst_60 : f32 to vector<2x8x1024xf32>
    %144 = arith.maximumf %142, %143 : vector<2x8x1024xf32>
    %145 = vector.shape_cast %144 : vector<2x8x1024xf32> to vector<16x1024xf32>
    %c0_61 = arith.constant 0 : index
    %c0_62 = arith.constant 0 : index
    %146 = vector.load %arg18[%c0_61, %c0_62] : memref<1024x128xf32, #tpu.memory_space<vmem>>, vector<1024x128xf32>
    %cst_63 = arith.constant dense<0.000000e+00> : vector<16x128xf32>
    %147 = tpu.matmul %145, %146, %cst_63 {dimension_numbers = #tpu.dot_dimension_numbers<[1], [0], [0], [1], [0, 0, 1, 1], [], []>} : vector<16x1024xf32>, vector<1024x128xf32>, vector<16x128xf32> -> vector<16x128xf32>
    %c0_64 = arith.constant 0 : index
    %c0_65 = arith.constant 0 : index
    %148 = vector.load %arg19[%c0_64, %c0_65] : memref<1x128xf32, #tpu.memory_space<vmem>>, vector<1x128xf32>
    %149 = vector.broadcast %148 : vector<1x128xf32> to vector<16x128xf32>
    %150 = arith.addf %147, %149 : vector<16x128xf32>
    %cst_66 = arith.constant 5.000000e-01 : f32
    %151 = vector.broadcast %cst_66 : f32 to vector<16x128xf32>
    %152 = arith.mulf %151, %150 : vector<16x128xf32>
    %153 = math.tanh %152 : vector<16x128xf32>
    %cst_67 = arith.constant 1.000000e+00 : f32
    %154 = vector.broadcast %cst_67 : f32 to vector<16x128xf32>
    %155 = arith.addf %153, %154 : vector<16x128xf32>
    %cst_68 = arith.constant 5.000000e-01 : f32
    %156 = vector.broadcast %cst_68 : f32 to vector<16x128xf32>
    %157 = arith.mulf %156, %155 : vector<16x128xf32>
    %158 = vector.shape_cast %157 : vector<16x128xf32> to vector<2x8x128xf32>
    %c0_69 = arith.constant 0 : index
    %c0_70 = arith.constant 0 : index
    %c0_71 = arith.constant 0 : index
    %159 = vector.load %arg20[%c0_69, %c0_70, %c0_71] : memref<2x8x128xf32, #tpu.memory_space<vmem>>, vector<2x8x128xf32>
    tpu.vector_store %arg20[%c0_69, %c0_70, %c0_71], %158 {strides = array<i32>} : memref<2x8x128xf32, #tpu.memory_space<vmem>>, vector<2x8x128xf32>,
    return
  }
  func.func @transform_0(%arg0: i32) -> (i32, i32, i32) {
    %c0_i32 = arith.constant 0 : i32
    %c0_i32_0 = arith.constant 0 : i32
    %c0_i32_1 = arith.constant 0 : i32
    return %arg0, %c0_i32, %c0_i32_0 : i32, i32, i32
  }
  func.func @transform_1(%arg0: i32) -> (i32, i32) {
    %c0_i32 = arith.constant 0 : i32
    %c0_i32_0 = arith.constant 0 : i32
    %c0_i32_1 = arith.constant 0 : i32
    return %c0_i32, %c0_i32_0 : i32, i32
  }
  func.func @transform_2(%arg0: i32) -> (i32, i32) {
    %c0_i32 = arith.constant 0 : i32
    %c0_i32_0 = arith.constant 0 : i32
    %c0_i32_1 = arith.constant 0 : i32
    return %c0_i32, %c0_i32_0 : i32, i32
  }
  func.func @transform_3(%arg0: i32) -> (i32, i32) {
    %c0_i32 = arith.constant 0 : i32
    %c0_i32_0 = arith.constant 0 : i32
    %c0_i32_1 = arith.constant 0 : i32
    return %c0_i32, %c0_i32_0 : i32, i32
  }
  func.func @transform_4(%arg0: i32) -> (i32, i32) {
    %c0_i32 = arith.constant 0 : i32
    %c0_i32_0 = arith.constant 0 : i32
    %c0_i32_1 = arith.constant 0 : i32
    return %c0_i32, %c0_i32_0 : i32, i32
  }
  func.func @transform_5(%arg0: i32) -> (i32, i32) {
    %c0_i32 = arith.constant 0 : i32
    %c0_i32_0 = arith.constant 0 : i32
    %c0_i32_1 = arith.constant 0 : i32
    return %c0_i32, %c0_i32_0 : i32, i32
  }
  func.func @transform_6(%arg0: i32) -> (i32, i32) {
    %c0_i32 = arith.constant 0 : i32
    %c0_i32_0 = arith.constant 0 : i32
    %c0_i32_1 = arith.constant 0 : i32
    return %c0_i32, %c0_i32_0 : i32, i32
  }
  func.func @transform_7(%arg0: i32) -> (i32, i32) {
    %c0_i32 = arith.constant 0 : i32
    %c0_i32_0 = arith.constant 0 : i32
    %c0_i32_1 = arith.constant 0 : i32
    return %c0_i32, %c0_i32_0 : i32, i32
  }
  func.func @transform_8(%arg0: i32) -> (i32, i32) {
    %c0_i32 = arith.constant 0 : i32
    %c0_i32_0 = arith.constant 0 : i32
    %c0_i32_1 = arith.constant 0 : i32
    return %c0_i32, %c0_i32_0 : i32, i32
  }
  func.func @transform_9(%arg0: i32) -> (i32, i32) {
    %c0_i32 = arith.constant 0 : i32
    %c0_i32_0 = arith.constant 0 : i32
    %c0_i32_1 = arith.constant 0 : i32
    return %c0_i32, %c0_i32_0 : i32, i32
  }
  func.func @transform_10(%arg0: i32) -> (i32, i32) {
    %c0_i32 = arith.constant 0 : i32
    %c0_i32_0 = arith.constant 0 : i32
    %c0_i32_1 = arith.constant 0 : i32
    return %c0_i32, %c0_i32_0 : i32, i32
  }
  func.func @transform_11(%arg0: i32) -> (i32, i32) {
    %c0_i32 = arith.constant 0 : i32
    %c0_i32_0 = arith.constant 0 : i32
    %c0_i32_1 = arith.constant 0 : i32
    return %c0_i32, %c0_i32_0 : i32, i32
  }
  func.func @transform_12(%arg0: i32) -> (i32, i32) {
    %c0_i32 = arith.constant 0 : i32
    %c0_i32_0 = arith.constant 0 : i32
    %c0_i32_1 = arith.constant 0 : i32
    return %c0_i32, %c0_i32_0 : i32, i32
  }
  func.func @transform_13(%arg0: i32) -> (i32, i32) {
    %c0_i32 = arith.constant 0 : i32
    %c0_i32_0 = arith.constant 0 : i32
    %c0_i32_1 = arith.constant 0 : i32
    return %c0_i32, %c0_i32_0 : i32, i32
  }
  func.func @transform_14(%arg0: i32) -> (i32, i32) {
    %c0_i32 = arith.constant 0 : i32
    %c0_i32_0 = arith.constant 0 : i32
    %c0_i32_1 = arith.constant 0 : i32
    return %c0_i32, %c0_i32_0 : i32, i32
  }
  func.func @transform_15(%arg0: i32) -> (i32, i32) {
    %c0_i32 = arith.constant 0 : i32
    %c0_i32_0 = arith.constant 0 : i32
    %c0_i32_1 = arith.constant 0 : i32
    return %c0_i32, %c0_i32_0 : i32, i32
  }
  func.func @transform_16(%arg0: i32) -> (i32, i32) {
    %c0_i32 = arith.constant 0 : i32
    %c0_i32_0 = arith.constant 0 : i32
    %c0_i32_1 = arith.constant 0 : i32
    return %c0_i32, %c0_i32_0 : i32, i32
  }
  func.func @transform_17(%arg0: i32) -> (i32, i32) {
    %c0_i32 = arith.constant 0 : i32
    %c0_i32_0 = arith.constant 0 : i32
    %c0_i32_1 = arith.constant 0 : i32
    return %c0_i32, %c0_i32_0 : i32, i32
  }
  func.func @transform_18(%arg0: i32) -> (i32, i32) {
    %c0_i32 = arith.constant 0 : i32
    %c0_i32_0 = arith.constant 0 : i32
    %c0_i32_1 = arith.constant 0 : i32
    return %c0_i32, %c0_i32_0 : i32, i32
  }
  func.func @transform_19(%arg0: i32) -> (i32, i32, i32) {
    %c0_i32 = arith.constant 0 : i32
    %c0_i32_0 = arith.constant 0 : i32
    %c0_i32_1 = arith.constant 0 : i32
    return %arg0, %c0_i32, %c0_i32_0 : i32, i32, i32
  }
}

</mosaic_0001>

<llo_original>
// kernel: tpu_custom_call.1
$region0: #{tpu_custom_call.1}
  #allocation0 [shape = 'u32[]', space=smem, size = 0x4, offset = 0x4, fixed_abs, tag = 'smem constant byte address 0x4 - core index']
  #allocation1 [shape = 'u32[144,128]{1,0:T(1,128)}', space=vmem, size = 0x12000, scoped, tag = 'internal scratch']
  %s0 = inlined_call_operand.hbm [shape: f32[4,8,128], index: 0, kind: input, shape index: {}]
  %s1 = inlined_call_operand.hbm [shape: f32[128,128], index: 1, kind: input, shape index: {}]
  %s2 = inlined_call_operand.hbm [shape: f32[1,128], index: 2, kind: input, shape index: {}]
  %s3 = inlined_call_operand.hbm [shape: f32[1,128], index: 3, kind: input, shape index: {}]
  %s4 = inlined_call_operand.hbm [shape: f32[1,128], index: 4, kind: input, shape index: {}]
  %s5 = inlined_call_operand.hbm [shape: f32[128,256], index: 5, kind: input, shape index: {}]
  %s6 = inlined_call_operand.hbm [shape: f32[1,256], index: 6, kind: input, shape index: {}]
  %s7 = inlined_call_operand.hbm [shape: f32[1,256], index: 7, kind: input, shape index: {}]
  %s8 = inlined_call_operand.hbm [shape: f32[1,256], index: 8, kind: input, shape index: {}]
  %s9 = inlined_call_operand.hbm [shape: f32[256,512], index: 9, kind: input, shape index: {}]
  %s10 = inlined_call_operand.hbm [shape: f32[1,512], index: 10, kind: input, shape index: {}]
  %s11 = inlined_call_operand.hbm [shape: f32[1,512], index: 11, kind: input, shape index: {}]
  %s12 = inlined_call_operand.hbm [shape: f32[1,512], index: 12, kind: input, shape index: {}]
  %s13 = inlined_call_operand.hbm [shape: f32[512,1024], index: 13, kind: input, shape index: {}]
  %s14 = inlined_call_operand.hbm [shape: f32[1,1024], index: 14, kind: input, shape index: {}]
  %s15 = inlined_call_operand.hbm [shape: f32[1,1024], index: 15, kind: input, shape index: {}]
  %s16 = inlined_call_operand.hbm [shape: f32[1,1024], index: 16, kind: input, shape index: {}]
  %s17 = inlined_call_operand.hbm [shape: f32[1024,128], index: 17, kind: input, shape index: {}]
  %s18 = inlined_call_operand.hbm [shape: f32[1,128], index: 18, kind: input, shape index: {}]
  %s19 = inlined_call_operand.hbm [shape: f32[4,8,128], index: 19, kind: output, shape index: {}]
  %s20 = sld [smem:[#allocation0]]
  $region185: #{tpu_custom_call.1} parent=0
    _
  %s22 = ssub.s32 1, %s20
  %s23 = scalar_select 0, %s22, %s20
  $region1: #{tpu_custom_call.1} parent=0
    #allocation2 [shape = 'u8[16384]{0}', space=vmem, size = 0x4000, scoped, tag = 'input window, operand 0']
    #allocation3 [shape = 's32[2]{0}', space=sflag, size = 0x8, scoped, tag = 'scoped memory for tpu_custom_call.1']
    #allocation4 [shape = 's32[2]{0}', space=sflag, size = 0x8, scoped, tag = 'scoped memory for tpu_custom_call.1']
    #allocation5 [shape = 'u8[65536]{0}', space=vmem, size = 0x10000, scoped, tag = 'input window, operand 1, single buffered']
    #allocation6 [shape = 's32[1]{0}', space=sflag, size = 0x4, scoped, tag = 'scoped memory for tpu_custom_call.1']
    #allocation7 [shape = 'u8[512]{0}', space=vmem, size = 0x400, scoped, tag = 'input window, operand 2, single buffered']
    #allocation8 [shape = 'u8[512]{0}', space=vmem, size = 0x400, scoped, tag = 'input window, operand 3, single buffered']
    #allocation9 [shape = 's32[1]{0}', space=sflag, size = 0x4, scoped, tag = 'scoped memory for tpu_custom_call.1']
    #allocation10 [shape = 'u8[512]{0}', space=vmem, size = 0x400, scoped, tag = 'input window, operand 4, single buffered']
    #allocation11 [shape = 'u8[131072]{0}', space=vmem, size = 0x20000, scoped, tag = 'input window, operand 5, single buffered']
    #allocation12 [shape = 's32[1]{0}', space=sflag, size = 0x4, scoped, tag = 'scoped memory for tpu_custom_call.1']
    #allocation13 [shape = 'u8[1024]{0}', space=vmem, size = 0x400, scoped, tag = 'input window, operand 6, single buffered']
    #allocation14 [shape = 'u8[1024]{0}', space=vmem, size = 0x400, scoped, tag = 'input window, operand 7, single buffered']
    #allocation15 [shape = 's32[1]{0}', space=sflag, size = 0x4, scoped, tag = 'scoped memory for tpu_custom_call.1']
    #allocation16 [shape = 'u8[1024]{0}', space=vmem, size = 0x400, scoped, tag = 'input window, operand 8, single buffered']
    #allocation17 [shape = 'u8[524288]{0}', space=vmem, size = 0x80000, scoped, tag = 'input window, operand 9, single buffered']
    #allocation18 [shape = 's32[1]{0}', space=sflag, size = 0x4, scoped, tag = 'scoped memory for tpu_custom_call.1']
    #allocation19 [shape = 'u8[2048]{0}', space=vmem, size = 0x800, scoped, tag = 'input window, operand 10, single buffered']
    #allocation20 [shape = 'u8[2048]{0}', space=vmem, size = 0x800, scoped, tag = 'input window, operand 11, single buffered']
    #allocation21 [shape = 's32[1]{0}', space=sflag, size = 0x4, scoped, tag = 'scoped memory for tpu_custom_call.1']
    #allocation22 [shape = 'u8[2048]{0}', space=vmem, size = 0x800, scoped, tag = 'input window, operand 12, single buffered']
    #allocation23 [shape = 'u8[2097152]{0}', space=vmem, size = 0x200000, scoped, tag = 'input window, operand 13, single buffered']
    #allocation24 [shape = 's32[1]{0}', space=sflag, size = 0x4, scoped, tag = 'scoped memory for tpu_custom_call.1']
    #allocation25 [shape = 'u8[4096]{0}', space=vmem, size = 0x1000, scoped, tag = 'input window, operand 14, single buffered']
    #allocation26 [shape = 'u8[4096]{0}', space=vmem, size = 0x1000, scoped, tag = 'input window, operand 15, single buffered']
    #allocation27 [shape = 's32[1]{0}', space=sflag, size = 0x4, scoped, tag = 'scoped memory for tpu_custom_call.1']
    #allocation28 [shape = 'u8[4096]{0}', space=vmem, size = 0x1000, scoped, tag = 'input window, operand 16, single buffered']
    #allocation29 [shape = 'u8[524288]{0}', space=vmem, size = 0x80000, scoped, tag = 'input window, operand 17, single buffered']
    #allocation30 [shape = 's32[1]{0}', space=sflag, size = 0x4, scoped, tag = 'scoped memory for tpu_custom_call.1']
    #allocation31 [shape = 'u8[512]{0}', space=vmem, size = 0x400, scoped, tag = 'input window, operand 18, single buffered']
    #allocation32 [shape = 'u8[16384]{0}', space=vmem, size = 0x4000, scoped, tag = 'output window, operand 0']
    %24 = vsyncpa [#allocation3], 0
    %s25 = scalar_lea.sflag [#allocation3], 1
    %26 = vsyncpa %s25, 0
    %27 = vsyncpa [#allocation6], 0
    %28 = vsyncpa [#allocation9], 0
    %29 = vsyncpa [#allocation12], 0
    %30 = vsyncpa [#allocation15], 0
    %31 = vsyncpa [#allocation18], 0
    %32 = vsyncpa [#allocation21], 0
    %33 = vsyncpa [#allocation24], 0
    %34 = vsyncpa [#allocation27], 0
    %35 = vsyncpa [#allocation30], 0
    %36 = vsyncpa [#allocation4], 0
    %s37 = scalar_lea.sflag [#allocation4], 1
    %38 = vsyncpa %s37, 0
    loop: start=0, step=1, limit=4
    $region2: #{tpu_custom_call.1} parent=1 // loop_pre_header
      _
    $region3: #{tpu_custom_call.1} parent=1 // loop_header
      %s40 = sphi 0, %s44
      %p41 = scmp.ge.s32.totalorder %s40, 4
      %s50 = sphi 0, %s52
      %s53 = sphi 0, %s50
      %s54 = sphi 0, %s53
      %s70 = sphi 0, %s54
      %s74 = sphi 0, %s74
      %s76 = sphi 0, %s74
      %s77 = sphi 0, %s76
      %s91 = sphi 0, %s77
      %s95 = sphi 0, %s95
      %s97 = sphi 0, %s95
      %s98 = sphi 0, %s97
      %s112 = sphi 0, %s98
      %s116 = sphi 0, %s116
      %s118 = sphi 0, %s116
      %s119 = sphi 0, %s118
      %s133 = sphi 0, %s119
      %s137 = sphi 0, %s137
      %s139 = sphi 0, %s137
      %s140 = sphi 0, %s139
      %s154 = sphi 0, %s140
      %s158 = sphi 0, %s158
      %s160 = sphi 0, %s158
      %s161 = sphi 0, %s160
      %s175 = sphi 0, %s161
      %s179 = sphi 0, %s179
      %s181 = sphi 0, %s179
      %s182 = sphi 0, %s181
      %s196 = sphi 0, %s182
      %s200 = sphi 0, %s200
      %s202 = sphi 0, %s200
      %s203 = sphi 0, %s202
      %s217 = sphi 0, %s203
      %s221 = sphi 0, %s221
      %s223 = sphi 0, %s221
      %s224 = sphi 0, %s223
      %s238 = sphi 0, %s224
      %s242 = sphi 0, %s242
      %s244 = sphi 0, %s242
      %s245 = sphi 0, %s244
      %s259 = sphi 0, %s245
      %s263 = sphi 0, %s263
      %s265 = sphi 0, %s263
      %s266 = sphi 0, %s265
      %s280 = sphi 0, %s266
      %s284 = sphi 0, %s284
      %s286 = sphi 0, %s284
      %s287 = sphi 0, %s286
      %s301 = sphi 0, %s287
      %s305 = sphi 0, %s305
      %s307 = sphi 0, %s305
      %s308 = sphi 0, %s307
      %s322 = sphi 0, %s308
      %s326 = sphi 0, %s326
      %s328 = sphi 0, %s326
      %s329 = sphi 0, %s328
      %s343 = sphi 0, %s329
      %s347 = sphi 0, %s347
      %s349 = sphi 0, %s347
      %s350 = sphi 0, %s349
      %s364 = sphi 0, %s350
      %s368 = sphi 0, %s368
      %s370 = sphi 0, %s368
      %s371 = sphi 0, %s370
      %s385 = sphi 0, %s371
      %s389 = sphi 0, %s389
      %s391 = sphi 0, %s389
      %s392 = sphi 0, %s391
      %s406 = sphi 0, %s392
      %s410 = sphi 0, %s410
      %s412 = sphi 0, %s410
      %s413 = sphi 0, %s412
      %s427 = sphi 0, %s413
      %s431 = sphi 0, %s431
      %s433 = sphi 0, %s431
      %s434 = sphi 0, %s433
      %s448 = sphi 0, %s434
      %s454 = sphi 0, %s456
      %s457 = sphi 0, %s454
      %s458 = sphi 0, %s457
      %s474 = sphi 0, %s458
    $region4: #{tpu_custom_call.1} parent=1 // loop_header_branch
      %43 = sbr.rel (%p41) target = $region8
    $region5: #{tpu_custom_call.1} parent=1 // loop_body
      %s45 = ssub.s32 %s40, 1
      %s46 = ssub.s32 %s40, 2
      %s47 = sadd.s32 %s40, 1
      %s48 = ssub.s32 %s40, %s47
      %p49 = scmp.eq.s32.totalorder %s48, 0
      %s51 = sadd.s32 %s50, 1
      %s52 = scalar_select %p49, %s50, %s51
      %p55 = pneg %p49
      %p56 = scmp.eq.s32.totalorder %s40, 1
      %p57 = por %p55, %p56
      %p58 = scmp.ne.s32.totalorder %s50, %s53
      %p59 = scmp.eq.s32.totalorder %s40, 0
      %p60 = por %p58, %p59
      %p61 = scmp.ne.s32.totalorder %s50, %s53
      %p62 = scmp.eq.s32.totalorder %s45, 1
      %p63 = por %p61, %p62
      %p64 = scmp.ne.s32.totalorder %s53, %s54
      %p65 = scmp.eq.s32.totalorder %s45, 0
      %p66 = por %p64, %p65
      %p67 = scmp.ne.s32.totalorder %s53, %s54
      %p68 = scmp.eq.s32.totalorder %s46, 1
      %p69 = por %p67, %p68
      %p71 = scmp.ne.s32.totalorder %s54, %s70
      %p72 = scmp.eq.s32.totalorder %s46, 0
      %p73 = por %p71, %p72
      %s75 = sadd.s32 %s74, 1
      %p78 = scmp.eq.s32.totalorder %s40, 1
      %p79 = scmp.ne.s32.totalorder %s74, %s76
      %p80 = scmp.eq.s32.totalorder %s40, 0
      %p81 = por %p79, %p80
      %p82 = scmp.ne.s32.totalorder %s74, %s76
      %p83 = scmp.eq.s32.totalorder %s45, 1
      %p84 = por %p82, %p83
      %p85 = scmp.ne.s32.totalorder %s76, %s77
      %p86 = scmp.eq.s32.totalorder %s45, 0
      %p87 = por %p85, %p86
      %p88 = scmp.ne.s32.totalorder %s76, %s77
      %p89 = scmp.eq.s32.totalorder %s46, 1
      %p90 = por %p88, %p89
      %p92 = scmp.ne.s32.totalorder %s77, %s91
      %p93 = scmp.eq.s32.totalorder %s46, 0
      %p94 = por %p92, %p93
      %s96 = sadd.s32 %s95, 1
      %p99 = scmp.eq.s32.totalorder %s40, 1
      %p100 = scmp.ne.s32.totalorder %s95, %s97
      %p101 = scmp.eq.s32.totalorder %s40, 0
      %p102 = por %p100, %p101
      %p103 = scmp.ne.s32.totalorder %s95, %s97
      %p104 = scmp.eq.s32.totalorder %s45, 1
      %p105 = por %p103, %p104
      %p106 = scmp.ne.s32.totalorder %s97, %s98
      %p107 = scmp.eq.s32.totalorder %s45, 0
      %p108 = por %p106, %p107
      %p109 = scmp.ne.s32.totalorder %s97, %s98
      %p110 = scmp.eq.s32.totalorder %s46, 1
      %p111 = por %p109, %p110
      %p113 = scmp.ne.s32.totalorder %s98, %s112
      %p114 = scmp.eq.s32.totalorder %s46, 0
      %p115 = por %p113, %p114
      %s117 = sadd.s32 %s116, 1
      %p120 = scmp.eq.s32.totalorder %s40, 1
      %p121 = scmp.ne.s32.totalorder %s116, %s118
      %p122 = scmp.eq.s32.totalorder %s40, 0
      %p123 = por %p121, %p122
      %p124 = scmp.ne.s32.totalorder %s116, %s118
      %p125 = scmp.eq.s32.totalorder %s45, 1
      %p126 = por %p124, %p125
      %p127 = scmp.ne.s32.totalorder %s118, %s119
      %p128 = scmp.eq.s32.totalorder %s45, 0
      %p129 = por %p127, %p128
      %p130 = scmp.ne.s32.totalorder %s118, %s119
      %p131 = scmp.eq.s32.totalorder %s46, 1
      %p132 = por %p130, %p131
      %p134 = scmp.ne.s32.totalorder %s119, %s133
      %p135 = scmp.eq.s32.totalorder %s46, 0
      %p136 = por %p134, %p135
      %s138 = sadd.s32 %s137, 1
      %p141 = scmp.eq.s32.totalorder %s40, 1
      %p142 = scmp.ne.s32.totalorder %s137, %s139
      %p143 = scmp.eq.s32.totalorder %s40, 0
      %p144 = por %p142, %p143
      %p145 = scmp.ne.s32.totalorder %s137, %s139
      %p146 = scmp.eq.s32.totalorder %s45, 1
      %p147 = por %p145, %p146
      %p148 = scmp.ne.s32.totalorder %s139, %s140
      %p149 = scmp.eq.s32.totalorder %s45, 0
      %p150 = por %p148, %p149
      %p151 = scmp.ne.s32.totalorder %s139, %s140
      %p152 = scmp.eq.s32.totalorder %s46, 1
      %p153 = por %p151, %p152
      %p155 = scmp.ne.s32.totalorder %s140, %s154
      %p156 = scmp.eq.s32.totalorder %s46, 0
      %p157 = por %p155, %p156
      %s159 = sadd.s32 %s158, 1
      %p162 = scmp.eq.s32.totalorder %s40, 1
      %p163 = scmp.ne.s32.totalorder %s158, %s160
      %p164 = scmp.eq.s32.totalorder %s40, 0
      %p165 = por %p163, %p164
      %p166 = scmp.ne.s32.totalorder %s158, %s160
      %p167 = scmp.eq.s32.totalorder %s45, 1
      %p168 = por %p166, %p167
      %p169 = scmp.ne.s32.totalorder %s160, %s161
      %p170 = scmp.eq.s32.totalorder %s45, 0
      %p171 = por %p169, %p170
      %p172 = scmp.ne.s32.totalorder %s160, %s161
      %p173 = scmp.eq.s32.totalorder %s46, 1
      %p174 = por %p172, %p173
      %p176 = scmp.ne.s32.totalorder %s161, %s175
      %p177 = scmp.eq.s32.totalorder %s46, 0
      %p178 = por %p176, %p177
      %s180 = sadd.s32 %s179, 1
      %p183 = scmp.eq.s32.totalorder %s40, 1
      %p184 = scmp.ne.s32.totalorder %s179, %s181
      %p185 = scmp.eq.s32.totalorder %s40, 0
      %p186 = por %p184, %p185
      %p187 = scmp.ne.s32.totalorder %s179, %s181
      %p188 = scmp.eq.s32.totalorder %s45, 1
      %p189 = por %p187, %p188
      %p190 = scmp.ne.s32.totalorder %s181, %s182
      %p191 = scmp.eq.s32.totalorder %s45, 0
      %p192 = por %p190, %p191
      %p193 = scmp.ne.s32.totalorder %s181, %s182
      %p194 = scmp.eq.s32.totalorder %s46, 1
      %p195 = por %p193, %p194
      %p197 = scmp.ne.s32.totalorder %s182, %s196
      %p198 = scmp.eq.s32.totalorder %s46, 0
      %p199 = por %p197, %p198
      %s201 = sadd.s32 %s200, 1
      %p204 = scmp.eq.s32.totalorder %s40, 1
      %p205 = scmp.ne.s32.totalorder %s200, %s202
      %p206 = scmp.eq.s32.totalorder %s40, 0
      %p207 = por %p205, %p206
      %p208 = scmp.ne.s32.totalorder %s200, %s202
      %p209 = scmp.eq.s32.totalorder %s45, 1
      %p210 = por %p208, %p209
      %p211 = scmp.ne.s32.totalorder %s202, %s203
      %p212 = scmp.eq.s32.totalorder %s45, 0
      %p213 = por %p211, %p212
      %p214 = scmp.ne.s32.totalorder %s202, %s203
      %p215 = scmp.eq.s32.totalorder %s46, 1
      %p216 = por %p214, %p215
      %p218 = scmp.ne.s32.totalorder %s203, %s217
      %p219 = scmp.eq.s32.totalorder %s46, 0
      %p220 = por %p218, %p219
      %s222 = sadd.s32 %s221, 1
      %p225 = scmp.eq.s32.totalorder %s40, 1
      %p226 = scmp.ne.s32.totalorder %s221, %s223
      %p227 = scmp.eq.s32.totalorder %s40, 0
      %p228 = por %p226, %p227
      %p229 = scmp.ne.s32.totalorder %s221, %s223
      %p230 = scmp.eq.s32.totalorder %s45, 1
      %p231 = por %p229, %p230
      %p232 = scmp.ne.s32.totalorder %s223, %s224
      %p233 = scmp.eq.s32.totalorder %s45, 0
      %p234 = por %p232, %p233
      %p235 = scmp.ne.s32.totalorder %s223, %s224
      %p236 = scmp.eq.s32.totalorder %s46, 1
      %p237 = por %p235, %p236
      %p239 = scmp.ne.s32.totalorder %s224, %s238
      %p240 = scmp.eq.s32.totalorder %s46, 0
      %p241 = por %p239, %p240
      %s243 = sadd.s32 %s242, 1
      %p246 = scmp.eq.s32.totalorder %s40, 1
      %p247 = scmp.ne.s32.totalorder %s242, %s244
      %p248 = scmp.eq.s32.totalorder %s40, 0
      %p249 = por %p247, %p248
      %p250 = scmp.ne.s32.totalorder %s242, %s244
      %p251 = scmp.eq.s32.totalorder %s45, 1
      %p252 = por %p250, %p251
      %p253 = scmp.ne.s32.totalorder %s244, %s245
      %p254 = scmp.eq.s32.totalorder %s45, 0
      %p255 = por %p253, %p254
      %p256 = scmp.ne.s32.totalorder %s244, %s245
      %p257 = scmp.eq.s32.totalorder %s46, 1
      %p258 = por %p256, %p257
      %p260 = scmp.ne.s32.totalorder %s245, %s259
      %p261 = scmp.eq.s32.totalorder %s46, 0
      %p262 = por %p260, %p261
      %s264 = sadd.s32 %s263, 1
      %p267 = scmp.eq.s32.totalorder %s40, 1
      %p268 = scmp.ne.s32.totalorder %s263, %s265
      %p269 = scmp.eq.s32.totalorder %s40, 0
      %p270 = por %p268, %p269
      %p271 = scmp.ne.s32.totalorder %s263, %s265
      %p272 = scmp.eq.s32.totalorder %s45, 1
      %p273 = por %p271, %p272
      %p274 = scmp.ne.s32.totalorder %s265, %s266
      %p275 = scmp.eq.s32.totalorder %s45, 0
      %p276 = por %p274, %p275
      %p277 = scmp.ne.s32.totalorder %s265, %s266
      %p278 = scmp.eq.s32.totalorder %s46, 1
      %p279 = por %p277, %p278
      %p281 = scmp.ne.s32.totalorder %s266, %s280
      %p282 = scmp.eq.s32.totalorder %s46, 0
      %p283 = por %p281, %p282
      %s285 = sadd.s32 %s284, 1
      %p288 = scmp.eq.s32.totalorder %s40, 1
      %p289 = scmp.ne.s32.totalorder %s284, %s286
      %p290 = scmp.eq.s32.totalorder %s40, 0
      %p291 = por %p289, %p290
      %p292 = scmp.ne.s32.totalorder %s284, %s286
      %p293 = scmp.eq.s32.totalorder %s45, 1
      %p294 = por %p292, %p293
      %p295 = scmp.ne.s32.totalorder %s286, %s287
      %p296 = scmp.eq.s32.totalorder %s45, 0
      %p297 = por %p295, %p296
      %p298 = scmp.ne.s32.totalorder %s286, %s287
      %p299 = scmp.eq.s32.totalorder %s46, 1
      %p300 = por %p298, %p299
      %p302 = scmp.ne.s32.totalorder %s287, %s301
      %p303 = scmp.eq.s32.totalorder %s46, 0
      %p304 = por %p302, %p303
      %s306 = sadd.s32 %s305, 1
      %p309 = scmp.eq.s32.totalorder %s40, 1
      %p310 = scmp.ne.s32.totalorder %s305, %s307
      %p311 = scmp.eq.s32.totalorder %s40, 0
      %p312 = por %p310, %p311
      %p313 = scmp.ne.s32.totalorder %s305, %s307
      %p314 = scmp.eq.s32.totalorder %s45, 1
      %p315 = por %p313, %p314
      %p316 = scmp.ne.s32.totalorder %s307, %s308
      %p317 = scmp.eq.s32.totalorder %s45, 0
      %p318 = por %p316, %p317
      %p319 = scmp.ne.s32.totalorder %s307, %s308
      %p320 = scmp.eq.s32.totalorder %s46, 1
      %p321 = por %p319, %p320
      %p323 = scmp.ne.s32.totalorder %s308, %s322
      %p324 = scmp.eq.s32.totalorder %s46, 0
      %p325 = por %p323, %p324
      %s327 = sadd.s32 %s326, 1
      %p330 = scmp.eq.s32.totalorder %s40, 1
      %p331 = scmp.ne.s32.totalorder %s326, %s328
      %p332 = scmp.eq.s32.totalorder %s40, 0
      %p333 = por %p331, %p332
      %p334 = scmp.ne.s32.totalorder %s326, %s328
      %p335 = scmp.eq.s32.totalorder %s45, 1
      %p336 = por %p334, %p335
      %p337 = scmp.ne.s32.totalorder %s328, %s329
      %p338 = scmp.eq.s32.totalorder %s45, 0
      %p339 = por %p337, %p338
      %p340 = scmp.ne.s32.totalorder %s328, %s329
      %p341 = scmp.eq.s32.totalorder %s46, 1
      %p342 = por %p340, %p341
      %p344 = scmp.ne.s32.totalorder %s329, %s343
      %p345 = scmp.eq.s32.totalorder %s46, 0
      %p346 = por %p344, %p345
      %s348 = sadd.s32 %s347, 1
      %p351 = scmp.eq.s32.totalorder %s40, 1
      %p352 = scmp.ne.s32.totalorder %s347, %s349
      %p353 = scmp.eq.s32.totalorder %s40, 0
      %p354 = por %p352, %p353
      %p355 = scmp.ne.s32.totalorder %s347, %s349
      %p356 = scmp.eq.s32.totalorder %s45, 1
      %p357 = por %p355, %p356
      %p358 = scmp.ne.s32.totalorder %s349, %s350
      %p359 = scmp.eq.s32.totalorder %s45, 0
      %p360 = por %p358, %p359
      %p361 = scmp.ne.s32.totalorder %s349, %s350
      %p362 = scmp.eq.s32.totalorder %s46, 1
      %p363 = por %p361, %p362
      %p365 = scmp.ne.s32.totalorder %s350, %s364
      %p366 = scmp.eq.s32.totalorder %s46, 0
      %p367 = por %p365, %p366
      %s369 = sadd.s32 %s368, 1
      %p372 = scmp.eq.s32.totalorder %s40, 1
      %p373 = scmp.ne.s32.totalorder %s368, %s370
      %p374 = scmp.eq.s32.totalorder %s40, 0
      %p375 = por %p373, %p374
      %p376 = scmp.ne.s32.totalorder %s368, %s370
      %p377 = scmp.eq.s32.totalorder %s45, 1
      %p378 = por %p376, %p377
      %p379 = scmp.ne.s32.totalorder %s370, %s371
      %p380 = scmp.eq.s32.totalorder %s45, 0
      %p381 = por %p379, %p380
      %p382 = scmp.ne.s32.totalorder %s370, %s371
      %p383 = scmp.eq.s32.totalorder %s46, 1
      %p384 = por %p382, %p383
      %p386 = scmp.ne.s32.totalorder %s371, %s385
      %p387 = scmp.eq.s32.totalorder %s46, 0
      %p388 = por %p386, %p387
      %s390 = sadd.s32 %s389, 1
      %p393 = scmp.eq.s32.totalorder %s40, 1
      %p394 = scmp.ne.s32.totalorder %s389, %s391
      %p395 = scmp.eq.s32.totalorder %s40, 0
      %p396 = por %p394, %p395
      %p397 = scmp.ne.s32.totalorder %s389, %s391
      %p398 = scmp.eq.s32.totalorder %s45, 1
      %p399 = por %p397, %p398
      %p400 = scmp.ne.s32.totalorder %s391, %s392
      %p401 = scmp.eq.s32.totalorder %s45, 0
      %p402 = por %p400, %p401
      %p403 = scmp.ne.s32.totalorder %s391, %s392
      %p404 = scmp.eq.s32.totalorder %s46, 1
      %p405 = por %p403, %p404
      %p407 = scmp.ne.s32.totalorder %s392, %s406
      %p408 = scmp.eq.s32.totalorder %s46, 0
      %p409 = por %p407, %p408
      %s411 = sadd.s32 %s410, 1
      %p414 = scmp.eq.s32.totalorder %s40, 1
      %p415 = scmp.ne.s32.totalorder %s410, %s412
      %p416 = scmp.eq.s32.totalorder %s40, 0
      %p417 = por %p415, %p416
      %p418 = scmp.ne.s32.totalorder %s410, %s412
      %p419 = scmp.eq.s32.totalorder %s45, 1
      %p420 = por %p418, %p419
      %p421 = scmp.ne.s32.totalorder %s412, %s413
      %p422 = scmp.eq.s32.totalorder %s45, 0
      %p423 = por %p421, %p422
      %p424 = scmp.ne.s32.totalorder %s412, %s413
      %p425 = scmp.eq.s32.totalorder %s46, 1
      %p426 = por %p424, %p425
      %p428 = scmp.ne.s32.totalorder %s413, %s427
      %p429 = scmp.eq.s32.totalorder %s46, 0
      %p430 = por %p428, %p429
      %s432 = sadd.s32 %s431, 1
      %p435 = scmp.eq.s32.totalorder %s40, 1
      %p436 = scmp.ne.s32.totalorder %s431, %s433
      %p437 = scmp.eq.s32.totalorder %s40, 0
      %p438 = por %p436, %p437
      %p439 = scmp.ne.s32.totalorder %s431, %s433
      %p440 = scmp.eq.s32.totalorder %s45, 1
      %p441 = por %p439, %p440
      %p442 = scmp.ne.s32.totalorder %s433, %s434
      %p443 = scmp.eq.s32.totalorder %s45, 0
      %p444 = por %p442, %p443
      %p445 = scmp.ne.s32.totalorder %s433, %s434
      %p446 = scmp.eq.s32.totalorder %s46, 1
      %p447 = por %p445, %p446
      %p449 = scmp.ne.s32.totalorder %s434, %s448
      %p450 = scmp.eq.s32.totalorder %s46, 0
      %p451 = por %p449, %p450
      %s452 = ssub.s32 %s40, %s47
      %p453 = scmp.eq.s32.totalorder %s452, 0
      %s455 = sadd.s32 %s454, 1
      %s456 = scalar_select %p453, %s454, %s455
      %p459 = pneg %p453
      %p460 = scmp.eq.s32.totalorder %s40, 1
      %p461 = por %p459, %p460
      %p462 = scmp.ne.s32.totalorder %s454, %s457
      %p463 = scmp.eq.s32.totalorder %s40, 0
      %p464 = por %p462, %p463
      %p465 = scmp.ne.s32.totalorder %s454, %s457
      %p466 = scmp.eq.s32.totalorder %s45, 1
      %p467 = por %p465, %p466
      %p468 = scmp.ne.s32.totalorder %s457, %s458
      %p469 = scmp.eq.s32.totalorder %s45, 0
      %p470 = por %p468, %p469
      %p471 = scmp.ne.s32.totalorder %s457, %s458
      %p472 = scmp.eq.s32.totalorder %s46, 1
      %p473 = por %p471, %p472
      %p475 = scmp.ne.s32.totalorder %s458, %s474
      %p476 = scmp.eq.s32.totalorder %s46, 0
      %p477 = por %p475, %p476
      %p478 = scmp.le.s32.totalorder 1, %s40
      %p479 = scmp.lt.s32.totalorder %s40, 3
      %p480 = pnand %p478, %p479
      %p481 = pneg %p480
      // Predicated region
      $region9: #{tpu_custom_call.1} parent=5 // pred_check
        _
      $region10: #{tpu_custom_call.1} parent=5 // pred_check_branch
        %483 = sbr.rel (%p480) target = $region12
      $region11: #{tpu_custom_call.1} parent=5 // pred_region
        %s484 = ssub.s32 %s40, 1
        // Predicated region
        $region13: #{tpu_custom_call.1} parent=11 // pred_check
          %p485 = pneg %p87
        $region14: #{tpu_custom_call.1} parent=11 // pred_check_branch
          %487 = sbr.rel (%p485) target = $region16
        $region15: #{tpu_custom_call.1} parent=11 // pred_region
          %s489 = ssub.s32 2048, 2048
          %490 = vsyncadd [#allocation6], %s489
          %s491 = sshll.u32 [#allocation5], 4
          %s492 = int_to_ptr.vmem [resolvable:$true] %s491
          %497 = dma.hbm_to_vmem [thread:$0]  %s1, 2048, %s492, [#allocation6], 128, 128, 8
        $region16: #{tpu_custom_call.1} parent=11 // pred_fallthru
          _
        // Predicated region
        $region17: #{tpu_custom_call.1} parent=11 // pred_check
          %p498 = pneg %p108
        $region18: #{tpu_custom_call.1} parent=11 // pred_check_branch
          %500 = sbr.rel (%p498) target = $region20
        $region19: #{tpu_custom_call.1} parent=11 // pred_region
          %s502 = ssub.s32 16, 16
          %503 = vsyncadd [#allocation6], %s502
          %s505 = sshll.u32 [#allocation7], 4
          %s506 = int_to_ptr.vmem [resolvable:$true] %s505
          %508 = dma.hbm_to_vmem [thread:$0]  %s2, 16, %s506, [#allocation6]
        $region20: #{tpu_custom_call.1} parent=11 // pred_fallthru
          _
        // Predicated region
        $region21: #{tpu_custom_call.1} parent=11 // pred_check
          %p509 = pneg %p129
        $region22: #{tpu_custom_call.1} parent=11 // pred_check_branch
          %511 = sbr.rel (%p509) target = $region24
        $region23: #{tpu_custom_call.1} parent=11 // pred_region
          %s513 = ssub.s32 16, 16
          %514 = vsyncadd [#allocation9], %s513
          %s516 = sshll.u32 [#allocation8], 4
          %s517 = int_to_ptr.vmem [resolvable:$true] %s516
          %519 = dma.hbm_to_vmem [thread:$0]  %s3, 16, %s517, [#allocation9]
        $region24: #{tpu_custom_call.1} parent=11 // pred_fallthru
          _
        // Predicated region
        $region25: #{tpu_custom_call.1} parent=11 // pred_check
          %p520 = pneg %p150
        $region26: #{tpu_custom_call.1} parent=11 // pred_check_branch
          %522 = sbr.rel (%p520) target = $region28
        $region27: #{tpu_custom_call.1} parent=11 // pred_region
          %s524 = ssub.s32 16, 16
          %525 = vsyncadd [#allocation9], %s524
          %s527 = sshll.u32 [#allocation10], 4
          %s528 = int_to_ptr.vmem [resolvable:$true] %s527
          %530 = dma.hbm_to_vmem [thread:$0]  %s4, 16, %s528, [#allocation9]
        $region28: #{tpu_custom_call.1} parent=11 // pred_fallthru
          _
        // Predicated region
        $region29: #{tpu_custom_call.1} parent=11 // pred_check
          %p531 = pneg %p171
        $region30: #{tpu_custom_call.1} parent=11 // pred_check_branch
          %533 = sbr.rel (%p531) target = $region32
        $region31: #{tpu_custom_call.1} parent=11 // pred_region
          %s535 = ssub.s32 4096, 4096
          %536 = vsyncadd [#allocation12], %s535
          %s537 = sshll.u32 [#allocation11], 4
          %s538 = int_to_ptr.vmem [resolvable:$true] %s537
          %543 = dma.hbm_to_vmem [thread:$0]  %s5, 4096, %s538, [#allocation12], 256, 256, 16
        $region32: #{tpu_custom_call.1} parent=11 // pred_fallthru
          _
        // Predicated region
        $region33: #{tpu_custom_call.1} parent=11 // pred_check
          %p544 = pneg %p192
        $region34: #{tpu_custom_call.1} parent=11 // pred_check_branch
          %546 = sbr.rel (%p544) target = $region36
        $region35: #{tpu_custom_call.1} parent=11 // pred_region
          %s548 = ssub.s32 32, 32
          %549 = vsyncadd [#allocation12], %s548
          %s551 = sshll.u32 [#allocation13], 4
          %s552 = int_to_ptr.vmem [resolvable:$true] %s551
          %554 = dma.hbm_to_vmem [thread:$0]  %s6, 32, %s552, [#allocation12]
        $region36: #{tpu_custom_call.1} parent=11 // pred_fallthru
          _
        // Predicated region
        $region37: #{tpu_custom_call.1} parent=11 // pred_check
          %p555 = pneg %p213
        $region38: #{tpu_custom_call.1} parent=11 // pred_check_branch
          %557 = sbr.rel (%p555) target = $region40
        $region39: #{tpu_custom_call.1} parent=11 // pred_region
          %s559 = ssub.s32 32, 32
          %560 = vsyncadd [#allocation15], %s559
          %s562 = sshll.u32 [#allocation14], 4
          %s563 = int_to_ptr.vmem [resolvable:$true] %s562
          %565 = dma.hbm_to_vmem [thread:$0]  %s7, 32, %s563, [#allocation15]
        $region40: #{tpu_custom_call.1} parent=11 // pred_fallthru
          _
        // Predicated region
        $region41: #{tpu_custom_call.1} parent=11 // pred_check
          %p566 = pneg %p234
        $region42: #{tpu_custom_call.1} parent=11 // pred_check_branch
          %568 = sbr.rel (%p566) target = $region44
        $region43: #{tpu_custom_call.1} parent=11 // pred_region
          %s570 = ssub.s32 32, 32
          %571 = vsyncadd [#allocation15], %s570
          %s573 = sshll.u32 [#allocation16], 4
          %s574 = int_to_ptr.vmem [resolvable:$true] %s573
          %576 = dma.hbm_to_vmem [thread:$0]  %s8, 32, %s574, [#allocation15]
        $region44: #{tpu_custom_call.1} parent=11 // pred_fallthru
          _
        // Predicated region
        $region45: #{tpu_custom_call.1} parent=11 // pred_check
          %p577 = pneg %p255
        $region46: #{tpu_custom_call.1} parent=11 // pred_check_branch
          %579 = sbr.rel (%p577) target = $region48
        $region47: #{tpu_custom_call.1} parent=11 // pred_region
          %s581 = ssub.s32 16384, 16384
          %582 = vsyncadd [#allocation18], %s581
          %s583 = sshll.u32 [#allocation17], 4
          %s584 = int_to_ptr.vmem [resolvable:$true] %s583
          %589 = dma.hbm_to_vmem [thread:$0]  %s9, 16384, %s584, [#allocation18], 512, 512, 32
        $region48: #{tpu_custom_call.1} parent=11 // pred_fallthru
          _
        // Predicated region
        $region49: #{tpu_custom_call.1} parent=11 // pred_check
          %p590 = pneg %p276
        $region50: #{tpu_custom_call.1} parent=11 // pred_check_branch
          %592 = sbr.rel (%p590) target = $region52
        $region51: #{tpu_custom_call.1} parent=11 // pred_region
          %s594 = ssub.s32 64, 64
          %595 = vsyncadd [#allocation18], %s594
          %s597 = sshll.u32 [#allocation19], 4
          %s598 = int_to_ptr.vmem [resolvable:$true] %s597
          %600 = dma.hbm_to_vmem [thread:$0]  %s10, 64, %s598, [#allocation18]
        $region52: #{tpu_custom_call.1} parent=11 // pred_fallthru
          _
        // Predicated region
        $region53: #{tpu_custom_call.1} parent=11 // pred_check
          %p601 = pneg %p297
        $region54: #{tpu_custom_call.1} parent=11 // pred_check_branch
          %603 = sbr.rel (%p601) target = $region56
        $region55: #{tpu_custom_call.1} parent=11 // pred_region
          %s605 = ssub.s32 64, 64
          %606 = vsyncadd [#allocation21], %s605
          %s608 = sshll.u32 [#allocation20], 4
          %s609 = int_to_ptr.vmem [resolvable:$true] %s608
          %611 = dma.hbm_to_vmem [thread:$0]  %s11, 64, %s609, [#allocation21]
        $region56: #{tpu_custom_call.1} parent=11 // pred_fallthru
          _
        // Predicated region
        $region57: #{tpu_custom_call.1} parent=11 // pred_check
          %p612 = pneg %p318
        $region58: #{tpu_custom_call.1} parent=11 // pred_check_branch
          %614 = sbr.rel (%p612) target = $region60
        $region59: #{tpu_custom_call.1} parent=11 // pred_region
          %s616 = ssub.s32 64, 64
          %617 = vsyncadd [#allocation21], %s616
          %s619 = sshll.u32 [#allocation22], 4
          %s620 = int_to_ptr.vmem [resolvable:$true] %s619
          %622 = dma.hbm_to_vmem [thread:$0]  %s12, 64, %s620, [#allocation21]
        $region60: #{tpu_custom_call.1} parent=11 // pred_fallthru
          _
        // Predicated region
        $region61: #{tpu_custom_call.1} parent=11 // pred_check
          %p623 = pneg %p339
        $region62: #{tpu_custom_call.1} parent=11 // pred_check_branch
          %625 = sbr.rel (%p623) target = $region64
        $region63: #{tpu_custom_call.1} parent=11 // pred_region
          %s627 = ssub.s32 65536, 65536
          %628 = vsyncadd [#allocation24], %s627
          %s629 = sshll.u32 [#allocation23], 4
          %s630 = int_to_ptr.vmem [resolvable:$true] %s629
          %635 = dma.hbm_to_vmem [thread:$0]  %s13, 65536, %s630, [#allocation24], 1024, 1024, 64
        $region64: #{tpu_custom_call.1} parent=11 // pred_fallthru
          _
        // Predicated region
        $region65: #{tpu_custom_call.1} parent=11 // pred_check
          %p636 = pneg %p360
        $region66: #{tpu_custom_call.1} parent=11 // pred_check_branch
          %638 = sbr.rel (%p636) target = $region68
        $region67: #{tpu_custom_call.1} parent=11 // pred_region
          %s640 = ssub.s32 128, 128
          %641 = vsyncadd [#allocation24], %s640
          %s643 = sshll.u32 [#allocation25], 4
          %s644 = int_to_ptr.vmem [resolvable:$true] %s643
          %646 = dma.hbm_to_vmem [thread:$0]  %s14, 128, %s644, [#allocation24]
        $region68: #{tpu_custom_call.1} parent=11 // pred_fallthru
          _
        // Predicated region
        $region69: #{tpu_custom_call.1} parent=11 // pred_check
          %p647 = pneg %p381
        $region70: #{tpu_custom_call.1} parent=11 // pred_check_branch
          %649 = sbr.rel (%p647) target = $region72
        $region71: #{tpu_custom_call.1} parent=11 // pred_region
          %s651 = ssub.s32 128, 128
          %652 = vsyncadd [#allocation27], %s651
          %s654 = sshll.u32 [#allocation26], 4
          %s655 = int_to_ptr.vmem [resolvable:$true] %s654
          %657 = dma.hbm_to_vmem [thread:$0]  %s15, 128, %s655, [#allocation27]
        $region72: #{tpu_custom_call.1} parent=11 // pred_fallthru
          _
        // Predicated region
        $region73: #{tpu_custom_call.1} parent=11 // pred_check
          %p658 = pneg %p402
        $region74: #{tpu_custom_call.1} parent=11 // pred_check_branch
          %660 = sbr.rel (%p658) target = $region76
        $region75: #{tpu_custom_call.1} parent=11 // pred_region
          %s662 = ssub.s32 128, 128
          %663 = vsyncadd [#allocation27], %s662
          %s665 = sshll.u32 [#allocation28], 4
          %s666 = int_to_ptr.vmem [resolvable:$true] %s665
          %668 = dma.hbm_to_vmem [thread:$0]  %s16, 128, %s666, [#allocation27]
        $region76: #{tpu_custom_call.1} parent=11 // pred_fallthru
          _
        // Predicated region
        $region77: #{tpu_custom_call.1} parent=11 // pred_check
          %p669 = pneg %p423
        $region78: #{tpu_custom_call.1} parent=11 // pred_check_branch
          %671 = sbr.rel (%p669) target = $region80
        $region79: #{tpu_custom_call.1} parent=11 // pred_region
          %s673 = ssub.s32 16384, 16384
          %674 = vsyncadd [#allocation30], %s673
          %s675 = sshll.u32 [#allocation29], 4
          %s676 = int_to_ptr.vmem [resolvable:$true] %s675
          %681 = dma.hbm_to_vmem [thread:$0]  %s17, 16384, %s676, [#allocation30], 128, 128, 8
        $region80: #{tpu_custom_call.1} parent=11 // pred_fallthru
          _
        // Predicated region
        $region81: #{tpu_custom_call.1} parent=11 // pred_check
          %p682 = pneg %p444
        $region82: #{tpu_custom_call.1} parent=11 // pred_check_branch
          %684 = sbr.rel (%p682) target = $region84
        $region83: #{tpu_custom_call.1} parent=11 // pred_region
          %s686 = ssub.s32 16, 16
          %687 = vsyncadd [#allocation30], %s686
          %s689 = sshll.u32 [#allocation31], 4
          %s690 = int_to_ptr.vmem [resolvable:$true] %s689
          %692 = dma.hbm_to_vmem [thread:$0]  %s18, 16, %s690, [#allocation30]
        $region84: #{tpu_custom_call.1} parent=11 // pred_fallthru
          _
      $region12: #{tpu_custom_call.1} parent=5 // pred_fallthru
        _
      %p693 = scmp.lt.s32.totalorder %s40, 2
      // Predicated region
      $region85: #{tpu_custom_call.1} parent=5 // pred_check
        %p694 = pneg %p693
      $region86: #{tpu_custom_call.1} parent=5 // pred_check_branch
        %696 = sbr.rel (%p694) target = $region88
      $region87: #{tpu_custom_call.1} parent=5 // pred_region
        // Predicated region
        $region89: #{tpu_custom_call.1} parent=87 // pred_check
          %p697 = pneg %p60
        $region90: #{tpu_custom_call.1} parent=87 // pred_check_branch
          %699 = sbr.rel (%p697) target = $region92
        $region91: #{tpu_custom_call.1} parent=87 // pred_region
          %s700 = sand.u32 %s50, 1
          %s701 = scalar_lea.sflag [#allocation3], %s700
          %s702 = sand.u32 %s50, 1
          %s703 = smul.addr %s702, 16
          %s704 = scalar_lea.vmem [#allocation2], %s703
          %s705 = smul.u32 2, %s40
          %s707 = ssub.s32 256, 256
          %708 = vsyncadd %s701, %s707
          %s709 = smul.addr %s705, 128
          %s710 = scalar_lea.hbm %s0, %s709
          %s711 = sshll.u32 %s704, 4
          %s712 = int_to_ptr.vmem [resolvable:$true] %s711
          %717 = dma.hbm_to_vmem [thread:$0]  %s710, 256, %s712, %s701, 128, 128, 8
        $region92: #{tpu_custom_call.1} parent=87 // pred_fallthru
          _
      $region88: #{tpu_custom_call.1} parent=5 // pred_fallthru
        _
      %p718 = scmp.le.s32.totalorder 1, %s40
      %p719 = scmp.lt.s32.totalorder %s40, 3
      %p720 = pnand %p718, %p719
      %p721 = pneg %p720
      // Predicated region
      $region93: #{tpu_custom_call.1} parent=5 // pred_check
        _
      $region94: #{tpu_custom_call.1} parent=5 // pred_check_branch
        %723 = sbr.rel (%p720) target = $region96
      $region95: #{tpu_custom_call.1} parent=5 // pred_region
        %s724 = ssub.s32 %s40, 1
        %s725 = sand.u32 %s53, 1
        %s726 = scalar_lea.sflag [#allocation3], %s725
        %s727 = sand.u32 %s53, 1
        %s728 = smul.addr %s727, 16
        %s729 = scalar_lea.vmem [#allocation2], %s728
        // Predicated region
        $region97: #{tpu_custom_call.1} parent=95 // pred_check
          %p730 = pneg %p66
        $region98: #{tpu_custom_call.1} parent=95 // pred_check_branch
          %732 = sbr.rel (%p730) target = $region100
        $region99: #{tpu_custom_call.1} parent=95 // pred_region
          %733 = dma.done %s726, 256
        $region100: #{tpu_custom_call.1} parent=95 // pred_fallthru
          _
        // Predicated region
        $region101: #{tpu_custom_call.1} parent=95 // pred_check
          %p734 = pneg %p87
        $region102: #{tpu_custom_call.1} parent=95 // pred_check_branch
          %736 = sbr.rel (%p734) target = $region104
        $region103: #{tpu_custom_call.1} parent=95 // pred_region
          %737 = dma.done [#allocation6], 2048
        $region104: #{tpu_custom_call.1} parent=95 // pred_fallthru
          _
        // Predicated region
        $region105: #{tpu_custom_call.1} parent=95 // pred_check
          %p738 = pneg %p108
        $region106: #{tpu_custom_call.1} parent=95 // pred_check_branch
          %740 = sbr.rel (%p738) target = $region108
        $region107: #{tpu_custom_call.1} parent=95 // pred_region
          %741 = dma.done [#allocation6], 16
        $region108: #{tpu_custom_call.1} parent=95 // pred_fallthru
          _
        // Predicated region
        $region109: #{tpu_custom_call.1} parent=95 // pred_check
          %p742 = pneg %p129
        $region110: #{tpu_custom_call.1} parent=95 // pred_check_branch
          %744 = sbr.rel (%p742) target = $region112
        $region111: #{tpu_custom_call.1} parent=95 // pred_region
          %745 = dma.done [#allocation9], 16
        $region112: #{tpu_custom_call.1} parent=95 // pred_fallthru
          _
        // Predicated region
        $region113: #{tpu_custom_call.1} parent=95 // pred_check
          %p746 = pneg %p150
        $region114: #{tpu_custom_call.1} parent=95 // pred_check_branch
          %748 = sbr.rel (%p746) target = $region116
        $region115: #{tpu_custom_call.1} parent=95 // pred_region
          %749 = dma.done [#allocation9], 16
        $region116: #{tpu_custom_call.1} parent=95 // pred_fallthru
          _
        // Predicated region
        $region117: #{tpu_custom_call.1} parent=95 // pred_check
          %p750 = pneg %p171
        $region118: #{tpu_custom_call.1} parent=95 // pred_check_branch
          %752 = sbr.rel (%p750) target = $region120
        $region119: #{tpu_custom_call.1} parent=95 // pred_region
          %753 = dma.done [#allocation12], 4096
        $region120: #{tpu_custom_call.1} parent=95 // pred_fallthru
          _
        // Predicated region
        $region121: #{tpu_custom_call.1} parent=95 // pred_check
          %p754 = pneg %p192
        $region122: #{tpu_custom_call.1} parent=95 // pred_check_branch
          %756 = sbr.rel (%p754) target = $region124
        $region123: #{tpu_custom_call.1} parent=95 // pred_region
          %757 = dma.done [#allocation12], 32
        $region124: #{tpu_custom_call.1} parent=95 // pred_fallthru
          _
        // Predicated region
        $region125: #{tpu_custom_call.1} parent=95 // pred_check
          %p758 = pneg %p213
        $region126: #{tpu_custom_call.1} parent=95 // pred_check_branch
          %760 = sbr.rel (%p758) target = $region128
        $region127: #{tpu_custom_call.1} parent=95 // pred_region
          %761 = dma.done [#allocation15], 32
        $region128: #{tpu_custom_call.1} parent=95 // pred_fallthru
          _
        // Predicated region
        $region129: #{tpu_custom_call.1} parent=95 // pred_check
          %p762 = pneg %p234
        $region130: #{tpu_custom_call.1} parent=95 // pred_check_branch
          %764 = sbr.rel (%p762) target = $region132
        $region131: #{tpu_custom_call.1} parent=95 // pred_region
          %765 = dma.done [#allocation15], 32
        $region132: #{tpu_custom_call.1} parent=95 // pred_fallthru
          _
        // Predicated region
        $region133: #{tpu_custom_call.1} parent=95 // pred_check
          %p766 = pneg %p255
        $region134: #{tpu_custom_call.1} parent=95 // pred_check_branch
          %768 = sbr.rel (%p766) target = $region136
        $region135: #{tpu_custom_call.1} parent=95 // pred_region
          %769 = dma.done [#allocation18], 16384
        $region136: #{tpu_custom_call.1} parent=95 // pred_fallthru
          _
        // Predicated region
        $region137: #{tpu_custom_call.1} parent=95 // pred_check
          %p770 = pneg %p276
        $region138: #{tpu_custom_call.1} parent=95 // pred_check_branch
          %772 = sbr.rel (%p770) target = $region140
        $region139: #{tpu_custom_call.1} parent=95 // pred_region
          %773 = dma.done [#allocation18], 64
        $region140: #{tpu_custom_call.1} parent=95 // pred_fallthru
          _
        // Predicated region
        $region141: #{tpu_custom_call.1} parent=95 // pred_check
          %p774 = pneg %p297
        $region142: #{tpu_custom_call.1} parent=95 // pred_check_branch
          %776 = sbr.rel (%p774) target = $region144
        $region143: #{tpu_custom_call.1} parent=95 // pred_region
          %777 = dma.done [#allocation21], 64
        $region144: #{tpu_custom_call.1} parent=95 // pred_fallthru
          _
        // Predicated region
        $region145: #{tpu_custom_call.1} parent=95 // pred_check
          %p778 = pneg %p318
        $region146: #{tpu_custom_call.1} parent=95 // pred_check_branch
          %780 = sbr.rel (%p778) target = $region148
        $region147: #{tpu_custom_call.1} parent=95 // pred_region
          %781 = dma.done [#allocation21], 64
        $region148: #{tpu_custom_call.1} parent=95 // pred_fallthru
          _
        // Predicated region
        $region149: #{tpu_custom_call.1} parent=95 // pred_check
          %p782 = pneg %p339
        $region150: #{tpu_custom_call.1} parent=95 // pred_check_branch
          %784 = sbr.rel (%p782) target = $region152
        $region151: #{tpu_custom_call.1} parent=95 // pred_region
          %785 = dma.done [#allocation24], 65536
        $region152: #{tpu_custom_call.1} parent=95 // pred_fallthru
          _
        // Predicated region
        $region153: #{tpu_custom_call.1} parent=95 // pred_check
          %p786 = pneg %p360
        $region154: #{tpu_custom_call.1} parent=95 // pred_check_branch
          %788 = sbr.rel (%p786) target = $region156
        $region155: #{tpu_custom_call.1} parent=95 // pred_region
          %789 = dma.done [#allocation24], 128
        $region156: #{tpu_custom_call.1} parent=95 // pred_fallthru
          _
        // Predicated region
        $region157: #{tpu_custom_call.1} parent=95 // pred_check
          %p790 = pneg %p381
        $region158: #{tpu_custom_call.1} parent=95 // pred_check_branch
          %792 = sbr.rel (%p790) target = $region160
        $region159: #{tpu_custom_call.1} parent=95 // pred_region
          %793 = dma.done [#allocation27], 128
        $region160: #{tpu_custom_call.1} parent=95 // pred_fallthru
          _
        // Predicated region
        $region161: #{tpu_custom_call.1} parent=95 // pred_check
          %p794 = pneg %p402
        $region162: #{tpu_custom_call.1} parent=95 // pred_check_branch
          %796 = sbr.rel (%p794) target = $region164
        $region163: #{tpu_custom_call.1} parent=95 // pred_region
          %797 = dma.done [#allocation27], 128
        $region164: #{tpu_custom_call.1} parent=95 // pred_fallthru
          _
        // Predicated region
        $region165: #{tpu_custom_call.1} parent=95 // pred_check
          %p798 = pneg %p423
        $region166: #{tpu_custom_call.1} parent=95 // pred_check_branch
          %800 = sbr.rel (%p798) target = $region168
        $region167: #{tpu_custom_call.1} parent=95 // pred_region
          %801 = dma.done [#allocation30], 16384
        $region168: #{tpu_custom_call.1} parent=95 // pred_fallthru
          _
        // Predicated region
        $region169: #{tpu_custom_call.1} parent=95 // pred_check
          %p802 = pneg %p444
        $region170: #{tpu_custom_call.1} parent=95 // pred_check_branch
          %804 = sbr.rel (%p802) target = $region172
        $region171: #{tpu_custom_call.1} parent=95 // pred_region
          %805 = dma.done [#allocation30], 16
        $region172: #{tpu_custom_call.1} parent=95 // pred_fallthru
          _
        %s806 = sand.u32 %s53, 1
        %s807 = scalar_lea.sflag [#allocation3], %s806
        %s808 = sand.u32 %s53, 1
        %s809 = smul.addr %s808, 16
        %s810 = scalar_lea.vmem [#allocation2], %s809
        %p811 = pneg %p66
        %p812 = pneg %p63
        %p813 = pneg %p87
        %p814 = pneg %p84
        %p815 = pneg %p108
        %p816 = pneg %p105
        %p817 = pneg %p129
        %p818 = pneg %p126
        %p819 = pneg %p150
        %p820 = pneg %p147
        %p821 = pneg %p171
        %p822 = pneg %p168
        %p823 = pneg %p192
        %p824 = pneg %p189
        %p825 = pneg %p213
        %p826 = pneg %p210
        %p827 = pneg %p234
        %p828 = pneg %p231
        %p829 = pneg %p255
        %p830 = pneg %p252
        %p831 = pneg %p276
        %p832 = pneg %p273
        %p833 = pneg %p297
        %p834 = pneg %p294
        %p835 = pneg %p318
        %p836 = pneg %p315
        %p837 = pneg %p339
        %p838 = pneg %p336
        %p839 = pneg %p360
        %p840 = pneg %p357
        %p841 = pneg %p381
        %p842 = pneg %p378
        %p843 = pneg %p402
        %p844 = pneg %p399
        %p845 = pneg %p423
        %p846 = pneg %p420
        %p847 = pneg %p444
        %p848 = pneg %p441
        %p849 = pneg %p470
        %p850 = pneg %p467
        %s851 = sand.u32 %s457, 1
        %s852 = scalar_lea.sflag [#allocation4], %s851
        %s853 = sand.u32 %s457, 1
        %s854 = smul.addr %s853, 16
        %s855 = scalar_lea.vmem [#allocation32], %s854
        %s856 = smul.u32 2, %s45
        %s857 = smul.u32 2, %s45
        %v858 = vld [vmem:[%s729] sm:$0xff]
        %v859 = vld [vmem:[%s729 + $0x8] sm:$0xff]
        %v860 = vld [vmem:[#allocation5] sm:$0xff]
        %v861 = vld [vmem:[#allocation5 + $0x8] sm:$0xff]
        %v862 = vld [vmem:[#allocation5 + $0x10] sm:$0xff]
        %v863 = vld [vmem:[#allocation5 + $0x18] sm:$0xff]
        %v864 = vld [vmem:[#allocation5 + $0x20] sm:$0xff]
        %v865 = vld [vmem:[#allocation5 + $0x28] sm:$0xff]
        %v866 = vld [vmem:[#allocation5 + $0x30] sm:$0xff]
        %v867 = vld [vmem:[#allocation5 + $0x38] sm:$0xff]
        %v868 = vld [vmem:[#allocation5 + $0x40] sm:$0xff]
        %v869 = vld [vmem:[#allocation5 + $0x48] sm:$0xff]
        %v870 = vld [vmem:[#allocation5 + $0x50] sm:$0xff]
        %v871 = vld [vmem:[#allocation5 + $0x58] sm:$0xff]
        %v872 = vld [vmem:[#allocation5 + $0x60] sm:$0xff]
        %v873 = vld [vmem:[#allocation5 + $0x68] sm:$0xff]
        %v874 = vld [vmem:[#allocation5 + $0x70] sm:$0xff]
        %v875 = vld [vmem:[#allocation5 + $0x78] sm:$0xff]
        %v876 = vld [vmem:[#allocation7] sm:$0x1]
        %v878 = vlaneseq
        %v879 = vshrl.u32 %v878, 7
        %v880 = vsub.s32 0, %v879
        %v881 = vrot.slane %v876, %v880
        %883 = vmatprep.subr.mxu0 0.0
        %884 = vmatpush1.msra.mxu0 %v875
        %885 = vmatprep.subr.mxu0 0.0
        %886 = vmatpush1.msra.mxu0 %v874
        %887 = vmatprep.subr.mxu0 0.0
        %888 = vmatpush1.msra.mxu0 %v873
        %889 = vmatprep.subr.mxu0 0.0
        %890 = vmatpush1.msra.mxu0 %v872
        %891 = vmatprep.subr.mxu0 0.0
        %892 = vmatpush1.msra.mxu0 %v871
        %893 = vmatprep.subr.mxu0 0.0
        %894 = vmatpush1.msra.mxu0 %v870
        %895 = vmatprep.subr.mxu0 0.0
        %896 = vmatpush1.msra.mxu0 %v869
        %897 = vmatprep.subr.mxu0 0.0
        %898 = vmatpush1.msra.mxu0 %v868
        %899 = vmatprep.subr.mxu0 0.0
        %900 = vmatpush1.msra.mxu0 %v867
        %901 = vmatprep.subr.mxu0 0.0
        %902 = vmatpush1.msra.mxu0 %v866
        %903 = vmatprep.subr.mxu0 0.0
        %904 = vmatpush1.msra.mxu0 %v865
        %905 = vmatprep.subr.mxu0 0.0
        %906 = vmatpush1.msra.mxu0 %v864
        %907 = vmatprep.subr.mxu0 0.0
        %908 = vmatpush1.msra.mxu0 %v863
        %909 = vmatprep.subr.mxu0 0.0
        %910 = vmatpush1.msra.mxu0 %v862
        %911 = vmatprep.subr.mxu0 0.0
        %912 = vmatpush1.msra.mxu0 %v861
        %913 = vmatprep.subr.mxu0 0.0
        %914 = vmatpush1.msra.mxu0 %v860
        %915 = vmatprep.subr.mxu0 0.0
        %916 = vmatpush2.msra.mxu0 0.0
        %917 = vmatprep.subr.mxu0 0.0
        %918 = vmatpush2.msra.mxu0 0.0
        %919 = vmatprep.subr.mxu0 0.0
        %920 = vmatpush2.msra.mxu0 0.0
        %921 = vmatprep.subr.mxu0 0.0
        %922 = vmatpush2.msra.mxu0 0.0
        %923 = vmatprep.subr.mxu0 0.0
        %924 = vmatpush2.msra.mxu0 0.0
        %925 = vmatprep.subr.mxu0 0.0
        %926 = vmatpush2.msra.mxu0 0.0
        %927 = vmatprep.subr.mxu0 0.0
        %928 = vmatpush2.msra.mxu0 0.0
        %929 = vmatprep.subr.mxu0 0.0
        %930 = vmatpush2.msra.mxu0 0.0
        %931 = vmatprep.subr.mxu0 0.0
        %932 = vmatpush2.msra.mxu0 0.0
        %933 = vmatprep.subr.mxu0 0.0
        %934 = vmatpush2.msra.mxu0 0.0
        %935 = vmatprep.subr.mxu0 0.0
        %936 = vmatpush2.msra.mxu0 0.0
        %937 = vmatprep.subr.mxu0 0.0
        %938 = vmatpush2.msra.mxu0 0.0
        %939 = vmatprep.subr.mxu0 0.0
        %940 = vmatpush2.msra.mxu0 0.0
        %941 = vmatprep.subr.mxu0 0.0
        %942 = vmatpush2.msra.mxu0 0.0
        %943 = vmatprep.subr.mxu0 0.0
        %944 = vmatpush2.msra.mxu0 0.0
        %945 = vmatprep.subr.mxu0 0.0
        %946 = vmatpush2.msra.mxu0 0.0
        %947 = vmatprep.mubr.f32.mxu0 0.0
        %948 = vmatmul.mubr.f32.gmra.mxu0 %v858
        %v949 = vpop.f32.mrf.mxu0
        %v950 = vadd.f32 %v881, %v949
        %v951 = vpop.f32.mrf.mxu0
        %952 = vmatprep.mubr.f32.mxu0 0.0
        %953 = vmatmul.mubr.f32.gmra.mxu0 %v859
        %v954 = vpop.f32.mrf.mxu0
        %v955 = vadd.f32 %v881, %v954
        %v956 = vpop.f32.mrf.mxu0
        %957 = vdwg.mxu0
        %v958 = vrot.slane %v950, 4
        %v959 = vadd.f32 %v950, %v958
        %v960 = vrot.slane %v959, 2
        %v961 = vadd.f32 %v959, %v960
        %v962 = vrot.slane %v961, 1
        %v963 = vadd.f32 %v961, %v962
        %v964 = vrot.slane %v955, 4
        %v965 = vadd.f32 %v955, %v964
        %v966 = vrot.slane %v965, 2
        %v967 = vadd.f32 %v965, %v966
        %v968 = vrot.slane %v967, 1
        %v969 = vadd.f32 %v967, %v968
        %v970 = vrcp.pop 8.0
        %v971 = vmul.f32 %v963, %v970
        %v972 = vmul.f32 %v969, %v970
        %v973 = vsub.f32 %v950, %v971
        %v974 = vsub.f32 %v955, %v972
        %v975 = vmul.f32 %v973, %v973
        %v976 = vmul.f32 %v974, %v974
        %v977 = vrot.slane %v975, 4
        %v978 = vadd.f32 %v975, %v977
        %v979 = vrot.slane %v978, 2
        %v980 = vadd.f32 %v978, %v979
        %v981 = vrot.slane %v980, 1
        %v982 = vadd.f32 %v980, %v981
        %v983 = vrot.slane %v976, 4
        %v984 = vadd.f32 %v976, %v983
        %v985 = vrot.slane %v984, 2
        %v986 = vadd.f32 %v984, %v985
        %v987 = vrot.slane %v986, 1
        %v988 = vadd.f32 %v986, %v987
        %v989 = vmul.f32 %v982, %v970
        %v990 = vmul.f32 %v988, %v970
        %v991 = vld [vmem:[#allocation8] sm:$0x1]
        %v992 = vadd.f32 %v989, 1e-05
        %v993 = vadd.f32 %v990, 1e-05
        %v994 = vrsqrt.pop %v992
        %v995 = vrsqrt.pop %v993
        %v996 = vmul.f32 %v991, %v994
        %v997 = vmul.f32 %v991, %v995
        %v998 = vld [vmem:[#allocation10] sm:$0x1]
        %v999 = vmul.f32 %v971, %v996
        %v1000 = vmul.f32 %v972, %v997
        %v1001 = vsub.f32 %v998, %v999
        %v1002 = vsub.f32 %v998, %v1000
        %v1005 = vlaneseq
        %v1006 = vshrl.u32 %v1005, 7
        %v1007 = vsub.s32 0, %v1006
        %v1008 = vrot.slane %v996, %v1007
        %v1009 = vlaneseq
        %v1010 = vshrl.u32 %v1009, 7
        %v1011 = vsub.s32 0, %v1010
        %v1012 = vrot.slane %v997, %v1011
        %v1015 = vmul.f32 %v950, %v1008
        %v1016 = vmul.f32 %v955, %v1012
        %v1019 = vlaneseq
        %v1020 = vshrl.u32 %v1019, 7
        %v1021 = vsub.s32 0, %v1020
        %v1022 = vrot.slane %v1001, %v1021
        %v1023 = vlaneseq
        %v1024 = vshrl.u32 %v1023, 7
        %v1025 = vsub.s32 0, %v1024
        %v1026 = vrot.slane %v1002, %v1025
        %v1029 = vadd.f32 %v1015, %v1022
        %v1030 = vadd.f32 %v1016, %v1026
        %v1031 = vmax.f32 %v1029, 0.0
        %v1032 = vmax.f32 %v1030, 0.0
        %v1033 = vld [vmem:[#allocation11] sm:$0xff]
        %v1034 = vld [vmem:[#allocation11 + $0x8] sm:$0xff]
        %v1035 = vld [vmem:[#allocation11 + $0x10] sm:$0xff]
        %v1036 = vld [vmem:[#allocation11 + $0x18] sm:$0xff]
        %v1037 = vld [vmem:[#allocation11 + $0x20] sm:$0xff]
        %v1038 = vld [vmem:[#allocation11 + $0x28] sm:$0xff]
        %v1039 = vld [vmem:[#allocation11 + $0x30] sm:$0xff]
        %v1040 = vld [vmem:[#allocation11 + $0x38] sm:$0xff]
        %v1041 = vld [vmem:[#allocation11 + $0x40] sm:$0xff]
        %v1042 = vld [vmem:[#allocation11 + $0x48] sm:$0xff]
        %v1043 = vld [vmem:[#allocation11 + $0x50] sm:$0xff]
        %v1044 = vld [vmem:[#allocation11 + $0x58] sm:$0xff]
        %v1045 = vld [vmem:[#allocation11 + $0x60] sm:$0xff]
        %v1046 = vld [vmem:[#allocation11 + $0x68] sm:$0xff]
        %v1047 = vld [vmem:[#allocation11 + $0x70] sm:$0xff]
        %v1048 = vld [vmem:[#allocation11 + $0x78] sm:$0xff]
        %v1049 = vld [vmem:[#allocation11 + $0x80] sm:$0xff]
        %v1050 = vld [vmem:[#allocation11 + $0x88] sm:$0xff]
        %v1051 = vld [vmem:[#allocation11 + $0x90] sm:$0xff]
        %v1052 = vld [vmem:[#allocation11 + $0x98] sm:$0xff]
        %v1053 = vld [vmem:[#allocation11 + $0xa0] sm:$0xff]
        %v1054 = vld [vmem:[#allocation11 + $0xa8] sm:$0xff]
        %v1055 = vld [vmem:[#allocation11 + $0xb0] sm:$0xff]
        %v1056 = vld [vmem:[#allocation11 + $0xb8] sm:$0xff]
        %v1057 = vld [vmem:[#allocation11 + $0xc0] sm:$0xff]
        %v1058 = vld [vmem:[#allocation11 + $0xc8] sm:$0xff]
        %v1059 = vld [vmem:[#allocation11 + $0xd0] sm:$0xff]
        %v1060 = vld [vmem:[#allocation11 + $0xd8] sm:$0xff]
        %v1061 = vld [vmem:[#allocation11 + $0xe0] sm:$0xff]
        %v1062 = vld [vmem:[#allocation11 + $0xe8] sm:$0xff]
        %v1063 = vld [vmem:[#allocation11 + $0xf0] sm:$0xff]
        %v1064 = vld [vmem:[#allocation11 + $0xf8] sm:$0xff]
        %v1065 = vld [vmem:[#allocation13] sm:$0x3]
        %v1067 = vlaneseq
        %v1068 = vshrl.u32 %v1067, 7
        %v1069 = vsub.s32 0, %v1068
        %v1070 = vrot.slane %v1065, %v1069
        %v1071 = vlaneseq
        %v1072 = vshrl.u32 %v1071, 7
        %v1073 = vsub.s32 1, %v1072
        %v1074 = vrot.slane %v1065, %v1073
        %1077 = vmatprep.subr.mxu0 %v1064
        %1078 = vmatpush1.msra.mxu0 %v1063
        %1079 = vmatprep.subr.mxu0 %v1062
        %1080 = vmatpush1.msra.mxu0 %v1061
        %1081 = vmatprep.subr.mxu0 %v1060
        %1082 = vmatpush1.msra.mxu0 %v1059
        %1083 = vmatprep.subr.mxu0 %v1058
        %1084 = vmatpush1.msra.mxu0 %v1057
        %1085 = vmatprep.subr.mxu0 %v1056
        %1086 = vmatpush1.msra.mxu0 %v1055
        %1087 = vmatprep.subr.mxu0 %v1054
        %1088 = vmatpush1.msra.mxu0 %v1053
        %1089 = vmatprep.subr.mxu0 %v1052
        %1090 = vmatpush1.msra.mxu0 %v1051
        %1091 = vmatprep.subr.mxu0 %v1050
        %1092 = vmatpush1.msra.mxu0 %v1049
        %1093 = vmatprep.subr.mxu0 %v1048
        %1094 = vmatpush1.msra.mxu0 %v1047
        %1095 = vmatprep.subr.mxu0 %v1046
        %1096 = vmatpush1.msra.mxu0 %v1045
        %1097 = vmatprep.subr.mxu0 %v1044
        %1098 = vmatpush1.msra.mxu0 %v1043
        %1099 = vmatprep.subr.mxu0 %v1042
        %1100 = vmatpush1.msra.mxu0 %v1041
        %1101 = vmatprep.subr.mxu0 %v1040
        %1102 = vmatpush1.msra.mxu0 %v1039
        %1103 = vmatprep.subr.mxu0 %v1038
        %1104 = vmatpush1.msra.mxu0 %v1037
        %1105 = vmatprep.subr.mxu0 %v1036
        %1106 = vmatpush1.msra.mxu0 %v1035
        %1107 = vmatprep.subr.mxu0 %v1034
        %1108 = vmatpush1.msra.mxu0 %v1033
        %1109 = vmatprep.subr.mxu0 0.0
        %1110 = vmatpush2.msra.mxu0 0.0
        %1111 = vmatprep.subr.mxu0 0.0
        %1112 = vmatpush2.msra.mxu0 0.0
        %1113 = vmatprep.subr.mxu0 0.0
        %1114 = vmatpush2.msra.mxu0 0.0
        %1115 = vmatprep.subr.mxu0 0.0
        %1116 = vmatpush2.msra.mxu0 0.0
        %1117 = vmatprep.subr.mxu0 0.0
        %1118 = vmatpush2.msra.mxu0 0.0
        %1119 = vmatprep.subr.mxu0 0.0
        %1120 = vmatpush2.msra.mxu0 0.0
        %1121 = vmatprep.subr.mxu0 0.0
        %1122 = vmatpush2.msra.mxu0 0.0
        %1123 = vmatprep.subr.mxu0 0.0
        %1124 = vmatpush2.msra.mxu0 0.0
        %1125 = vmatprep.subr.mxu0 0.0
        %1126 = vmatpush2.msra.mxu0 0.0
        %1127 = vmatprep.subr.mxu0 0.0
        %1128 = vmatpush2.msra.mxu0 0.0
        %1129 = vmatprep.subr.mxu0 0.0
        %1130 = vmatpush2.msra.mxu0 0.0
        %1131 = vmatprep.subr.mxu0 0.0
        %1132 = vmatpush2.msra.mxu0 0.0
        %1133 = vmatprep.subr.mxu0 0.0
        %1134 = vmatpush2.msra.mxu0 0.0
        %1135 = vmatprep.subr.mxu0 0.0
        %1136 = vmatpush2.msra.mxu0 0.0
        %1137 = vmatprep.subr.mxu0 0.0
        %1138 = vmatpush2.msra.mxu0 0.0
        %1139 = vmatprep.subr.mxu0 0.0
        %1140 = vmatpush2.msra.mxu0 0.0
        %1141 = vmatprep.mubr.f32.mxu0 0.0
        %1142 = vmatmul.mubr.f32.gmra.mxu0 %v1031
        %v1143 = vpop.f32.mrf.mxu0
        %v1144 = vadd.f32 %v1070, %v1143
        %v1145 = vpop.f32.mrf.mxu0
        %v1146 = vadd.f32 %v1074, %v1145
        %1147 = vmatprep.mubr.f32.mxu0 0.0
        %1148 = vmatmul.mubr.f32.gmra.mxu0 %v1032
        %v1149 = vpop.f32.mrf.mxu0
        %v1150 = vadd.f32 %v1070, %v1149
        %v1151 = vpop.f32.mrf.mxu0
        %v1152 = vadd.f32 %v1074, %v1151
        %1153 = vdwg.mxu0
        %v1154 = vrot.slane %v1144, 4
        %v1155 = vadd.f32 %v1144, %v1154
        %v1156 = vrot.slane %v1155, 2
        %v1157 = vadd.f32 %v1155, %v1156
        %v1158 = vrot.slane %v1157, 1
        %v1159 = vadd.f32 %v1157, %v1158
        %v1160 = vrot.slane %v1146, 4
        %v1161 = vadd.f32 %v1146, %v1160
        %v1162 = vrot.slane %v1161, 2
        %v1163 = vadd.f32 %v1161, %v1162
        %v1164 = vrot.slane %v1163, 1
        %v1165 = vadd.f32 %v1163, %v1164
        %v1166 = vrot.slane %v1150, 4
        %v1167 = vadd.f32 %v1150, %v1166
        %v1168 = vrot.slane %v1167, 2
        %v1169 = vadd.f32 %v1167, %v1168
        %v1170 = vrot.slane %v1169, 1
        %v1171 = vadd.f32 %v1169, %v1170
        %v1172 = vrot.slane %v1152, 4
        %v1173 = vadd.f32 %v1152, %v1172
        %v1174 = vrot.slane %v1173, 2
        %v1175 = vadd.f32 %v1173, %v1174
        %v1176 = vrot.slane %v1175, 1
        %v1177 = vadd.f32 %v1175, %v1176
        %v1178 = vmul.f32 %v1159, %v970
        %v1179 = vmul.f32 %v1165, %v970
        %v1180 = vmul.f32 %v1171, %v970
        %v1181 = vmul.f32 %v1177, %v970
        %v1182 = vsub.f32 %v1144, %v1178
        %v1183 = vsub.f32 %v1146, %v1179
        %v1184 = vsub.f32 %v1150, %v1180
        %v1185 = vsub.f32 %v1152, %v1181
        %v1186 = vmul.f32 %v1182, %v1182
        %v1187 = vmul.f32 %v1183, %v1183
        %v1188 = vmul.f32 %v1184, %v1184
        %v1189 = vmul.f32 %v1185, %v1185
        %v1190 = vrot.slane %v1186, 4
        %v1191 = vadd.f32 %v1186, %v1190
        %v1192 = vrot.slane %v1191, 2
        %v1193 = vadd.f32 %v1191, %v1192
        %v1194 = vrot.slane %v1193, 1
        %v1195 = vadd.f32 %v1193, %v1194
        %v1196 = vrot.slane %v1187, 4
        %v1197 = vadd.f32 %v1187, %v1196
        %v1198 = vrot.slane %v1197, 2
        %v1199 = vadd.f32 %v1197, %v1198
        %v1200 = vrot.slane %v1199, 1
        %v1201 = vadd.f32 %v1199, %v1200
        %v1202 = vrot.slane %v1188, 4
        %v1203 = vadd.f32 %v1188, %v1202
        %v1204 = vrot.slane %v1203, 2
        %v1205 = vadd.f32 %v1203, %v1204
        %v1206 = vrot.slane %v1205, 1
        %v1207 = vadd.f32 %v1205, %v1206
        %v1208 = vrot.slane %v1189, 4
        %v1209 = vadd.f32 %v1189, %v1208
        %v1210 = vrot.slane %v1209, 2
        %v1211 = vadd.f32 %v1209, %v1210
        %v1212 = vrot.slane %v1211, 1
        %v1213 = vadd.f32 %v1211, %v1212
        %v1214 = vmul.f32 %v1195, %v970
        %v1215 = vmul.f32 %v1201, %v970
        %v1216 = vmul.f32 %v1207, %v970
        %v1217 = vmul.f32 %v1213, %v970
        %v1218 = vld [vmem:[#allocation14] sm:$0x3]
        %v1219 = vadd.f32 %v1214, 1e-05
        %v1220 = vadd.f32 %v1215, 1e-05
        %v1221 = vadd.f32 %v1216, 1e-05
        %v1222 = vadd.f32 %v1217, 1e-05
        %v1223 = vrsqrt.pop %v1219
        %v1224 = vrsqrt.pop %v1220
        %v1225 = vrsqrt.pop %v1221
        %v1226 = vrsqrt.pop %v1222
        %v1231 = vcombine.low %v1223, %v1224
        %v1233 = vunpack.c.l.s4 1966171168
        %v1234 = vunpack.c.0.s8 %v1233
        %v1235 = vlaneseq
        %v1236 = vshrl.u32 %v1235, 7
        %v1237 = vsub.s32 %v1234, %v1236
        %v1238 = vrot.slane %v1231, %v1237
        %v1240 = vunpack.c.l.s4 1966171168
        %v1241 = vunpack.c.0.s8 %v1240
        %v1242 = vlaneseq
        %v1243 = vshrl.u32 %v1242, 7
        %v1244 = vsub.s32 %v1241, %v1243
        %v1245 = vrot.slane %v1238, %v1244
        %v1246 = vcombine.low %v1225, %v1226
        %v1248 = vunpack.c.l.s4 1966171168
        %v1249 = vunpack.c.0.s8 %v1248
        %v1250 = vlaneseq
        %v1251 = vshrl.u32 %v1250, 7
        %v1252 = vsub.s32 %v1249, %v1251
        %v1253 = vrot.slane %v1246, %v1252
        %v1255 = vunpack.c.l.s4 1966171168
        %v1256 = vunpack.c.0.s8 %v1255
        %v1257 = vlaneseq
        %v1258 = vshrl.u32 %v1257, 7
        %v1259 = vsub.s32 %v1256, %v1258
        %v1260 = vrot.slane %v1253, %v1259
        %v1263 = vmul.f32 %v1218, %v1245
        %v1264 = vmul.f32 %v1218, %v1260
        %v1265 = vld [vmem:[#allocation16] sm:$0x3]
        %v1268 = vlaneseq
        %v1269 = vshrl.u32 %v1268, 7
        %v1270 = vsub.s32 0, %v1269
        %v1271 = vrot.slane %v1263, %v1270
        %v1272 = vlaneseq
        %v1273 = vshrl.u32 %v1272, 7
        %v1274 = vsub.s32 1, %v1273
        %v1275 = vrot.slane %v1263, %v1274
        %v1276 = vlaneseq
        %v1277 = vshrl.u32 %v1276, 7
        %v1278 = vsub.s32 0, %v1277
        %v1279 = vrot.slane %v1264, %v1278
        %v1280 = vlaneseq
        %v1281 = vshrl.u32 %v1280, 7
        %v1282 = vsub.s32 1, %v1281
        %v1283 = vrot.slane %v1264, %v1282
        %v1288 = vmul.f32 %v1178, %v1271
        %v1289 = vmul.f32 %v1179, %v1275
        %v1290 = vmul.f32 %v1180, %v1279
        %v1291 = vmul.f32 %v1181, %v1283
        %v1296 = vcombine.low %v1288, %v1289
        %v1298 = vunpack.c.l.s4 1966171168
        %v1299 = vunpack.c.0.s8 %v1298
        %v1300 = vlaneseq
        %v1301 = vshrl.u32 %v1300, 7
        %v1302 = vsub.s32 %v1299, %v1301
        %v1303 = vrot.slane %v1296, %v1302
        %v1305 = vunpack.c.l.s4 1966171168
        %v1306 = vunpack.c.0.s8 %v1305
        %v1307 = vlaneseq
        %v1308 = vshrl.u32 %v1307, 7
        %v1309 = vsub.s32 %v1306, %v1308
        %v1310 = vrot.slane %v1303, %v1309
        %v1311 = vcombine.low %v1290, %v1291
        %v1313 = vunpack.c.l.s4 1966171168
        %v1314 = vunpack.c.0.s8 %v1313
        %v1315 = vlaneseq
        %v1316 = vshrl.u32 %v1315, 7
        %v1317 = vsub.s32 %v1314, %v1316
        %v1318 = vrot.slane %v1311, %v1317
        %v1320 = vunpack.c.l.s4 1966171168
        %v1321 = vunpack.c.0.s8 %v1320
        %v1322 = vlaneseq
        %v1323 = vshrl.u32 %v1322, 7
        %v1324 = vsub.s32 %v1321, %v1323
        %v1325 = vrot.slane %v1318, %v1324
        %v1328 = vsub.f32 %v1265, %v1310
        %v1329 = vsub.f32 %v1265, %v1325
        %v1330 = vmul.f32 %v1144, %v1271
        %v1331 = vmul.f32 %v1146, %v1275
        %v1332 = vmul.f32 %v1150, %v1279
        %v1333 = vmul.f32 %v1152, %v1283
        %v1336 = vlaneseq
        %v1337 = vshrl.u32 %v1336, 7
        %v1338 = vsub.s32 0, %v1337
        %v1339 = vrot.slane %v1328, %v1338
        %v1340 = vlaneseq
        %v1341 = vshrl.u32 %v1340, 7
        %v1342 = vsub.s32 1, %v1341
        %v1343 = vrot.slane %v1328, %v1342
        %v1344 = vlaneseq
        %v1345 = vshrl.u32 %v1344, 7
        %v1346 = vsub.s32 0, %v1345
        %v1347 = vrot.slane %v1329, %v1346
        %v1348 = vlaneseq
        %v1349 = vshrl.u32 %v1348, 7
        %v1350 = vsub.s32 1, %v1349
        %v1351 = vrot.slane %v1329, %v1350
        %v1356 = vadd.f32 %v1330, %v1339
        %v1357 = vadd.f32 %v1331, %v1343
        %v1358 = vadd.f32 %v1332, %v1347
        %v1359 = vadd.f32 %v1333, %v1351
        %v1360 = vmax.f32 %v1356, 0.0
        %v1361 = vmax.f32 %v1357, 0.0
        %v1362 = vmax.f32 %v1358, 0.0
        %v1363 = vmax.f32 %v1359, 0.0
        %v1364 = vld [vmem:[#allocation17] sm:$0xff]
        %v1365 = vld [vmem:[#allocation17 + $0x8] sm:$0xff]
        %v1366 = vld [vmem:[#allocation17 + $0x10] sm:$0xff]
        %v1367 = vld [vmem:[#allocation17 + $0x18] sm:$0xff]
        %v1368 = vld [vmem:[#allocation17 + $0x20] sm:$0xff]
        %v1369 = vld [vmem:[#allocation17 + $0x28] sm:$0xff]
        %v1370 = vld [vmem:[#allocation17 + $0x30] sm:$0xff]
        %v1371 = vld [vmem:[#allocation17 + $0x38] sm:$0xff]
        %v1372 = vld [vmem:[#allocation17 + $0x40] sm:$0xff]
        %v1373 = vld [vmem:[#allocation17 + $0x48] sm:$0xff]
        %v1374 = vld [vmem:[#allocation17 + $0x50] sm:$0xff]
        %v1375 = vld [vmem:[#allocation17 + $0x58] sm:$0xff]
        %v1376 = vld [vmem:[#allocation17 + $0x60] sm:$0xff]
        %v1377 = vld [vmem:[#allocation17 + $0x68] sm:$0xff]
        %v1378 = vld [vmem:[#allocation17 + $0x70] sm:$0xff]
        %v1379 = vld [vmem:[#allocation17 + $0x78] sm:$0xff]
        %v1380 = vld [vmem:[#allocation17 + $0x80] sm:$0xff]
        %v1381 = vld [vmem:[#allocation17 + $0x88] sm:$0xff]
        %v1382 = vld [vmem:[#allocation17 + $0x90] sm:$0xff]
        %v1383 = vld [vmem:[#allocation17 + $0x98] sm:$0xff]
        %v1384 = vld [vmem:[#allocation17 + $0xa0] sm:$0xff]
        %v1385 = vld [vmem:[#allocation17 + $0xa8] sm:$0xff]
        %v1386 = vld [vmem:[#allocation17 + $0xb0] sm:$0xff]
        %v1387 = vld [vmem:[#allocation17 + $0xb8] sm:$0xff]
        %v1388 = vld [vmem:[#allocation17 + $0xc0] sm:$0xff]
        %v1389 = vld [vmem:[#allocation17 + $0xc8] sm:$0xff]
        %v1390 = vld [vmem:[#allocation17 + $0xd0] sm:$0xff]
        %v1391 = vld [vmem:[#allocation17 + $0xd8] sm:$0xff]
        %v1392 = vld [vmem:[#allocation17 + $0xe0] sm:$0xff]
        %v1393 = vld [vmem:[#allocation17 + $0xe8] sm:$0xff]
        %v1394 = vld [vmem:[#allocation17 + $0xf0] sm:$0xff]
        %v1395 = vld [vmem:[#allocation17 + $0xf8] sm:$0xff]
        %v1396 = vld [vmem:[#allocation17 + $0x100] sm:$0xff]
        %v1397 = vld [vmem:[#allocation17 + $0x108] sm:$0xff]
        %v1398 = vld [vmem:[#allocation17 + $0x110] sm:$0xff]
        %v1399 = vld [vmem:[#allocation17 + $0x118] sm:$0xff]
        %v1400 = vld [vmem:[#allocation17 + $0x120] sm:$0xff]
        %v1401 = vld [vmem:[#allocation17 + $0x128] sm:$0xff]
        %v1402 = vld [vmem:[#allocation17 + $0x130] sm:$0xff]
        %v1403 = vld [vmem:[#allocation17 + $0x138] sm:$0xff]
        %v1404 = vld [vmem:[#allocation17 + $0x140] sm:$0xff]
        %v1405 = vld [vmem:[#allocation17 + $0x148] sm:$0xff]
        %v1406 = vld [vmem:[#allocation17 + $0x150] sm:$0xff]
        %v1407 = vld [vmem:[#allocation17 + $0x158] sm:$0xff]
        %v1408 = vld [vmem:[#allocation17 + $0x160] sm:$0xff]
        %v1409 = vld [vmem:[#allocation17 + $0x168] sm:$0xff]
        %v1410 = vld [vmem:[#allocation17 + $0x170] sm:$0xff]
        %v1411 = vld [vmem:[#allocation17 + $0x178] sm:$0xff]
        %v1412 = vld [vmem:[#allocation17 + $0x180] sm:$0xff]
        %v1413 = vld [vmem:[#allocation17 + $0x188] sm:$0xff]
        %v1414 = vld [vmem:[#allocation17 + $0x190] sm:$0xff]
        %v1415 = vld [vmem:[#allocation17 + $0x198] sm:$0xff]
        %v1416 = vld [vmem:[#allocation17 + $0x1a0] sm:$0xff]
        %v1417 = vld [vmem:[#allocation17 + $0x1a8] sm:$0xff]
        %v1418 = vld [vmem:[#allocation17 + $0x1b0] sm:$0xff]
        %v1419 = vld [vmem:[#allocation17 + $0x1b8] sm:$0xff]
        %v1420 = vld [vmem:[#allocation17 + $0x1c0] sm:$0xff]
        %v1421 = vld [vmem:[#allocation17 + $0x1c8] sm:$0xff]
        %v1422 = vld [vmem:[#allocation17 + $0x1d0] sm:$0xff]
        %v1423 = vld [vmem:[#allocation17 + $0x1d8] sm:$0xff]
        %v1424 = vld [vmem:[#allocation17 + $0x1e0] sm:$0xff]
        %v1425 = vld [vmem:[#allocation17 + $0x1e8] sm:$0xff]
        %v1426 = vld [vmem:[#allocation17 + $0x1f0] sm:$0xff]
        %v1427 = vld [vmem:[#allocation17 + $0x1f8] sm:$0xff]
        %v1428 = vld [vmem:[#allocation17 + $0x200] sm:$0xff]
        %v1429 = vld [vmem:[#allocation17 + $0x208] sm:$0xff]
        %v1430 = vld [vmem:[#allocation17 + $0x210] sm:$0xff]
        %v1431 = vld [vmem:[#allocation17 + $0x218] sm:$0xff]
        %v1432 = vld [vmem:[#allocation17 + $0x220] sm:$0xff]
        %v1433 = vld [vmem:[#allocation17 + $0x228] sm:$0xff]
        %v1434 = vld [vmem:[#allocation17 + $0x230] sm:$0xff]
        %v1435 = vld [vmem:[#allocation17 + $0x238] sm:$0xff]
        %v1436 = vld [vmem:[#allocation17 + $0x240] sm:$0xff]
        %v1437 = vld [vmem:[#allocation17 + $0x248] sm:$0xff]
        %v1438 = vld [vmem:[#allocation17 + $0x250] sm:$0xff]
        %v1439 = vld [vmem:[#allocation17 + $0x258] sm:$0xff]
        %v1440 = vld [vmem:[#allocation17 + $0x260] sm:$0xff]
        %v1441 = vld [vmem:[#allocation17 + $0x268] sm:$0xff]
        %v1442 = vld [vmem:[#allocation17 + $0x270] sm:$0xff]
        %v1443 = vld [vmem:[#allocation17 + $0x278] sm:$0xff]
        %v1444 = vld [vmem:[#allocation17 + $0x280] sm:$0xff]
        %v1445 = vld [vmem:[#allocation17 + $0x288] sm:$0xff]
        %v1446 = vld [vmem:[#allocation17 + $0x290] sm:$0xff]
        %v1447 = vld [vmem:[#allocation17 + $0x298] sm:$0xff]
        %v1448 = vld [vmem:[#allocation17 + $0x2a0] sm:$0xff]
        %v1449 = vld [vmem:[#allocation17 + $0x2a8] sm:$0xff]
        %v1450 = vld [vmem:[#allocation17 + $0x2b0] sm:$0xff]
        %v1451 = vld [vmem:[#allocation17 + $0x2b8] sm:$0xff]
        %v1452 = vld [vmem:[#allocation17 + $0x2c0] sm:$0xff]
        %v1453 = vld [vmem:[#allocation17 + $0x2c8] sm:$0xff]
        %v1454 = vld [vmem:[#allocation17 + $0x2d0] sm:$0xff]
        %v1455 = vld [vmem:[#allocation17 + $0x2d8] sm:$0xff]
        %v1456 = vld [vmem:[#allocation17 + $0x2e0] sm:$0xff]
        %v1457 = vld [vmem:[#allocation17 + $0x2e8] sm:$0xff]
        %v1458 = vld [vmem:[#allocation17 + $0x2f0] sm:$0xff]
        %v1459 = vld [vmem:[#allocation17 + $0x2f8] sm:$0xff]
        %v1460 = vld [vmem:[#allocation17 + $0x300] sm:$0xff]
        %v1461 = vld [vmem:[#allocation17 + $0x308] sm:$0xff]
        %v1462 = vld [vmem:[#allocation17 + $0x310] sm:$0xff]
        %v1463 = vld [vmem:[#allocation17 + $0x318] sm:$0xff]
        %v1464 = vld [vmem:[#allocation17 + $0x320] sm:$0xff]
        %v1465 = vld [vmem:[#allocation17 + $0x328] sm:$0xff]
        %v1466 = vld [vmem:[#allocation17 + $0x330] sm:$0xff]
        %v1467 = vld [vmem:[#allocation17 + $0x338] sm:$0xff]
        %v1468 = vld [vmem:[#allocation17 + $0x340] sm:$0xff]
        %v1469 = vld [vmem:[#allocation17 + $0x348] sm:$0xff]
        %v1470 = vld [vmem:[#allocation17 + $0x350] sm:$0xff]
        %v1471 = vld [vmem:[#allocation17 + $0x358] sm:$0xff]
        %v1472 = vld [vmem:[#allocation17 + $0x360] sm:$0xff]
        %v1473 = vld [vmem:[#allocation17 + $0x368] sm:$0xff]
        %v1474 = vld [vmem:[#allocation17 + $0x370] sm:$0xff]
        %v1475 = vld [vmem:[#allocation17 + $0x378] sm:$0xff]
        %v1476 = vld [vmem:[#allocation17 + $0x380] sm:$0xff]
        %v1477 = vld [vmem:[#allocation17 + $0x388] sm:$0xff]
        %v1478 = vld [vmem:[#allocation17 + $0x390] sm:$0xff]
        %v1479 = vld [vmem:[#allocation17 + $0x398] sm:$0xff]
        %v1480 = vld [vmem:[#allocation17 + $0x3a0] sm:$0xff]
        %v1481 = vld [vmem:[#allocation17 + $0x3a8] sm:$0xff]
        %v1482 = vld [vmem:[#allocation17 + $0x3b0] sm:$0xff]
        %v1483 = vld [vmem:[#allocation17 + $0x3b8] sm:$0xff]
        %v1484 = vld [vmem:[#allocation17 + $0x3c0] sm:$0xff]
        %v1485 = vld [vmem:[#allocation17 + $0x3c8] sm:$0xff]
        %v1486 = vld [vmem:[#allocation17 + $0x3d0] sm:$0xff]
        %v1487 = vld [vmem:[#allocation17 + $0x3d8] sm:$0xff]
        %v1488 = vld [vmem:[#allocation17 + $0x3e0] sm:$0xff]
        %v1489 = vld [vmem:[#allocation17 + $0x3e8] sm:$0xff]
        %v1490 = vld [vmem:[#allocation17 + $0x3f0] sm:$0xff]
        %v1491 = vld [vmem:[#allocation17 + $0x3f8] sm:$0xff]
        %v1492 = vld [vmem:[#allocation19] sm:$0xf]
        %v1494 = vlaneseq
        %v1495 = vshrl.u32 %v1494, 7
        %v1496 = vsub.s32 0, %v1495
        %v1497 = vrot.slane %v1492, %v1496
        %v1498 = vlaneseq
        %v1499 = vshrl.u32 %v1498, 7
        %v1500 = vsub.s32 1, %v1499
        %v1501 = vrot.slane %v1492, %v1500
        %v1502 = vlaneseq
        %v1503 = vshrl.u32 %v1502, 7
        %v1504 = vsub.s32 2, %v1503
        %v1505 = vrot.slane %v1492, %v1504
        %v1506 = vlaneseq
        %v1507 = vshrl.u32 %v1506, 7
        %v1508 = vsub.s32 3, %v1507
        %v1509 = vrot.slane %v1492, %v1508
        %1514 = vmatprep.subr.mxu0 %v1425
        %1515 = vmatpush1.msra.mxu0 %v1424
        %1516 = vmatprep.subr.mxu0 %v1421
        %1517 = vmatpush1.msra.mxu0 %v1420
        %1518 = vmatprep.subr.mxu0 %v1417
        %1519 = vmatpush1.msra.mxu0 %v1416
        %1520 = vmatprep.subr.mxu0 %v1413
        %1521 = vmatpush1.msra.mxu0 %v1412
        %1522 = vmatprep.subr.mxu0 %v1409
        %1523 = vmatpush1.msra.mxu0 %v1408
        %1524 = vmatprep.subr.mxu0 %v1405
        %1525 = vmatpush1.msra.mxu0 %v1404
        %1526 = vmatprep.subr.mxu0 %v1401
        %1527 = vmatpush1.msra.mxu0 %v1400
        %1528 = vmatprep.subr.mxu0 %v1397
        %1529 = vmatpush1.msra.mxu0 %v1396
        %1530 = vmatprep.subr.mxu0 %v1393
        %1531 = vmatpush1.msra.mxu0 %v1392
        %1532 = vmatprep.subr.mxu0 %v1389
        %1533 = vmatpush1.msra.mxu0 %v1388
        %1534 = vmatprep.subr.mxu0 %v1385
        %1535 = vmatpush1.msra.mxu0 %v1384
        %1536 = vmatprep.subr.mxu0 %v1381
        %1537 = vmatpush1.msra.mxu0 %v1380
        %1538 = vmatprep.subr.mxu0 %v1377
        %1539 = vmatpush1.msra.mxu0 %v1376
        %1540 = vmatprep.subr.mxu0 %v1373
        %1541 = vmatpush1.msra.mxu0 %v1372
        %1542 = vmatprep.subr.mxu0 %v1369
        %1543 = vmatpush1.msra.mxu0 %v1368
        %1544 = vmatprep.subr.mxu0 %v1365
        %1545 = vmatpush1.msra.mxu0 %v1364
        %1546 = vmatprep.subr.mxu0 %v1489
        %1547 = vmatpush2.msra.mxu0 %v1488
        %1548 = vmatprep.subr.mxu0 %v1485
        %1549 = vmatpush2.msra.mxu0 %v1484
        %1550 = vmatprep.subr.mxu0 %v1481
        %1551 = vmatpush2.msra.mxu0 %v1480
        %1552 = vmatprep.subr.mxu0 %v1477
        %1553 = vmatpush2.msra.mxu0 %v1476
        %1554 = vmatprep.subr.mxu0 %v1473
        %1555 = vmatpush2.msra.mxu0 %v1472
        %1556 = vmatprep.subr.mxu0 %v1469
        %1557 = vmatpush2.msra.mxu0 %v1468
        %1558 = vmatprep.subr.mxu0 %v1465
        %1559 = vmatpush2.msra.mxu0 %v1464
        %1560 = vmatprep.subr.mxu0 %v1461
        %1561 = vmatpush2.msra.mxu0 %v1460
        %1562 = vmatprep.subr.mxu0 %v1457
        %1563 = vmatpush2.msra.mxu0 %v1456
        %1564 = vmatprep.subr.mxu0 %v1453
        %1565 = vmatpush2.msra.mxu0 %v1452
        %1566 = vmatprep.subr.mxu0 %v1449
        %1567 = vmatpush2.msra.mxu0 %v1448
        %1568 = vmatprep.subr.mxu0 %v1445
        %1569 = vmatpush2.msra.mxu0 %v1444
        %1570 = vmatprep.subr.mxu0 %v1441
        %1571 = vmatpush2.msra.mxu0 %v1440
        %1572 = vmatprep.subr.mxu0 %v1437
        %1573 = vmatpush2.msra.mxu0 %v1436
        %1574 = vmatprep.subr.mxu0 %v1433
        %1575 = vmatpush2.msra.mxu0 %v1432
        %1576 = vmatprep.subr.mxu0 %v1429
        %1577 = vmatpush2.msra.mxu0 %v1428
        %1578 = vmatprep.mubr.f32.mxu0 %v1361
        %1579 = vmatmul.mubr.f32.gmra.mxu0 %v1360
        %v1580 = vpop.f32.mrf.mxu0
        %v1581 = vadd.f32 %v1497, %v1580
        %v1582 = vpop.f32.mrf.mxu0
        %v1583 = vadd.f32 %v1501, %v1582
        %1584 = vmatprep.mubr.f32.mxu0 %v1363
        %1585 = vmatmul.mubr.f32.gmra.mxu0 %v1362
        %v1586 = vpop.f32.mrf.mxu0
        %v1587 = vadd.f32 %v1497, %v1586
        %v1588 = vpop.f32.mrf.mxu0
        %v1589 = vadd.f32 %v1501, %v1588
        %1590 = vdwg.mxu0
        %1591 = vmatprep.subr.mxu0 %v1427
        %1592 = vmatpush1.msra.mxu0 %v1426
        %1593 = vmatprep.subr.mxu0 %v1423
        %1594 = vmatpush1.msra.mxu0 %v1422
        %1595 = vmatprep.subr.mxu0 %v1419
        %1596 = vmatpush1.msra.mxu0 %v1418
        %1597 = vmatprep.subr.mxu0 %v1415
        %1598 = vmatpush1.msra.mxu0 %v1414
        %1599 = vmatprep.subr.mxu0 %v1411
        %1600 = vmatpush1.msra.mxu0 %v1410
        %1601 = vmatprep.subr.mxu0 %v1407
        %1602 = vmatpush1.msra.mxu0 %v1406
        %1603 = vmatprep.subr.mxu0 %v1403
        %1604 = vmatpush1.msra.mxu0 %v1402
        %1605 = vmatprep.subr.mxu0 %v1399
        %1606 = vmatpush1.msra.mxu0 %v1398
        %1607 = vmatprep.subr.mxu0 %v1395
        %1608 = vmatpush1.msra.mxu0 %v1394
        %1609 = vmatprep.subr.mxu0 %v1391
        %1610 = vmatpush1.msra.mxu0 %v1390
        %1611 = vmatprep.subr.mxu0 %v1387
        %1612 = vmatpush1.msra.mxu0 %v1386
        %1613 = vmatprep.subr.mxu0 %v1383
        %1614 = vmatpush1.msra.mxu0 %v1382
        %1615 = vmatprep.subr.mxu0 %v1379
        %1616 = vmatpush1.msra.mxu0 %v1378
        %1617 = vmatprep.subr.mxu0 %v1375
        %1618 = vmatpush1.msra.mxu0 %v1374
        %1619 = vmatprep.subr.mxu0 %v1371
        %1620 = vmatpush1.msra.mxu0 %v1370
        %1621 = vmatprep.subr.mxu0 %v1367
        %1622 = vmatpush1.msra.mxu0 %v1366
        %1623 = vmatprep.subr.mxu0 %v1491
        %1624 = vmatpush2.msra.mxu0 %v1490
        %1625 = vmatprep.subr.mxu0 %v1487
        %1626 = vmatpush2.msra.mxu0 %v1486
        %1627 = vmatprep.subr.mxu0 %v1483
        %1628 = vmatpush2.msra.mxu0 %v1482
        %1629 = vmatprep.subr.mxu0 %v1479
        %1630 = vmatpush2.msra.mxu0 %v1478
        %1631 = vmatprep.subr.mxu0 %v1475
        %1632 = vmatpush2.msra.mxu0 %v1474
        %1633 = vmatprep.subr.mxu0 %v1471
        %1634 = vmatpush2.msra.mxu0 %v1470
        %1635 = vmatprep.subr.mxu0 %v1467
        %1636 = vmatpush2.msra.mxu0 %v1466
        %1637 = vmatprep.subr.mxu0 %v1463
        %1638 = vmatpush2.msra.mxu0 %v1462
        %1639 = vmatprep.subr.mxu0 %v1459
        %1640 = vmatpush2.msra.mxu0 %v1458
        %1641 = vmatprep.subr.mxu0 %v1455
        %1642 = vmatpush2.msra.mxu0 %v1454
        %1643 = vmatprep.subr.mxu0 %v1451
        %1644 = vmatpush2.msra.mxu0 %v1450
        %1645 = vmatprep.subr.mxu0 %v1447
        %1646 = vmatpush2.msra.mxu0 %v1446
        %1647 = vmatprep.subr.mxu0 %v1443
        %1648 = vmatpush2.msra.mxu0 %v1442
        %1649 = vmatprep.subr.mxu0 %v1439
        %1650 = vmatpush2.msra.mxu0 %v1438
        %1651 = vmatprep.subr.mxu0 %v1435
        %1652 = vmatpush2.msra.mxu0 %v1434
        %1653 = vmatprep.subr.mxu0 %v1431
        %1654 = vmatpush2.msra.mxu0 %v1430
        %1655 = vmatprep.mubr.f32.mxu0 %v1361
        %1656 = vmatmul.mubr.f32.gmra.mxu0 %v1360
        %v1657 = vpop.f32.mrf.mxu0
        %v1658 = vadd.f32 %v1505, %v1657
        %v1659 = vpop.f32.mrf.mxu0
        %v1660 = vadd.f32 %v1509, %v1659
        %1661 = vmatprep.mubr.f32.mxu0 %v1363
        %1662 = vmatmul.mubr.f32.gmra.mxu0 %v1362
        %v1663 = vpop.f32.mrf.mxu0
        %v1664 = vadd.f32 %v1505, %v1663
        %v1665 = vpop.f32.mrf.mxu0
        %v1666 = vadd.f32 %v1509, %v1665
        %1667 = vdwg.mxu0
        %v1668 = vrot.slane %v1581, 4
        %v1669 = vadd.f32 %v1581, %v1668
        %v1670 = vrot.slane %v1669, 2
        %v1671 = vadd.f32 %v1669, %v1670
        %v1672 = vrot.slane %v1671, 1
        %v1673 = vadd.f32 %v1671, %v1672
        %v1674 = vrot.slane %v1583, 4
        %v1675 = vadd.f32 %v1583, %v1674
        %v1676 = vrot.slane %v1675, 2
        %v1677 = vadd.f32 %v1675, %v1676
        %v1678 = vrot.slane %v1677, 1
        %v1679 = vadd.f32 %v1677, %v1678
        %v1680 = vrot.slane %v1658, 4
        %v1681 = vadd.f32 %v1658, %v1680
        %v1682 = vrot.slane %v1681, 2
        %v1683 = vadd.f32 %v1681, %v1682
        %v1684 = vrot.slane %v1683, 1
        %v1685 = vadd.f32 %v1683, %v1684
        %v1686 = vrot.slane %v1660, 4
        %v1687 = vadd.f32 %v1660, %v1686
        %v1688 = vrot.slane %v1687, 2
        %v1689 = vadd.f32 %v1687, %v1688
        %v1690 = vrot.slane %v1689, 1
        %v1691 = vadd.f32 %v1689, %v1690
        %v1692 = vrot.slane %v1587, 4
        %v1693 = vadd.f32 %v1587, %v1692
        %v1694 = vrot.slane %v1693, 2
        %v1695 = vadd.f32 %v1693, %v1694
        %v1696 = vrot.slane %v1695, 1
        %v1697 = vadd.f32 %v1695, %v1696
        %v1698 = vrot.slane %v1589, 4
        %v1699 = vadd.f32 %v1589, %v1698
        %v1700 = vrot.slane %v1699, 2
        %v1701 = vadd.f32 %v1699, %v1700
        %v1702 = vrot.slane %v1701, 1
        %v1703 = vadd.f32 %v1701, %v1702
        %v1704 = vrot.slane %v1664, 4
        %v1705 = vadd.f32 %v1664, %v1704
        %v1706 = vrot.slane %v1705, 2
        %v1707 = vadd.f32 %v1705, %v1706
        %v1708 = vrot.slane %v1707, 1
        %v1709 = vadd.f32 %v1707, %v1708
        %v1710 = vrot.slane %v1666, 4
        %v1711 = vadd.f32 %v1666, %v1710
        %v1712 = vrot.slane %v1711, 2
        %v1713 = vadd.f32 %v1711, %v1712
        %v1714 = vrot.slane %v1713, 1
        %v1715 = vadd.f32 %v1713, %v1714
        %v1716 = vmul.f32 %v1673, %v970
        %v1717 = vmul.f32 %v1679, %v970
        %v1718 = vmul.f32 %v1685, %v970
        %v1719 = vmul.f32 %v1691, %v970
        %v1720 = vmul.f32 %v1697, %v970
        %v1721 = vmul.f32 %v1703, %v970
        %v1722 = vmul.f32 %v1709, %v970
        %v1723 = vmul.f32 %v1715, %v970
        %v1724 = vsub.f32 %v1581, %v1716
        %v1725 = vsub.f32 %v1583, %v1717
        %v1726 = vsub.f32 %v1658, %v1718
        %v1727 = vsub.f32 %v1660, %v1719
        %v1728 = vsub.f32 %v1587, %v1720
        %v1729 = vsub.f32 %v1589, %v1721
        %v1730 = vsub.f32 %v1664, %v1722
        %v1731 = vsub.f32 %v1666, %v1723
        %v1732 = vmul.f32 %v1724, %v1724
        %v1733 = vmul.f32 %v1725, %v1725
        %v1734 = vmul.f32 %v1726, %v1726
        %v1735 = vmul.f32 %v1727, %v1727
        %v1736 = vmul.f32 %v1728, %v1728
        %v1737 = vmul.f32 %v1729, %v1729
        %v1738 = vmul.f32 %v1730, %v1730
        %v1739 = vmul.f32 %v1731, %v1731
        %v1740 = vrot.slane %v1732, 4
        %v1741 = vadd.f32 %v1732, %v1740
        %v1742 = vrot.slane %v1741, 2
        %v1743 = vadd.f32 %v1741, %v1742
        %v1744 = vrot.slane %v1743, 1
        %v1745 = vadd.f32 %v1743, %v1744
        %v1746 = vrot.slane %v1733, 4
        %v1747 = vadd.f32 %v1733, %v1746
        %v1748 = vrot.slane %v1747, 2
        %v1749 = vadd.f32 %v1747, %v1748
        %v1750 = vrot.slane %v1749, 1
        %v1751 = vadd.f32 %v1749, %v1750
        %v1752 = vrot.slane %v1734, 4
        %v1753 = vadd.f32 %v1734, %v1752
        %v1754 = vrot.slane %v1753, 2
        %v1755 = vadd.f32 %v1753, %v1754
        %v1756 = vrot.slane %v1755, 1
        %v1757 = vadd.f32 %v1755, %v1756
        %v1758 = vrot.slane %v1735, 4
        %v1759 = vadd.f32 %v1735, %v1758
        %v1760 = vrot.slane %v1759, 2
        %v1761 = vadd.f32 %v1759, %v1760
        %v1762 = vrot.slane %v1761, 1
        %v1763 = vadd.f32 %v1761, %v1762
        %v1764 = vrot.slane %v1736, 4
        %v1765 = vadd.f32 %v1736, %v1764
        %v1766 = vrot.slane %v1765, 2
        %v1767 = vadd.f32 %v1765, %v1766
        %v1768 = vrot.slane %v1767, 1
        %v1769 = vadd.f32 %v1767, %v1768
        %v1770 = vrot.slane %v1737, 4
        %v1771 = vadd.f32 %v1737, %v1770
        %v1772 = vrot.slane %v1771, 2
        %v1773 = vadd.f32 %v1771, %v1772
        %v1774 = vrot.slane %v1773, 1
        %v1775 = vadd.f32 %v1773, %v1774
        %v1776 = vrot.slane %v1738, 4
        %v1777 = vadd.f32 %v1738, %v1776
        %v1778 = vrot.slane %v1777, 2
        %v1779 = vadd.f32 %v1777, %v1778
        %v1780 = vrot.slane %v1779, 1
        %v1781 = vadd.f32 %v1779, %v1780
        %v1782 = vrot.slane %v1739, 4
        %v1783 = vadd.f32 %v1739, %v1782
        %v1784 = vrot.slane %v1783, 2
        %v1785 = vadd.f32 %v1783, %v1784
        %v1786 = vrot.slane %v1785, 1
        %v1787 = vadd.f32 %v1785, %v1786
        %v1788 = vmul.f32 %v1745, %v970
        %v1789 = vmul.f32 %v1751, %v970
        %v1790 = vmul.f32 %v1757, %v970
        %v1791 = vmul.f32 %v1763, %v970
        %v1792 = vmul.f32 %v1769, %v970
        %v1793 = vmul.f32 %v1775, %v970
        %v1794 = vmul.f32 %v1781, %v970
        %v1795 = vmul.f32 %v1787, %v970
        %v1796 = vld [vmem:[#allocation20] sm:$0xf]
        %v1797 = vadd.f32 %v1788, 1e-05
        %v1798 = vadd.f32 %v1789, 1e-05
        %v1799 = vadd.f32 %v1790, 1e-05
        %v1800 = vadd.f32 %v1791, 1e-05
        %v1801 = vadd.f32 %v1792, 1e-05
        %v1802 = vadd.f32 %v1793, 1e-05
        %v1803 = vadd.f32 %v1794, 1e-05
        %v1804 = vadd.f32 %v1795, 1e-05
        %v1805 = vrsqrt.pop %v1797
        %v1806 = vrsqrt.pop %v1798
        %v1807 = vrsqrt.pop %v1799
        %v1808 = vrsqrt.pop %v1800
        %v1809 = vrsqrt.pop %v1801
        %v1810 = vrsqrt.pop %v1802
        %v1811 = vrsqrt.pop %v1803
        %v1812 = vrsqrt.pop %v1804
        %v1821 = vcombine.low %v1805, %v1806
        %v1822 = vcombine.low %v1807, %v1808
        %v1824 = vunpack.c.l.s4 1966171168
        %v1825 = vunpack.c.0.s8 %v1824
        %v1826 = vlaneseq
        %v1827 = vshrl.u32 %v1826, 7
        %v1828 = vsub.s32 %v1825, %v1827
        %v1829 = vrot.slane %v1821, %v1828
        %v1831 = vunpack.c.l.s4 1966171168
        %v1832 = vunpack.c.0.s8 %v1831
        %v1833 = vlaneseq
        %v1834 = vshrl.u32 %v1833, 7
        %v1835 = vsub.s32 %v1832, %v1834
        %v1836 = vrot.slane %v1822, %v1835
        %v1837 = vcombine.low %v1829, %v1836
        %v1839 = vunpack.c.l.s4 1966171168
        %v1840 = vunpack.c.0.s8 %v1839
        %v1841 = vlaneseq
        %v1842 = vshrl.u32 %v1841, 7
        %v1843 = vsub.s32 %v1840, %v1842
        %v1844 = vrot.slane %v1837, %v1843
        %v1845 = vcombine.low %v1809, %v1810
        %v1846 = vcombine.low %v1811, %v1812
        %v1848 = vunpack.c.l.s4 1966171168
        %v1849 = vunpack.c.0.s8 %v1848
        %v1850 = vlaneseq
        %v1851 = vshrl.u32 %v1850, 7
        %v1852 = vsub.s32 %v1849, %v1851
        %v1853 = vrot.slane %v1845, %v1852
        %v1855 = vunpack.c.l.s4 1966171168
        %v1856 = vunpack.c.0.s8 %v1855
        %v1857 = vlaneseq
        %v1858 = vshrl.u32 %v1857, 7
        %v1859 = vsub.s32 %v1856, %v1858
        %v1860 = vrot.slane %v1846, %v1859
        %v1861 = vcombine.low %v1853, %v1860
        %v1863 = vunpack.c.l.s4 1966171168
        %v1864 = vunpack.c.0.s8 %v1863
        %v1865 = vlaneseq
        %v1866 = vshrl.u32 %v1865, 7
        %v1867 = vsub.s32 %v1864, %v1866
        %v1868 = vrot.slane %v1861, %v1867
        %v1871 = vmul.f32 %v1796, %v1844
        %v1872 = vmul.f32 %v1796, %v1868
        %v1873 = vld [vmem:[#allocation22] sm:$0xf]
        %v1876 = vlaneseq
        %v1877 = vshrl.u32 %v1876, 7
        %v1878 = vsub.s32 0, %v1877
        %v1879 = vrot.slane %v1871, %v1878
        %v1880 = vlaneseq
        %v1881 = vshrl.u32 %v1880, 7
        %v1882 = vsub.s32 1, %v1881
        %v1883 = vrot.slane %v1871, %v1882
        %v1884 = vlaneseq
        %v1885 = vshrl.u32 %v1884, 7
        %v1886 = vsub.s32 2, %v1885
        %v1887 = vrot.slane %v1871, %v1886
        %v1888 = vlaneseq
        %v1889 = vshrl.u32 %v1888, 7
        %v1890 = vsub.s32 3, %v1889
        %v1891 = vrot.slane %v1871, %v1890
        %v1892 = vlaneseq
        %v1893 = vshrl.u32 %v1892, 7
        %v1894 = vsub.s32 0, %v1893
        %v1895 = vrot.slane %v1872, %v1894
        %v1896 = vlaneseq
        %v1897 = vshrl.u32 %v1896, 7
        %v1898 = vsub.s32 1, %v1897
        %v1899 = vrot.slane %v1872, %v1898
        %v1900 = vlaneseq
        %v1901 = vshrl.u32 %v1900, 7
        %v1902 = vsub.s32 2, %v1901
        %v1903 = vrot.slane %v1872, %v1902
        %v1904 = vlaneseq
        %v1905 = vshrl.u32 %v1904, 7
        %v1906 = vsub.s32 3, %v1905
        %v1907 = vrot.slane %v1872, %v1906
        %v1916 = vmul.f32 %v1716, %v1879
        %v1917 = vmul.f32 %v1717, %v1883
        %v1918 = vmul.f32 %v1718, %v1887
        %v1919 = vmul.f32 %v1719, %v1891
        %v1920 = vmul.f32 %v1720, %v1895
        %v1921 = vmul.f32 %v1721, %v1899
        %v1922 = vmul.f32 %v1722, %v1903
        %v1923 = vmul.f32 %v1723, %v1907
        %v1932 = vcombine.low %v1916, %v1917
        %v1933 = vcombine.low %v1918, %v1919
        %v1935 = vunpack.c.l.s4 1966171168
        %v1936 = vunpack.c.0.s8 %v1935
        %v1937 = vlaneseq
        %v1938 = vshrl.u32 %v1937, 7
        %v1939 = vsub.s32 %v1936, %v1938
        %v1940 = vrot.slane %v1932, %v1939
        %v1942 = vunpack.c.l.s4 1966171168
        %v1943 = vunpack.c.0.s8 %v1942
        %v1944 = vlaneseq
        %v1945 = vshrl.u32 %v1944, 7
        %v1946 = vsub.s32 %v1943, %v1945
        %v1947 = vrot.slane %v1933, %v1946
        %v1948 = vcombine.low %v1940, %v1947
        %v1950 = vunpack.c.l.s4 1966171168
        %v1951 = vunpack.c.0.s8 %v1950
        %v1952 = vlaneseq
        %v1953 = vshrl.u32 %v1952, 7
        %v1954 = vsub.s32 %v1951, %v1953
        %v1955 = vrot.slane %v1948, %v1954
        %v1956 = vcombine.low %v1920, %v1921
        %v1957 = vcombine.low %v1922, %v1923
        %v1959 = vunpack.c.l.s4 1966171168
        %v1960 = vunpack.c.0.s8 %v1959
        %v1961 = vlaneseq
        %v1962 = vshrl.u32 %v1961, 7
        %v1963 = vsub.s32 %v1960, %v1962
        %v1964 = vrot.slane %v1956, %v1963
        %v1966 = vunpack.c.l.s4 1966171168
        %v1967 = vunpack.c.0.s8 %v1966
        %v1968 = vlaneseq
        %v1969 = vshrl.u32 %v1968, 7
        %v1970 = vsub.s32 %v1967, %v1969
        %v1971 = vrot.slane %v1957, %v1970
        %v1972 = vcombine.low %v1964, %v1971
        %v1974 = vunpack.c.l.s4 1966171168
        %v1975 = vunpack.c.0.s8 %v1974
        %v1976 = vlaneseq
        %v1977 = vshrl.u32 %v1976, 7
        %v1978 = vsub.s32 %v1975, %v1977
        %v1979 = vrot.slane %v1972, %v1978
        %v1982 = vsub.f32 %v1873, %v1955
        %v1983 = vsub.f32 %v1873, %v1979
        %v1984 = vmul.f32 %v1581, %v1879
        %v1985 = vmul.f32 %v1583, %v1883
        %v1986 = vmul.f32 %v1658, %v1887
        %v1987 = vmul.f32 %v1660, %v1891
        %v1988 = vmul.f32 %v1587, %v1895
        %v1989 = vmul.f32 %v1589, %v1899
        %v1990 = vmul.f32 %v1664, %v1903
        %v1991 = vmul.f32 %v1666, %v1907
        %v1994 = vlaneseq
        %v1995 = vshrl.u32 %v1994, 7
        %v1996 = vsub.s32 0, %v1995
        %v1997 = vrot.slane %v1982, %v1996
        %v1998 = vlaneseq
        %v1999 = vshrl.u32 %v1998, 7
        %v2000 = vsub.s32 1, %v1999
        %v2001 = vrot.slane %v1982, %v2000
        %v2002 = vlaneseq
        %v2003 = vshrl.u32 %v2002, 7
        %v2004 = vsub.s32 2, %v2003
        %v2005 = vrot.slane %v1982, %v2004
        %v2006 = vlaneseq
        %v2007 = vshrl.u32 %v2006, 7
        %v2008 = vsub.s32 3, %v2007
        %v2009 = vrot.slane %v1982, %v2008
        %v2010 = vlaneseq
        %v2011 = vshrl.u32 %v2010, 7
        %v2012 = vsub.s32 0, %v2011
        %v2013 = vrot.slane %v1983, %v2012
        %v2014 = vlaneseq
        %v2015 = vshrl.u32 %v2014, 7
        %v2016 = vsub.s32 1, %v2015
        %v2017 = vrot.slane %v1983, %v2016
        %v2018 = vlaneseq
        %v2019 = vshrl.u32 %v2018, 7
        %v2020 = vsub.s32 2, %v2019
        %v2021 = vrot.slane %v1983, %v2020
        %v2022 = vlaneseq
        %v2023 = vshrl.u32 %v2022, 7
        %v2024 = vsub.s32 3, %v2023
        %v2025 = vrot.slane %v1983, %v2024
        %v2034 = vadd.f32 %v1984, %v1997
        %v2035 = vadd.f32 %v1985, %v2001
        %v2036 = vadd.f32 %v1986, %v2005
        %v2037 = vadd.f32 %v1987, %v2009
        %v2038 = vadd.f32 %v1988, %v2013
        %v2039 = vadd.f32 %v1989, %v2017
        %v2040 = vadd.f32 %v1990, %v2021
        %v2041 = vadd.f32 %v1991, %v2025
        %v2042 = vmax.f32 %v2034, 0.0
        %v2043 = vmax.f32 %v2035, 0.0
        %v2044 = vmax.f32 %v2036, 0.0
        %v2045 = vmax.f32 %v2037, 0.0
        %v2046 = vmax.f32 %v2038, 0.0
        %v2047 = vmax.f32 %v2039, 0.0
        %v2048 = vmax.f32 %v2040, 0.0
        %v2049 = vmax.f32 %v2041, 0.0
        %v2050 = vld [vmem:[#allocation23] sm:$0xff]
        %v2051 = vld [vmem:[#allocation23 + $0x8] sm:$0xff]
        %v2052 = vld [vmem:[#allocation23 + $0x10] sm:$0xff]
        %v2053 = vld [vmem:[#allocation23 + $0x18] sm:$0xff]
        %v2054 = vld [vmem:[#allocation23 + $0x20] sm:$0xff]
        %v2055 = vld [vmem:[#allocation23 + $0x28] sm:$0xff]
        %v2056 = vld [vmem:[#allocation23 + $0x30] sm:$0xff]
        %v2057 = vld [vmem:[#allocation23 + $0x38] sm:$0xff]
        %v2058 = vld [vmem:[#allocation23 + $0x40] sm:$0xff]
        %v2059 = vld [vmem:[#allocation23 + $0x48] sm:$0xff]
        %v2060 = vld [vmem:[#allocation23 + $0x50] sm:$0xff]
        %v2061 = vld [vmem:[#allocation23 + $0x58] sm:$0xff]
        %v2062 = vld [vmem:[#allocation23 + $0x60] sm:$0xff]
        %v2063 = vld [vmem:[#allocation23 + $0x68] sm:$0xff]
        %v2064 = vld [vmem:[#allocation23 + $0x70] sm:$0xff]
        %v2065 = vld [vmem:[#allocation23 + $0x78] sm:$0xff]
        %v2066 = vld [vmem:[#allocation23 + $0x80] sm:$0xff]
        %v2067 = vld [vmem:[#allocation23 + $0x88] sm:$0xff]
        %v2068 = vld [vmem:[#allocation23 + $0x90] sm:$0xff]
        %v2069 = vld [vmem:[#allocation23 + $0x98] sm:$0xff]
        %v2070 = vld [vmem:[#allocation23 + $0xa0] sm:$0xff]
        %v2071 = vld [vmem:[#allocation23 + $0xa8] sm:$0xff]
        %v2072 = vld [vmem:[#allocation23 + $0xb0] sm:$0xff]
        %v2073 = vld [vmem:[#allocation23 + $0xb8] sm:$0xff]
        %v2074 = vld [vmem:[#allocation23 + $0xc0] sm:$0xff]
        %v2075 = vld [vmem:[#allocation23 + $0xc8] sm:$0xff]
        %v2076 = vld [vmem:[#allocation23 + $0xd0] sm:$0xff]
        %v2077 = vld [vmem:[#allocation23 + $0xd8] sm:$0xff]
        %v2078 = vld [vmem:[#allocation23 + $0xe0] sm:$0xff]
        %v2079 = vld [vmem:[#allocation23 + $0xe8] sm:$0xff]
        %v2080 = vld [vmem:[#allocation23 + $0xf0] sm:$0xff]
        %v2081 = vld [vmem:[#allocation23 + $0xf8] sm:$0xff]
        %v2082 = vld [vmem:[#allocation23 + $0x100] sm:$0xff]
        %v2083 = vld [vmem:[#allocation23 + $0x108] sm:$0xff]
        %v2084 = vld [vmem:[#allocation23 + $0x110] sm:$0xff]
        %v2085 = vld [vmem:[#allocation23 + $0x118] sm:$0xff]
        %v2086 = vld [vmem:[#allocation23 + $0x120] sm:$0xff]
        %v2087 = vld [vmem:[#allocation23 + $0x128] sm:$0xff]
        %v2088 = vld [vmem:[#allocation23 + $0x130] sm:$0xff]
        %v2089 = vld [vmem:[#allocation23 + $0x138] sm:$0xff]
        %v2090 = vld [vmem:[#allocation23 + $0x140] sm:$0xff]
        %v2091 = vld [vmem:[#allocation23 + $0x148] sm:$0xff]
        %v2092 = vld [vmem:[#allocation23 + $0x150] sm:$0xff]
        %v2093 = vld [vmem:[#allocation23 + $0x158] sm:$0xff]
        %v2094 = vld [vmem:[#allocation23 + $0x160] sm:$0xff]
        %v2095 = vld [vmem:[#allocation23 + $0x168] sm:$0xff]
        %v2096 = vld [vmem:[#allocation23 + $0x170] sm:$0xff]
        %v2097 = vld [vmem:[#allocation23 + $0x178] sm:$0xff]
        %v2098 = vld [vmem:[#allocation23 + $0x180] sm:$0xff]
        %v2099 = vld [vmem:[#allocation23 + $0x188] sm:$0xff]
        %v2100 = vld [vmem:[#allocation23 + $0x190] sm:$0xff]
        %v2101 = vld [vmem:[#allocation23 + $0x198] sm:$0xff]
        %v2102 = vld [vmem:[#allocation23 + $0x1a0] sm:$0xff]
        %v2103 = vld [vmem:[#allocation23 + $0x1a8] sm:$0xff]
        %v2104 = vld [vmem:[#allocation23 + $0x1b0] sm:$0xff]
        %v2105 = vld [vmem:[#allocation23 + $0x1b8] sm:$0xff]
        %v2106 = vld [vmem:[#allocation23 + $0x1c0] sm:$0xff]
        %v2107 = vld [vmem:[#allocation23 + $0x1c8] sm:$0xff]
        %v2108 = vld [vmem:[#allocation23 + $0x1d0] sm:$0xff]
        %v2109 = vld [vmem:[#allocation23 + $0x1d8] sm:$0xff]
        %v2110 = vld [vmem:[#allocation23 + $0x1e0] sm:$0xff]
        %v2111 = vld [vmem:[#allocation23 + $0x1e8] sm:$0xff]
        %v2112 = vld [vmem:[#allocation23 + $0x1f0] sm:$0xff]
        %v2113 = vld [vmem:[#allocation23 + $0x1f8] sm:$0xff]
        %v2114 = vld [vmem:[#allocation23 + $0x200] sm:$0xff]
        %v2115 = vld [vmem:[#allocation23 + $0x208] sm:$0xff]
        %v2116 = vld [vmem:[#allocation23 + $0x210] sm:$0xff]
        %v2117 = vld [vmem:[#allocation23 + $0x218] sm:$0xff]
        %v2118 = vld [vmem:[#allocation23 + $0x220] sm:$0xff]
        %v2119 = vld [vmem:[#allocation23 + $0x228] sm:$0xff]
        %v2120 = vld [vmem:[#allocation23 + $0x230] sm:$0xff]
        %v2121 = vld [vmem:[#allocation23 + $0x238] sm:$0xff]
        %v2122 = vld [vmem:[#allocation23 + $0x240] sm:$0xff]
        %v2123 = vld [vmem:[#allocation23 + $0x248] sm:$0xff]
        %v2124 = vld [vmem:[#allocation23 + $0x250] sm:$0xff]
        %v2125 = vld [vmem:[#allocation23 + $0x258] sm:$0xff]
        %v2126 = vld [vmem:[#allocation23 + $0x260] sm:$0xff]
        %v2127 = vld [vmem:[#allocation23 + $0x268] sm:$0xff]
        %v2128 = vld [vmem:[#allocation23 + $0x270] sm:$0xff]
        %v2129 = vld [vmem:[#allocation23 + $0x278] sm:$0xff]
        %v2130 = vld [vmem:[#allocation23 + $0x280] sm:$0xff]
        %v2131 = vld [vmem:[#allocation23 + $0x288] sm:$0xff]
        %v2132 = vld [vmem:[#allocation23 + $0x290] sm:$0xff]
        %v2133 = vld [vmem:[#allocation23 + $0x298] sm:$0xff]
        %v2134 = vld [vmem:[#allocation23 + $0x2a0] sm:$0xff]
        %v2135 = vld [vmem:[#allocation23 + $0x2a8] sm:$0xff]
        %v2136 = vld [vmem:[#allocation23 + $0x2b0] sm:$0xff]
        %v2137 = vld [vmem:[#allocation23 + $0x2b8] sm:$0xff]
        %v2138 = vld [vmem:[#allocation23 + $0x2c0] sm:$0xff]
        %v2139 = vld [vmem:[#allocation23 + $0x2c8] sm:$0xff]
        %v2140 = vld [vmem:[#allocation23 + $0x2d0] sm:$0xff]
        %v2141 = vld [vmem:[#allocation23 + $0x2d8] sm:$0xff]
        %v2142 = vld [vmem:[#allocation23 + $0x2e0] sm:$0xff]
        %v2143 = vld [vmem:[#allocation23 + $0x2e8] sm:$0xff]
        %v2144 = vld [vmem:[#allocation23 + $0x2f0] sm:$0xff]
        %v2145 = vld [vmem:[#allocation23 + $0x2f8] sm:$0xff]
        %v2146 = vld [vmem:[#allocation23 + $0x300] sm:$0xff]
        %v2147 = vld [vmem:[#allocation23 + $0x308] sm:$0xff]
        %v2148 = vld [vmem:[#allocation23 + $0x310] sm:$0xff]
        %v2149 = vld [vmem:[#allocation23 + $0x318] sm:$0xff]
        %v2150 = vld [vmem:[#allocation23 + $0x320] sm:$0xff]
        %v2151 = vld [vmem:[#allocation23 + $0x328] sm:$0xff]
        %v2152 = vld [vmem:[#allocation23 + $0x330] sm:$0xff]
        %v2153 = vld [vmem:[#allocation23 + $0x338] sm:$0xff]
        %v2154 = vld [vmem:[#allocation23 + $0x340] sm:$0xff]
        %v2155 = vld [vmem:[#allocation23 + $0x348] sm:$0xff]
        %v2156 = vld [vmem:[#allocation23 + $0x350] sm:$0xff]
        %v2157 = vld [vmem:[#allocation23 + $0x358] sm:$0xff]
        %v2158 = vld [vmem:[#allocation23 + $0x360] sm:$0xff]
        %v2159 = vld [vmem:[#allocation23 + $0x368] sm:$0xff]
        %v2160 = vld [vmem:[#allocation23 + $0x370] sm:$0xff]
        %v2161 = vld [vmem:[#allocation23 + $0x378] sm:$0xff]
        %v2162 = vld [vmem:[#allocation23 + $0x380] sm:$0xff]
        %v2163 = vld [vmem:[#allocation23 + $0x388] sm:$0xff]
        %v2164 = vld [vmem:[#allocation23 + $0x390] sm:$0xff]
        %v2165 = vld [vmem:[#allocation23 + $0x398] sm:$0xff]
        %v2166 = vld [vmem:[#allocation23 + $0x3a0] sm:$0xff]
        %v2167 = vld [vmem:[#allocation23 + $0x3a8] sm:$0xff]
        %v2168 = vld [vmem:[#allocation23 + $0x3b0] sm:$0xff]
        %v2169 = vld [vmem:[#allocation23 + $0x3b8] sm:$0xff]
        %v2170 = vld [vmem:[#allocation23 + $0x3c0] sm:$0xff]
        %v2171 = vld [vmem:[#allocation23 + $0x3c8] sm:$0xff]
        %v2172 = vld [vmem:[#allocation23 + $0x3d0] sm:$0xff]
        %v2173 = vld [vmem:[#allocation23 + $0x3d8] sm:$0xff]
        %v2174 = vld [vmem:[#allocation23 + $0x3e0] sm:$0xff]
        %v2175 = vld [vmem:[#allocation23 + $0x3e8] sm:$0xff]
        %v2176 = vld [vmem:[#allocation23 + $0x3f0] sm:$0xff]
        %v2177 = vld [vmem:[#allocation23 + $0x3f8] sm:$0xff]
        %v2178 = vld [vmem:[#allocation23 + $0x400] sm:$0xff]
        %v2179 = vld [vmem:[#allocation23 + $0x408] sm:$0xff]
        %v2180 = vld [vmem:[#allocation23 + $0x410] sm:$0xff]
        %v2181 = vld [vmem:[#allocation23 + $0x418] sm:$0xff]
        %v2182 = vld [vmem:[#allocation23 + $0x420] sm:$0xff]
        %v2183 = vld [vmem:[#allocation23 + $0x428] sm:$0xff]
        %v2184 = vld [vmem:[#allocation23 + $0x430] sm:$0xff]
        %v2185 = vld [vmem:[#allocation23 + $0x438] sm:$0xff]
        %v2186 = vld [vmem:[#allocation23 + $0x440] sm:$0xff]
        %v2187 = vld [vmem:[#allocation23 + $0x448] sm:$0xff]
        %v2188 = vld [vmem:[#allocation23 + $0x450] sm:$0xff]
        %v2189 = vld [vmem:[#allocation23 + $0x458] sm:$0xff]
        %v2190 = vld [vmem:[#allocation23 + $0x460] sm:$0xff]
        %v2191 = vld [vmem:[#allocation23 + $0x468] sm:$0xff]
        %v2192 = vld [vmem:[#allocation23 + $0x470] sm:$0xff]
        %v2193 = vld [vmem:[#allocation23 + $0x478] sm:$0xff]
        %v2194 = vld [vmem:[#allocation23 + $0x480] sm:$0xff]
        %v2195 = vld [vmem:[#allocation23 + $0x488] sm:$0xff]
        %v2196 = vld [vmem:[#allocation23 + $0x490] sm:$0xff]
        %v2197 = vld [vmem:[#allocation23 + $0x498] sm:$0xff]
        %v2198 = vld [vmem:[#allocation23 + $0x4a0] sm:$0xff]
        %v2199 = vld [vmem:[#allocation23 + $0x4a8] sm:$0xff]
        %v2200 = vld [vmem:[#allocation23 + $0x4b0] sm:$0xff]
        %v2201 = vld [vmem:[#allocation23 + $0x4b8] sm:$0xff]
        %v2202 = vld [vmem:[#allocation23 + $0x4c0] sm:$0xff]
        %v2203 = vld [vmem:[#allocation23 + $0x4c8] sm:$0xff]
        %v2204 = vld [vmem:[#allocation23 + $0x4d0] sm:$0xff]
        %v2205 = vld [vmem:[#allocation23 + $0x4d8] sm:$0xff]
        %v2206 = vld [vmem:[#allocation23 + $0x4e0] sm:$0xff]
        %v2207 = vld [vmem:[#allocation23 + $0x4e8] sm:$0xff]
        %v2208 = vld [vmem:[#allocation23 + $0x4f0] sm:$0xff]
        %v2209 = vld [vmem:[#allocation23 + $0x4f8] sm:$0xff]
        %v2210 = vld [vmem:[#allocation23 + $0x500] sm:$0xff]
        %v2211 = vld [vmem:[#allocation23 + $0x508] sm:$0xff]
        %v2212 = vld [vmem:[#allocation23 + $0x510] sm:$0xff]
        %v2213 = vld [vmem:[#allocation23 + $0x518] sm:$0xff]
        %v2214 = vld [vmem:[#allocation23 + $0x520] sm:$0xff]
        %v2215 = vld [vmem:[#allocation23 + $0x528] sm:$0xff]
        %v2216 = vld [vmem:[#allocation23 + $0x530] sm:$0xff]
        %v2217 = vld [vmem:[#allocation23 + $0x538] sm:$0xff]
        %v2218 = vld [vmem:[#allocation23 + $0x540] sm:$0xff]
        %v2219 = vld [vmem:[#allocation23 + $0x548] sm:$0xff]
        %v2220 = vld [vmem:[#allocation23 + $0x550] sm:$0xff]
        %v2221 = vld [vmem:[#allocation23 + $0x558] sm:$0xff]
        %v2222 = vld [vmem:[#allocation23 + $0x560] sm:$0xff]
        %v2223 = vld [vmem:[#allocation23 + $0x568] sm:$0xff]
        %v2224 = vld [vmem:[#allocation23 + $0x570] sm:$0xff]
        %v2225 = vld [vmem:[#allocation23 + $0x578] sm:$0xff]
        %v2226 = vld [vmem:[#allocation23 + $0x580] sm:$0xff]
        %v2227 = vld [vmem:[#allocation23 + $0x588] sm:$0xff]
        %v2228 = vld [vmem:[#allocation23 + $0x590] sm:$0xff]
        %v2229 = vld [vmem:[#allocation23 + $0x598] sm:$0xff]
        %v2230 = vld [vmem:[#allocation23 + $0x5a0] sm:$0xff]
        %v2231 = vld [vmem:[#allocation23 + $0x5a8] sm:$0xff]
        %v2232 = vld [vmem:[#allocation23 + $0x5b0] sm:$0xff]
        %v2233 = vld [vmem:[#allocation23 + $0x5b8] sm:$0xff]
        %v2234 = vld [vmem:[#allocation23 + $0x5c0] sm:$0xff]
        %v2235 = vld [vmem:[#allocation23 + $0x5c8] sm:$0xff]
        %v2236 = vld [vmem:[#allocation23 + $0x5d0] sm:$0xff]
        %v2237 = vld [vmem:[#allocation23 + $0x5d8] sm:$0xff]
        %v2238 = vld [vmem:[#allocation23 + $0x5e0] sm:$0xff]
        %v2239 = vld [vmem:[#allocation23 + $0x5e8] sm:$0xff]
        %v2240 = vld [vmem:[#allocation23 + $0x5f0] sm:$0xff]
        %v2241 = vld [vmem:[#allocation23 + $0x5f8] sm:$0xff]
        %v2242 = vld [vmem:[#allocation23 + $0x600] sm:$0xff]
        %v2243 = vld [vmem:[#allocation23 + $0x608] sm:$0xff]
        %v2244 = vld [vmem:[#allocation23 + $0x610] sm:$0xff]
        %v2245 = vld [vmem:[#allocation23 + $0x618] sm:$0xff]
        %v2246 = vld [vmem:[#allocation23 + $0x620] sm:$0xff]
        %v2247 = vld [vmem:[#allocation23 + $0x628] sm:$0xff]
        %v2248 = vld [vmem:[#allocation23 + $0x630] sm:$0xff]
        %v2249 = vld [vmem:[#allocation23 + $0x638] sm:$0xff]
        %v2250 = vld [vmem:[#allocation23 + $0x640] sm:$0xff]
        %v2251 = vld [vmem:[#allocation23 + $0x648] sm:$0xff]
        %v2252 = vld [vmem:[#allocation23 + $0x650] sm:$0xff]
        %v2253 = vld [vmem:[#allocation23 + $0x658] sm:$0xff]
        %v2254 = vld [vmem:[#allocation23 + $0x660] sm:$0xff]
        %v2255 = vld [vmem:[#allocation23 + $0x668] sm:$0xff]
        %v2256 = vld [vmem:[#allocation23 + $0x670] sm:$0xff]
        %v2257 = vld [vmem:[#allocation23 + $0x678] sm:$0xff]
        %v2258 = vld [vmem:[#allocation23 + $0x680] sm:$0xff]
        %v2259 = vld [vmem:[#allocation23 + $0x688] sm:$0xff]
        %v2260 = vld [vmem:[#allocation23 + $0x690] sm:$0xff]
        %v2261 = vld [vmem:[#allocation23 + $0x698] sm:$0xff]
        %v2262 = vld [vmem:[#allocation23 + $0x6a0] sm:$0xff]
        %v2263 = vld [vmem:[#allocation23 + $0x6a8] sm:$0xff]
        %v2264 = vld [vmem:[#allocation23 + $0x6b0] sm:$0xff]
        %v2265 = vld [vmem:[#allocation23 + $0x6b8] sm:$0xff]
        %v2266 = vld [vmem:[#allocation23 + $0x6c0] sm:$0xff]
        %v2267 = vld [vmem:[#allocation23 + $0x6c8] sm:$0xff]
        %v2268 = vld [vmem:[#allocation23 + $0x6d0] sm:$0xff]
        %v2269 = vld [vmem:[#allocation23 + $0x6d8] sm:$0xff]
        %v2270 = vld [vmem:[#allocation23 + $0x6e0] sm:$0xff]
        %v2271 = vld [vmem:[#allocation23 + $0x6e8] sm:$0xff]
        %v2272 = vld [vmem:[#allocation23 + $0x6f0] sm:$0xff]
        %v2273 = vld [vmem:[#allocation23 + $0x6f8] sm:$0xff]
        %v2274 = vld [vmem:[#allocation23 + $0x700] sm:$0xff]
        %v2275 = vld [vmem:[#allocation23 + $0x708] sm:$0xff]
        %v2276 = vld [vmem:[#allocation23 + $0x710] sm:$0xff]
        %v2277 = vld [vmem:[#allocation23 + $0x718] sm:$0xff]
        %v2278 = vld [vmem:[#allocation23 + $0x720] sm:$0xff]
        %v2279 = vld [vmem:[#allocation23 + $0x728] sm:$0xff]
        %v2280 = vld [vmem:[#allocation23 + $0x730] sm:$0xff]
        %v2281 = vld [vmem:[#allocation23 + $0x738] sm:$0xff]
        %v2282 = vld [vmem:[#allocation23 + $0x740] sm:$0xff]
        %v2283 = vld [vmem:[#allocation23 + $0x748] sm:$0xff]
        %v2284 = vld [vmem:[#allocation23 + $0x750] sm:$0xff]
        %v2285 = vld [vmem:[#allocation23 + $0x758] sm:$0xff]
        %v2286 = vld [vmem:[#allocation23 + $0x760] sm:$0xff]
        %v2287 = vld [vmem:[#allocation23 + $0x768] sm:$0xff]
        %v2288 = vld [vmem:[#allocation23 + $0x770] sm:$0xff]
        %v2289 = vld [vmem:[#allocation23 + $0x778] sm:$0xff]
        %v2290 = vld [vmem:[#allocation23 + $0x780] sm:$0xff]
        %v2291 = vld [vmem:[#allocation23 + $0x788] sm:$0xff]
        %v2292 = vld [vmem:[#allocation23 + $0x790] sm:$0xff]
        %v2293 = vld [vmem:[#allocation23 + $0x798] sm:$0xff]
        %v2294 = vld [vmem:[#allocation23 + $0x7a0] sm:$0xff]
        %v2295 = vld [vmem:[#allocation23 + $0x7a8] sm:$0xff]
        %v2296 = vld [vmem:[#allocation23 + $0x7b0] sm:$0xff]
        %v2297 = vld [vmem:[#allocation23 + $0x7b8] sm:$0xff]
        %v2298 = vld [vmem:[#allocation23 + $0x7c0] sm:$0xff]
        %v2299 = vld [vmem:[#allocation23 + $0x7c8] sm:$0xff]
        %v2300 = vld [vmem:[#allocation23 + $0x7d0] sm:$0xff]
        %v2301 = vld [vmem:[#allocation23 + $0x7d8] sm:$0xff]
        %v2302 = vld [vmem:[#allocation23 + $0x7e0] sm:$0xff]
        %v2303 = vld [vmem:[#allocation23 + $0x7e8] sm:$0xff]
        %v2304 = vld [vmem:[#allocation23 + $0x7f0] sm:$0xff]
        %v2305 = vld [vmem:[#allocation23 + $0x7f8] sm:$0xff]
        %v2306 = vld [vmem:[#allocation23 + $0x800] sm:$0xff]
        %v2307 = vld [vmem:[#allocation23 + $0x808] sm:$0xff]
        %v2308 = vld [vmem:[#allocation23 + $0x810] sm:$0xff]
        %v2309 = vld [vmem:[#allocation23 + $0x818] sm:$0xff]
        %v2310 = vld [vmem:[#allocation23 + $0x820] sm:$0xff]
        %v2311 = vld [vmem:[#allocation23 + $0x828] sm:$0xff]
        %v2312 = vld [vmem:[#allocation23 + $0x830] sm:$0xff]
        %v2313 = vld [vmem:[#allocation23 + $0x838] sm:$0xff]
        %v2314 = vld [vmem:[#allocation23 + $0x840] sm:$0xff]
        %v2315 = vld [vmem:[#allocation23 + $0x848] sm:$0xff]
        %v2316 = vld [vmem:[#allocation23 + $0x850] sm:$0xff]
        %v2317 = vld [vmem:[#allocation23 + $0x858] sm:$0xff]
        %v2318 = vld [vmem:[#allocation23 + $0x860] sm:$0xff]
        %v2319 = vld [vmem:[#allocation23 + $0x868] sm:$0xff]
        %v2320 = vld [vmem:[#allocation23 + $0x870] sm:$0xff]
        %v2321 = vld [vmem:[#allocation23 + $0x878] sm:$0xff]
        %v2322 = vld [vmem:[#allocation23 + $0x880] sm:$0xff]
        %v2323 = vld [vmem:[#allocation23 + $0x888] sm:$0xff]
        %v2324 = vld [vmem:[#allocation23 + $0x890] sm:$0xff]
        %v2325 = vld [vmem:[#allocation23 + $0x898] sm:$0xff]
        %v2326 = vld [vmem:[#allocation23 + $0x8a0] sm:$0xff]
        %v2327 = vld [vmem:[#allocation23 + $0x8a8] sm:$0xff]
        %v2328 = vld [vmem:[#allocation23 + $0x8b0] sm:$0xff]
        %v2329 = vld [vmem:[#allocation23 + $0x8b8] sm:$0xff]
        %v2330 = vld [vmem:[#allocation23 + $0x8c0] sm:$0xff]
        %v2331 = vld [vmem:[#allocation23 + $0x8c8] sm:$0xff]
        %v2332 = vld [vmem:[#allocation23 + $0x8d0] sm:$0xff]
        %v2333 = vld [vmem:[#allocation23 + $0x8d8] sm:$0xff]
        %v2334 = vld [vmem:[#allocation23 + $0x8e0] sm:$0xff]
        %v2335 = vld [vmem:[#allocation23 + $0x8e8] sm:$0xff]
        %v2336 = vld [vmem:[#allocation23 + $0x8f0] sm:$0xff]
        %v2337 = vld [vmem:[#allocation23 + $0x8f8] sm:$0xff]
        %v2338 = vld [vmem:[#allocation23 + $0x900] sm:$0xff]
        %v2339 = vld [vmem:[#allocation23 + $0x908] sm:$0xff]
        %v2340 = vld [vmem:[#allocation23 + $0x910] sm:$0xff]
        %v2341 = vld [vmem:[#allocation23 + $0x918] sm:$0xff]
        %v2342 = vld [vmem:[#allocation23 + $0x920] sm:$0xff]
        %v2343 = vld [vmem:[#allocation23 + $0x928] sm:$0xff]
        %v2344 = vld [vmem:[#allocation23 + $0x930] sm:$0xff]
        %v2345 = vld [vmem:[#allocation23 + $0x938] sm:$0xff]
        %v2346 = vld [vmem:[#allocation23 + $0x940] sm:$0xff]
        %v2347 = vld [vmem:[#allocation23 + $0x948] sm:$0xff]
        %v2348 = vld [vmem:[#allocation23 + $0x950] sm:$0xff]
        %v2349 = vld [vmem:[#allocation23 + $0x958] sm:$0xff]
        %v2350 = vld [vmem:[#allocation23 + $0x960] sm:$0xff]
        %v2351 = vld [vmem:[#allocation23 + $0x968] sm:$0xff]
        %v2352 = vld [vmem:[#allocation23 + $0x970] sm:$0xff]
        %v2353 = vld [vmem:[#allocation23 + $0x978] sm:$0xff]
        %v2354 = vld [vmem:[#allocation23 + $0x980] sm:$0xff]
        %v2355 = vld [vmem:[#allocation23 + $0x988] sm:$0xff]
        %v2356 = vld [vmem:[#allocation23 + $0x990] sm:$0xff]
        %v2357 = vld [vmem:[#allocation23 + $0x998] sm:$0xff]
        %v2358 = vld [vmem:[#allocation23 + $0x9a0] sm:$0xff]
        %v2359 = vld [vmem:[#allocation23 + $0x9a8] sm:$0xff]
        %v2360 = vld [vmem:[#allocation23 + $0x9b0] sm:$0xff]
        %v2361 = vld [vmem:[#allocation23 + $0x9b8] sm:$0xff]
        %v2362 = vld [vmem:[#allocation23 + $0x9c0] sm:$0xff]
        %v2363 = vld [vmem:[#allocation23 + $0x9c8] sm:$0xff]
        %v2364 = vld [vmem:[#allocation23 + $0x9d0] sm:$0xff]
        %v2365 = vld [vmem:[#allocation23 + $0x9d8] sm:$0xff]
        %v2366 = vld [vmem:[#allocation23 + $0x9e0] sm:$0xff]
        %v2367 = vld [vmem:[#allocation23 + $0x9e8] sm:$0xff]
        %v2368 = vld [vmem:[#allocation23 + $0x9f0] sm:$0xff]
        %v2369 = vld [vmem:[#allocation23 + $0x9f8] sm:$0xff]
        %v2370 = vld [vmem:[#allocation23 + $0xa00] sm:$0xff]
        %v2371 = vld [vmem:[#allocation23 + $0xa08] sm:$0xff]
        %v2372 = vld [vmem:[#allocation23 + $0xa10] sm:$0xff]
        %v2373 = vld [vmem:[#allocation23 + $0xa18] sm:$0xff]
        %v2374 = vld [vmem:[#allocation23 + $0xa20] sm:$0xff]
        %v2375 = vld [vmem:[#allocation23 + $0xa28] sm:$0xff]
        %v2376 = vld [vmem:[#allocation23 + $0xa30] sm:$0xff]
        %v2377 = vld [vmem:[#allocation23 + $0xa38] sm:$0xff]
        %v2378 = vld [vmem:[#allocation23 + $0xa40] sm:$0xff]
        %v2379 = vld [vmem:[#allocation23 + $0xa48] sm:$0xff]
        %v2380 = vld [vmem:[#allocation23 + $0xa50] sm:$0xff]
        %v2381 = vld [vmem:[#allocation23 + $0xa58] sm:$0xff]
        %v2382 = vld [vmem:[#allocation23 + $0xa60] sm:$0xff]
        %v2383 = vld [vmem:[#allocation23 + $0xa68] sm:$0xff]
        %v2384 = vld [vmem:[#allocation23 + $0xa70] sm:$0xff]
        %v2385 = vld [vmem:[#allocation23 + $0xa78] sm:$0xff]
        %v2386 = vld [vmem:[#allocation23 + $0xa80] sm:$0xff]
        %v2387 = vld [vmem:[#allocation23 + $0xa88] sm:$0xff]
        %v2388 = vld [vmem:[#allocation23 + $0xa90] sm:$0xff]
        %v2389 = vld [vmem:[#allocation23 + $0xa98] sm:$0xff]
        %v2390 = vld [vmem:[#allocation23 + $0xaa0] sm:$0xff]
        %v2391 = vld [vmem:[#allocation23 + $0xaa8] sm:$0xff]
        %v2392 = vld [vmem:[#allocation23 + $0xab0] sm:$0xff]
        %v2393 = vld [vmem:[#allocation23 + $0xab8] sm:$0xff]
        %v2394 = vld [vmem:[#allocation23 + $0xac0] sm:$0xff]
        %v2395 = vld [vmem:[#allocation23 + $0xac8] sm:$0xff]
        %v2396 = vld [vmem:[#allocation23 + $0xad0] sm:$0xff]
        %v2397 = vld [vmem:[#allocation23 + $0xad8] sm:$0xff]
        %v2398 = vld [vmem:[#allocation23 + $0xae0] sm:$0xff]
        %v2399 = vld [vmem:[#allocation23 + $0xae8] sm:$0xff]
        %v2400 = vld [vmem:[#allocation23 + $0xaf0] sm:$0xff]
        %v2401 = vld [vmem:[#allocation23 + $0xaf8] sm:$0xff]
        %v2402 = vld [vmem:[#allocation23 + $0xb00] sm:$0xff]
        %v2403 = vld [vmem:[#allocation23 + $0xb08] sm:$0xff]
        %v2404 = vld [vmem:[#allocation23 + $0xb10] sm:$0xff]
        %v2405 = vld [vmem:[#allocation23 + $0xb18] sm:$0xff]
        %v2406 = vld [vmem:[#allocation23 + $0xb20] sm:$0xff]
        %v2407 = vld [vmem:[#allocation23 + $0xb28] sm:$0xff]
        %v2408 = vld [vmem:[#allocation23 + $0xb30] sm:$0xff]
        %v2409 = vld [vmem:[#allocation23 + $0xb38] sm:$0xff]
        %v2410 = vld [vmem:[#allocation23 + $0xb40] sm:$0xff]
        %v2411 = vld [vmem:[#allocation23 + $0xb48] sm:$0xff]
        %v2412 = vld [vmem:[#allocation23 + $0xb50] sm:$0xff]
        %v2413 = vld [vmem:[#allocation23 + $0xb58] sm:$0xff]
        %v2414 = vld [vmem:[#allocation23 + $0xb60] sm:$0xff]
        %v2415 = vld [vmem:[#allocation23 + $0xb68] sm:$0xff]
        %v2416 = vld [vmem:[#allocation23 + $0xb70] sm:$0xff]
        %v2417 = vld [vmem:[#allocation23 + $0xb78] sm:$0xff]
        %v2418 = vld [vmem:[#allocation23 + $0xb80] sm:$0xff]
        %v2419 = vld [vmem:[#allocation23 + $0xb88] sm:$0xff]
        %v2420 = vld [vmem:[#allocation23 + $0xb90] sm:$0xff]
        %v2421 = vld [vmem:[#allocation23 + $0xb98] sm:$0xff]
        %v2422 = vld [vmem:[#allocation23 + $0xba0] sm:$0xff]
        %v2423 = vld [vmem:[#allocation23 + $0xba8] sm:$0xff]
        %v2424 = vld [vmem:[#allocation23 + $0xbb0] sm:$0xff]
        %v2425 = vld [vmem:[#allocation23 + $0xbb8] sm:$0xff]
        %v2426 = vld [vmem:[#allocation23 + $0xbc0] sm:$0xff]
        %v2427 = vld [vmem:[#allocation23 + $0xbc8] sm:$0xff]
        %v2428 = vld [vmem:[#allocation23 + $0xbd0] sm:$0xff]
        %v2429 = vld [vmem:[#allocation23 + $0xbd8] sm:$0xff]
        %v2430 = vld [vmem:[#allocation23 + $0xbe0] sm:$0xff]
        %v2431 = vld [vmem:[#allocation23 + $0xbe8] sm:$0xff]
        %v2432 = vld [vmem:[#allocation23 + $0xbf0] sm:$0xff]
        %v2433 = vld [vmem:[#allocation23 + $0xbf8] sm:$0xff]
        %v2434 = vld [vmem:[#allocation23 + $0xc00] sm:$0xff]
        %v2435 = vld [vmem:[#allocation23 + $0xc08] sm:$0xff]
        %v2436 = vld [vmem:[#allocation23 + $0xc10] sm:$0xff]
        %v2437 = vld [vmem:[#allocation23 + $0xc18] sm:$0xff]
        %v2438 = vld [vmem:[#allocation23 + $0xc20] sm:$0xff]
        %v2439 = vld [vmem:[#allocation23 + $0xc28] sm:$0xff]
        %v2440 = vld [vmem:[#allocation23 + $0xc30] sm:$0xff]
        %v2441 = vld [vmem:[#allocation23 + $0xc38] sm:$0xff]
        %v2442 = vld [vmem:[#allocation23 + $0xc40] sm:$0xff]
        %v2443 = vld [vmem:[#allocation23 + $0xc48] sm:$0xff]
        %v2444 = vld [vmem:[#allocation23 + $0xc50] sm:$0xff]
        %v2445 = vld [vmem:[#allocation23 + $0xc58] sm:$0xff]
        %v2446 = vld [vmem:[#allocation23 + $0xc60] sm:$0xff]
        %v2447 = vld [vmem:[#allocation23 + $0xc68] sm:$0xff]
        %v2448 = vld [vmem:[#allocation23 + $0xc70] sm:$0xff]
        %v2449 = vld [vmem:[#allocation23 + $0xc78] sm:$0xff]
        %v2450 = vld [vmem:[#allocation23 + $0xc80] sm:$0xff]
        %v2451 = vld [vmem:[#allocation23 + $0xc88] sm:$0xff]
        %v2452 = vld [vmem:[#allocation23 + $0xc90] sm:$0xff]
        %v2453 = vld [vmem:[#allocation23 + $0xc98] sm:$0xff]
        %v2454 = vld [vmem:[#allocation23 + $0xca0] sm:$0xff]
        %v2455 = vld [vmem:[#allocation23 + $0xca8] sm:$0xff]
        %v2456 = vld [vmem:[#allocation23 + $0xcb0] sm:$0xff]
        %v2457 = vld [vmem:[#allocation23 + $0xcb8] sm:$0xff]
        %v2458 = vld [vmem:[#allocation23 + $0xcc0] sm:$0xff]
        %v2459 = vld [vmem:[#allocation23 + $0xcc8] sm:$0xff]
        %v2460 = vld [vmem:[#allocation23 + $0xcd0] sm:$0xff]
        %v2461 = vld [vmem:[#allocation23 + $0xcd8] sm:$0xff]
        %v2462 = vld [vmem:[#allocation23 + $0xce0] sm:$0xff]
        %v2463 = vld [vmem:[#allocation23 + $0xce8] sm:$0xff]
        %v2464 = vld [vmem:[#allocation23 + $0xcf0] sm:$0xff]
        %v2465 = vld [vmem:[#allocation23 + $0xcf8] sm:$0xff]
        %v2466 = vld [vmem:[#allocation23 + $0xd00] sm:$0xff]
        %v2467 = vld [vmem:[#allocation23 + $0xd08] sm:$0xff]
        %v2468 = vld [vmem:[#allocation23 + $0xd10] sm:$0xff]
        %v2469 = vld [vmem:[#allocation23 + $0xd18] sm:$0xff]
        %v2470 = vld [vmem:[#allocation23 + $0xd20] sm:$0xff]
        %v2471 = vld [vmem:[#allocation23 + $0xd28] sm:$0xff]
        %v2472 = vld [vmem:[#allocation23 + $0xd30] sm:$0xff]
        %v2473 = vld [vmem:[#allocation23 + $0xd38] sm:$0xff]
        %v2474 = vld [vmem:[#allocation23 + $0xd40] sm:$0xff]
        %v2475 = vld [vmem:[#allocation23 + $0xd48] sm:$0xff]
        %v2476 = vld [vmem:[#allocation23 + $0xd50] sm:$0xff]
        %v2477 = vld [vmem:[#allocation23 + $0xd58] sm:$0xff]
        %v2478 = vld [vmem:[#allocation23 + $0xd60] sm:$0xff]
        %v2479 = vld [vmem:[#allocation23 + $0xd68] sm:$0xff]
        %v2480 = vld [vmem:[#allocation23 + $0xd70] sm:$0xff]
        %v2481 = vld [vmem:[#allocation23 + $0xd78] sm:$0xff]
        %v2482 = vld [vmem:[#allocation23 + $0xd80] sm:$0xff]
        %v2483 = vld [vmem:[#allocation23 + $0xd88] sm:$0xff]
        %v2484 = vld [vmem:[#allocation23 + $0xd90] sm:$0xff]
        %v2485 = vld [vmem:[#allocation23 + $0xd98] sm:$0xff]
        %v2486 = vld [vmem:[#allocation23 + $0xda0] sm:$0xff]
        %v2487 = vld [vmem:[#allocation23 + $0xda8] sm:$0xff]
        %v2488 = vld [vmem:[#allocation23 + $0xdb0] sm:$0xff]
        %v2489 = vld [vmem:[#allocation23 + $0xdb8] sm:$0xff]
        %v2490 = vld [vmem:[#allocation23 + $0xdc0] sm:$0xff]
        %v2491 = vld [vmem:[#allocation23 + $0xdc8] sm:$0xff]
        %v2492 = vld [vmem:[#allocation23 + $0xdd0] sm:$0xff]
        %v2493 = vld [vmem:[#allocation23 + $0xdd8] sm:$0xff]
        %v2494 = vld [vmem:[#allocation23 + $0xde0] sm:$0xff]
        %v2495 = vld [vmem:[#allocation23 + $0xde8] sm:$0xff]
        %v2496 = vld [vmem:[#allocation23 + $0xdf0] sm:$0xff]
        %v2497 = vld [vmem:[#allocation23 + $0xdf8] sm:$0xff]
        %v2498 = vld [vmem:[#allocation23 + $0xe00] sm:$0xff]
        %v2499 = vld [vmem:[#allocation23 + $0xe08] sm:$0xff]
        %v2500 = vld [vmem:[#allocation23 + $0xe10] sm:$0xff]
        %v2501 = vld [vmem:[#allocation23 + $0xe18] sm:$0xff]
        %v2502 = vld [vmem:[#allocation23 + $0xe20] sm:$0xff]
        %v2503 = vld [vmem:[#allocation23 + $0xe28] sm:$0xff]
        %v2504 = vld [vmem:[#allocation23 + $0xe30] sm:$0xff]
        %v2505 = vld [vmem:[#allocation23 + $0xe38] sm:$0xff]
        %v2506 = vld [vmem:[#allocation23 + $0xe40] sm:$0xff]
        %v2507 = vld [vmem:[#allocation23 + $0xe48] sm:$0xff]
        %v2508 = vld [vmem:[#allocation23 + $0xe50] sm:$0xff]
        %v2509 = vld [vmem:[#allocation23 + $0xe58] sm:$0xff]
        %v2510 = vld [vmem:[#allocation23 + $0xe60] sm:$0xff]
        %v2511 = vld [vmem:[#allocation23 + $0xe68] sm:$0xff]
        %v2512 = vld [vmem:[#allocation23 + $0xe70] sm:$0xff]
        %v2513 = vld [vmem:[#allocation23 + $0xe78] sm:$0xff]
        %v2514 = vld [vmem:[#allocation23 + $0xe80] sm:$0xff]
        %v2515 = vld [vmem:[#allocation23 + $0xe88] sm:$0xff]
        %v2516 = vld [vmem:[#allocation23 + $0xe90] sm:$0xff]
        %v2517 = vld [vmem:[#allocation23 + $0xe98] sm:$0xff]
        %v2518 = vld [vmem:[#allocation23 + $0xea0] sm:$0xff]
        %v2519 = vld [vmem:[#allocation23 + $0xea8] sm:$0xff]
        %v2520 = vld [vmem:[#allocation23 + $0xeb0] sm:$0xff]
        %v2521 = vld [vmem:[#allocation23 + $0xeb8] sm:$0xff]
        %v2522 = vld [vmem:[#allocation23 + $0xec0] sm:$0xff]
        %v2523 = vld [vmem:[#allocation23 + $0xec8] sm:$0xff]
        %v2524 = vld [vmem:[#allocation23 + $0xed0] sm:$0xff]
        %v2525 = vld [vmem:[#allocation23 + $0xed8] sm:$0xff]
        %v2526 = vld [vmem:[#allocation23 + $0xee0] sm:$0xff]
        %v2527 = vld [vmem:[#allocation23 + $0xee8] sm:$0xff]
        %v2528 = vld [vmem:[#allocation23 + $0xef0] sm:$0xff]
        %v2529 = vld [vmem:[#allocation23 + $0xef8] sm:$0xff]
        %v2530 = vld [vmem:[#allocation23 + $0xf00] sm:$0xff]
        %v2531 = vld [vmem:[#allocation23 + $0xf08] sm:$0xff]
        %v2532 = vld [vmem:[#allocation23 + $0xf10] sm:$0xff]
        %v2533 = vld [vmem:[#allocation23 + $0xf18] sm:$0xff]
        %v2534 = vld [vmem:[#allocation23 + $0xf20] sm:$0xff]
        %v2535 = vld [vmem:[#allocation23 + $0xf28] sm:$0xff]
        %v2536 = vld [vmem:[#allocation23 + $0xf30] sm:$0xff]
        %v2537 = vld [vmem:[#allocation23 + $0xf38] sm:$0xff]
        %v2538 = vld [vmem:[#allocation23 + $0xf40] sm:$0xff]
        %v2539 = vld [vmem:[#allocation23 + $0xf48] sm:$0xff]
        %v2540 = vld [vmem:[#allocation23 + $0xf50] sm:$0xff]
        %v2541 = vld [vmem:[#allocation23 + $0xf58] sm:$0xff]
        %v2542 = vld [vmem:[#allocation23 + $0xf60] sm:$0xff]
        %v2543 = vld [vmem:[#allocation23 + $0xf68] sm:$0xff]
        %v2544 = vld [vmem:[#allocation23 + $0xf70] sm:$0xff]
        %v2545 = vld [vmem:[#allocation23 + $0xf78] sm:$0xff]
        %v2546 = vld [vmem:[#allocation23 + $0xf80] sm:$0xff]
        %v2547 = vld [vmem:[#allocation23 + $0xf88] sm:$0xff]
        %v2548 = vld [vmem:[#allocation23 + $0xf90] sm:$0xff]
        %v2549 = vld [vmem:[#allocation23 + $0xf98] sm:$0xff]
        %v2550 = vld [vmem:[#allocation23 + $0xfa0] sm:$0xff]
        %v2551 = vld [vmem:[#allocation23 + $0xfa8] sm:$0xff]
        %v2552 = vld [vmem:[#allocation23 + $0xfb0] sm:$0xff]
        %v2553 = vld [vmem:[#allocation23 + $0xfb8] sm:$0xff]
        %v2554 = vld [vmem:[#allocation23 + $0xfc0] sm:$0xff]
        %v2555 = vld [vmem:[#allocation23 + $0xfc8] sm:$0xff]
        %v2556 = vld [vmem:[#allocation23 + $0xfd0] sm:$0xff]
        %v2557 = vld [vmem:[#allocation23 + $0xfd8] sm:$0xff]
        %v2558 = vld [vmem:[#allocation23 + $0xfe0] sm:$0xff]
        %v2559 = vld [vmem:[#allocation23 + $0xfe8] sm:$0xff]
        %v2560 = vld [vmem:[#allocation23 + $0xff0] sm:$0xff]
        %v2561 = vld [vmem:[#allocation23 + $0xff8] sm:$0xff]
        %v2562 = vld [vmem:[#allocation25] sm:$0xff]
        %v2564 = vlaneseq
        %v2565 = vshrl.u32 %v2564, 7
        %v2566 = vsub.s32 0, %v2565
        %v2567 = vrot.slane %v2562, %v2566
        %v2568 = vlaneseq
        %v2569 = vshrl.u32 %v2568, 7
        %v2570 = vsub.s32 1, %v2569
        %v2571 = vrot.slane %v2562, %v2570
        %v2572 = vlaneseq
        %v2573 = vshrl.u32 %v2572, 7
        %v2574 = vsub.s32 2, %v2573
        %v2575 = vrot.slane %v2562, %v2574
        %v2576 = vlaneseq
        %v2577 = vshrl.u32 %v2576, 7
        %v2578 = vsub.s32 3, %v2577
        %v2579 = vrot.slane %v2562, %v2578
        %v2580 = vlaneseq
        %v2581 = vshrl.u32 %v2580, 7
        %v2582 = vsub.s32 4, %v2581
        %v2583 = vrot.slane %v2562, %v2582
        %v2584 = vlaneseq
        %v2585 = vshrl.u32 %v2584, 7
        %v2586 = vsub.s32 5, %v2585
        %v2587 = vrot.slane %v2562, %v2586
        %v2588 = vlaneseq
        %v2589 = vshrl.u32 %v2588, 7
        %v2590 = vsub.s32 6, %v2589
        %v2591 = vrot.slane %v2562, %v2590
        %v2592 = vlaneseq
        %v2593 = vshrl.u32 %v2592, 7
        %v2594 = vsub.s32 7, %v2593
        %v2595 = vrot.slane %v2562, %v2594
        %2604 = vmatprep.subr.mxu0 %v2171
        %2605 = vmatpush1.msra.mxu0 %v2170
        %2606 = vmatprep.subr.mxu0 %v2163
        %2607 = vmatpush1.msra.mxu0 %v2162
        %2608 = vmatprep.subr.mxu0 %v2155
        %2609 = vmatpush1.msra.mxu0 %v2154
        %2610 = vmatprep.subr.mxu0 %v2147
        %2611 = vmatpush1.msra.mxu0 %v2146
        %2612 = vmatprep.subr.mxu0 %v2139
        %2613 = vmatpush1.msra.mxu0 %v2138
        %2614 = vmatprep.subr.mxu0 %v2131
        %2615 = vmatpush1.msra.mxu0 %v2130
        %2616 = vmatprep.subr.mxu0 %v2123
        %2617 = vmatpush1.msra.mxu0 %v2122
        %2618 = vmatprep.subr.mxu0 %v2115
        %2619 = vmatpush1.msra.mxu0 %v2114
        %2620 = vmatprep.subr.mxu0 %v2107
        %2621 = vmatpush1.msra.mxu0 %v2106
        %2622 = vmatprep.subr.mxu0 %v2099
        %2623 = vmatpush1.msra.mxu0 %v2098
        %2624 = vmatprep.subr.mxu0 %v2091
        %2625 = vmatpush1.msra.mxu0 %v2090
        %2626 = vmatprep.subr.mxu0 %v2083
        %2627 = vmatpush1.msra.mxu0 %v2082
        %2628 = vmatprep.subr.mxu0 %v2075
        %2629 = vmatpush1.msra.mxu0 %v2074
        %2630 = vmatprep.subr.mxu0 %v2067
        %2631 = vmatpush1.msra.mxu0 %v2066
        %2632 = vmatprep.subr.mxu0 %v2059
        %2633 = vmatpush1.msra.mxu0 %v2058
        %2634 = vmatprep.subr.mxu0 %v2051
        %2635 = vmatpush1.msra.mxu0 %v2050
        %2636 = vmatprep.subr.mxu0 %v2299
        %2637 = vmatpush2.msra.mxu0 %v2298
        %2638 = vmatprep.subr.mxu0 %v2291
        %2639 = vmatpush2.msra.mxu0 %v2290
        %2640 = vmatprep.subr.mxu0 %v2283
        %2641 = vmatpush2.msra.mxu0 %v2282
        %2642 = vmatprep.subr.mxu0 %v2275
        %2643 = vmatpush2.msra.mxu0 %v2274
        %2644 = vmatprep.subr.mxu0 %v2267
        %2645 = vmatpush2.msra.mxu0 %v2266
        %2646 = vmatprep.subr.mxu0 %v2259
        %2647 = vmatpush2.msra.mxu0 %v2258
        %2648 = vmatprep.subr.mxu0 %v2251
        %2649 = vmatpush2.msra.mxu0 %v2250
        %2650 = vmatprep.subr.mxu0 %v2243
        %2651 = vmatpush2.msra.mxu0 %v2242
        %2652 = vmatprep.subr.mxu0 %v2235
        %2653 = vmatpush2.msra.mxu0 %v2234
        %2654 = vmatprep.subr.mxu0 %v2227
        %2655 = vmatpush2.msra.mxu0 %v2226
        %2656 = vmatprep.subr.mxu0 %v2219
        %2657 = vmatpush2.msra.mxu0 %v2218
        %2658 = vmatprep.subr.mxu0 %v2211
        %2659 = vmatpush2.msra.mxu0 %v2210
        %2660 = vmatprep.subr.mxu0 %v2203
        %2661 = vmatpush2.msra.mxu0 %v2202
        %2662 = vmatprep.subr.mxu0 %v2195
        %2663 = vmatpush2.msra.mxu0 %v2194
        %2664 = vmatprep.subr.mxu0 %v2187
        %2665 = vmatpush2.msra.mxu0 %v2186
        %2666 = vmatprep.subr.mxu0 %v2179
        %2667 = vmatpush2.msra.mxu0 %v2178
        %2668 = vmatprep.mubr.f32.mxu0 %v2043
        %2669 = vmatmul.mubr.f32.gmra.mxu0 %v2042
        %v2670 = vpop.f32.mrf.mxu0
        %v2671 = vadd.f32 %v2567, %v2670
        %v2672 = vpop.f32.mrf.mxu0
        %v2673 = vadd.f32 %v2571, %v2672
        %2674 = vmatprep.mubr.f32.mxu0 %v2047
        %2675 = vmatmul.mubr.f32.gmra.mxu0 %v2046
        %v2676 = vpop.f32.mrf.mxu0
        %v2677 = vadd.f32 %v2567, %v2676
        %v2678 = vpop.f32.mrf.mxu0
        %v2679 = vadd.f32 %v2571, %v2678
        %2680 = vdwg.mxu0
        %2681 = vmatprep.subr.mxu0 %v2427
        %2682 = vmatpush1.msra.mxu0 %v2426
        %2683 = vmatprep.subr.mxu0 %v2419
        %2684 = vmatpush1.msra.mxu0 %v2418
        %2685 = vmatprep.subr.mxu0 %v2411
        %2686 = vmatpush1.msra.mxu0 %v2410
        %2687 = vmatprep.subr.mxu0 %v2403
        %2688 = vmatpush1.msra.mxu0 %v2402
        %2689 = vmatprep.subr.mxu0 %v2395
        %2690 = vmatpush1.msra.mxu0 %v2394
        %2691 = vmatprep.subr.mxu0 %v2387
        %2692 = vmatpush1.msra.mxu0 %v2386
        %2693 = vmatprep.subr.mxu0 %v2379
        %2694 = vmatpush1.msra.mxu0 %v2378
        %2695 = vmatprep.subr.mxu0 %v2371
        %2696 = vmatpush1.msra.mxu0 %v2370
        %2697 = vmatprep.subr.mxu0 %v2363
        %2698 = vmatpush1.msra.mxu0 %v2362
        %2699 = vmatprep.subr.mxu0 %v2355
        %2700 = vmatpush1.msra.mxu0 %v2354
        %2701 = vmatprep.subr.mxu0 %v2347
        %2702 = vmatpush1.msra.mxu0 %v2346
        %2703 = vmatprep.subr.mxu0 %v2339
        %2704 = vmatpush1.msra.mxu0 %v2338
        %2705 = vmatprep.subr.mxu0 %v2331
        %2706 = vmatpush1.msra.mxu0 %v2330
        %2707 = vmatprep.subr.mxu0 %v2323
        %2708 = vmatpush1.msra.mxu0 %v2322
        %2709 = vmatprep.subr.mxu0 %v2315
        %2710 = vmatpush1.msra.mxu0 %v2314
        %2711 = vmatprep.subr.mxu0 %v2307
        %2712 = vmatpush1.msra.mxu0 %v2306
        %2713 = vmatprep.subr.mxu0 %v2555
        %2714 = vmatpush2.msra.mxu0 %v2554
        %2715 = vmatprep.subr.mxu0 %v2547
        %2716 = vmatpush2.msra.mxu0 %v2546
        %2717 = vmatprep.subr.mxu0 %v2539
        %2718 = vmatpush2.msra.mxu0 %v2538
        %2719 = vmatprep.subr.mxu0 %v2531
        %2720 = vmatpush2.msra.mxu0 %v2530
        %2721 = vmatprep.subr.mxu0 %v2523
        %2722 = vmatpush2.msra.mxu0 %v2522
        %2723 = vmatprep.subr.mxu0 %v2515
        %2724 = vmatpush2.msra.mxu0 %v2514
        %2725 = vmatprep.subr.mxu0 %v2507
        %2726 = vmatpush2.msra.mxu0 %v2506
        %2727 = vmatprep.subr.mxu0 %v2499
        %2728 = vmatpush2.msra.mxu0 %v2498
        %2729 = vmatprep.subr.mxu0 %v2491
        %2730 = vmatpush2.msra.mxu0 %v2490
        %2731 = vmatprep.subr.mxu0 %v2483
        %2732 = vmatpush2.msra.mxu0 %v2482
        %2733 = vmatprep.subr.mxu0 %v2475
        %2734 = vmatpush2.msra.mxu0 %v2474
        %2735 = vmatprep.subr.mxu0 %v2467
        %2736 = vmatpush2.msra.mxu0 %v2466
        %2737 = vmatprep.subr.mxu0 %v2459
        %2738 = vmatpush2.msra.mxu0 %v2458
        %2739 = vmatprep.subr.mxu0 %v2451
        %2740 = vmatpush2.msra.mxu0 %v2450
        %2741 = vmatprep.subr.mxu0 %v2443
        %2742 = vmatpush2.msra.mxu0 %v2442
        %2743 = vmatprep.subr.mxu0 %v2435
        %2744 = vmatpush2.msra.mxu0 %v2434
        %2745 = vmatprep.mubr.f32.mxu0 %v2045
        %2746 = vmatmul.mubr.f32.gmra.mxu0 %v2044
        %v2747 = vpop.f32.mrf.mxu0
        %v2748 = vadd.f32 %v2671, %v2747
        %v2749 = vpop.f32.mrf.mxu0
        %v2750 = vadd.f32 %v2673, %v2749
        %2751 = vmatprep.mubr.f32.mxu0 %v2049
        %2752 = vmatmul.mubr.f32.gmra.mxu0 %v2048
        %v2753 = vpop.f32.mrf.mxu0
        %v2754 = vadd.f32 %v2677, %v2753
        %v2755 = vpop.f32.mrf.mxu0
        %v2756 = vadd.f32 %v2679, %v2755
        %2757 = vdwg.mxu0
        %2758 = vmatprep.subr.mxu0 %v2173
        %2759 = vmatpush1.msra.mxu0 %v2172
        %2760 = vmatprep.subr.mxu0 %v2165
        %2761 = vmatpush1.msra.mxu0 %v2164
        %2762 = vmatprep.subr.mxu0 %v2157
        %2763 = vmatpush1.msra.mxu0 %v2156
        %2764 = vmatprep.subr.mxu0 %v2149
        %2765 = vmatpush1.msra.mxu0 %v2148
        %2766 = vmatprep.subr.mxu0 %v2141
        %2767 = vmatpush1.msra.mxu0 %v2140
        %2768 = vmatprep.subr.mxu0 %v2133
        %2769 = vmatpush1.msra.mxu0 %v2132
        %2770 = vmatprep.subr.mxu0 %v2125
        %2771 = vmatpush1.msra.mxu0 %v2124
        %2772 = vmatprep.subr.mxu0 %v2117
        %2773 = vmatpush1.msra.mxu0 %v2116
        %2774 = vmatprep.subr.mxu0 %v2109
        %2775 = vmatpush1.msra.mxu0 %v2108
        %2776 = vmatprep.subr.mxu0 %v2101
        %2777 = vmatpush1.msra.mxu0 %v2100
        %2778 = vmatprep.subr.mxu0 %v2093
        %2779 = vmatpush1.msra.mxu0 %v2092
        %2780 = vmatprep.subr.mxu0 %v2085
        %2781 = vmatpush1.msra.mxu0 %v2084
        %2782 = vmatprep.subr.mxu0 %v2077
        %2783 = vmatpush1.msra.mxu0 %v2076
        %2784 = vmatprep.subr.mxu0 %v2069
        %2785 = vmatpush1.msra.mxu0 %v2068
        %2786 = vmatprep.subr.mxu0 %v2061
        %2787 = vmatpush1.msra.mxu0 %v2060
        %2788 = vmatprep.subr.mxu0 %v2053
        %2789 = vmatpush1.msra.mxu0 %v2052
        %2790 = vmatprep.subr.mxu0 %v2301
        %2791 = vmatpush2.msra.mxu0 %v2300
        %2792 = vmatprep.subr.mxu0 %v2293
        %2793 = vmatpush2.msra.mxu0 %v2292
        %2794 = vmatprep.subr.mxu0 %v2285
        %2795 = vmatpush2.msra.mxu0 %v2284
        %2796 = vmatprep.subr.mxu0 %v2277
        %2797 = vmatpush2.msra.mxu0 %v2276
        %2798 = vmatprep.subr.mxu0 %v2269
        %2799 = vmatpush2.msra.mxu0 %v2268
        %2800 = vmatprep.subr.mxu0 %v2261
        %2801 = vmatpush2.msra.mxu0 %v2260
        %2802 = vmatprep.subr.mxu0 %v2253
        %2803 = vmatpush2.msra.mxu0 %v2252
        %2804 = vmatprep.subr.mxu0 %v2245
        %2805 = vmatpush2.msra.mxu0 %v2244
        %2806 = vmatprep.subr.mxu0 %v2237
        %2807 = vmatpush2.msra.mxu0 %v2236
        %2808 = vmatprep.subr.mxu0 %v2229
        %2809 = vmatpush2.msra.mxu0 %v2228
        %2810 = vmatprep.subr.mxu0 %v2221
        %2811 = vmatpush2.msra.mxu0 %v2220
        %2812 = vmatprep.subr.mxu0 %v2213
        %2813 = vmatpush2.msra.mxu0 %v2212
        %2814 = vmatprep.subr.mxu0 %v2205
        %2815 = vmatpush2.msra.mxu0 %v2204
        %2816 = vmatprep.subr.mxu0 %v2197
        %2817 = vmatpush2.msra.mxu0 %v2196
        %2818 = vmatprep.subr.mxu0 %v2189
        %2819 = vmatpush2.msra.mxu0 %v2188
        %2820 = vmatprep.subr.mxu0 %v2181
        %2821 = vmatpush2.msra.mxu0 %v2180
        %2822 = vmatprep.mubr.f32.mxu0 %v2043
        %2823 = vmatmul.mubr.f32.gmra.mxu0 %v2042
        %v2824 = vpop.f32.mrf.mxu0
        %v2825 = vadd.f32 %v2575, %v2824
        %v2826 = vpop.f32.mrf.mxu0
        %v2827 = vadd.f32 %v2579, %v2826
        %2828 = vmatprep.mubr.f32.mxu0 %v2047
        %2829 = vmatmul.mubr.f32.gmra.mxu0 %v2046
        %v2830 = vpop.f32.mrf.mxu0
        %v2831 = vadd.f32 %v2575, %v2830
        %v2832 = vpop.f32.mrf.mxu0
        %v2833 = vadd.f32 %v2579, %v2832
        %2834 = vdwg.mxu0
        %2835 = vmatprep.subr.mxu0 %v2429
        %2836 = vmatpush1.msra.mxu0 %v2428
        %2837 = vmatprep.subr.mxu0 %v2421
        %2838 = vmatpush1.msra.mxu0 %v2420
        %2839 = vmatprep.subr.mxu0 %v2413
        %2840 = vmatpush1.msra.mxu0 %v2412
        %2841 = vmatprep.subr.mxu0 %v2405
        %2842 = vmatpush1.msra.mxu0 %v2404
        %2843 = vmatprep.subr.mxu0 %v2397
        %2844 = vmatpush1.msra.mxu0 %v2396
        %2845 = vmatprep.subr.mxu0 %v2389
        %2846 = vmatpush1.msra.mxu0 %v2388
        %2847 = vmatprep.subr.mxu0 %v2381
        %2848 = vmatpush1.msra.mxu0 %v2380
        %2849 = vmatprep.subr.mxu0 %v2373
        %2850 = vmatpush1.msra.mxu0 %v2372
        %2851 = vmatprep.subr.mxu0 %v2365
        %2852 = vmatpush1.msra.mxu0 %v2364
        %2853 = vmatprep.subr.mxu0 %v2357
        %2854 = vmatpush1.msra.mxu0 %v2356
        %2855 = vmatprep.subr.mxu0 %v2349
        %2856 = vmatpush1.msra.mxu0 %v2348
        %2857 = vmatprep.subr.mxu0 %v2341
        %2858 = vmatpush1.msra.mxu0 %v2340
        %2859 = vmatprep.subr.mxu0 %v2333
        %2860 = vmatpush1.msra.mxu0 %v2332
        %2861 = vmatprep.subr.mxu0 %v2325
        %2862 = vmatpush1.msra.mxu0 %v2324
        %2863 = vmatprep.subr.mxu0 %v2317
        %2864 = vmatpush1.msra.mxu0 %v2316
        %2865 = vmatprep.subr.mxu0 %v2309
        %2866 = vmatpush1.msra.mxu0 %v2308
        %2867 = vmatprep.subr.mxu0 %v2557
        %2868 = vmatpush2.msra.mxu0 %v2556
        %2869 = vmatprep.subr.mxu0 %v2549
        %2870 = vmatpush2.msra.mxu0 %v2548
        %2871 = vmatprep.subr.mxu0 %v2541
        %2872 = vmatpush2.msra.mxu0 %v2540
        %2873 = vmatprep.subr.mxu0 %v2533
        %2874 = vmatpush2.msra.mxu0 %v2532
        %2875 = vmatprep.subr.mxu0 %v2525
        %2876 = vmatpush2.msra.mxu0 %v2524
        %2877 = vmatprep.subr.mxu0 %v2517
        %2878 = vmatpush2.msra.mxu0 %v2516
        %2879 = vmatprep.subr.mxu0 %v2509
        %2880 = vmatpush2.msra.mxu0 %v2508
        %2881 = vmatprep.subr.mxu0 %v2501
        %2882 = vmatpush2.msra.mxu0 %v2500
        %2883 = vmatprep.subr.mxu0 %v2493
        %2884 = vmatpush2.msra.mxu0 %v2492
        %2885 = vmatprep.subr.mxu0 %v2485
        %2886 = vmatpush2.msra.mxu0 %v2484
        %2887 = vmatprep.subr.mxu0 %v2477
        %2888 = vmatpush2.msra.mxu0 %v2476
        %2889 = vmatprep.subr.mxu0 %v2469
        %2890 = vmatpush2.msra.mxu0 %v2468
        %2891 = vmatprep.subr.mxu0 %v2461
        %2892 = vmatpush2.msra.mxu0 %v2460
        %2893 = vmatprep.subr.mxu0 %v2453
        %2894 = vmatpush2.msra.mxu0 %v2452
        %2895 = vmatprep.subr.mxu0 %v2445
        %2896 = vmatpush2.msra.mxu0 %v2444
        %2897 = vmatprep.subr.mxu0 %v2437
        %2898 = vmatpush2.msra.mxu0 %v2436
        %2899 = vmatprep.mubr.f32.mxu0 %v2045
        %2900 = vmatmul.mubr.f32.gmra.mxu0 %v2044
        %v2901 = vpop.f32.mrf.mxu0
        %v2902 = vadd.f32 %v2825, %v2901
        %v2903 = vpop.f32.mrf.mxu0
        %v2904 = vadd.f32 %v2827, %v2903
        %2905 = vmatprep.mubr.f32.mxu0 %v2049
        %2906 = vmatmul.mubr.f32.gmra.mxu0 %v2048
        %v2907 = vpop.f32.mrf.mxu0
        %v2908 = vadd.f32 %v2831, %v2907
        %v2909 = vpop.f32.mrf.mxu0
        %v2910 = vadd.f32 %v2833, %v2909
        %2911 = vdwg.mxu0
        %2912 = vmatprep.subr.mxu0 %v2175
        %2913 = vmatpush1.msra.mxu0 %v2174
        %2914 = vmatprep.subr.mxu0 %v2167
        %2915 = vmatpush1.msra.mxu0 %v2166
        %2916 = vmatprep.subr.mxu0 %v2159
        %2917 = vmatpush1.msra.mxu0 %v2158
        %2918 = vmatprep.subr.mxu0 %v2151
        %2919 = vmatpush1.msra.mxu0 %v2150
        %2920 = vmatprep.subr.mxu0 %v2143
        %2921 = vmatpush1.msra.mxu0 %v2142
        %2922 = vmatprep.subr.mxu0 %v2135
        %2923 = vmatpush1.msra.mxu0 %v2134
        %2924 = vmatprep.subr.mxu0 %v2127
        %2925 = vmatpush1.msra.mxu0 %v2126
        %2926 = vmatprep.subr.mxu0 %v2119
        %2927 = vmatpush1.msra.mxu0 %v2118
        %2928 = vmatprep.subr.mxu0 %v2111
        %2929 = vmatpush1.msra.mxu0 %v2110
        %2930 = vmatprep.subr.mxu0 %v2103
        %2931 = vmatpush1.msra.mxu0 %v2102
        %2932 = vmatprep.subr.mxu0 %v2095
        %2933 = vmatpush1.msra.mxu0 %v2094
        %2934 = vmatprep.subr.mxu0 %v2087
        %2935 = vmatpush1.msra.mxu0 %v2086
        %2936 = vmatprep.subr.mxu0 %v2079
        %2937 = vmatpush1.msra.mxu0 %v2078
        %2938 = vmatprep.subr.mxu0 %v2071
        %2939 = vmatpush1.msra.mxu0 %v2070
        %2940 = vmatprep.subr.mxu0 %v2063
        %2941 = vmatpush1.msra.mxu0 %v2062
        %2942 = vmatprep.subr.mxu0 %v2055
        %2943 = vmatpush1.msra.mxu0 %v2054
        %2944 = vmatprep.subr.mxu0 %v2303
        %2945 = vmatpush2.msra.mxu0 %v2302
        %2946 = vmatprep.subr.mxu0 %v2295
        %2947 = vmatpush2.msra.mxu0 %v2294
        %2948 = vmatprep.subr.mxu0 %v2287
        %2949 = vmatpush2.msra.mxu0 %v2286
        %2950 = vmatprep.subr.mxu0 %v2279
        %2951 = vmatpush2.msra.mxu0 %v2278
        %2952 = vmatprep.subr.mxu0 %v2271
        %2953 = vmatpush2.msra.mxu0 %v2270
        %2954 = vmatprep.subr.mxu0 %v2263
        %2955 = vmatpush2.msra.mxu0 %v2262
        %2956 = vmatprep.subr.mxu0 %v2255
        %2957 = vmatpush2.msra.mxu0 %v2254
        %2958 = vmatprep.subr.mxu0 %v2247
        %2959 = vmatpush2.msra.mxu0 %v2246
        %2960 = vmatprep.subr.mxu0 %v2239
        %2961 = vmatpush2.msra.mxu0 %v2238
        %2962 = vmatprep.subr.mxu0 %v2231
        %2963 = vmatpush2.msra.mxu0 %v2230
        %2964 = vmatprep.subr.mxu0 %v2223
        %2965 = vmatpush2.msra.mxu0 %v2222
        %2966 = vmatprep.subr.mxu0 %v2215
        %2967 = vmatpush2.msra.mxu0 %v2214
        %2968 = vmatprep.subr.mxu0 %v2207
        %2969 = vmatpush2.msra.mxu0 %v2206
        %2970 = vmatprep.subr.mxu0 %v2199
        %2971 = vmatpush2.msra.mxu0 %v2198
        %2972 = vmatprep.subr.mxu0 %v2191
        %2973 = vmatpush2.msra.mxu0 %v2190
        %2974 = vmatprep.subr.mxu0 %v2183
        %2975 = vmatpush2.msra.mxu0 %v2182
        %2976 = vmatprep.mubr.f32.mxu0 %v2043
        %2977 = vmatmul.mubr.f32.gmra.mxu0 %v2042
        %v2978 = vpop.f32.mrf.mxu0
        %v2979 = vadd.f32 %v2583, %v2978
        %v2980 = vpop.f32.mrf.mxu0
        %v2981 = vadd.f32 %v2587, %v2980
        %2982 = vmatprep.mubr.f32.mxu0 %v2047
        %2983 = vmatmul.mubr.f32.gmra.mxu0 %v2046
        %v2984 = vpop.f32.mrf.mxu0
        %v2985 = vadd.f32 %v2583, %v2984
        %v2986 = vpop.f32.mrf.mxu0
        %v2987 = vadd.f32 %v2587, %v2986
        %2988 = vdwg.mxu0
        %2989 = vmatprep.subr.mxu0 %v2431
        %2990 = vmatpush1.msra.mxu0 %v2430
        %2991 = vmatprep.subr.mxu0 %v2423
        %2992 = vmatpush1.msra.mxu0 %v2422
        %2993 = vmatprep.subr.mxu0 %v2415
        %2994 = vmatpush1.msra.mxu0 %v2414
        %2995 = vmatprep.subr.mxu0 %v2407
        %2996 = vmatpush1.msra.mxu0 %v2406
        %2997 = vmatprep.subr.mxu0 %v2399
        %2998 = vmatpush1.msra.mxu0 %v2398
        %2999 = vmatprep.subr.mxu0 %v2391
        %3000 = vmatpush1.msra.mxu0 %v2390
        %3001 = vmatprep.subr.mxu0 %v2383
        %3002 = vmatpush1.msra.mxu0 %v2382
        %3003 = vmatprep.subr.mxu0 %v2375
        %3004 = vmatpush1.msra.mxu0 %v2374
        %3005 = vmatprep.subr.mxu0 %v2367
        %3006 = vmatpush1.msra.mxu0 %v2366
        %3007 = vmatprep.subr.mxu0 %v2359
        %3008 = vmatpush1.msra.mxu0 %v2358
        %3009 = vmatprep.subr.mxu0 %v2351
        %3010 = vmatpush1.msra.mxu0 %v2350
        %3011 = vmatprep.subr.mxu0 %v2343
        %3012 = vmatpush1.msra.mxu0 %v2342
        %3013 = vmatprep.subr.mxu0 %v2335
        %3014 = vmatpush1.msra.mxu0 %v2334
        %3015 = vmatprep.subr.mxu0 %v2327
        %3016 = vmatpush1.msra.mxu0 %v2326
        %3017 = vmatprep.subr.mxu0 %v2319
        %3018 = vmatpush1.msra.mxu0 %v2318
        %3019 = vmatprep.subr.mxu0 %v2311
        %3020 = vmatpush1.msra.mxu0 %v2310
        %3021 = vmatprep.subr.mxu0 %v2559
        %3022 = vmatpush2.msra.mxu0 %v2558
        %3023 = vmatprep.subr.mxu0 %v2551
        %3024 = vmatpush2.msra.mxu0 %v2550
        %3025 = vmatprep.subr.mxu0 %v2543
        %3026 = vmatpush2.msra.mxu0 %v2542
        %3027 = vmatprep.subr.mxu0 %v2535
        %3028 = vmatpush2.msra.mxu0 %v2534
        %3029 = vmatprep.subr.mxu0 %v2527
        %3030 = vmatpush2.msra.mxu0 %v2526
        %3031 = vmatprep.subr.mxu0 %v2519
        %3032 = vmatpush2.msra.mxu0 %v2518
        %3033 = vmatprep.subr.mxu0 %v2511
        %3034 = vmatpush2.msra.mxu0 %v2510
        %3035 = vmatprep.subr.mxu0 %v2503
        %3036 = vmatpush2.msra.mxu0 %v2502
        %3037 = vmatprep.subr.mxu0 %v2495
        %3038 = vmatpush2.msra.mxu0 %v2494
        %3039 = vmatprep.subr.mxu0 %v2487
        %3040 = vmatpush2.msra.mxu0 %v2486
        %3041 = vmatprep.subr.mxu0 %v2479
        %3042 = vmatpush2.msra.mxu0 %v2478
        %3043 = vmatprep.subr.mxu0 %v2471
        %3044 = vmatpush2.msra.mxu0 %v2470
        %3045 = vmatprep.subr.mxu0 %v2463
        %3046 = vmatpush2.msra.mxu0 %v2462
        %3047 = vmatprep.subr.mxu0 %v2455
        %3048 = vmatpush2.msra.mxu0 %v2454
        %3049 = vmatprep.subr.mxu0 %v2447
        %3050 = vmatpush2.msra.mxu0 %v2446
        %3051 = vmatprep.subr.mxu0 %v2439
        %3052 = vmatpush2.msra.mxu0 %v2438
        %3053 = vmatprep.mubr.f32.mxu0 %v2045
        %3054 = vmatmul.mubr.f32.gmra.mxu0 %v2044
        %v3055 = vpop.f32.mrf.mxu0
        %v3056 = vadd.f32 %v2979, %v3055
        %v3057 = vpop.f32.mrf.mxu0
        %v3058 = vadd.f32 %v2981, %v3057
        %3059 = vmatprep.mubr.f32.mxu0 %v2049
        %3060 = vmatmul.mubr.f32.gmra.mxu0 %v2048
        %v3061 = vpop.f32.mrf.mxu0
        %v3062 = vadd.f32 %v2985, %v3061
        %v3063 = vpop.f32.mrf.mxu0
        %v3064 = vadd.f32 %v2987, %v3063
        %3065 = vdwg.mxu0
        %3066 = vmatprep.subr.mxu0 %v2177
        %3067 = vmatpush1.msra.mxu0 %v2176
        %3068 = vmatprep.subr.mxu0 %v2169
        %3069 = vmatpush1.msra.mxu0 %v2168
        %3070 = vmatprep.subr.mxu0 %v2161
        %3071 = vmatpush1.msra.mxu0 %v2160
        %3072 = vmatprep.subr.mxu0 %v2153
        %3073 = vmatpush1.msra.mxu0 %v2152
        %3074 = vmatprep.subr.mxu0 %v2145
        %3075 = vmatpush1.msra.mxu0 %v2144
        %3076 = vmatprep.subr.mxu0 %v2137
        %3077 = vmatpush1.msra.mxu0 %v2136
        %3078 = vmatprep.subr.mxu0 %v2129
        %3079 = vmatpush1.msra.mxu0 %v2128
        %3080 = vmatprep.subr.mxu0 %v2121
        %3081 = vmatpush1.msra.mxu0 %v2120
        %3082 = vmatprep.subr.mxu0 %v2113
        %3083 = vmatpush1.msra.mxu0 %v2112
        %3084 = vmatprep.subr.mxu0 %v2105
        %3085 = vmatpush1.msra.mxu0 %v2104
        %3086 = vmatprep.subr.mxu0 %v2097
        %3087 = vmatpush1.msra.mxu0 %v2096
        %3088 = vmatprep.subr.mxu0 %v2089
        %3089 = vmatpush1.msra.mxu0 %v2088
        %3090 = vmatprep.subr.mxu0 %v2081
        %3091 = vmatpush1.msra.mxu0 %v2080
        %3092 = vmatprep.subr.mxu0 %v2073
        %3093 = vmatpush1.msra.mxu0 %v2072
        %3094 = vmatprep.subr.mxu0 %v2065
        %3095 = vmatpush1.msra.mxu0 %v2064
        %3096 = vmatprep.subr.mxu0 %v2057
        %3097 = vmatpush1.msra.mxu0 %v2056
        %3098 = vmatprep.subr.mxu0 %v2305
        %3099 = vmatpush2.msra.mxu0 %v2304
        %3100 = vmatprep.subr.mxu0 %v2297
        %3101 = vmatpush2.msra.mxu0 %v2296
        %3102 = vmatprep.subr.mxu0 %v2289
        %3103 = vmatpush2.msra.mxu0 %v2288
        %3104 = vmatprep.subr.mxu0 %v2281
        %3105 = vmatpush2.msra.mxu0 %v2280
        %3106 = vmatprep.subr.mxu0 %v2273
        %3107 = vmatpush2.msra.mxu0 %v2272
        %3108 = vmatprep.subr.mxu0 %v2265
        %3109 = vmatpush2.msra.mxu0 %v2264
        %3110 = vmatprep.subr.mxu0 %v2257
        %3111 = vmatpush2.msra.mxu0 %v2256
        %3112 = vmatprep.subr.mxu0 %v2249
        %3113 = vmatpush2.msra.mxu0 %v2248
        %3114 = vmatprep.subr.mxu0 %v2241
        %3115 = vmatpush2.msra.mxu0 %v2240
        %3116 = vmatprep.subr.mxu0 %v2233
        %3117 = vmatpush2.msra.mxu0 %v2232
        %3118 = vmatprep.subr.mxu0 %v2225
        %3119 = vmatpush2.msra.mxu0 %v2224
        %3120 = vmatprep.subr.mxu0 %v2217
        %3121 = vmatpush2.msra.mxu0 %v2216
        %3122 = vmatprep.subr.mxu0 %v2209
        %3123 = vmatpush2.msra.mxu0 %v2208
        %3124 = vmatprep.subr.mxu0 %v2201
        %3125 = vmatpush2.msra.mxu0 %v2200
        %3126 = vmatprep.subr.mxu0 %v2193
        %3127 = vmatpush2.msra.mxu0 %v2192
        %3128 = vmatprep.subr.mxu0 %v2185
        %3129 = vmatpush2.msra.mxu0 %v2184
        %3130 = vmatprep.mubr.f32.mxu0 %v2043
        %3131 = vmatmul.mubr.f32.gmra.mxu0 %v2042
        %v3132 = vpop.f32.mrf.mxu0
        %v3133 = vadd.f32 %v2591, %v3132
        %v3134 = vpop.f32.mrf.mxu0
        %v3135 = vadd.f32 %v2595, %v3134
        %3136 = vmatprep.mubr.f32.mxu0 %v2047
        %3137 = vmatmul.mubr.f32.gmra.mxu0 %v2046
        %v3138 = vpop.f32.mrf.mxu0
        %v3139 = vadd.f32 %v2591, %v3138
        %v3140 = vpop.f32.mrf.mxu0
        %v3141 = vadd.f32 %v2595, %v3140
        %3142 = vdwg.mxu0
        %3143 = vmatprep.subr.mxu0 %v2433
        %3144 = vmatpush1.msra.mxu0 %v2432
        %3145 = vmatprep.subr.mxu0 %v2425
        %3146 = vmatpush1.msra.mxu0 %v2424
        %3147 = vmatprep.subr.mxu0 %v2417
        %3148 = vmatpush1.msra.mxu0 %v2416
        %3149 = vmatprep.subr.mxu0 %v2409
        %3150 = vmatpush1.msra.mxu0 %v2408
        %3151 = vmatprep.subr.mxu0 %v2401
        %3152 = vmatpush1.msra.mxu0 %v2400
        %3153 = vmatprep.subr.mxu0 %v2393
        %3154 = vmatpush1.msra.mxu0 %v2392
        %3155 = vmatprep.subr.mxu0 %v2385
        %3156 = vmatpush1.msra.mxu0 %v2384
        %3157 = vmatprep.subr.mxu0 %v2377
        %3158 = vmatpush1.msra.mxu0 %v2376
        %3159 = vmatprep.subr.mxu0 %v2369
        %3160 = vmatpush1.msra.mxu0 %v2368
        %3161 = vmatprep.subr.mxu0 %v2361
        %3162 = vmatpush1.msra.mxu0 %v2360
        %3163 = vmatprep.subr.mxu0 %v2353
        %3164 = vmatpush1.msra.mxu0 %v2352
        %3165 = vmatprep.subr.mxu0 %v2345
        %3166 = vmatpush1.msra.mxu0 %v2344
        %3167 = vmatprep.subr.mxu0 %v2337
        %3168 = vmatpush1.msra.mxu0 %v2336
        %3169 = vmatprep.subr.mxu0 %v2329
        %3170 = vmatpush1.msra.mxu0 %v2328
        %3171 = vmatprep.subr.mxu0 %v2321
        %3172 = vmatpush1.msra.mxu0 %v2320
        %3173 = vmatprep.subr.mxu0 %v2313
        %3174 = vmatpush1.msra.mxu0 %v2312
        %3175 = vmatprep.subr.mxu0 %v2561
        %3176 = vmatpush2.msra.mxu0 %v2560
        %3177 = vmatprep.subr.mxu0 %v2553
        %3178 = vmatpush2.msra.mxu0 %v2552
        %3179 = vmatprep.subr.mxu0 %v2545
        %3180 = vmatpush2.msra.mxu0 %v2544
        %3181 = vmatprep.subr.mxu0 %v2537
        %3182 = vmatpush2.msra.mxu0 %v2536
        %3183 = vmatprep.subr.mxu0 %v2529
        %3184 = vmatpush2.msra.mxu0 %v2528
        %3185 = vmatprep.subr.mxu0 %v2521
        %3186 = vmatpush2.msra.mxu0 %v2520
        %3187 = vmatprep.subr.mxu0 %v2513
        %3188 = vmatpush2.msra.mxu0 %v2512
        %3189 = vmatprep.subr.mxu0 %v2505
        %3190 = vmatpush2.msra.mxu0 %v2504
        %3191 = vmatprep.subr.mxu0 %v2497
        %3192 = vmatpush2.msra.mxu0 %v2496
        %3193 = vmatprep.subr.mxu0 %v2489
        %3194 = vmatpush2.msra.mxu0 %v2488
        %3195 = vmatprep.subr.mxu0 %v2481
        %3196 = vmatpush2.msra.mxu0 %v2480
        %3197 = vmatprep.subr.mxu0 %v2473
        %3198 = vmatpush2.msra.mxu0 %v2472
        %3199 = vmatprep.subr.mxu0 %v2465
        %3200 = vmatpush2.msra.mxu0 %v2464
        %3201 = vmatprep.subr.mxu0 %v2457
        %3202 = vmatpush2.msra.mxu0 %v2456
        %3203 = vmatprep.subr.mxu0 %v2449
        %3204 = vmatpush2.msra.mxu0 %v2448
        %3205 = vmatprep.subr.mxu0 %v2441
        %3206 = vmatpush2.msra.mxu0 %v2440
        %3207 = vmatprep.mubr.f32.mxu0 %v2045
        %3208 = vmatmul.mubr.f32.gmra.mxu0 %v2044
        %v3209 = vpop.f32.mrf.mxu0
        %v3210 = vadd.f32 %v3133, %v3209
        %v3211 = vpop.f32.mrf.mxu0
        %v3212 = vadd.f32 %v3135, %v3211
        %3213 = vmatprep.mubr.f32.mxu0 %v2049
        %3214 = vmatmul.mubr.f32.gmra.mxu0 %v2048
        %v3215 = vpop.f32.mrf.mxu0
        %v3216 = vadd.f32 %v3139, %v3215
        %v3217 = vpop.f32.mrf.mxu0
        %v3218 = vadd.f32 %v3141, %v3217
        %3219 = vdwg.mxu0
        %v3220 = vrot.slane %v2748, 4
        %v3221 = vadd.f32 %v2748, %v3220
        %v3222 = vrot.slane %v3221, 2
        %v3223 = vadd.f32 %v3221, %v3222
        %v3224 = vrot.slane %v3223, 1
        %v3225 = vadd.f32 %v3223, %v3224
        %v3226 = vrot.slane %v2750, 4
        %v3227 = vadd.f32 %v2750, %v3226
        %v3228 = vrot.slane %v3227, 2
        %v3229 = vadd.f32 %v3227, %v3228
        %v3230 = vrot.slane %v3229, 1
        %v3231 = vadd.f32 %v3229, %v3230
        %v3232 = vrot.slane %v2902, 4
        %v3233 = vadd.f32 %v2902, %v3232
        %v3234 = vrot.slane %v3233, 2
        %v3235 = vadd.f32 %v3233, %v3234
        %v3236 = vrot.slane %v3235, 1
        %v3237 = vadd.f32 %v3235, %v3236
        %v3238 = vrot.slane %v2904, 4
        %v3239 = vadd.f32 %v2904, %v3238
        %v3240 = vrot.slane %v3239, 2
        %v3241 = vadd.f32 %v3239, %v3240
        %v3242 = vrot.slane %v3241, 1
        %v3243 = vadd.f32 %v3241, %v3242
        %v3244 = vrot.slane %v3056, 4
        %v3245 = vadd.f32 %v3056, %v3244
        %v3246 = vrot.slane %v3245, 2
        %v3247 = vadd.f32 %v3245, %v3246
        %v3248 = vrot.slane %v3247, 1
        %v3249 = vadd.f32 %v3247, %v3248
        %v3250 = vrot.slane %v3058, 4
        %v3251 = vadd.f32 %v3058, %v3250
        %v3252 = vrot.slane %v3251, 2
        %v3253 = vadd.f32 %v3251, %v3252
        %v3254 = vrot.slane %v3253, 1
        %v3255 = vadd.f32 %v3253, %v3254
        %v3256 = vrot.slane %v3210, 4
        %v3257 = vadd.f32 %v3210, %v3256
        %v3258 = vrot.slane %v3257, 2
        %v3259 = vadd.f32 %v3257, %v3258
        %v3260 = vrot.slane %v3259, 1
        %v3261 = vadd.f32 %v3259, %v3260
        %v3262 = vrot.slane %v3212, 4
        %v3263 = vadd.f32 %v3212, %v3262
        %v3264 = vrot.slane %v3263, 2
        %v3265 = vadd.f32 %v3263, %v3264
        %v3266 = vrot.slane %v3265, 1
        %v3267 = vadd.f32 %v3265, %v3266
        %v3268 = vrot.slane %v2754, 4
        %v3269 = vadd.f32 %v2754, %v3268
        %v3270 = vrot.slane %v3269, 2
        %v3271 = vadd.f32 %v3269, %v3270
        %v3272 = vrot.slane %v3271, 1
        %v3273 = vadd.f32 %v3271, %v3272
        %v3274 = vrot.slane %v2756, 4
        %v3275 = vadd.f32 %v2756, %v3274
        %v3276 = vrot.slane %v3275, 2
        %v3277 = vadd.f32 %v3275, %v3276
        %v3278 = vrot.slane %v3277, 1
        %v3279 = vadd.f32 %v3277, %v3278
        %v3280 = vrot.slane %v2908, 4
        %v3281 = vadd.f32 %v2908, %v3280
        %v3282 = vrot.slane %v3281, 2
        %v3283 = vadd.f32 %v3281, %v3282
        %v3284 = vrot.slane %v3283, 1
        %v3285 = vadd.f32 %v3283, %v3284
        %v3286 = vrot.slane %v2910, 4
        %v3287 = vadd.f32 %v2910, %v3286
        %v3288 = vrot.slane %v3287, 2
        %v3289 = vadd.f32 %v3287, %v3288
        %v3290 = vrot.slane %v3289, 1
        %v3291 = vadd.f32 %v3289, %v3290
        %v3292 = vrot.slane %v3062, 4
        %v3293 = vadd.f32 %v3062, %v3292
        %v3294 = vrot.slane %v3293, 2
        %v3295 = vadd.f32 %v3293, %v3294
        %v3296 = vrot.slane %v3295, 1
        %v3297 = vadd.f32 %v3295, %v3296
        %v3298 = vrot.slane %v3064, 4
        %v3299 = vadd.f32 %v3064, %v3298
        %v3300 = vrot.slane %v3299, 2
        %v3301 = vadd.f32 %v3299, %v3300
        %v3302 = vrot.slane %v3301, 1
        %v3303 = vadd.f32 %v3301, %v3302
        %v3304 = vrot.slane %v3216, 4
        %v3305 = vadd.f32 %v3216, %v3304
        %v3306 = vrot.slane %v3305, 2
        %v3307 = vadd.f32 %v3305, %v3306
        %v3308 = vrot.slane %v3307, 1
        %v3309 = vadd.f32 %v3307, %v3308
        %v3310 = vrot.slane %v3218, 4
        %v3311 = vadd.f32 %v3218, %v3310
        %v3312 = vrot.slane %v3311, 2
        %v3313 = vadd.f32 %v3311, %v3312
        %v3314 = vrot.slane %v3313, 1
        %v3315 = vadd.f32 %v3313, %v3314
        %v3316 = vmul.f32 %v3225, %v970
        %v3317 = vmul.f32 %v3231, %v970
        %v3318 = vmul.f32 %v3237, %v970
        %v3319 = vmul.f32 %v3243, %v970
        %v3320 = vmul.f32 %v3249, %v970
        %v3321 = vmul.f32 %v3255, %v970
        %v3322 = vmul.f32 %v3261, %v970
        %v3323 = vmul.f32 %v3267, %v970
        %v3324 = vmul.f32 %v3273, %v970
        %v3325 = vmul.f32 %v3279, %v970
        %v3326 = vmul.f32 %v3285, %v970
        %v3327 = vmul.f32 %v3291, %v970
        %v3328 = vmul.f32 %v3297, %v970
        %v3329 = vmul.f32 %v3303, %v970
        %v3330 = vmul.f32 %v3309, %v970
        %v3331 = vmul.f32 %v3315, %v970
        %v3332 = vsub.f32 %v2748, %v3316
        %v3333 = vsub.f32 %v2750, %v3317
        %v3334 = vsub.f32 %v2902, %v3318
        %v3335 = vsub.f32 %v2904, %v3319
        %v3336 = vsub.f32 %v3056, %v3320
        %v3337 = vsub.f32 %v3058, %v3321
        %v3338 = vsub.f32 %v3210, %v3322
        %v3339 = vsub.f32 %v3212, %v3323
        %v3340 = vsub.f32 %v2754, %v3324
        %v3341 = vsub.f32 %v2756, %v3325
        %v3342 = vsub.f32 %v2908, %v3326
        %v3343 = vsub.f32 %v2910, %v3327
        %v3344 = vsub.f32 %v3062, %v3328
        %v3345 = vsub.f32 %v3064, %v3329
        %v3346 = vsub.f32 %v3216, %v3330
        %v3347 = vsub.f32 %v3218, %v3331
        %v3348 = vmul.f32 %v3332, %v3332
        %v3349 = vmul.f32 %v3333, %v3333
        %v3350 = vmul.f32 %v3334, %v3334
        %v3351 = vmul.f32 %v3335, %v3335
        %v3352 = vmul.f32 %v3336, %v3336
        %v3353 = vmul.f32 %v3337, %v3337
        %v3354 = vmul.f32 %v3338, %v3338
        %v3355 = vmul.f32 %v3339, %v3339
        %v3356 = vmul.f32 %v3340, %v3340
        %v3357 = vmul.f32 %v3341, %v3341
        %v3358 = vmul.f32 %v3342, %v3342
        %v3359 = vmul.f32 %v3343, %v3343
        %v3360 = vmul.f32 %v3344, %v3344
        %v3361 = vmul.f32 %v3345, %v3345
        %v3362 = vmul.f32 %v3346, %v3346
        %v3363 = vmul.f32 %v3347, %v3347
        %v3364 = vrot.slane %v3348, 4
        %v3365 = vadd.f32 %v3348, %v3364
        %v3366 = vrot.slane %v3365, 2
        %v3367 = vadd.f32 %v3365, %v3366
        %v3368 = vrot.slane %v3367, 1
        %v3369 = vadd.f32 %v3367, %v3368
        %v3370 = vrot.slane %v3349, 4
        %v3371 = vadd.f32 %v3349, %v3370
        %v3372 = vrot.slane %v3371, 2
        %v3373 = vadd.f32 %v3371, %v3372
        %v3374 = vrot.slane %v3373, 1
        %v3375 = vadd.f32 %v3373, %v3374
        %v3376 = vrot.slane %v3350, 4
        %v3377 = vadd.f32 %v3350, %v3376
        %v3378 = vrot.slane %v3377, 2
        %v3379 = vadd.f32 %v3377, %v3378
        %v3380 = vrot.slane %v3379, 1
        %v3381 = vadd.f32 %v3379, %v3380
        %v3382 = vrot.slane %v3351, 4
        %v3383 = vadd.f32 %v3351, %v3382
        %v3384 = vrot.slane %v3383, 2
        %v3385 = vadd.f32 %v3383, %v3384
        %v3386 = vrot.slane %v3385, 1
        %v3387 = vadd.f32 %v3385, %v3386
        %v3388 = vrot.slane %v3352, 4
        %v3389 = vadd.f32 %v3352, %v3388
        %v3390 = vrot.slane %v3389, 2
        %v3391 = vadd.f32 %v3389, %v3390
        %v3392 = vrot.slane %v3391, 1
        %v3393 = vadd.f32 %v3391, %v3392
        %v3394 = vrot.slane %v3353, 4
        %v3395 = vadd.f32 %v3353, %v3394
        %v3396 = vrot.slane %v3395, 2
        %v3397 = vadd.f32 %v3395, %v3396
        %v3398 = vrot.slane %v3397, 1
        %v3399 = vadd.f32 %v3397, %v3398
        %v3400 = vrot.slane %v3354, 4
        %v3401 = vadd.f32 %v3354, %v3400
        %v3402 = vrot.slane %v3401, 2
        %v3403 = vadd.f32 %v3401, %v3402
        %v3404 = vrot.slane %v3403, 1
        %v3405 = vadd.f32 %v3403, %v3404
        %v3406 = vrot.slane %v3355, 4
        %v3407 = vadd.f32 %v3355, %v3406
        %v3408 = vrot.slane %v3407, 2
        %v3409 = vadd.f32 %v3407, %v3408
        %v3410 = vrot.slane %v3409, 1
        %v3411 = vadd.f32 %v3409, %v3410
        %v3412 = vrot.slane %v3356, 4
        %v3413 = vadd.f32 %v3356, %v3412
        %v3414 = vrot.slane %v3413, 2
        %v3415 = vadd.f32 %v3413, %v3414
        %v3416 = vrot.slane %v3415, 1
        %v3417 = vadd.f32 %v3415, %v3416
        %v3418 = vrot.slane %v3357, 4
        %v3419 = vadd.f32 %v3357, %v3418
        %v3420 = vrot.slane %v3419, 2
        %v3421 = vadd.f32 %v3419, %v3420
        %v3422 = vrot.slane %v3421, 1
        %v3423 = vadd.f32 %v3421, %v3422
        %v3424 = vrot.slane %v3358, 4
        %v3425 = vadd.f32 %v3358, %v3424
        %v3426 = vrot.slane %v3425, 2
        %v3427 = vadd.f32 %v3425, %v3426
        %v3428 = vrot.slane %v3427, 1
        %v3429 = vadd.f32 %v3427, %v3428
        %v3430 = vrot.slane %v3359, 4
        %v3431 = vadd.f32 %v3359, %v3430
        %v3432 = vrot.slane %v3431, 2
        %v3433 = vadd.f32 %v3431, %v3432
        %v3434 = vrot.slane %v3433, 1
        %v3435 = vadd.f32 %v3433, %v3434
        %v3436 = vrot.slane %v3360, 4
        %v3437 = vadd.f32 %v3360, %v3436
        %v3438 = vrot.slane %v3437, 2
        %v3439 = vadd.f32 %v3437, %v3438
        %v3440 = vrot.slane %v3439, 1
        %v3441 = vadd.f32 %v3439, %v3440
        %v3442 = vrot.slane %v3361, 4
        %v3443 = vadd.f32 %v3361, %v3442
        %v3444 = vrot.slane %v3443, 2
        %v3445 = vadd.f32 %v3443, %v3444
        %v3446 = vrot.slane %v3445, 1
        %v3447 = vadd.f32 %v3445, %v3446
        %v3448 = vrot.slane %v3362, 4
        %v3449 = vadd.f32 %v3362, %v3448
        %v3450 = vrot.slane %v3449, 2
        %v3451 = vadd.f32 %v3449, %v3450
        %v3452 = vrot.slane %v3451, 1
        %v3453 = vadd.f32 %v3451, %v3452
        %v3454 = vrot.slane %v3363, 4
        %v3455 = vadd.f32 %v3363, %v3454
        %v3456 = vrot.slane %v3455, 2
        %v3457 = vadd.f32 %v3455, %v3456
        %v3458 = vrot.slane %v3457, 1
        %v3459 = vadd.f32 %v3457, %v3458
        %v3460 = vmul.f32 %v3369, %v970
        %v3461 = vmul.f32 %v3375, %v970
        %v3462 = vmul.f32 %v3381, %v970
        %v3463 = vmul.f32 %v3387, %v970
        %v3464 = vmul.f32 %v3393, %v970
        %v3465 = vmul.f32 %v3399, %v970
        %v3466 = vmul.f32 %v3405, %v970
        %v3467 = vmul.f32 %v3411, %v970
        %v3468 = vmul.f32 %v3417, %v970
        %v3469 = vmul.f32 %v3423, %v970
        %v3470 = vmul.f32 %v3429, %v970
        %v3471 = vmul.f32 %v3435, %v970
        %v3472 = vmul.f32 %v3441, %v970
        %v3473 = vmul.f32 %v3447, %v970
        %v3474 = vmul.f32 %v3453, %v970
        %v3475 = vmul.f32 %v3459, %v970
        %v3476 = vld [vmem:[#allocation26] sm:$0xff]
        %v3477 = vadd.f32 %v3460, 1e-05
        %v3478 = vadd.f32 %v3461, 1e-05
        %v3479 = vadd.f32 %v3462, 1e-05
        %v3480 = vadd.f32 %v3463, 1e-05
        %v3481 = vadd.f32 %v3464, 1e-05
        %v3482 = vadd.f32 %v3465, 1e-05
        %v3483 = vadd.f32 %v3466, 1e-05
        %v3484 = vadd.f32 %v3467, 1e-05
        %v3485 = vadd.f32 %v3468, 1e-05
        %v3486 = vadd.f32 %v3469, 1e-05
        %v3487 = vadd.f32 %v3470, 1e-05
        %v3488 = vadd.f32 %v3471, 1e-05
        %v3489 = vadd.f32 %v3472, 1e-05
        %v3490 = vadd.f32 %v3473, 1e-05
        %v3491 = vadd.f32 %v3474, 1e-05
        %v3492 = vadd.f32 %v3475, 1e-05
        %v3493 = vrsqrt.pop %v3477
        %v3494 = vrsqrt.pop %v3478
        %v3495 = vrsqrt.pop %v3479
        %v3496 = vrsqrt.pop %v3480
        %v3497 = vrsqrt.pop %v3481
        %v3498 = vrsqrt.pop %v3482
        %v3499 = vrsqrt.pop %v3483
        %v3500 = vrsqrt.pop %v3484
        %v3501 = vrsqrt.pop %v3485
        %v3502 = vrsqrt.pop %v3486
        %v3503 = vrsqrt.pop %v3487
        %v3504 = vrsqrt.pop %v3488
        %v3505 = vrsqrt.pop %v3489
        %v3506 = vrsqrt.pop %v3490
        %v3507 = vrsqrt.pop %v3491
        %v3508 = vrsqrt.pop %v3492
        %v3525 = vcombine.low %v3493, %v3494
        %v3526 = vcombine.low %v3495, %v3496
        %v3527 = vcombine.low %v3497, %v3498
        %v3528 = vcombine.low %v3499, %v3500
        %v3530 = vunpack.c.l.s4 1966171168
        %v3531 = vunpack.c.0.s8 %v3530
        %v3532 = vlaneseq
        %v3533 = vshrl.u32 %v3532, 7
        %v3534 = vsub.s32 %v3531, %v3533
        %v3535 = vrot.slane %v3525, %v3534
        %v3537 = vunpack.c.l.s4 1966171168
        %v3538 = vunpack.c.0.s8 %v3537
        %v3539 = vlaneseq
        %v3540 = vshrl.u32 %v3539, 7
        %v3541 = vsub.s32 %v3538, %v3540
        %v3542 = vrot.slane %v3526, %v3541
        %v3544 = vunpack.c.l.s4 1966171168
        %v3545 = vunpack.c.0.s8 %v3544
        %v3546 = vlaneseq
        %v3547 = vshrl.u32 %v3546, 7
        %v3548 = vsub.s32 %v3545, %v3547
        %v3549 = vrot.slane %v3527, %v3548
        %v3551 = vunpack.c.l.s4 1966171168
        %v3552 = vunpack.c.0.s8 %v3551
        %v3553 = vlaneseq
        %v3554 = vshrl.u32 %v3553, 7
        %v3555 = vsub.s32 %v3552, %v3554
        %v3556 = vrot.slane %v3528, %v3555
        %v3557 = vcombine.low %v3535, %v3542
        %v3558 = vcombine.low %v3549, %v3556
        %v3560 = vunpack.c.l.s4 1966171168
        %v3561 = vunpack.c.0.s8 %v3560
        %v3562 = vlaneseq
        %v3563 = vshrl.u32 %v3562, 7
        %v3564 = vsub.s32 %v3561, %v3563
        %v3565 = vrot.slane %v3557, %v3564
        %v3567 = vunpack.c.l.s4 1966171168
        %v3568 = vunpack.c.0.s8 %v3567
        %v3569 = vlaneseq
        %v3570 = vshrl.u32 %v3569, 7
        %v3571 = vsub.s32 %v3568, %v3570
        %v3572 = vrot.slane %v3558, %v3571
        %v3573 = vcombine.low %v3565, %v3572
        %v3574 = vcombine.low %v3501, %v3502
        %v3575 = vcombine.low %v3503, %v3504
        %v3576 = vcombine.low %v3505, %v3506
        %v3577 = vcombine.low %v3507, %v3508
        %v3579 = vunpack.c.l.s4 1966171168
        %v3580 = vunpack.c.0.s8 %v3579
        %v3581 = vlaneseq
        %v3582 = vshrl.u32 %v3581, 7
        %v3583 = vsub.s32 %v3580, %v3582
        %v3584 = vrot.slane %v3574, %v3583
        %v3586 = vunpack.c.l.s4 1966171168
        %v3587 = vunpack.c.0.s8 %v3586
        %v3588 = vlaneseq
        %v3589 = vshrl.u32 %v3588, 7
        %v3590 = vsub.s32 %v3587, %v3589
        %v3591 = vrot.slane %v3575, %v3590
        %v3593 = vunpack.c.l.s4 1966171168
        %v3594 = vunpack.c.0.s8 %v3593
        %v3595 = vlaneseq
        %v3596 = vshrl.u32 %v3595, 7
        %v3597 = vsub.s32 %v3594, %v3596
        %v3598 = vrot.slane %v3576, %v3597
        %v3600 = vunpack.c.l.s4 1966171168
        %v3601 = vunpack.c.0.s8 %v3600
        %v3602 = vlaneseq
        %v3603 = vshrl.u32 %v3602, 7
        %v3604 = vsub.s32 %v3601, %v3603
        %v3605 = vrot.slane %v3577, %v3604
        %v3606 = vcombine.low %v3584, %v3591
        %v3607 = vcombine.low %v3598, %v3605
        %v3609 = vunpack.c.l.s4 1966171168
        %v3610 = vunpack.c.0.s8 %v3609
        %v3611 = vlaneseq
        %v3612 = vshrl.u32 %v3611, 7
        %v3613 = vsub.s32 %v3610, %v3612
        %v3614 = vrot.slane %v3606, %v3613
        %v3616 = vunpack.c.l.s4 1966171168
        %v3617 = vunpack.c.0.s8 %v3616
        %v3618 = vlaneseq
        %v3619 = vshrl.u32 %v3618, 7
        %v3620 = vsub.s32 %v3617, %v3619
        %v3621 = vrot.slane %v3607, %v3620
        %v3622 = vcombine.low %v3614, %v3621
        %v3625 = vmul.f32 %v3476, %v3573
        %v3626 = vmul.f32 %v3476, %v3622
        %v3627 = vld [vmem:[#allocation28] sm:$0xff]
        %v3630 = vlaneseq
        %v3631 = vshrl.u32 %v3630, 7
        %v3632 = vsub.s32 0, %v3631
        %v3633 = vrot.slane %v3625, %v3632
        %v3634 = vlaneseq
        %v3635 = vshrl.u32 %v3634, 7
        %v3636 = vsub.s32 1, %v3635
        %v3637 = vrot.slane %v3625, %v3636
        %v3638 = vlaneseq
        %v3639 = vshrl.u32 %v3638, 7
        %v3640 = vsub.s32 2, %v3639
        %v3641 = vrot.slane %v3625, %v3640
        %v3642 = vlaneseq
        %v3643 = vshrl.u32 %v3642, 7
        %v3644 = vsub.s32 3, %v3643
        %v3645 = vrot.slane %v3625, %v3644
        %v3646 = vlaneseq
        %v3647 = vshrl.u32 %v3646, 7
        %v3648 = vsub.s32 4, %v3647
        %v3649 = vrot.slane %v3625, %v3648
        %v3650 = vlaneseq
        %v3651 = vshrl.u32 %v3650, 7
        %v3652 = vsub.s32 5, %v3651
        %v3653 = vrot.slane %v3625, %v3652
        %v3654 = vlaneseq
        %v3655 = vshrl.u32 %v3654, 7
        %v3656 = vsub.s32 6, %v3655
        %v3657 = vrot.slane %v3625, %v3656
        %v3658 = vlaneseq
        %v3659 = vshrl.u32 %v3658, 7
        %v3660 = vsub.s32 7, %v3659
        %v3661 = vrot.slane %v3625, %v3660
        %v3662 = vlaneseq
        %v3663 = vshrl.u32 %v3662, 7
        %v3664 = vsub.s32 0, %v3663
        %v3665 = vrot.slane %v3626, %v3664
        %v3666 = vlaneseq
        %v3667 = vshrl.u32 %v3666, 7
        %v3668 = vsub.s32 1, %v3667
        %v3669 = vrot.slane %v3626, %v3668
        %v3670 = vlaneseq
        %v3671 = vshrl.u32 %v3670, 7
        %v3672 = vsub.s32 2, %v3671
        %v3673 = vrot.slane %v3626, %v3672
        %v3674 = vlaneseq
        %v3675 = vshrl.u32 %v3674, 7
        %v3676 = vsub.s32 3, %v3675
        %v3677 = vrot.slane %v3626, %v3676
        %v3678 = vlaneseq
        %v3679 = vshrl.u32 %v3678, 7
        %v3680 = vsub.s32 4, %v3679
        %v3681 = vrot.slane %v3626, %v3680
        %v3682 = vlaneseq
        %v3683 = vshrl.u32 %v3682, 7
        %v3684 = vsub.s32 5, %v3683
        %v3685 = vrot.slane %v3626, %v3684
        %v3686 = vlaneseq
        %v3687 = vshrl.u32 %v3686, 7
        %v3688 = vsub.s32 6, %v3687
        %v3689 = vrot.slane %v3626, %v3688
        %v3690 = vlaneseq
        %v3691 = vshrl.u32 %v3690, 7
        %v3692 = vsub.s32 7, %v3691
        %v3693 = vrot.slane %v3626, %v3692
        %v3710 = vmul.f32 %v3316, %v3633
        %v3711 = vmul.f32 %v3317, %v3637
        %v3712 = vmul.f32 %v3318, %v3641
        %v3713 = vmul.f32 %v3319, %v3645
        %v3714 = vmul.f32 %v3320, %v3649
        %v3715 = vmul.f32 %v3321, %v3653
        %v3716 = vmul.f32 %v3322, %v3657
        %v3717 = vmul.f32 %v3323, %v3661
        %v3718 = vmul.f32 %v3324, %v3665
        %v3719 = vmul.f32 %v3325, %v3669
        %v3720 = vmul.f32 %v3326, %v3673
        %v3721 = vmul.f32 %v3327, %v3677
        %v3722 = vmul.f32 %v3328, %v3681
        %v3723 = vmul.f32 %v3329, %v3685
        %v3724 = vmul.f32 %v3330, %v3689
        %v3725 = vmul.f32 %v3331, %v3693
        %v3742 = vcombine.low %v3710, %v3711
        %v3743 = vcombine.low %v3712, %v3713
        %v3744 = vcombine.low %v3714, %v3715
        %v3745 = vcombine.low %v3716, %v3717
        %v3747 = vunpack.c.l.s4 1966171168
        %v3748 = vunpack.c.0.s8 %v3747
        %v3749 = vlaneseq
        %v3750 = vshrl.u32 %v3749, 7
        %v3751 = vsub.s32 %v3748, %v3750
        %v3752 = vrot.slane %v3742, %v3751
        %v3754 = vunpack.c.l.s4 1966171168
        %v3755 = vunpack.c.0.s8 %v3754
        %v3756 = vlaneseq
        %v3757 = vshrl.u32 %v3756, 7
        %v3758 = vsub.s32 %v3755, %v3757
        %v3759 = vrot.slane %v3743, %v3758
        %v3761 = vunpack.c.l.s4 1966171168
        %v3762 = vunpack.c.0.s8 %v3761
        %v3763 = vlaneseq
        %v3764 = vshrl.u32 %v3763, 7
        %v3765 = vsub.s32 %v3762, %v3764
        %v3766 = vrot.slane %v3744, %v3765
        %v3768 = vunpack.c.l.s4 1966171168
        %v3769 = vunpack.c.0.s8 %v3768
        %v3770 = vlaneseq
        %v3771 = vshrl.u32 %v3770, 7
        %v3772 = vsub.s32 %v3769, %v3771
        %v3773 = vrot.slane %v3745, %v3772
        %v3774 = vcombine.low %v3752, %v3759
        %v3775 = vcombine.low %v3766, %v3773
        %v3777 = vunpack.c.l.s4 1966171168
        %v3778 = vunpack.c.0.s8 %v3777
        %v3779 = vlaneseq
        %v3780 = vshrl.u32 %v3779, 7
        %v3781 = vsub.s32 %v3778, %v3780
        %v3782 = vrot.slane %v3774, %v3781
        %v3784 = vunpack.c.l.s4 1966171168
        %v3785 = vunpack.c.0.s8 %v3784
        %v3786 = vlaneseq
        %v3787 = vshrl.u32 %v3786, 7
        %v3788 = vsub.s32 %v3785, %v3787
        %v3789 = vrot.slane %v3775, %v3788
        %v3790 = vcombine.low %v3782, %v3789
        %v3791 = vcombine.low %v3718, %v3719
        %v3792 = vcombine.low %v3720, %v3721
        %v3793 = vcombine.low %v3722, %v3723
        %v3794 = vcombine.low %v3724, %v3725
        %v3796 = vunpack.c.l.s4 1966171168
        %v3797 = vunpack.c.0.s8 %v3796
        %v3798 = vlaneseq
        %v3799 = vshrl.u32 %v3798, 7
        %v3800 = vsub.s32 %v3797, %v3799
        %v3801 = vrot.slane %v3791, %v3800
        %v3803 = vunpack.c.l.s4 1966171168
        %v3804 = vunpack.c.0.s8 %v3803
        %v3805 = vlaneseq
        %v3806 = vshrl.u32 %v3805, 7
        %v3807 = vsub.s32 %v3804, %v3806
        %v3808 = vrot.slane %v3792, %v3807
        %v3810 = vunpack.c.l.s4 1966171168
        %v3811 = vunpack.c.0.s8 %v3810
        %v3812 = vlaneseq
        %v3813 = vshrl.u32 %v3812, 7
        %v3814 = vsub.s32 %v3811, %v3813
        %v3815 = vrot.slane %v3793, %v3814
        %v3817 = vunpack.c.l.s4 1966171168
        %v3818 = vunpack.c.0.s8 %v3817
        %v3819 = vlaneseq
        %v3820 = vshrl.u32 %v3819, 7
        %v3821 = vsub.s32 %v3818, %v3820
        %v3822 = vrot.slane %v3794, %v3821
        %v3823 = vcombine.low %v3801, %v3808
        %v3824 = vcombine.low %v3815, %v3822
        %v3826 = vunpack.c.l.s4 1966171168
        %v3827 = vunpack.c.0.s8 %v3826
        %v3828 = vlaneseq
        %v3829 = vshrl.u32 %v3828, 7
        %v3830 = vsub.s32 %v3827, %v3829
        %v3831 = vrot.slane %v3823, %v3830
        %v3833 = vunpack.c.l.s4 1966171168
        %v3834 = vunpack.c.0.s8 %v3833
        %v3835 = vlaneseq
        %v3836 = vshrl.u32 %v3835, 7
        %v3837 = vsub.s32 %v3834, %v3836
        %v3838 = vrot.slane %v3824, %v3837
        %v3839 = vcombine.low %v3831, %v3838
        %v3842 = vsub.f32 %v3627, %v3790
        %v3843 = vsub.f32 %v3627, %v3839
        %v3844 = vmul.f32 %v2748, %v3633
        %v3845 = vmul.f32 %v2750, %v3637
        %v3846 = vmul.f32 %v2902, %v3641
        %v3847 = vmul.f32 %v2904, %v3645
        %v3848 = vmul.f32 %v3056, %v3649
        %v3849 = vmul.f32 %v3058, %v3653
        %v3850 = vmul.f32 %v3210, %v3657
        %v3851 = vmul.f32 %v3212, %v3661
        %v3852 = vmul.f32 %v2754, %v3665
        %v3853 = vmul.f32 %v2756, %v3669
        %v3854 = vmul.f32 %v2908, %v3673
        %v3855 = vmul.f32 %v2910, %v3677
        %v3856 = vmul.f32 %v3062, %v3681
        %v3857 = vmul.f32 %v3064, %v3685
        %v3858 = vmul.f32 %v3216, %v3689
        %v3859 = vmul.f32 %v3218, %v3693
        %v3862 = vlaneseq
        %v3863 = vshrl.u32 %v3862, 7
        %v3864 = vsub.s32 0, %v3863
        %v3865 = vrot.slane %v3842, %v3864
        %v3866 = vlaneseq
        %v3867 = vshrl.u32 %v3866, 7
        %v3868 = vsub.s32 1, %v3867
        %v3869 = vrot.slane %v3842, %v3868
        %v3870 = vlaneseq
        %v3871 = vshrl.u32 %v3870, 7
        %v3872 = vsub.s32 2, %v3871
        %v3873 = vrot.slane %v3842, %v3872
        %v3874 = vlaneseq
        %v3875 = vshrl.u32 %v3874, 7
        %v3876 = vsub.s32 3, %v3875
        %v3877 = vrot.slane %v3842, %v3876
        %v3878 = vlaneseq
        %v3879 = vshrl.u32 %v3878, 7
        %v3880 = vsub.s32 4, %v3879
        %v3881 = vrot.slane %v3842, %v3880
        %v3882 = vlaneseq
        %v3883 = vshrl.u32 %v3882, 7
        %v3884 = vsub.s32 5, %v3883
        %v3885 = vrot.slane %v3842, %v3884
        %v3886 = vlaneseq
        %v3887 = vshrl.u32 %v3886, 7
        %v3888 = vsub.s32 6, %v3887
        %v3889 = vrot.slane %v3842, %v3888
        %v3890 = vlaneseq
        %v3891 = vshrl.u32 %v3890, 7
        %v3892 = vsub.s32 7, %v3891
        %v3893 = vrot.slane %v3842, %v3892
        %v3894 = vlaneseq
        %v3895 = vshrl.u32 %v3894, 7
        %v3896 = vsub.s32 0, %v3895
        %v3897 = vrot.slane %v3843, %v3896
        %v3898 = vlaneseq
        %v3899 = vshrl.u32 %v3898, 7
        %v3900 = vsub.s32 1, %v3899
        %v3901 = vrot.slane %v3843, %v3900
        %v3902 = vlaneseq
        %v3903 = vshrl.u32 %v3902, 7
        %v3904 = vsub.s32 2, %v3903
        %v3905 = vrot.slane %v3843, %v3904
        %v3906 = vlaneseq
        %v3907 = vshrl.u32 %v3906, 7
        %v3908 = vsub.s32 3, %v3907
        %v3909 = vrot.slane %v3843, %v3908
        %v3910 = vlaneseq
        %v3911 = vshrl.u32 %v3910, 7
        %v3912 = vsub.s32 4, %v3911
        %v3913 = vrot.slane %v3843, %v3912
        %v3914 = vlaneseq
        %v3915 = vshrl.u32 %v3914, 7
        %v3916 = vsub.s32 5, %v3915
        %v3917 = vrot.slane %v3843, %v3916
        %v3918 = vlaneseq
        %v3919 = vshrl.u32 %v3918, 7
        %v3920 = vsub.s32 6, %v3919
        %v3921 = vrot.slane %v3843, %v3920
        %v3922 = vlaneseq
        %v3923 = vshrl.u32 %v3922, 7
        %v3924 = vsub.s32 7, %v3923
        %v3925 = vrot.slane %v3843, %v3924
        %v3942 = vadd.f32 %v3844, %v3865
        %v3943 = vadd.f32 %v3845, %v3869
        %v3944 = vadd.f32 %v3846, %v3873
        %v3945 = vadd.f32 %v3847, %v3877
        %v3946 = vadd.f32 %v3848, %v3881
        %v3947 = vadd.f32 %v3849, %v3885
        %v3948 = vadd.f32 %v3850, %v3889
        %v3949 = vadd.f32 %v3851, %v3893
        %v3950 = vadd.f32 %v3852, %v3897
        %v3951 = vadd.f32 %v3853, %v3901
        %v3952 = vadd.f32 %v3854, %v3905
        %v3953 = vadd.f32 %v3855, %v3909
        %v3954 = vadd.f32 %v3856, %v3913
        %v3955 = vadd.f32 %v3857, %v3917
        %v3956 = vadd.f32 %v3858, %v3921
        %v3957 = vadd.f32 %v3859, %v3925
        %v3958 = vmax.f32 %v3942, 0.0
        %v3959 = vmax.f32 %v3943, 0.0
        %v3960 = vmax.f32 %v3944, 0.0
        %v3961 = vmax.f32 %v3945, 0.0
        %v3962 = vmax.f32 %v3946, 0.0
        %v3963 = vmax.f32 %v3947, 0.0
        %v3964 = vmax.f32 %v3948, 0.0
        %v3965 = vmax.f32 %v3949, 0.0
        %v3966 = vmax.f32 %v3950, 0.0
        %v3967 = vmax.f32 %v3951, 0.0
        %v3968 = vmax.f32 %v3952, 0.0
        %v3969 = vmax.f32 %v3953, 0.0
        %v3970 = vmax.f32 %v3954, 0.0
        %v3971 = vmax.f32 %v3955, 0.0
        %v3972 = vmax.f32 %v3956, 0.0
        %v3973 = vmax.f32 %v3957, 0.0
        %v3974 = vld [vmem:[#allocation29] sm:$0xff]
        %v3975 = vld [vmem:[#allocation29 + $0x8] sm:$0xff]
        %v3976 = vld [vmem:[#allocation29 + $0x10] sm:$0xff]
        %v3977 = vld [vmem:[#allocation29 + $0x18] sm:$0xff]
        %v3978 = vld [vmem:[#allocation29 + $0x20] sm:$0xff]
        %v3979 = vld [vmem:[#allocation29 + $0x28] sm:$0xff]
        %v3980 = vld [vmem:[#allocation29 + $0x30] sm:$0xff]
        %v3981 = vld [vmem:[#allocation29 + $0x38] sm:$0xff]
        %v3982 = vld [vmem:[#allocation29 + $0x40] sm:$0xff]
        %v3983 = vld [vmem:[#allocation29 + $0x48] sm:$0xff]
        %v3984 = vld [vmem:[#allocation29 + $0x50] sm:$0xff]
        %v3985 = vld [vmem:[#allocation29 + $0x58] sm:$0xff]
        %v3986 = vld [vmem:[#allocation29 + $0x60] sm:$0xff]
        %v3987 = vld [vmem:[#allocation29 + $0x68] sm:$0xff]
        %v3988 = vld [vmem:[#allocation29 + $0x70] sm:$0xff]
        %v3989 = vld [vmem:[#allocation29 + $0x78] sm:$0xff]
        %v3990 = vld [vmem:[#allocation29 + $0x80] sm:$0xff]
        %v3991 = vld [vmem:[#allocation29 + $0x88] sm:$0xff]
        %v3992 = vld [vmem:[#allocation29 + $0x90] sm:$0xff]
        %v3993 = vld [vmem:[#allocation29 + $0x98] sm:$0xff]
        %v3994 = vld [vmem:[#allocation29 + $0xa0] sm:$0xff]
        %v3995 = vld [vmem:[#allocation29 + $0xa8] sm:$0xff]
        %v3996 = vld [vmem:[#allocation29 + $0xb0] sm:$0xff]
        %v3997 = vld [vmem:[#allocation29 + $0xb8] sm:$0xff]
        %v3998 = vld [vmem:[#allocation29 + $0xc0] sm:$0xff]
        %v3999 = vld [vmem:[#allocation29 + $0xc8] sm:$0xff]
        %v4000 = vld [vmem:[#allocation29 + $0xd0] sm:$0xff]
        %v4001 = vld [vmem:[#allocation29 + $0xd8] sm:$0xff]
        %v4002 = vld [vmem:[#allocation29 + $0xe0] sm:$0xff]
        %v4003 = vld [vmem:[#allocation29 + $0xe8] sm:$0xff]
        %v4004 = vld [vmem:[#allocation29 + $0xf0] sm:$0xff]
        %v4005 = vld [vmem:[#allocation29 + $0xf8] sm:$0xff]
        %v4006 = vld [vmem:[#allocation29 + $0x100] sm:$0xff]
        %v4007 = vld [vmem:[#allocation29 + $0x108] sm:$0xff]
        %v4008 = vld [vmem:[#allocation29 + $0x110] sm:$0xff]
        %v4009 = vld [vmem:[#allocation29 + $0x118] sm:$0xff]
        %v4010 = vld [vmem:[#allocation29 + $0x120] sm:$0xff]
        %v4011 = vld [vmem:[#allocation29 + $0x128] sm:$0xff]
        %v4012 = vld [vmem:[#allocation29 + $0x130] sm:$0xff]
        %v4013 = vld [vmem:[#allocation29 + $0x138] sm:$0xff]
        %v4014 = vld [vmem:[#allocation29 + $0x140] sm:$0xff]
        %v4015 = vld [vmem:[#allocation29 + $0x148] sm:$0xff]
        %v4016 = vld [vmem:[#allocation29 + $0x150] sm:$0xff]
        %v4017 = vld [vmem:[#allocation29 + $0x158] sm:$0xff]
        %v4018 = vld [vmem:[#allocation29 + $0x160] sm:$0xff]
        %v4019 = vld [vmem:[#allocation29 + $0x168] sm:$0xff]
        %v4020 = vld [vmem:[#allocation29 + $0x170] sm:$0xff]
        %v4021 = vld [vmem:[#allocation29 + $0x178] sm:$0xff]
        %v4022 = vld [vmem:[#allocation29 + $0x180] sm:$0xff]
        %v4023 = vld [vmem:[#allocation29 + $0x188] sm:$0xff]
        %v4024 = vld [vmem:[#allocation29 + $0x190] sm:$0xff]
        %v4025 = vld [vmem:[#allocation29 + $0x198] sm:$0xff]
        %v4026 = vld [vmem:[#allocation29 + $0x1a0] sm:$0xff]
        %v4027 = vld [vmem:[#allocation29 + $0x1a8] sm:$0xff]
        %v4028 = vld [vmem:[#allocation29 + $0x1b0] sm:$0xff]
        %v4029 = vld [vmem:[#allocation29 + $0x1b8] sm:$0xff]
        %v4030 = vld [vmem:[#allocation29 + $0x1c0] sm:$0xff]
        %v4031 = vld [vmem:[#allocation29 + $0x1c8] sm:$0xff]
        %v4032 = vld [vmem:[#allocation29 + $0x1d0] sm:$0xff]
        %v4033 = vld [vmem:[#allocation29 + $0x1d8] sm:$0xff]
        %v4034 = vld [vmem:[#allocation29 + $0x1e0] sm:$0xff]
        %v4035 = vld [vmem:[#allocation29 + $0x1e8] sm:$0xff]
        %v4036 = vld [vmem:[#allocation29 + $0x1f0] sm:$0xff]
        %v4037 = vld [vmem:[#allocation29 + $0x1f8] sm:$0xff]
        %v4038 = vld [vmem:[#allocation29 + $0x200] sm:$0xff]
        %v4039 = vld [vmem:[#allocation29 + $0x208] sm:$0xff]
        %v4040 = vld [vmem:[#allocation29 + $0x210] sm:$0xff]
        %v4041 = vld [vmem:[#allocation29 + $0x218] sm:$0xff]
        %v4042 = vld [vmem:[#allocation29 + $0x220] sm:$0xff]
        %v4043 = vld [vmem:[#allocation29 + $0x228] sm:$0xff]
        %v4044 = vld [vmem:[#allocation29 + $0x230] sm:$0xff]
        %v4045 = vld [vmem:[#allocation29 + $0x238] sm:$0xff]
        %v4046 = vld [vmem:[#allocation29 + $0x240] sm:$0xff]
        %v4047 = vld [vmem:[#allocation29 + $0x248] sm:$0xff]
        %v4048 = vld [vmem:[#allocation29 + $0x250] sm:$0xff]
        %v4049 = vld [vmem:[#allocation29 + $0x258] sm:$0xff]
        %v4050 = vld [vmem:[#allocation29 + $0x260] sm:$0xff]
        %v4051 = vld [vmem:[#allocation29 + $0x268] sm:$0xff]
        %v4052 = vld [vmem:[#allocation29 + $0x270] sm:$0xff]
        %v4053 = vld [vmem:[#allocation29 + $0x278] sm:$0xff]
        %v4054 = vld [vmem:[#allocation29 + $0x280] sm:$0xff]
        %v4055 = vld [vmem:[#allocation29 + $0x288] sm:$0xff]
        %v4056 = vld [vmem:[#allocation29 + $0x290] sm:$0xff]
        %v4057 = vld [vmem:[#allocation29 + $0x298] sm:$0xff]
        %v4058 = vld [vmem:[#allocation29 + $0x2a0] sm:$0xff]
        %v4059 = vld [vmem:[#allocation29 + $0x2a8] sm:$0xff]
        %v4060 = vld [vmem:[#allocation29 + $0x2b0] sm:$0xff]
        %v4061 = vld [vmem:[#allocation29 + $0x2b8] sm:$0xff]
        %v4062 = vld [vmem:[#allocation29 + $0x2c0] sm:$0xff]
        %v4063 = vld [vmem:[#allocation29 + $0x2c8] sm:$0xff]
        %v4064 = vld [vmem:[#allocation29 + $0x2d0] sm:$0xff]
        %v4065 = vld [vmem:[#allocation29 + $0x2d8] sm:$0xff]
        %v4066 = vld [vmem:[#allocation29 + $0x2e0] sm:$0xff]
        %v4067 = vld [vmem:[#allocation29 + $0x2e8] sm:$0xff]
        %v4068 = vld [vmem:[#allocation29 + $0x2f0] sm:$0xff]
        %v4069 = vld [vmem:[#allocation29 + $0x2f8] sm:$0xff]
        %v4070 = vld [vmem:[#allocation29 + $0x300] sm:$0xff]
        %v4071 = vld [vmem:[#allocation29 + $0x308] sm:$0xff]
        %v4072 = vld [vmem:[#allocation29 + $0x310] sm:$0xff]
        %v4073 = vld [vmem:[#allocation29 + $0x318] sm:$0xff]
        %v4074 = vld [vmem:[#allocation29 + $0x320] sm:$0xff]
        %v4075 = vld [vmem:[#allocation29 + $0x328] sm:$0xff]
        %v4076 = vld [vmem:[#allocation29 + $0x330] sm:$0xff]
        %v4077 = vld [vmem:[#allocation29 + $0x338] sm:$0xff]
        %v4078 = vld [vmem:[#allocation29 + $0x340] sm:$0xff]
        %v4079 = vld [vmem:[#allocation29 + $0x348] sm:$0xff]
        %v4080 = vld [vmem:[#allocation29 + $0x350] sm:$0xff]
        %v4081 = vld [vmem:[#allocation29 + $0x358] sm:$0xff]
        %v4082 = vld [vmem:[#allocation29 + $0x360] sm:$0xff]
        %v4083 = vld [vmem:[#allocation29 + $0x368] sm:$0xff]
        %v4084 = vld [vmem:[#allocation29 + $0x370] sm:$0xff]
        %v4085 = vld [vmem:[#allocation29 + $0x378] sm:$0xff]
        %v4086 = vld [vmem:[#allocation29 + $0x380] sm:$0xff]
        %v4087 = vld [vmem:[#allocation29 + $0x388] sm:$0xff]
        %v4088 = vld [vmem:[#allocation29 + $0x390] sm:$0xff]
        %v4089 = vld [vmem:[#allocation29 + $0x398] sm:$0xff]
        %v4090 = vld [vmem:[#allocation29 + $0x3a0] sm:$0xff]
        %v4091 = vld [vmem:[#allocation29 + $0x3a8] sm:$0xff]
        %v4092 = vld [vmem:[#allocation29 + $0x3b0] sm:$0xff]
        %v4093 = vld [vmem:[#allocation29 + $0x3b8] sm:$0xff]
        %v4094 = vld [vmem:[#allocation29 + $0x3c0] sm:$0xff]
        %v4095 = vld [vmem:[#allocation29 + $0x3c8] sm:$0xff]
        %v4096 = vld [vmem:[#allocation29 + $0x3d0] sm:$0xff]
        %v4097 = vld [vmem:[#allocation29 + $0x3d8] sm:$0xff]
        %v4098 = vld [vmem:[#allocation29 + $0x3e0] sm:$0xff]
        %v4099 = vld [vmem:[#allocation29 + $0x3e8] sm:$0xff]
        %v4100 = vld [vmem:[#allocation29 + $0x3f0] sm:$0xff]
        %v4101 = vld [vmem:[#allocation29 + $0x3f8] sm:$0xff]
        %v4102 = vld [vmem:[#allocation31] sm:$0x1]
        %v4104 = vlaneseq
        %v4105 = vshrl.u32 %v4104, 7
        %v4106 = vsub.s32 0, %v4105
        %v4107 = vrot.slane %v4102, %v4106
        %4109 = vmatprep.subr.mxu0 0.0
        %4110 = vmatpush1.msra.mxu0 %v3989
        %4111 = vmatprep.subr.mxu0 0.0
        %4112 = vmatpush1.msra.mxu0 %v3988
        %4113 = vmatprep.subr.mxu0 0.0
        %4114 = vmatpush1.msra.mxu0 %v3987
        %4115 = vmatprep.subr.mxu0 0.0
        %4116 = vmatpush1.msra.mxu0 %v3986
        %4117 = vmatprep.subr.mxu0 0.0
        %4118 = vmatpush1.msra.mxu0 %v3985
        %4119 = vmatprep.subr.mxu0 0.0
        %4120 = vmatpush1.msra.mxu0 %v3984
        %4121 = vmatprep.subr.mxu0 0.0
        %4122 = vmatpush1.msra.mxu0 %v3983
        %4123 = vmatprep.subr.mxu0 0.0
        %4124 = vmatpush1.msra.mxu0 %v3982
        %4125 = vmatprep.subr.mxu0 0.0
        %4126 = vmatpush1.msra.mxu0 %v3981
        %4127 = vmatprep.subr.mxu0 0.0
        %4128 = vmatpush1.msra.mxu0 %v3980
        %4129 = vmatprep.subr.mxu0 0.0
        %4130 = vmatpush1.msra.mxu0 %v3979
        %4131 = vmatprep.subr.mxu0 0.0
        %4132 = vmatpush1.msra.mxu0 %v3978
        %4133 = vmatprep.subr.mxu0 0.0
        %4134 = vmatpush1.msra.mxu0 %v3977
        %4135 = vmatprep.subr.mxu0 0.0
        %4136 = vmatpush1.msra.mxu0 %v3976
        %4137 = vmatprep.subr.mxu0 0.0
        %4138 = vmatpush1.msra.mxu0 %v3975
        %4139 = vmatprep.subr.mxu0 0.0
        %4140 = vmatpush1.msra.mxu0 %v3974
        %4141 = vmatprep.subr.mxu0 0.0
        %4142 = vmatpush2.msra.mxu0 %v4005
        %4143 = vmatprep.subr.mxu0 0.0
        %4144 = vmatpush2.msra.mxu0 %v4004
        %4145 = vmatprep.subr.mxu0 0.0
        %4146 = vmatpush2.msra.mxu0 %v4003
        %4147 = vmatprep.subr.mxu0 0.0
        %4148 = vmatpush2.msra.mxu0 %v4002
        %4149 = vmatprep.subr.mxu0 0.0
        %4150 = vmatpush2.msra.mxu0 %v4001
        %4151 = vmatprep.subr.mxu0 0.0
        %4152 = vmatpush2.msra.mxu0 %v4000
        %4153 = vmatprep.subr.mxu0 0.0
        %4154 = vmatpush2.msra.mxu0 %v3999
        %4155 = vmatprep.subr.mxu0 0.0
        %4156 = vmatpush2.msra.mxu0 %v3998
        %4157 = vmatprep.subr.mxu0 0.0
        %4158 = vmatpush2.msra.mxu0 %v3997
        %4159 = vmatprep.subr.mxu0 0.0
        %4160 = vmatpush2.msra.mxu0 %v3996
        %4161 = vmatprep.subr.mxu0 0.0
        %4162 = vmatpush2.msra.mxu0 %v3995
        %4163 = vmatprep.subr.mxu0 0.0
        %4164 = vmatpush2.msra.mxu0 %v3994
        %4165 = vmatprep.subr.mxu0 0.0
        %4166 = vmatpush2.msra.mxu0 %v3993
        %4167 = vmatprep.subr.mxu0 0.0
        %4168 = vmatpush2.msra.mxu0 %v3992
        %4169 = vmatprep.subr.mxu0 0.0
        %4170 = vmatpush2.msra.mxu0 %v3991
        %4171 = vmatprep.subr.mxu0 0.0
        %4172 = vmatpush2.msra.mxu0 %v3990
        %4173 = vmatprep.mubr.f32.mxu0 %v3959
        %4174 = vmatmul.mubr.f32.gmra.mxu0 %v3958
        %v4175 = vpop.f32.mrf.mxu0
        %v4176 = vadd.f32 %v4107, %v4175
        %v4177 = vpop.f32.mrf.mxu0
        %4178 = vmatprep.mubr.f32.mxu0 %v3967
        %4179 = vmatmul.mubr.f32.gmra.mxu0 %v3966
        %v4180 = vpop.f32.mrf.mxu0
        %v4181 = vadd.f32 %v4107, %v4180
        %v4182 = vpop.f32.mrf.mxu0
        %4183 = vdwg.mxu0
        %4184 = vmatprep.subr.mxu0 0.0
        %4185 = vmatpush1.msra.mxu0 %v4021
        %4186 = vmatprep.subr.mxu0 0.0
        %4187 = vmatpush1.msra.mxu0 %v4020
        %4188 = vmatprep.subr.mxu0 0.0
        %4189 = vmatpush1.msra.mxu0 %v4019
        %4190 = vmatprep.subr.mxu0 0.0
        %4191 = vmatpush1.msra.mxu0 %v4018
        %4192 = vmatprep.subr.mxu0 0.0
        %4193 = vmatpush1.msra.mxu0 %v4017
        %4194 = vmatprep.subr.mxu0 0.0
        %4195 = vmatpush1.msra.mxu0 %v4016
        %4196 = vmatprep.subr.mxu0 0.0
        %4197 = vmatpush1.msra.mxu0 %v4015
        %4198 = vmatprep.subr.mxu0 0.0
        %4199 = vmatpush1.msra.mxu0 %v4014
        %4200 = vmatprep.subr.mxu0 0.0
        %4201 = vmatpush1.msra.mxu0 %v4013
        %4202 = vmatprep.subr.mxu0 0.0
        %4203 = vmatpush1.msra.mxu0 %v4012
        %4204 = vmatprep.subr.mxu0 0.0
        %4205 = vmatpush1.msra.mxu0 %v4011
        %4206 = vmatprep.subr.mxu0 0.0
        %4207 = vmatpush1.msra.mxu0 %v4010
        %4208 = vmatprep.subr.mxu0 0.0
        %4209 = vmatpush1.msra.mxu0 %v4009
        %4210 = vmatprep.subr.mxu0 0.0
        %4211 = vmatpush1.msra.mxu0 %v4008
        %4212 = vmatprep.subr.mxu0 0.0
        %4213 = vmatpush1.msra.mxu0 %v4007
        %4214 = vmatprep.subr.mxu0 0.0
        %4215 = vmatpush1.msra.mxu0 %v4006
        %4216 = vmatprep.subr.mxu0 0.0
        %4217 = vmatpush2.msra.mxu0 %v4037
        %4218 = vmatprep.subr.mxu0 0.0
        %4219 = vmatpush2.msra.mxu0 %v4036
        %4220 = vmatprep.subr.mxu0 0.0
        %4221 = vmatpush2.msra.mxu0 %v4035
        %4222 = vmatprep.subr.mxu0 0.0
        %4223 = vmatpush2.msra.mxu0 %v4034
        %4224 = vmatprep.subr.mxu0 0.0
        %4225 = vmatpush2.msra.mxu0 %v4033
        %4226 = vmatprep.subr.mxu0 0.0
        %4227 = vmatpush2.msra.mxu0 %v4032
        %4228 = vmatprep.subr.mxu0 0.0
        %4229 = vmatpush2.msra.mxu0 %v4031
        %4230 = vmatprep.subr.mxu0 0.0
        %4231 = vmatpush2.msra.mxu0 %v4030
        %4232 = vmatprep.subr.mxu0 0.0
        %4233 = vmatpush2.msra.mxu0 %v4029
        %4234 = vmatprep.subr.mxu0 0.0
        %4235 = vmatpush2.msra.mxu0 %v4028
        %4236 = vmatprep.subr.mxu0 0.0
        %4237 = vmatpush2.msra.mxu0 %v4027
        %4238 = vmatprep.subr.mxu0 0.0
        %4239 = vmatpush2.msra.mxu0 %v4026
        %4240 = vmatprep.subr.mxu0 0.0
        %4241 = vmatpush2.msra.mxu0 %v4025
        %4242 = vmatprep.subr.mxu0 0.0
        %4243 = vmatpush2.msra.mxu0 %v4024
        %4244 = vmatprep.subr.mxu0 0.0
        %4245 = vmatpush2.msra.mxu0 %v4023
        %4246 = vmatprep.subr.mxu0 0.0
        %4247 = vmatpush2.msra.mxu0 %v4022
        %4248 = vmatprep.mubr.f32.mxu0 %v3961
        %4249 = vmatmul.mubr.f32.gmra.mxu0 %v3960
        %v4250 = vpop.f32.mrf.mxu0
        %v4251 = vadd.f32 %v4176, %v4250
        %v4252 = vpop.f32.mrf.mxu0
        %4253 = vmatprep.mubr.f32.mxu0 %v3969
        %4254 = vmatmul.mubr.f32.gmra.mxu0 %v3968
        %v4255 = vpop.f32.mrf.mxu0
        %v4256 = vadd.f32 %v4181, %v4255
        %v4257 = vpop.f32.mrf.mxu0
        %4258 = vdwg.mxu0
        %4259 = vmatprep.subr.mxu0 0.0
        %4260 = vmatpush1.msra.mxu0 %v4053
        %4261 = vmatprep.subr.mxu0 0.0
        %4262 = vmatpush1.msra.mxu0 %v4052
        %4263 = vmatprep.subr.mxu0 0.0
        %4264 = vmatpush1.msra.mxu0 %v4051
        %4265 = vmatprep.subr.mxu0 0.0
        %4266 = vmatpush1.msra.mxu0 %v4050
        %4267 = vmatprep.subr.mxu0 0.0
        %4268 = vmatpush1.msra.mxu0 %v4049
        %4269 = vmatprep.subr.mxu0 0.0
        %4270 = vmatpush1.msra.mxu0 %v4048
        %4271 = vmatprep.subr.mxu0 0.0
        %4272 = vmatpush1.msra.mxu0 %v4047
        %4273 = vmatprep.subr.mxu0 0.0
        %4274 = vmatpush1.msra.mxu0 %v4046
        %4275 = vmatprep.subr.mxu0 0.0
        %4276 = vmatpush1.msra.mxu0 %v4045
        %4277 = vmatprep.subr.mxu0 0.0
        %4278 = vmatpush1.msra.mxu0 %v4044
        %4279 = vmatprep.subr.mxu0 0.0
        %4280 = vmatpush1.msra.mxu0 %v4043
        %4281 = vmatprep.subr.mxu0 0.0
        %4282 = vmatpush1.msra.mxu0 %v4042
        %4283 = vmatprep.subr.mxu0 0.0
        %4284 = vmatpush1.msra.mxu0 %v4041
        %4285 = vmatprep.subr.mxu0 0.0
        %4286 = vmatpush1.msra.mxu0 %v4040
        %4287 = vmatprep.subr.mxu0 0.0
        %4288 = vmatpush1.msra.mxu0 %v4039
        %4289 = vmatprep.subr.mxu0 0.0
        %4290 = vmatpush1.msra.mxu0 %v4038
        %4291 = vmatprep.subr.mxu0 0.0
        %4292 = vmatpush2.msra.mxu0 %v4069
        %4293 = vmatprep.subr.mxu0 0.0
        %4294 = vmatpush2.msra.mxu0 %v4068
        %4295 = vmatprep.subr.mxu0 0.0
        %4296 = vmatpush2.msra.mxu0 %v4067
        %4297 = vmatprep.subr.mxu0 0.0
        %4298 = vmatpush2.msra.mxu0 %v4066
        %4299 = vmatprep.subr.mxu0 0.0
        %4300 = vmatpush2.msra.mxu0 %v4065
        %4301 = vmatprep.subr.mxu0 0.0
        %4302 = vmatpush2.msra.mxu0 %v4064
        %4303 = vmatprep.subr.mxu0 0.0
        %4304 = vmatpush2.msra.mxu0 %v4063
        %4305 = vmatprep.subr.mxu0 0.0
        %4306 = vmatpush2.msra.mxu0 %v4062
        %4307 = vmatprep.subr.mxu0 0.0
        %4308 = vmatpush2.msra.mxu0 %v4061
        %4309 = vmatprep.subr.mxu0 0.0
        %4310 = vmatpush2.msra.mxu0 %v4060
        %4311 = vmatprep.subr.mxu0 0.0
        %4312 = vmatpush2.msra.mxu0 %v4059
        %4313 = vmatprep.subr.mxu0 0.0
        %4314 = vmatpush2.msra.mxu0 %v4058
        %4315 = vmatprep.subr.mxu0 0.0
        %4316 = vmatpush2.msra.mxu0 %v4057
        %4317 = vmatprep.subr.mxu0 0.0
        %4318 = vmatpush2.msra.mxu0 %v4056
        %4319 = vmatprep.subr.mxu0 0.0
        %4320 = vmatpush2.msra.mxu0 %v4055
        %4321 = vmatprep.subr.mxu0 0.0
        %4322 = vmatpush2.msra.mxu0 %v4054
        %4323 = vmatprep.mubr.f32.mxu0 %v3963
        %4324 = vmatmul.mubr.f32.gmra.mxu0 %v3962
        %v4325 = vpop.f32.mrf.mxu0
        %v4326 = vadd.f32 %v4251, %v4325
        %v4327 = vpop.f32.mrf.mxu0
        %4328 = vmatprep.mubr.f32.mxu0 %v3971
        %4329 = vmatmul.mubr.f32.gmra.mxu0 %v3970
        %v4330 = vpop.f32.mrf.mxu0
        %v4331 = vadd.f32 %v4256, %v4330
        %v4332 = vpop.f32.mrf.mxu0
        %4333 = vdwg.mxu0
        %4334 = vmatprep.subr.mxu0 0.0
        %4335 = vmatpush1.msra.mxu0 %v4085
        %4336 = vmatprep.subr.mxu0 0.0
        %4337 = vmatpush1.msra.mxu0 %v4084
        %4338 = vmatprep.subr.mxu0 0.0
        %4339 = vmatpush1.msra.mxu0 %v4083
        %4340 = vmatprep.subr.mxu0 0.0
        %4341 = vmatpush1.msra.mxu0 %v4082
        %4342 = vmatprep.subr.mxu0 0.0
        %4343 = vmatpush1.msra.mxu0 %v4081
        %4344 = vmatprep.subr.mxu0 0.0
        %4345 = vmatpush1.msra.mxu0 %v4080
        %4346 = vmatprep.subr.mxu0 0.0
        %4347 = vmatpush1.msra.mxu0 %v4079
        %4348 = vmatprep.subr.mxu0 0.0
        %4349 = vmatpush1.msra.mxu0 %v4078
        %4350 = vmatprep.subr.mxu0 0.0
        %4351 = vmatpush1.msra.mxu0 %v4077
        %4352 = vmatprep.subr.mxu0 0.0
        %4353 = vmatpush1.msra.mxu0 %v4076
        %4354 = vmatprep.subr.mxu0 0.0
        %4355 = vmatpush1.msra.mxu0 %v4075
        %4356 = vmatprep.subr.mxu0 0.0
        %4357 = vmatpush1.msra.mxu0 %v4074
        %4358 = vmatprep.subr.mxu0 0.0
        %4359 = vmatpush1.msra.mxu0 %v4073
        %4360 = vmatprep.subr.mxu0 0.0
        %4361 = vmatpush1.msra.mxu0 %v4072
        %4362 = vmatprep.subr.mxu0 0.0
        %4363 = vmatpush1.msra.mxu0 %v4071
        %4364 = vmatprep.subr.mxu0 0.0
        %4365 = vmatpush1.msra.mxu0 %v4070
        %4366 = vmatprep.subr.mxu0 0.0
        %4367 = vmatpush2.msra.mxu0 %v4101
        %4368 = vmatprep.subr.mxu0 0.0
        %4369 = vmatpush2.msra.mxu0 %v4100
        %4370 = vmatprep.subr.mxu0 0.0
        %4371 = vmatpush2.msra.mxu0 %v4099
        %4372 = vmatprep.subr.mxu0 0.0
        %4373 = vmatpush2.msra.mxu0 %v4098
        %4374 = vmatprep.subr.mxu0 0.0
        %4375 = vmatpush2.msra.mxu0 %v4097
        %4376 = vmatprep.subr.mxu0 0.0
        %4377 = vmatpush2.msra.mxu0 %v4096
        %4378 = vmatprep.subr.mxu0 0.0
        %4379 = vmatpush2.msra.mxu0 %v4095
        %4380 = vmatprep.subr.mxu0 0.0
        %4381 = vmatpush2.msra.mxu0 %v4094
        %4382 = vmatprep.subr.mxu0 0.0
        %4383 = vmatpush2.msra.mxu0 %v4093
        %4384 = vmatprep.subr.mxu0 0.0
        %4385 = vmatpush2.msra.mxu0 %v4092
        %4386 = vmatprep.subr.mxu0 0.0
        %4387 = vmatpush2.msra.mxu0 %v4091
        %4388 = vmatprep.subr.mxu0 0.0
        %4389 = vmatpush2.msra.mxu0 %v4090
        %4390 = vmatprep.subr.mxu0 0.0
        %4391 = vmatpush2.msra.mxu0 %v4089
        %4392 = vmatprep.subr.mxu0 0.0
        %4393 = vmatpush2.msra.mxu0 %v4088
        %4394 = vmatprep.subr.mxu0 0.0
        %4395 = vmatpush2.msra.mxu0 %v4087
        %4396 = vmatprep.subr.mxu0 0.0
        %4397 = vmatpush2.msra.mxu0 %v4086
        %4398 = vmatprep.mubr.f32.mxu0 %v3965
        %4399 = vmatmul.mubr.f32.gmra.mxu0 %v3964
        %v4400 = vpop.f32.mrf.mxu0
        %v4401 = vadd.f32 %v4326, %v4400
        %v4402 = vpop.f32.mrf.mxu0
        %4403 = vmatprep.mubr.f32.mxu0 %v3973
        %4404 = vmatmul.mubr.f32.gmra.mxu0 %v3972
        %v4405 = vpop.f32.mrf.mxu0
        %v4406 = vadd.f32 %v4331, %v4405
        %v4407 = vpop.f32.mrf.mxu0
        %4408 = vdwg.mxu0
        %v4409 = vmul.f32 %v4401, 0.5
        %v4410 = vmul.f32 %v4406, 0.5
        %v4411 = vtanh.pop %v4409
        %v4412 = vtanh.pop %v4410
        %v4413 = vadd.f32 %v4411, 1.0
        %v4414 = vadd.f32 %v4412, 1.0
        %v4415 = vmul.f32 %v4413, 0.5
        %v4416 = vmul.f32 %v4414, 0.5
        %4417 = vst [vmem:[%s855] sm:$0xff] %v4415
        %4418 = vst [vmem:[%s855 + $0x8] sm:$0xff] %v4416
        %s4419 = sand.u32 %s457, 1
        %s4420 = scalar_lea.sflag [#allocation4], %s4419
        %s4421 = sand.u32 %s457, 1
        %s4422 = smul.addr %s4421, 16
        %s4423 = scalar_lea.vmem [#allocation32], %s4422
        // Predicated region
        $region173: #{tpu_custom_call.1} parent=95 // pred_check
          %p4424 = pneg %p467
        $region174: #{tpu_custom_call.1} parent=95 // pred_check_branch
          %4426 = sbr.rel (%p4424) target = $region176
        $region175: #{tpu_custom_call.1} parent=95 // pred_region
          %s4427 = smul.u32 2, %s45
          %s4429 = ssub.s32 256, 256
          %4430 = vsyncadd %s4420, %s4429
          %s4431 = smul.addr %s4427, 128
          %s4432 = scalar_lea.hbm %s19, %s4431
          %s4433 = sshll.u32 %s4423, 4
          %s4434 = int_to_ptr.vmem [resolvable:$true] %s4433
          %4439 = dma.vmem_to_hbm [thread:$0]  %s4434, 256, %s4432, %s4420, 128, 128, 8
        $region176: #{tpu_custom_call.1} parent=95 // pred_fallthru
          _
      $region96: #{tpu_custom_call.1} parent=5 // pred_fallthru
        _
      %p4440 = scmp.le.s32.totalorder 2, %s40
      // Predicated region
      $region177: #{tpu_custom_call.1} parent=5 // pred_check
        %p4441 = pneg %p4440
      $region178: #{tpu_custom_call.1} parent=5 // pred_check_branch
        %4443 = sbr.rel (%p4441) target = $region180
      $region179: #{tpu_custom_call.1} parent=5 // pred_region
        %s4444 = ssub.s32 %s40, 2
        // Predicated region
        $region181: #{tpu_custom_call.1} parent=179 // pred_check
          %p4445 = pneg %p473
        $region182: #{tpu_custom_call.1} parent=179 // pred_check_branch
          %4447 = sbr.rel (%p4445) target = $region184
        $region183: #{tpu_custom_call.1} parent=179 // pred_region
          %s4448 = sand.u32 %s458, 1
          %s4449 = scalar_lea.sflag [#allocation4], %s4448
          %s4450 = sand.u32 %s458, 1
          %s4451 = smul.addr %s4450, 16
          %s4452 = scalar_lea.vmem [#allocation32], %s4451
          %4453 = dma.done %s4449, 256
        $region184: #{tpu_custom_call.1} parent=179 // pred_fallthru
          _
      $region180: #{tpu_custom_call.1} parent=5 // pred_fallthru
        _
    $region6: #{tpu_custom_call.1} parent=1 // loop_footer
      %s44 = sadd.s32 1, %s40
    $region7: #{tpu_custom_call.1} parent=1 // loop_footer_branch
      %39 = sbr.rel target = $region3
    $region8: #{tpu_custom_call.1} parent=1 // loop_exit
      _
    %4454 = vsyncpa [#allocation3], 1
    %s4455 = scalar_lea.sflag [#allocation3], 1
    %4456 = vsyncpa %s4455, 1
    %4457 = vsyncpa [#allocation6], 1
    %4458 = vsyncpa [#allocation9], 1
    %4459 = vsyncpa [#allocation12], 1
    %4460 = vsyncpa [#allocation15], 1
    %4461 = vsyncpa [#allocation18], 1
    %4462 = vsyncpa [#allocation21], 1
    %4463 = vsyncpa [#allocation24], 1
    %4464 = vsyncpa [#allocation27], 1
    %4465 = vsyncpa [#allocation30], 1
    %4466 = vsyncpa [#allocation4], 1
    %s4467 = scalar_lea.sflag [#allocation4], 1
    %4468 = vsyncpa %s4467, 1

// kernel: tpu_custom_call.1
$region0: #{tpu_custom_call.1}
  #allocation0 [shape = 'u32[]', space=smem, size = 0x4, offset = 0x4, fixed_abs, tag = 'smem constant byte address 0x4 - core index']
  #allocation1 [shape = 'u32[144,128]{1,0:T(1,128)}', space=vmem, size = 0x12000, scoped, tag = 'internal scratch']
  %s0 = inlined_call_operand.hbm [shape: f32[4,8,128], index: 0, kind: input, shape index: {}]
  %s1 = inlined_call_operand.hbm [shape: f32[128,128], index: 1, kind: input, shape index: {}]
  %s2 = inlined_call_operand.hbm [shape: f32[1,128], index: 2, kind: input, shape index: {}]
  %s3 = inlined_call_operand.hbm [shape: f32[1,128], index: 3, kind: input, shape index: {}]
  %s4 = inlined_call_operand.hbm [shape: f32[1,128], index: 4, kind: input, shape index: {}]
  %s5 = inlined_call_operand.hbm [shape: f32[128,256], index: 5, kind: input, shape index: {}]
  %s6 = inlined_call_operand.hbm [shape: f32[1,256], index: 6, kind: input, shape index: {}]
  %s7 = inlined_call_operand.hbm [shape: f32[1,256], index: 7, kind: input, shape index: {}]
  %s8 = inlined_call_operand.hbm [shape: f32[1,256], index: 8, kind: input, shape index: {}]
  %s9 = inlined_call_operand.hbm [shape: f32[256,512], index: 9, kind: input, shape index: {}]
  %s10 = inlined_call_operand.hbm [shape: f32[1,512], index: 10, kind: input, shape index: {}]
  %s11 = inlined_call_operand.hbm [shape: f32[1,512], index: 11, kind: input, shape index: {}]
  %s12 = inlined_call_operand.hbm [shape: f32[1,512], index: 12, kind: input, shape index: {}]
  %s13 = inlined_call_operand.hbm [shape: f32[512,1024], index: 13, kind: input, shape index: {}]
  %s14 = inlined_call_operand.hbm [shape: f32[1,1024], index: 14, kind: input, shape index: {}]
  %s15 = inlined_call_operand.hbm [shape: f32[1,1024], index: 15, kind: input, shape index: {}]
  %s16 = inlined_call_operand.hbm [shape: f32[1,1024], index: 16, kind: input, shape index: {}]
  %s17 = inlined_call_operand.hbm [shape: f32[1024,128], index: 17, kind: input, shape index: {}]
  %s18 = inlined_call_operand.hbm [shape: f32[1,128], index: 18, kind: input, shape index: {}]
  %s19 = inlined_call_operand.hbm [shape: f32[4,8,128], index: 19, kind: output, shape index: {}]
  %s20 = sld [smem:[#allocation0]]
  $region185: #{tpu_custom_call.1} parent=0
    _
  %s22 = ssub.s32 1, %s20
  %s23 = scalar_select 0, %s22, %s20
  $region1: #{tpu_custom_call.1} parent=0
    #allocation2 [shape = 'u8[16384]{0}', space=vmem, size = 0x4000, scoped, tag = 'input window, operand 0']
    #allocation3 [shape = 's32[2]{0}', space=sflag, size = 0x8, scoped, tag = 'scoped memory for tpu_custom_call.1']
    #allocation4 [shape = 's32[2]{0}', space=sflag, size = 0x8, scoped, tag = 'scoped memory for tpu_custom_call.1']
    #allocation5 [shape = 'u8[65536]{0}', space=vmem, size = 0x10000, scoped, tag = 'input window, operand 1, single buffered']
    #allocation6 [shape = 's32[1]{0}', space=sflag, size = 0x4, scoped, tag = 'scoped memory for tpu_custom_call.1']
    #allocation7 [shape = 'u8[512]{0}', space=vmem, size = 0x400, scoped, tag = 'input window, operand 2, single buffered']
    #allocation8 [shape = 'u8[512]{0}', space=vmem, size = 0x400, scoped, tag = 'input window, operand 3, single buffered']
    #allocation9 [shape = 's32[1]{0}', space=sflag, size = 0x4, scoped, tag = 'scoped memory for tpu_custom_call.1']
    #allocation10 [shape = 'u8[512]{0}', space=vmem, size = 0x400, scoped, tag = 'input window, operand 4, single buffered']
    #allocation11 [shape = 'u8[131072]{0}', space=vmem, size = 0x20000, scoped, tag = 'input window, operand 5, single buffered']
    #allocation12 [shape = 's32[1]{0}', space=sflag, size = 0x4, scoped, tag = 'scoped memory for tpu_custom_call.1']
    #allocation13 [shape = 'u8[1024]{0}', space=vmem, size = 0x400, scoped, tag = 'input window, operand 6, single buffered']
    #allocation14 [shape = 'u8[1024]{0}', space=vmem, size = 0x400, scoped, tag = 'input window, operand 7, single buffered']
    #allocation15 [shape = 's32[1]{0}', space=sflag, size = 0x4, scoped, tag = 'scoped memory for tpu_custom_call.1']
    #allocation16 [shape = 'u8[1024]{0}', space=vmem, size = 0x400, scoped, tag = 'input window, operand 8, single buffered']
    #allocation17 [shape = 'u8[524288]{0}', space=vmem, size = 0x80000, scoped, tag = 'input window, operand 9, single buffered']
    #allocation18 [shape = 's32[1]{0}', space=sflag, size = 0x4, scoped, tag = 'scoped memory for tpu_custom_call.1']
    #allocation19 [shape = 'u8[2048]{0}', space=vmem, size = 0x800, scoped, tag = 'input window, operand 10, single buffered']
    #allocation20 [shape = 'u8[2048]{0}', space=vmem, size = 0x800, scoped, tag = 'input window, operand 11, single buffered']
    #allocation21 [shape = 's32[1]{0}', space=sflag, size = 0x4, scoped, tag = 'scoped memory for tpu_custom_call.1']
    #allocation22 [shape = 'u8[2048]{0}', space=vmem, size = 0x800, scoped, tag = 'input window, operand 12, single buffered']
    #allocation23 [shape = 'u8[2097152]{0}', space=vmem, size = 0x200000, scoped, tag = 'input window, operand 13, single buffered']
    #allocation24 [shape = 's32[1]{0}', space=sflag, size = 0x4, scoped, tag = 'scoped memory for tpu_custom_call.1']
    #allocation25 [shape = 'u8[4096]{0}', space=vmem, size = 0x1000, scoped, tag = 'input window, operand 14, single buffered']
    #allocation26 [shape = 'u8[4096]{0}', space=vmem, size = 0x1000, scoped, tag = 'input window, operand 15, single buffered']
    #allocation27 [shape = 's32[1]{0}', space=sflag, size = 0x4, scoped, tag = 'scoped memory for tpu_custom_call.1']
    #allocation28 [shape = 'u8[4096]{0}', space=vmem, size = 0x1000, scoped, tag = 'input window, operand 16, single buffered']
    #allocation29 [shape = 'u8[524288]{0}', space=vmem, size = 0x80000, scoped, tag = 'input window, operand 17, single buffered']
    #allocation30 [shape = 's32[1]{0}', space=sflag, size = 0x4, scoped, tag = 'scoped memory for tpu_custom_call.1']
    #allocation31 [shape = 'u8[512]{0}', space=vmem, size = 0x400, scoped, tag = 'input window, operand 18, single buffered']
    #allocation32 [shape = 'u8[16384]{0}', space=vmem, size = 0x4000, scoped, tag = 'output window, operand 0']
    %24 = vsyncpa [#allocation3], 0
    %s25 = scalar_lea.sflag [#allocation3], 1
    %26 = vsyncpa %s25, 0
    %27 = vsyncpa [#allocation6], 0
    %28 = vsyncpa [#allocation9], 0
    %29 = vsyncpa [#allocation12], 0
    %30 = vsyncpa [#allocation15], 0
    %31 = vsyncpa [#allocation18], 0
    %32 = vsyncpa [#allocation21], 0
    %33 = vsyncpa [#allocation24], 0
    %34 = vsyncpa [#allocation27], 0
    %35 = vsyncpa [#allocation30], 0
    %36 = vsyncpa [#allocation4], 0
    %s37 = scalar_lea.sflag [#allocation4], 1
    %38 = vsyncpa %s37, 0
    loop: start=0, step=1, limit=4
    $region2: #{tpu_custom_call.1} parent=1 // loop_pre_header
      _
    $region3: #{tpu_custom_call.1} parent=1 // loop_header
      %s40 = sphi 0, %s44
      %p41 = scmp.ge.s32.totalorder %s40, 4
      %s50 = sphi 0, %s52
      %s53 = sphi 0, %s50
      %s54 = sphi 0, %s53
      %s70 = sphi 0, %s54
      %s74 = sphi 0, %s74
      %s76 = sphi 0, %s74
      %s77 = sphi 0, %s76
      %s91 = sphi 0, %s77
      %s95 = sphi 0, %s95
      %s97 = sphi 0, %s95
      %s98 = sphi 0, %s97
      %s112 = sphi 0, %s98
      %s116 = sphi 0, %s116
      %s118 = sphi 0, %s116
      %s119 = sphi 0, %s118
      %s133 = sphi 0, %s119
      %s137 = sphi 0, %s137
      %s139 = sphi 0, %s137
      %s140 = sphi 0, %s139
      %s154 = sphi 0, %s140
      %s158 = sphi 0, %s158
      %s160 = sphi 0, %s158
      %s161 = sphi 0, %s160
      %s175 = sphi 0, %s161
      %s179 = sphi 0, %s179
      %s181 = sphi 0, %s179
      %s182 = sphi 0, %s181
      %s196 = sphi 0, %s182
      %s200 = sphi 0, %s200
      %s202 = sphi 0, %s200
      %s203 = sphi 0, %s202
      %s217 = sphi 0, %s203
      %s221 = sphi 0, %s221
      %s223 = sphi 0, %s221
      %s224 = sphi 0, %s223
      %s238 = sphi 0, %s224
      %s242 = sphi 0, %s242
      %s244 = sphi 0, %s242
      %s245 = sphi 0, %s244
      %s259 = sphi 0, %s245
      %s263 = sphi 0, %s263
      %s265 = sphi 0, %s263
      %s266 = sphi 0, %s265
      %s280 = sphi 0, %s266
      %s284 = sphi 0, %s284
      %s286 = sphi 0, %s284
      %s287 = sphi 0, %s286
      %s301 = sphi 0, %s287
      %s305 = sphi 0, %s305
      %s307 = sphi 0, %s305
      %s308 = sphi 0, %s307
      %s322 = sphi 0, %s308
      %s326 = sphi 0, %s326
      %s328 = sphi 0, %s326
      %s329 = sphi 0, %s328
      %s343 = sphi 0, %s329
      %s347 = sphi 0, %s347
      %s349 = sphi 0, %s347
      %s350 = sphi 0, %s349
      %s364 = sphi 0, %s350
      %s368 = sphi 0, %s368
      %s370 = sphi 0, %s368
      %s371 = sphi 0, %s370
      %s385 = sphi 0, %s371
      %s389 = sphi 0, %s389
      %s391 = sphi 0, %s389
      %s392 = sphi 0, %s391
      %s406 = sphi 0, %s392
      %s410 = sphi 0, %s410
      %s412 = sphi 0, %s410
      %s413 = sphi 0, %s412
      %s427 = sphi 0, %s413
      %s431 = sphi 0, %s431
      %s433 = sphi 0, %s431
      %s434 = sphi 0, %s433
      %s448 = sphi 0, %s434
      %s454 = sphi 0, %s456
      %s457 = sphi 0, %s454
      %s458 = sphi 0, %s457
      %s474 = sphi 0, %s458
    $region4: #{tpu_custom_call.1} parent=1 // loop_header_branch
      %43 = sbr.rel (%p41) target = $region8
    $region5: #{tpu_custom_call.1} parent=1 // loop_body
      %s45 = ssub.s32 %s40, 1
      %s46 = ssub.s32 %s40, 2
      %s47 = sadd.s32 %s40, 1
      %s48 = ssub.s32 %s40, %s47
      %p49 = scmp.eq.s32.totalorder %s48, 0
      %s51 = sadd.s32 %s50, 1
      %s52 = scalar_select %p49, %s50, %s51
      %p55 = pneg %p49
      %p56 = scmp.eq.s32.totalorder %s40, 1
      %p57 = por %p55, %p56
      %p58 = scmp.ne.s32.totalorder %s50, %s53
      %p59 = scmp.eq.s32.totalorder %s40, 0
      %p60 = por %p58, %p59
      %p61 = scmp.ne.s32.totalorder %s50, %s53
      %p62 = scmp.eq.s32.totalorder %s45, 1
      %p63 = por %p61, %p62
      %p64 = scmp.ne.s32.totalorder %s53, %s54
      %p65 = scmp.eq.s32.totalorder %s45, 0
      %p66 = por %p64, %p65
      %p67 = scmp.ne.s32.totalorder %s53, %s54
      %p68 = scmp.eq.s32.totalorder %s46, 1
      %p69 = por %p67, %p68
      %p71 = scmp.ne.s32.totalorder %s54, %s70
      %p72 = scmp.eq.s32.totalorder %s46, 0
      %p73 = por %p71, %p72
      %s75 = sadd.s32 %s74, 1
      %p78 = scmp.eq.s32.totalorder %s40, 1
      %p79 = scmp.ne.s32.totalorder %s74, %s76
      %p80 = scmp.eq.s32.totalorder %s40, 0
      %p81 = por %p79, %p80
      %p82 = scmp.ne.s32.totalorder %s74, %s76
      %p83 = scmp.eq.s32.totalorder %s45, 1
      %p84 = por %p82, %p83
      %p85 = scmp.ne.s32.totalorder %s76, %s77
      %p86 = scmp.eq.s32.totalorder %s45, 0
      %p87 = por %p85, %p86
      %p88 = scmp.ne.s32.totalorder %s76, %s77
      %p89 = scmp.eq.s32.totalorder %s46, 1
      %p90 = por %p88, %p89
      %p92 = scmp.ne.s32.totalorder %s77, %s91
      %p93 = scmp.eq.s32.totalorder %s46, 0
      %p94 = por %p92, %p93
      %s96 = sadd.s32 %s95, 1
      %p99 = scmp.eq.s32.totalorder %s40, 1
      %p100 = scmp.ne.s32.totalorder %s95, %s97
      %p101 = scmp.eq.s32.totalorder %s40, 0
      %p102 = por %p100, %p101
      %p103 = scmp.ne.s32.totalorder %s95, %s97
      %p104 = scmp.eq.s32.totalorder %s45, 1
      %p105 = por %p103, %p104
      %p106 = scmp.ne.s32.totalorder %s97, %s98
      %p107 = scmp.eq.s32.totalorder %s45, 0
      %p108 = por %p106, %p107
      %p109 = scmp.ne.s32.totalorder %s97, %s98
      %p110 = scmp.eq.s32.totalorder %s46, 1
      %p111 = por %p109, %p110
      %p113 = scmp.ne.s32.totalorder %s98, %s112
      %p114 = scmp.eq.s32.totalorder %s46, 0
      %p115 = por %p113, %p114
      %s117 = sadd.s32 %s116, 1
      %p120 = scmp.eq.s32.totalorder %s40, 1
      %p121 = scmp.ne.s32.totalorder %s116, %s118
      %p122 = scmp.eq.s32.totalorder %s40, 0
      %p123 = por %p121, %p122
      %p124 = scmp.ne.s32.totalorder %s116, %s118
      %p125 = scmp.eq.s32.totalorder %s45, 1
      %p126 = por %p124, %p125
      %p127 = scmp.ne.s32.totalorder %s118, %s119
      %p128 = scmp.eq.s32.totalorder %s45, 0
      %p129 = por %p127, %p128
      %p130 = scmp.ne.s32.totalorder %s118, %s119
      %p131 = scmp.eq.s32.totalorder %s46, 1
      %p132 = por %p130, %p131
      %p134 = scmp.ne.s32.totalorder %s119, %s133
      %p135 = scmp.eq.s32.totalorder %s46, 0
      %p136 = por %p134, %p135
      %s138 = sadd.s32 %s137, 1
      %p141 = scmp.eq.s32.totalorder %s40, 1
      %p142 = scmp.ne.s32.totalorder %s137, %s139
      %p143 = scmp.eq.s32.totalorder %s40, 0
      %p144 = por %p142, %p143
      %p145 = scmp.ne.s32.totalorder %s137, %s139
      %p146 = scmp.eq.s32.totalorder %s45, 1
      %p147 = por %p145, %p146
      %p148 = scmp.ne.s32.totalorder %s139, %s140
      %p149 = scmp.eq.s32.totalorder %s45, 0
      %p150 = por %p148, %p149
      %p151 = scmp.ne.s32.totalorder %s139, %s140
      %p152 = scmp.eq.s32.totalorder %s46, 1
      %p153 = por %p151, %p152
      %p155 = scmp.ne.s32.totalorder %s140, %s154
      %p156 = scmp.eq.s32.totalorder %s46, 0
      %p157 = por %p155, %p156
      %s159 = sadd.s32 %s158, 1
      %p162 = scmp.eq.s32.totalorder %s40, 1
      %p163 = scmp.ne.s32.totalorder %s158, %s160
      %p164 = scmp.eq.s32.totalorder %s40, 0
      %p165 = por %p163, %p164
      %p166 = scmp.ne.s32.totalorder %s158, %s160
      %p167 = scmp.eq.s32.totalorder %s45, 1
      %p168 = por %p166, %p167
      %p169 = scmp.ne.s32.totalorder %s160, %s161
      %p170 = scmp.eq.s32.totalorder %s45, 0
      %p171 = por %p169, %p170
      %p172 = scmp.ne.s32.totalorder %s160, %s161
      %p173 = scmp.eq.s32.totalorder %s46, 1
      %p174 = por %p172, %p173
      %p176 = scmp.ne.s32.totalorder %s161, %s175
      %p177 = scmp.eq.s32.totalorder %s46, 0
      %p178 = por %p176, %p177
      %s180 = sadd.s32 %s179, 1
      %p183 = scmp.eq.s32.totalorder %s40, 1
      %p184 = scmp.ne.s32.totalorder %s179, %s181
      %p185 = scmp.eq.s32.totalorder %s40, 0
      %p186 = por %p184, %p185
      %p187 = scmp.ne.s32.totalorder %s179, %s181
      %p188 = scmp.eq.s32.totalorder %s45, 1
      %p189 = por %p187, %p188
      %p190 = scmp.ne.s32.totalorder %s181, %s182
      %p191 = scmp.eq.s32.totalorder %s45, 0
      %p192 = por %p190, %p191
      %p193 = scmp.ne.s32.totalorder %s181, %s182
      %p194 = scmp.eq.s32.totalorder %s46, 1
      %p195 = por %p193, %p194
      %p197 = scmp.ne.s32.totalorder %s182, %s196
      %p198 = scmp.eq.s32.totalorder %s46, 0
      %p199 = por %p197, %p198
      %s201 = sadd.s32 %s200, 1
      %p204 = scmp.eq.s32.totalorder %s40, 1
      %p205 = scmp.ne.s32.totalorder %s200, %s202
      %p206 = scmp.eq.s32.totalorder %s40, 0
      %p207 = por %p205, %p206
      %p208 = scmp.ne.s32.totalorder %s200, %s202
      %p209 = scmp.eq.s32.totalorder %s45, 1
      %p210 = por %p208, %p209
      %p211 = scmp.ne.s32.totalorder %s202, %s203
      %p212 = scmp.eq.s32.totalorder %s45, 0
      %p213 = por %p211, %p212
      %p214 = scmp.ne.s32.totalorder %s202, %s203
      %p215 = scmp.eq.s32.totalorder %s46, 1
      %p216 = por %p214, %p215
      %p218 = scmp.ne.s32.totalorder %s203, %s217
      %p219 = scmp.eq.s32.totalorder %s46, 0
      %p220 = por %p218, %p219
      %s222 = sadd.s32 %s221, 1
      %p225 = scmp.eq.s32.totalorder %s40, 1
      %p226 = scmp.ne.s32.totalorder %s221, %s223
      %p227 = scmp.eq.s32.totalorder %s40, 0
      %p228 = por %p226, %p227
      %p229 = scmp.ne.s32.totalorder %s221, %s223
      %p230 = scmp.eq.s32.totalorder %s45, 1
      %p231 = por %p229, %p230
      %p232 = scmp.ne.s32.totalorder %s223, %s224
      %p233 = scmp.eq.s32.totalorder %s45, 0
      %p234 = por %p232, %p233
      %p235 = scmp.ne.s32.totalorder %s223, %s224
      %p236 = scmp.eq.s32.totalorder %s46, 1
      %p237 = por %p235, %p236
      %p239 = scmp.ne.s32.totalorder %s224, %s238
      %p240 = scmp.eq.s32.totalorder %s46, 0
      %p241 = por %p239, %p240
      %s243 = sadd.s32 %s242, 1
      %p246 = scmp.eq.s32.totalorder %s40, 1
      %p247 = scmp.ne.s32.totalorder %s242, %s244
      %p248 = scmp.eq.s32.totalorder %s40, 0
      %p249 = por %p247, %p248
      %p250 = scmp.ne.s32.totalorder %s242, %s244
      %p251 = scmp.eq.s32.totalorder %s45, 1
      %p252 = por %p250, %p251
      %p253 = scmp.ne.s32.totalorder %s244, %s245
      %p254 = scmp.eq.s32.totalorder %s45, 0
      %p255 = por %p253, %p254
      %p256 = scmp.ne.s32.totalorder %s244, %s245
      %p257 = scmp.eq.s32.totalorder %s46, 1
      %p258 = por %p256, %p257
      %p260 = scmp.ne.s32.totalorder %s245, %s259
      %p261 = scmp.eq.s32.totalorder %s46, 0
      %p262 = por %p260, %p261
      %s264 = sadd.s32 %s263, 1
      %p267 = scmp.eq.s32.totalorder %s40, 1
      %p268 = scmp.ne.s32.totalorder %s263, %s265
      %p269 = scmp.eq.s32.totalorder %s40, 0
      %p270 = por %p268, %p269
      %p271 = scmp.ne.s32.totalorder %s263, %s265
      %p272 = scmp.eq.s32.totalorder %s45, 1
      %p273 = por %p271, %p272
      %p274 = scmp.ne.s32.totalorder %s265, %s266
      %p275 = scmp.eq.s32.totalorder %s45, 0
      %p276 = por %p274, %p275
      %p277 = scmp.ne.s32.totalorder %s265, %s266
      %p278 = scmp.eq.s32.totalorder %s46, 1
      %p279 = por %p277, %p278
      %p281 = scmp.ne.s32.totalorder %s266, %s280
      %p282 = scmp.eq.s32.totalorder %s46, 0
      %p283 = por %p281, %p282
      %s285 = sadd.s32 %s284, 1
      %p288 = scmp.eq.s32.totalorder %s40, 1
      %p289 = scmp.ne.s32.totalorder %s284, %s286
      %p290 = scmp.eq.s32.totalorder %s40, 0
      %p291 = por %p289, %p290
      %p292 = scmp.ne.s32.totalorder %s284, %s286
      %p293 = scmp.eq.s32.totalorder %s45, 1
      %p294 = por %p292, %p293
      %p295 = scmp.ne.s32.totalorder %s286, %s287
      %p296 = scmp.eq.s32.totalorder %s45, 0
      %p297 = por %p295, %p296
      %p298 = scmp.ne.s32.totalorder %s286, %s287
      %p299 = scmp.eq.s32.totalorder %s46, 1
      %p300 = por %p298, %p299
      %p302 = scmp.ne.s32.totalorder %s287, %s301
      %p303 = scmp.eq.s32.totalorder %s46, 0
      %p304 = por %p302, %p303
      %s306 = sadd.s32 %s305, 1
      %p309 = scmp.eq.s32.totalorder %s40, 1
      %p310 = scmp.ne.s32.totalorder %s305, %s307
      %p311 = scmp.eq.s32.totalorder %s40, 0
      %p312 = por %p310, %p311
      %p313 = scmp.ne.s32.totalorder %s305, %s307
      %p314 = scmp.eq.s32.totalorder %s45, 1
      %p315 = por %p313, %p314
      %p316 = scmp.ne.s32.totalorder %s307, %s308
      %p317 = scmp.eq.s32.totalorder %s45, 0
      %p318 = por %p316, %p317
      %p319 = scmp.ne.s32.totalorder %s307, %s308
      %p320 = scmp.eq.s32.totalorder %s46, 1
      %p321 = por %p319, %p320
      %p323 = scmp.ne.s32.totalorder %s308, %s322
      %p324 = scmp.eq.s32.totalorder %s46, 0
      %p325 = por %p323, %p324
      %s327 = sadd.s32 %s326, 1
      %p330 = scmp.eq.s32.totalorder %s40, 1
      %p331 = scmp.ne.s32.totalorder %s326, %s328
      %p332 = scmp.eq.s32.totalorder %s40, 0
      %p333 = por %p331, %p332
      %p334 = scmp.ne.s32.totalorder %s326, %s328
      %p335 = scmp.eq.s32.totalorder %s45, 1
      %p336 = por %p334, %p335
      %p337 = scmp.ne.s32.totalorder %s328, %s329
      %p338 = scmp.eq.s32.totalorder %s45, 0
      %p339 = por %p337, %p338
      %p340 = scmp.ne.s32.totalorder %s328, %s329
      %p341 = scmp.eq.s32.totalorder %s46, 1
      %p342 = por %p340, %p341
      %p344 = scmp.ne.s32.totalorder %s329, %s343
      %p345 = scmp.eq.s32.totalorder %s46, 0
      %p346 = por %p344, %p345
      %s348 = sadd.s32 %s347, 1
      %p351 = scmp.eq.s32.totalorder %s40, 1
      %p352 = scmp.ne.s32.totalorder %s347, %s349
      %p353 = scmp.eq.s32.totalorder %s40, 0
      %p354 = por %p352, %p353
      %p355 = scmp.ne.s32.totalorder %s347, %s349
      %p356 = scmp.eq.s32.totalorder %s45, 1
      %p357 = por %p355, %p356
      %p358 = scmp.ne.s32.totalorder %s349, %s350
      %p359 = scmp.eq.s32.totalorder %s45, 0
      %p360 = por %p358, %p359
      %p361 = scmp.ne.s32.totalorder %s349, %s350
      %p362 = scmp.eq.s32.totalorder %s46, 1
      %p363 = por %p361, %p362
      %p365 = scmp.ne.s32.totalorder %s350, %s364
      %p366 = scmp.eq.s32.totalorder %s46, 0
      %p367 = por %p365, %p366
      %s369 = sadd.s32 %s368, 1
      %p372 = scmp.eq.s32.totalorder %s40, 1
      %p373 = scmp.ne.s32.totalorder %s368, %s370
      %p374 = scmp.eq.s32.totalorder %s40, 0
      %p375 = por %p373, %p374
      %p376 = scmp.ne.s32.totalorder %s368, %s370
      %p377 = scmp.eq.s32.totalorder %s45, 1
      %p378 = por %p376, %p377
      %p379 = scmp.ne.s32.totalorder %s370, %s371
      %p380 = scmp.eq.s32.totalorder %s45, 0
      %p381 = por %p379, %p380
      %p382 = scmp.ne.s32.totalorder %s370, %s371
      %p383 = scmp.eq.s32.totalorder %s46, 1
      %p384 = por %p382, %p383
      %p386 = scmp.ne.s32.totalorder %s371, %s385
      %p387 = scmp.eq.s32.totalorder %s46, 0
      %p388 = por %p386, %p387
      %s390 = sadd.s32 %s389, 1
      %p393 = scmp.eq.s32.totalorder %s40, 1
      %p394 = scmp.ne.s32.totalorder %s389, %s391
      %p395 = scmp.eq.s32.totalorder %s40, 0
      %p396 = por %p394, %p395
      %p397 = scmp.ne.s32.totalorder %s389, %s391
      %p398 = scmp.eq.s32.totalorder %s45, 1
      %p399 = por %p397, %p398
      %p400 = scmp.ne.s32.totalorder %s391, %s392
      %p401 = scmp.eq.s32.totalorder %s45, 0
      %p402 = por %p400, %p401
      %p403 = scmp.ne.s32.totalorder %s391, %s392
      %p404 = scmp.eq.s32.totalorder %s46, 1
      %p405 = por %p403, %p404
      %p407 = scmp.ne.s32.totalorder %s392, %s406
      %p408 = scmp.eq.s32.totalorder %s46, 0
      %p409 = por %p407, %p408
      %s411 = sadd.s32 %s410, 1
      %p414 = scmp.eq.s32.totalorder %s40, 1
      %p415 = scmp.ne.s32.totalorder %s410, %s412
      %p416 = scmp.eq.s32.totalorder %s40, 0
      %p417 = por %p415, %p416
      %p418 = scmp.ne.s32.totalorder %s410, %s412
      %p419 = scmp.eq.s32.totalorder %s45, 1
      %p420 = por %p418, %p419
      %p421 = scmp.ne.s32.totalorder %s412, %s413
      %p422 = scmp.eq.s32.totalorder %s45, 0
      %p423 = por %p421, %p422
      %p424 = scmp.ne.s32.totalorder %s412, %s413
      %p425 = scmp.eq.s32.totalorder %s46, 1
      %p426 = por %p424, %p425
      %p428 = scmp.ne.s32.totalorder %s413, %s427
      %p429 = scmp.eq.s32.totalorder %s46, 0
      %p430 = por %p428, %p429
      %s432 = sadd.s32 %s431, 1
      %p435 = scmp.eq.s32.totalorder %s40, 1
      %p436 = scmp.ne.s32.totalorder %s431, %s433
      %p437 = scmp.eq.s32.totalorder %s40, 0
      %p438 = por %p436, %p437
      %p439 = scmp.ne.s32.totalorder %s431, %s433
      %p440 = scmp.eq.s32.totalorder %s45, 1
      %p441 = por %p439, %p440
      %p442 = scmp.ne.s32.totalorder %s433, %s434
      %p443 = scmp.eq.s32.totalorder %s45, 0
      %p444 = por %p442, %p443
      %p445 = scmp.ne.s32.totalorder %s433, %s434
      %p446 = scmp.eq.s32.totalorder %s46, 1
      %p447 = por %p445, %p446
      %p449 = scmp.ne.s32.totalorder %s434, %s448
      %p450 = scmp.eq.s32.totalorder %s46, 0
      %p451 = por %p449, %p450
      %s452 = ssub.s32 %s40, %s47
      %p453 = scmp.eq.s32.totalorder %s452, 0
      %s455 = sadd.s32 %s454, 1
      %s456 = scalar_select %p453, %s454, %s455
      %p459 = pneg %p453
      %p460 = scmp.eq.s32.totalorder %s40, 1
      %p461 = por %p459, %p460
      %p462 = scmp.ne.s32.totalorder %s454, %s457
      %p463 = scmp.eq.s32.totalorder %s40, 0
      %p464 = por %p462, %p463
      %p465 = scmp.ne.s32.totalorder %s454, %s457
      %p466 = scmp.eq.s32.totalorder %s45, 1
      %p467 = por %p465, %p466
      %p468 = scmp.ne.s32.totalorder %s457, %s458
      %p469 = scmp.eq.s32.totalorder %s45, 0
      %p470 = por %p468, %p469
      %p471 = scmp.ne.s32.totalorder %s457, %s458
      %p472 = scmp.eq.s32.totalorder %s46, 1
      %p473 = por %p471, %p472
      %p475 = scmp.ne.s32.totalorder %s458, %s474
      %p476 = scmp.eq.s32.totalorder %s46, 0
      %p477 = por %p475, %p476
      %p478 = scmp.le.s32.totalorder 1, %s40
      %p479 = scmp.lt.s32.totalorder %s40, 3
      %p480 = pnand %p478, %p479
      %p481 = pneg %p480
      // Predicated region
      $region9: #{tpu_custom_call.1} parent=5 // pred_check
        _
      $region10: #{tpu_custom_call.1} parent=5 // pred_check_branch
        %483 = sbr.rel (%p480) target = $region12
      $region11: #{tpu_custom_call.1} parent=5 // pred_region
        %s484 = ssub.s32 %s40, 1
        // Predicated region
        $region13: #{tpu_custom_call.1} parent=11 // pred_check
          %p485 = pneg %p87
        $region14: #{tpu_custom_call.1} parent=11 // pred_check_branch
          %487 = sbr.rel (%p485) target = $region16
        $region15: #{tpu_custom_call.1} parent=11 // pred_region
          %s489 = ssub.s32 2048, 2048
          %490 = vsyncadd [#allocation6], %s489
          %s491 = sshll.u32 [#allocation5], 4
          %s492 = int_to_ptr.vmem [resolvable:$true] %s491
          %497 = dma.hbm_to_vmem [thread:$0]  %s1, 2048, %s492, [#allocation6], 128, 128, 8
        $region16: #{tpu_custom_call.1} parent=11 // pred_fallthru
          _
        // Predicated region
        $region17: #{tpu_custom_call.1} parent=11 // pred_check
          %p498 = pneg %p108
        $region18: #{tpu_custom_call.1} parent=11 // pred_check_branch
          %500 = sbr.rel (%p498) target = $region20
        $region19: #{tpu_custom_call.1} parent=11 // pred_region
          %s502 = ssub.s32 16, 16
          %503 = vsyncadd [#allocation6], %s502
          %s505 = sshll.u32 [#allocation7], 4
          %s506 = int_to_ptr.vmem [resolvable:$true] %s505
          %508 = dma.hbm_to_vmem [thread:$0]  %s2, 16, %s506, [#allocation6]
        $region20: #{tpu_custom_call.1} parent=11 // pred_fallthru
          _
        // Predicated region
        $region21: #{tpu_custom_call.1} parent=11 // pred_check
          %p509 = pneg %p129
        $region22: #{tpu_custom_call.1} parent=11 // pred_check_branch
          %511 = sbr.rel (%p509) target = $region24
        $region23: #{tpu_custom_call.1} parent=11 // pred_region
          %s513 = ssub.s32 16, 16
          %514 = vsyncadd [#allocation9], %s513
          %s516 = sshll.u32 [#allocation8], 4
          %s517 = int_to_ptr.vmem [resolvable:$true] %s516
          %519 = dma.hbm_to_vmem [thread:$0]  %s3, 16, %s517, [#allocation9]
        $region24: #{tpu_custom_call.1} parent=11 // pred_fallthru
          _
        // Predicated region
        $region25: #{tpu_custom_call.1} parent=11 // pred_check
          %p520 = pneg %p150
        $region26: #{tpu_custom_call.1} parent=11 // pred_check_branch
          %522 = sbr.rel (%p520) target = $region28
        $region27: #{tpu_custom_call.1} parent=11 // pred_region
          %s524 = ssub.s32 16, 16
          %525 = vsyncadd [#allocation9], %s524
          %s527 = sshll.u32 [#allocation10], 4
          %s528 = int_to_ptr.vmem [resolvable:$true] %s527
          %530 = dma.hbm_to_vmem [thread:$0]  %s4, 16, %s528, [#allocation9]
        $region28: #{tpu_custom_call.1} parent=11 // pred_fallthru
          _
        // Predicated region
        $region29: #{tpu_custom_call.1} parent=11 // pred_check
          %p531 = pneg %p171
        $region30: #{tpu_custom_call.1} parent=11 // pred_check_branch
          %533 = sbr.rel (%p531) target = $region32
        $region31: #{tpu_custom_call.1} parent=11 // pred_region
          %s535 = ssub.s32 4096, 4096
          %536 = vsyncadd [#allocation12], %s535
          %s537 = sshll.u32 [#allocation11], 4
          %s538 = int_to_ptr.vmem [resolvable:$true] %s537
          %543 = dma.hbm_to_vmem [thread:$0]  %s5, 4096, %s538, [#allocation12], 256, 256, 16
        $region32: #{tpu_custom_call.1} parent=11 // pred_fallthru
          _
        // Predicated region
        $region33: #{tpu_custom_call.1} parent=11 // pred_check
          %p544 = pneg %p192
        $region34: #{tpu_custom_call.1} parent=11 // pred_check_branch
          %546 = sbr.rel (%p544) target = $region36
        $region35: #{tpu_custom_call.1} parent=11 // pred_region
          %s548 = ssub.s32 32, 32
          %549 = vsyncadd [#allocation12], %s548
          %s551 = sshll.u32 [#allocation13], 4
          %s552 = int_to_ptr.vmem [resolvable:$true] %s551
          %554 = dma.hbm_to_vmem [thread:$0]  %s6, 32, %s552, [#allocation12]
        $region36: #{tpu_custom_call.1} parent=11 // pred_fallthru
          _
        // Predicated region
        $region37: #{tpu_custom_call.1} parent=11 // pred_check
          %p555 = pneg %p213
        $region38: #{tpu_custom_call.1} parent=11 // pred_check_branch
          %557 = sbr.rel (%p555) target = $region40
        $region39: #{tpu_custom_call.1} parent=11 // pred_region
          %s559 = ssub.s32 32, 32
          %560 = vsyncadd [#allocation15], %s559
          %s562 = sshll.u32 [#allocation14], 4
          %s563 = int_to_ptr.vmem [resolvable:$true] %s562
          %565 = dma.hbm_to_vmem [thread:$0]  %s7, 32, %s563, [#allocation15]
        $region40: #{tpu_custom_call.1} parent=11 // pred_fallthru
          _
        // Predicated region
        $region41: #{tpu_custom_call.1} parent=11 // pred_check
          %p566 = pneg %p234
        $region42: #{tpu_custom_call.1} parent=11 // pred_check_branch
          %568 = sbr.rel (%p566) target = $region44
        $region43: #{tpu_custom_call.1} parent=11 // pred_region
          %s570 = ssub.s32 32, 32
          %571 = vsyncadd [#allocation15], %s570
          %s573 = sshll.u32 [#allocation16], 4
          %s574 = int_to_ptr.vmem [resolvable:$true] %s573
          %576 = dma.hbm_to_vmem [thread:$0]  %s8, 32, %s574, [#allocation15]
        $region44: #{tpu_custom_call.1} parent=11 // pred_fallthru
          _
        // Predicated region
        $region45: #{tpu_custom_call.1} parent=11 // pred_check
          %p577 = pneg %p255
        $region46: #{tpu_custom_call.1} parent=11 // pred_check_branch
          %579 = sbr.rel (%p577) target = $region48
        $region47: #{tpu_custom_call.1} parent=11 // pred_region
          %s581 = ssub.s32 16384, 16384
          %582 = vsyncadd [#allocation18], %s581
          %s583 = sshll.u32 [#allocation17], 4
          %s584 = int_to_ptr.vmem [resolvable:$true] %s583
          %589 = dma.hbm_to_vmem [thread:$0]  %s9, 16384, %s584, [#allocation18], 512, 512, 32
        $region48: #{tpu_custom_call.1} parent=11 // pred_fallthru
          _
        // Predicated region
        $region49: #{tpu_custom_call.1} parent=11 // pred_check
          %p590 = pneg %p276
        $region50: #{tpu_custom_call.1} parent=11 // pred_check_branch
          %592 = sbr.rel (%p590) target = $region52
        $region51: #{tpu_custom_call.1} parent=11 // pred_region
          %s594 = ssub.s32 64, 64
          %595 = vsyncadd [#allocation18], %s594
          %s597 = sshll.u32 [#allocation19], 4
          %s598 = int_to_ptr.vmem [resolvable:$true] %s597
          %600 = dma.hbm_to_vmem [thread:$0]  %s10, 64, %s598, [#allocation18]
        $region52: #{tpu_custom_call.1} parent=11 // pred_fallthru
          _
        // Predicated region
        $region53: #{tpu_custom_call.1} parent=11 // pred_check
          %p601 = pneg %p297
        $region54: #{tpu_custom_call.1} parent=11 // pred_check_branch
          %603 = sbr.rel (%p601) target = $region56
        $region55: #{tpu_custom_call.1} parent=11 // pred_region
          %s605 = ssub.s32 64, 64
          %606 = vsyncadd [#allocation21], %s605
          %s608 = sshll.u32 [#allocation20], 4
          %s609 = int_to_ptr.vmem [resolvable:$true] %s608
          %611 = dma.hbm_to_vmem [thread:$0]  %s11, 64, %s609, [#allocation21]
        $region56: #{tpu_custom_call.1} parent=11 // pred_fallthru
          _
        // Predicated region
        $region57: #{tpu_custom_call.1} parent=11 // pred_check
          %p612 = pneg %p318
        $region58: #{tpu_custom_call.1} parent=11 // pred_check_branch
          %614 = sbr.rel (%p612) target = $region60
        $region59: #{tpu_custom_call.1} parent=11 // pred_region
          %s616 = ssub.s32 64, 64
          %617 = vsyncadd [#allocation21], %s616
          %s619 = sshll.u32 [#allocation22], 4
          %s620 = int_to_ptr.vmem [resolvable:$true] %s619
          %622 = dma.hbm_to_vmem [thread:$0]  %s12, 64, %s620, [#allocation21]
        $region60: #{tpu_custom_call.1} parent=11 // pred_fallthru
          _
        // Predicated region
        $region61: #{tpu_custom_call.1} parent=11 // pred_check
          %p623 = pneg %p339
        $region62: #{tpu_custom_call.1} parent=11 // pred_check_branch
          %625 = sbr.rel (%p623) target = $region64
        $region63: #{tpu_custom_call.1} parent=11 // pred_region
          %s627 = ssub.s32 65536, 65536
          %628 = vsyncadd [#allocation24], %s627
          %s629 = sshll.u32 [#allocation23], 4
          %s630 = int_to_ptr.vmem [resolvable:$true] %s629
          %635 = dma.hbm_to_vmem [thread:$0]  %s13, 65536, %s630, [#allocation24], 1024, 1024, 64
        $region64: #{tpu_custom_call.1} parent=11 // pred_fallthru
          _
        // Predicated region
        $region65: #{tpu_custom_call.1} parent=11 // pred_check
          %p636 = pneg %p360
        $region66: #{tpu_custom_call.1} parent=11 // pred_check_branch
          %638 = sbr.rel (%p636) target = $region68
        $region67: #{tpu_custom_call.1} parent=11 // pred_region
          %s640 = ssub.s32 128, 128
          %641 = vsyncadd [#allocation24], %s640
          %s643 = sshll.u32 [#allocation25], 4
          %s644 = int_to_ptr.vmem [resolvable:$true] %s643
          %646 = dma.hbm_to_vmem [thread:$0]  %s14, 128, %s644, [#allocation24]
        $region68: #{tpu_custom_call.1} parent=11 // pred_fallthru
          _
        // Predicated region
        $region69: #{tpu_custom_call.1} parent=11 // pred_check
          %p647 = pneg %p381
        $region70: #{tpu_custom_call.1} parent=11 // pred_check_branch
          %649 = sbr.rel (%p647) target = $region72
        $region71: #{tpu_custom_call.1} parent=11 // pred_region
          %s651 = ssub.s32 128, 128
          %652 = vsyncadd [#allocation27], %s651
          %s654 = sshll.u32 [#allocation26], 4
          %s655 = int_to_ptr.vmem [resolvable:$true] %s654
          %657 = dma.hbm_to_vmem [thread:$0]  %s15, 128, %s655, [#allocation27]
        $region72: #{tpu_custom_call.1} parent=11 // pred_fallthru
          _
        // Predicated region
        $region73: #{tpu_custom_call.1} parent=11 // pred_check
          %p658 = pneg %p402
        $region74: #{tpu_custom_call.1} parent=11 // pred_check_branch
          %660 = sbr.rel (%p658) target = $region76
        $region75: #{tpu_custom_call.1} parent=11 // pred_region
          %s662 = ssub.s32 128, 128
          %663 = vsyncadd [#allocation27], %s662
          %s665 = sshll.u32 [#allocation28], 4
          %s666 = int_to_ptr.vmem [resolvable:$true] %s665
          %668 = dma.hbm_to_vmem [thread:$0]  %s16, 128, %s666, [#allocation27]
        $region76: #{tpu_custom_call.1} parent=11 // pred_fallthru
          _
        // Predicated region
        $region77: #{tpu_custom_call.1} parent=11 // pred_check
          %p669 = pneg %p423
        $region78: #{tpu_custom_call.1} parent=11 // pred_check_branch
          %671 = sbr.rel (%p669) target = $region80
        $region79: #{tpu_custom_call.1} parent=11 // pred_region
          %s673 = ssub.s32 16384, 16384
          %674 = vsyncadd [#allocation30], %s673
          %s675 = sshll.u32 [#allocation29], 4
          %s676 = int_to_ptr.vmem [resolvable:$true] %s675
          %681 = dma.hbm_to_vmem [thread:$0]  %s17, 16384, %s676, [#allocation30], 128, 128, 8
        $region80: #{tpu_custom_call.1} parent=11 // pred_fallthru
          _
        // Predicated region
        $region81: #{tpu_custom_call.1} parent=11 // pred_check
          %p682 = pneg %p444
        $region82: #{tpu_custom_call.1} parent=11 // pred_check_branch
          %684 = sbr.rel (%p682) target = $region84
        $region83: #{tpu_custom_call.1} parent=11 // pred_region
          %s686 = ssub.s32 16, 16
          %687 = vsyncadd [#allocation30], %s686
          %s689 = sshll.u32 [#allocation31], 4
          %s690 = int_to_ptr.vmem [resolvable:$true] %s689
          %692 = dma.hbm_to_vmem [thread:$0]  %s18, 16, %s690, [#allocation30]
        $region84: #{tpu_custom_call.1} parent=11 // pred_fallthru
          _
      $region12: #{tpu_custom_call.1} parent=5 // pred_fallthru
        _
      %p693 = scmp.lt.s32.totalorder %s40, 2
      // Predicated region
      $region85: #{tpu_custom_call.1} parent=5 // pred_check
        %p694 = pneg %p693
      $region86: #{tpu_custom_call.1} parent=5 // pred_check_branch
        %696 = sbr.rel (%p694) target = $region88
      $region87: #{tpu_custom_call.1} parent=5 // pred_region
        // Predicated region
        $region89: #{tpu_custom_call.1} parent=87 // pred_check
          %p697 = pneg %p60
        $region90: #{tpu_custom_call.1} parent=87 // pred_check_branch
          %699 = sbr.rel (%p697) target = $region92
        $region91: #{tpu_custom_call.1} parent=87 // pred_region
          %s700 = sand.u32 %s50, 1
          %s701 = scalar_lea.sflag [#allocation3], %s700
          %s702 = sand.u32 %s50, 1
          %s703 = smul.addr %s702, 16
          %s704 = scalar_lea.vmem [#allocation2], %s703
          %s705 = smul.u32 2, %s40
          %s707 = ssub.s32 256, 256
          %708 = vsyncadd %s701, %s707
          %s709 = smul.addr %s705, 128
          %s710 = scalar_lea.hbm %s0, %s709
          %s711 = sshll.u32 %s704, 4
          %s712 = int_to_ptr.vmem [resolvable:$true] %s711
          %717 = dma.hbm_to_vmem [thread:$0]  %s710, 256, %s712, %s701, 128, 128, 8
        $region92: #{tpu_custom_call.1} parent=87 // pred_fallthru
          _
      $region88: #{tpu_custom_call.1} parent=5 // pred_fallthru
        _
      %p718 = scmp.le.s32.totalorder 1, %s40
      %p719 = scmp.lt.s32.totalorder %s40, 3
      %p720 = pnand %p718, %p719
      %p721 = pneg %p720
      // Predicated region
      $region93: #{tpu_custom_call.1} parent=5 // pred_check
        _
      $region94: #{tpu_custom_call.1} parent=5 // pred_check_branch
        %723 = sbr.rel (%p720) target = $region96
      $region95: #{tpu_custom_call.1} parent=5 // pred_region
        %s724 = ssub.s32 %s40, 1
        %s725 = sand.u32 %s53, 1
        %s726 = scalar_lea.sflag [#allocation3], %s725
        %s727 = sand.u32 %s53, 1
        %s728 = smul.addr %s727, 16
        %s729 = scalar_lea.vmem [#allocation2], %s728
        // Predicated region
        $region97: #{tpu_custom_call.1} parent=95 // pred_check
          %p730 = pneg %p66
        $region98: #{tpu_custom_call.1} parent=95 // pred_check_branch
          %732 = sbr.rel (%p730) target = $region100
        $region99: #{tpu_custom_call.1} parent=95 // pred_region
          %733 = dma.done %s726, 256
        $region100: #{tpu_custom_call.1} parent=95 // pred_fallthru
          _
        // Predicated region
        $region101: #{tpu_custom_call.1} parent=95 // pred_check
          %p734 = pneg %p87
        $region102: #{tpu_custom_call.1} parent=95 // pred_check_branch
          %736 = sbr.rel (%p734) target = $region104
        $region103: #{tpu_custom_call.1} parent=95 // pred_region
          %737 = dma.done [#allocation6], 2048
        $region104: #{tpu_custom_call.1} parent=95 // pred_fallthru
          _
        // Predicated region
        $region105: #{tpu_custom_call.1} parent=95 // pred_check
          %p738 = pneg %p108
        $region106: #{tpu_custom_call.1} parent=95 // pred_check_branch
          %740 = sbr.rel (%p738) target = $region108
        $region107: #{tpu_custom_call.1} parent=95 // pred_region
          %741 = dma.done [#allocation6], 16
        $region108: #{tpu_custom_call.1} parent=95 // pred_fallthru
          _
        // Predicated region
        $region109: #{tpu_custom_call.1} parent=95 // pred_check
          %p742 = pneg %p129
        $region110: #{tpu_custom_call.1} parent=95 // pred_check_branch
          %744 = sbr.rel (%p742) target = $region112
        $region111: #{tpu_custom_call.1} parent=95 // pred_region
          %745 = dma.done [#allocation9], 16
        $region112: #{tpu_custom_call.1} parent=95 // pred_fallthru
          _
        // Predicated region
        $region113: #{tpu_custom_call.1} parent=95 // pred_check
          %p746 = pneg %p150
        $region114: #{tpu_custom_call.1} parent=95 // pred_check_branch
          %748 = sbr.rel (%p746) target = $region116
        $region115: #{tpu_custom_call.1} parent=95 // pred_region
          %749 = dma.done [#allocation9], 16
        $region116: #{tpu_custom_call.1} parent=95 // pred_fallthru
          _
        // Predicated region
        $region117: #{tpu_custom_call.1} parent=95 // pred_check
          %p750 = pneg %p171
        $region118: #{tpu_custom_call.1} parent=95 // pred_check_branch
          %752 = sbr.rel (%p750) target = $region120
        $region119: #{tpu_custom_call.1} parent=95 // pred_region
          %753 = dma.done [#allocation12], 4096
        $region120: #{tpu_custom_call.1} parent=95 // pred_fallthru
          _
        // Predicated region
        $region121: #{tpu_custom_call.1} parent=95 // pred_check
          %p754 = pneg %p192
        $region122: #{tpu_custom_call.1} parent=95 // pred_check_branch
          %756 = sbr.rel (%p754) target = $region124
        $region123: #{tpu_custom_call.1} parent=95 // pred_region
          %757 = dma.done [#allocation12], 32
        $region124: #{tpu_custom_call.1} parent=95 // pred_fallthru
          _
        // Predicated region
        $region125: #{tpu_custom_call.1} parent=95 // pred_check
          %p758 = pneg %p213
        $region126: #{tpu_custom_call.1} parent=95 // pred_check_branch
          %760 = sbr.rel (%p758) target = $region128
        $region127: #{tpu_custom_call.1} parent=95 // pred_region
          %761 = dma.done [#allocation15], 32
        $region128: #{tpu_custom_call.1} parent=95 // pred_fallthru
          _
        // Predicated region
        $region129: #{tpu_custom_call.1} parent=95 // pred_check
          %p762 = pneg %p234
        $region130: #{tpu_custom_call.1} parent=95 // pred_check_branch
          %764 = sbr.rel (%p762) target = $region132
        $region131: #{tpu_custom_call.1} parent=95 // pred_region
          %765 = dma.done [#allocation15], 32
        $region132: #{tpu_custom_call.1} parent=95 // pred_fallthru
          _
        // Predicated region
        $region133: #{tpu_custom_call.1} parent=95 // pred_check
          %p766 = pneg %p255
        $region134: #{tpu_custom_call.1} parent=95 // pred_check_branch
          %768 = sbr.rel (%p766) target = $region136
        $region135: #{tpu_custom_call.1} parent=95 // pred_region
          %769 = dma.done [#allocation18], 16384
        $region136: #{tpu_custom_call.1} parent=95 // pred_fallthru
          _
        // Predicated region
        $region137: #{tpu_custom_call.1} parent=95 // pred_check
          %p770 = pneg %p276
        $region138: #{tpu_custom_call.1} parent=95 // pred_check_branch
          %772 = sbr.rel (%p770) target = $region140
        $region139: #{tpu_custom_call.1} parent=95 // pred_region
          %773 = dma.done [#allocation18], 64
        $region140: #{tpu_custom_call.1} parent=95 // pred_fallthru
          _
        // Predicated region
        $region141: #{tpu_custom_call.1} parent=95 // pred_check
          %p774 = pneg %p297
        $region142: #{tpu_custom_call.1} parent=95 // pred_check_branch
          %776 = sbr.rel (%p774) target = $region144
        $region143: #{tpu_custom_call.1} parent=95 // pred_region
          %777 = dma.done [#allocation21], 64
        $region144: #{tpu_custom_call.1} parent=95 // pred_fallthru
          _
        // Predicated region
        $region145: #{tpu_custom_call.1} parent=95 // pred_check
          %p778 = pneg %p318
        $region146: #{tpu_custom_call.1} parent=95 // pred_check_branch
          %780 = sbr.rel (%p778) target = $region148
        $region147: #{tpu_custom_call.1} parent=95 // pred_region
          %781 = dma.done [#allocation21], 64
        $region148: #{tpu_custom_call.1} parent=95 // pred_fallthru
          _
        // Predicated region
        $region149: #{tpu_custom_call.1} parent=95 // pred_check
          %p782 = pneg %p339
        $region150: #{tpu_custom_call.1} parent=95 // pred_check_branch
          %784 = sbr.rel (%p782) target = $region152
        $region151: #{tpu_custom_call.1} parent=95 // pred_region
          %785 = dma.done [#allocation24], 65536
        $region152: #{tpu_custom_call.1} parent=95 // pred_fallthru
          _
        // Predicated region
        $region153: #{tpu_custom_call.1} parent=95 // pred_check
          %p786 = pneg %p360
        $region154: #{tpu_custom_call.1} parent=95 // pred_check_branch
          %788 = sbr.rel (%p786) target = $region156
        $region155: #{tpu_custom_call.1} parent=95 // pred_region
          %789 = dma.done [#allocation24], 128
        $region156: #{tpu_custom_call.1} parent=95 // pred_fallthru
          _
        // Predicated region
        $region157: #{tpu_custom_call.1} parent=95 // pred_check
          %p790 = pneg %p381
        $region158: #{tpu_custom_call.1} parent=95 // pred_check_branch
          %792 = sbr.rel (%p790) target = $region160
        $region159: #{tpu_custom_call.1} parent=95 // pred_region
          %793 = dma.done [#allocation27], 128
        $region160: #{tpu_custom_call.1} parent=95 // pred_fallthru
          _
        // Predicated region
        $region161: #{tpu_custom_call.1} parent=95 // pred_check
          %p794 = pneg %p402
        $region162: #{tpu_custom_call.1} parent=95 // pred_check_branch
          %796 = sbr.rel (%p794) target = $region164
        $region163: #{tpu_custom_call.1} parent=95 // pred_region
          %797 = dma.done [#allocation27], 128
        $region164: #{tpu_custom_call.1} parent=95 // pred_fallthru
          _
        // Predicated region
        $region165: #{tpu_custom_call.1} parent=95 // pred_check
          %p798 = pneg %p423
        $region166: #{tpu_custom_call.1} parent=95 // pred_check_branch
          %800 = sbr.rel (%p798) target = $region168
        $region167: #{tpu_custom_call.1} parent=95 // pred_region
          %801 = dma.done [#allocation30], 16384
        $region168: #{tpu_custom_call.1} parent=95 // pred_fallthru
          _
        // Predicated region
        $region169: #{tpu_custom_call.1} parent=95 // pred_check
          %p802 = pneg %p444
        $region170: #{tpu_custom_call.1} parent=95 // pred_check_branch
          %804 = sbr.rel (%p802) target = $region172
        $region171: #{tpu_custom_call.1} parent=95 // pred_region
          %805 = dma.done [#allocation30], 16
        $region172: #{tpu_custom_call.1} parent=95 // pred_fallthru
          _
        %s806 = sand.u32 %s53, 1
        %s807 = scalar_lea.sflag [#allocation3], %s806
        %s808 = sand.u32 %s53, 1
        %s809 = smul.addr %s808, 16
        %s810 = scalar_lea.vmem [#allocation2], %s809
        %p811 = pneg %p66
        %p812 = pneg %p63
        %p813 = pneg %p87
        %p814 = pneg %p84
        %p815 = pneg %p108
        %p816 = pneg %p105
        %p817 = pneg %p129
        %p818 = pneg %p126
        %p819 = pneg %p150
        %p820 = pneg %p147
        %p821 = pneg %p171
        %p822 = pneg %p168
        %p823 = pneg %p192
        %p824 = pneg %p189
        %p825 = pneg %p213
        %p826 = pneg %p210
        %p827 = pneg %p234
        %p828 = pneg %p231
        %p829 = pneg %p255
        %p830 = pneg %p252
        %p831 = pneg %p276
        %p832 = pneg %p273
        %p833 = pneg %p297
        %p834 = pneg %p294
        %p835 = pneg %p318
        %p836 = pneg %p315
        %p837 = pneg %p339
        %p838 = pneg %p336
        %p839 = pneg %p360
        %p840 = pneg %p357
        %p841 = pneg %p381
        %p842 = pneg %p378
        %p843 = pneg %p402
        %p844 = pneg %p399
        %p845 = pneg %p423
        %p846 = pneg %p420
        %p847 = pneg %p444
        %p848 = pneg %p441
        %p849 = pneg %p470
        %p850 = pneg %p467
        %s851 = sand.u32 %s457, 1
        %s852 = scalar_lea.sflag [#allocation4], %s851
        %s853 = sand.u32 %s457, 1
        %s854 = smul.addr %s853, 16
        %s855 = scalar_lea.vmem [#allocation32], %s854
        %s856 = smul.u32 2, %s45
        %s857 = smul.u32 2, %s45
        %v858 = vld [vmem:[%s729] sm:$0xff]
        %v859 = vld [vmem:[%s729 + $0x8] sm:$0xff]
        %v860 = vld [vmem:[#allocation5] sm:$0xff]
        %v861 = vld [vmem:[#allocation5 + $0x8] sm:$0xff]
        %v862 = vld [vmem:[#allocation5 + $0x10] sm:$0xff]
        %v863 = vld [vmem:[#allocation5 + $0x18] sm:$0xff]
        %v864 = vld [vmem:[#allocation5 + $0x20] sm:$0xff]
        %v865 = vld [vmem:[#allocation5 + $0x28] sm:$0xff]
        %v866 = vld [vmem:[#allocation5 + $0x30] sm:$0xff]
        %v867 = vld [vmem:[#allocation5 + $0x38] sm:$0xff]
        %v868 = vld [vmem:[#allocation5 + $0x40] sm:$0xff]
        %v869 = vld [vmem:[#allocation5 + $0x48] sm:$0xff]
        %v870 = vld [vmem:[#allocation5 + $0x50] sm:$0xff]
        %v871 = vld [vmem:[#allocation5 + $0x58] sm:$0xff]
        %v872 = vld [vmem:[#allocation5 + $0x60] sm:$0xff]
        %v873 = vld [vmem:[#allocation5 + $0x68] sm:$0xff]
        %v874 = vld [vmem:[#allocation5 + $0x70] sm:$0xff]
        %v875 = vld [vmem:[#allocation5 + $0x78] sm:$0xff]
        %v876 = vld [vmem:[#allocation7] sm:$0x1]
        %v878 = vlaneseq
        %v879 = vshrl.u32 %v878, 7
        %v880 = vsub.s32 0, %v879
        %v881 = vrot.slane %v876, %v880
        %883 = vmatprep.subr.mxu0 0.0
        %884 = vmatpush1.msra.mxu0 %v875
        %885 = vmatprep.subr.mxu0 0.0
        %886 = vmatpush1.msra.mxu0 %v874
        %887 = vmatprep.subr.mxu0 0.0
        %888 = vmatpush1.msra.mxu0 %v873
        %889 = vmatprep.subr.mxu0 0.0
        %890 = vmatpush1.msra.mxu0 %v872
        %891 = vmatprep.subr.mxu0 0.0
        %892 = vmatpush1.msra.mxu0 %v871
        %893 = vmatprep.subr.mxu0 0.0
        %894 = vmatpush1.msra.mxu0 %v870
        %895 = vmatprep.subr.mxu0 0.0
        %896 = vmatpush1.msra.mxu0 %v869
        %897 = vmatprep.subr.mxu0 0.0
        %898 = vmatpush1.msra.mxu0 %v868
        %899 = vmatprep.subr.mxu0 0.0
        %900 = vmatpush1.msra.mxu0 %v867
        %901 = vmatprep.subr.mxu0 0.0
        %902 = vmatpush1.msra.mxu0 %v866
        %903 = vmatprep.subr.mxu0 0.0
        %904 = vmatpush1.msra.mxu0 %v865
        %905 = vmatprep.subr.mxu0 0.0
        %906 = vmatpush1.msra.mxu0 %v864
        %907 = vmatprep.subr.mxu0 0.0
        %908 = vmatpush1.msra.mxu0 %v863
        %909 = vmatprep.subr.mxu0 0.0
        %910 = vmatpush1.msra.mxu0 %v862
        %911 = vmatprep.subr.mxu0 0.0
        %912 = vmatpush1.msra.mxu0 %v861
        %913 = vmatprep.subr.mxu0 0.0
        %914 = vmatpush1.msra.mxu0 %v860
        %915 = vmatprep.subr.mxu0 0.0
        %916 = vmatpush2.msra.mxu0 0.0
        %917 = vmatprep.subr.mxu0 0.0
        %918 = vmatpush2.msra.mxu0 0.0
        %919 = vmatprep.subr.mxu0 0.0
        %920 = vmatpush2.msra.mxu0 0.0
        %921 = vmatprep.subr.mxu0 0.0
        %922 = vmatpush2.msra.mxu0 0.0
        %923 = vmatprep.subr.mxu0 0.0
        %924 = vmatpush2.msra.mxu0 0.0
        %925 = vmatprep.subr.mxu0 0.0
        %926 = vmatpush2.msra.mxu0 0.0
        %927 = vmatprep.subr.mxu0 0.0
        %928 = vmatpush2.msra.mxu0 0.0
        %929 = vmatprep.subr.mxu0 0.0
        %930 = vmatpush2.msra.mxu0 0.0
        %931 = vmatprep.subr.mxu0 0.0
        %932 = vmatpush2.msra.mxu0 0.0
        %933 = vmatprep.subr.mxu0 0.0
        %934 = vmatpush2.msra.mxu0 0.0
        %935 = vmatprep.subr.mxu0 0.0
        %936 = vmatpush2.msra.mxu0 0.0
        %937 = vmatprep.subr.mxu0 0.0
        %938 = vmatpush2.msra.mxu0 0.0
        %939 = vmatprep.subr.mxu0 0.0
        %940 = vmatpush2.msra.mxu0 0.0
        %941 = vmatprep.subr.mxu0 0.0
        %942 = vmatpush2.msra.mxu0 0.0
        %943 = vmatprep.subr.mxu0 0.0
        %944 = vmatpush2.msra.mxu0 0.0
        %945 = vmatprep.subr.mxu0 0.0
        %946 = vmatpush2.msra.mxu0 0.0
        %947 = vmatprep.mubr.f32.mxu0 0.0
        %948 = vmatmul.mubr.f32.gmra.mxu0 %v858
        %v949 = vpop.f32.mrf.mxu0
        %v950 = vadd.f32 %v881, %v949
        %v951 = vpop.f32.mrf.mxu0
        %952 = vmatprep.mubr.f32.mxu0 0.0
        %953 = vmatmul.mubr.f32.gmra.mxu0 %v859
        %v954 = vpop.f32.mrf.mxu0
        %v955 = vadd.f32 %v881, %v954
        %v956 = vpop.f32.mrf.mxu0
        %957 = vdwg.mxu0
        %v958 = vrot.slane %v950, 4
        %v959 = vadd.f32 %v950, %v958
        %v960 = vrot.slane %v959, 2
        %v961 = vadd.f32 %v959, %v960
        %v962 = vrot.slane %v961, 1
        %v963 = vadd.f32 %v961, %v962
        %v964 = vrot.slane %v955, 4
        %v965 = vadd.f32 %v955, %v964
        %v966 = vrot.slane %v965, 2
        %v967 = vadd.f32 %v965, %v966
        %v968 = vrot.slane %v967, 1
        %v969 = vadd.f32 %v967, %v968
        %v970 = vrcp.pop 8.0
        %v971 = vmul.f32 %v963, %v970
        %v972 = vmul.f32 %v969, %v970
        %v973 = vsub.f32 %v950, %v971
        %v974 = vsub.f32 %v955, %v972
        %v975 = vmul.f32 %v973, %v973
        %v976 = vmul.f32 %v974, %v974
        %v977 = vrot.slane %v975, 4
        %v978 = vadd.f32 %v975, %v977
        %v979 = vrot.slane %v978, 2
        %v980 = vadd.f32 %v978, %v979
        %v981 = vrot.slane %v980, 1
        %v982 = vadd.f32 %v980, %v981
        %v983 = vrot.slane %v976, 4
        %v984 = vadd.f32 %v976, %v983
        %v985 = vrot.slane %v984, 2
        %v986 = vadd.f32 %v984, %v985
        %v987 = vrot.slane %v986, 1
        %v988 = vadd.f32 %v986, %v987
        %v989 = vmul.f32 %v982, %v970
        %v990 = vmul.f32 %v988, %v970
        %v991 = vld [vmem:[#allocation8] sm:$0x1]
        %v992 = vadd.f32 %v989, 1e-05
        %v993 = vadd.f32 %v990, 1e-05
        %v994 = vrsqrt.pop %v992
        %v995 = vrsqrt.pop %v993
        %v996 = vmul.f32 %v991, %v994
        %v997 = vmul.f32 %v991, %v995
        %v998 = vld [vmem:[#allocation10] sm:$0x1]
        %v999 = vmul.f32 %v971, %v996
        %v1000 = vmul.f32 %v972, %v997
        %v1001 = vsub.f32 %v998, %v999
        %v1002 = vsub.f32 %v998, %v1000
        %v1005 = vlaneseq
        %v1006 = vshrl.u32 %v1005, 7
        %v1007 = vsub.s32 0, %v1006
        %v1008 = vrot.slane %v996, %v1007
        %v1009 = vlaneseq
        %v1010 = vshrl.u32 %v1009, 7
        %v1011 = vsub.s32 0, %v1010
        %v1012 = vrot.slane %v997, %v1011
        %v1015 = vmul.f32 %v950, %v1008
        %v1016 = vmul.f32 %v955, %v1012
        %v1019 = vlaneseq
        %v1020 = vshrl.u32 %v1019, 7
        %v1021 = vsub.s32 0, %v1020
        %v1022 = vrot.slane %v1001, %v1021
        %v1023 = vlaneseq
        %v1024 = vshrl.u32 %v1023, 7
        %v1025 = vsub.s32 0, %v1024
        %v1026 = vrot.slane %v1002, %v1025
        %v1029 = vadd.f32 %v1015, %v1022
        %v1030 = vadd.f32 %v1016, %v1026
        %v1031 = vmax.f32 %v1029, 0.0
        %v1032 = vmax.f32 %v1030, 0.0
        %v1033 = vld [vmem:[#allocation11] sm:$0xff]
        %v1034 = vld [vmem:[#allocation11 + $0x8] sm:$0xff]
        %v1035 = vld [vmem:[#allocation11 + $0x10] sm:$0xff]
        %v1036 = vld [vmem:[#allocation11 + $0x18] sm:$0xff]
        %v1037 = vld [vmem:[#allocation11 + $0x20] sm:$0xff]
        %v1038 = vld [vmem:[#allocation11 + $0x28] sm:$0xff]
        %v1039 = vld [vmem:[#allocation11 + $0x30] sm:$0xff]
        %v1040 = vld [vmem:[#allocation11 + $0x38] sm:$0xff]
        %v1041 = vld [vmem:[#allocation11 + $0x40] sm:$0xff]
        %v1042 = vld [vmem:[#allocation11 + $0x48] sm:$0xff]
        %v1043 = vld [vmem:[#allocation11 + $0x50] sm:$0xff]
        %v1044 = vld [vmem:[#allocation11 + $0x58] sm:$0xff]
        %v1045 = vld [vmem:[#allocation11 + $0x60] sm:$0xff]
        %v1046 = vld [vmem:[#allocation11 + $0x68] sm:$0xff]
        %v1047 = vld [vmem:[#allocation11 + $0x70] sm:$0xff]
        %v1048 = vld [vmem:[#allocation11 + $0x78] sm:$0xff]
        %v1049 = vld [vmem:[#allocation11 + $0x80] sm:$0xff]
        %v1050 = vld [vmem:[#allocation11 + $0x88] sm:$0xff]
        %v1051 = vld [vmem:[#allocation11 + $0x90] sm:$0xff]
        %v1052 = vld [vmem:[#allocation11 + $0x98] sm:$0xff]
        %v1053 = vld [vmem:[#allocation11 + $0xa0] sm:$0xff]
        %v1054 = vld [vmem:[#allocation11 + $0xa8] sm:$0xff]
        %v1055 = vld [vmem:[#allocation11 + $0xb0] sm:$0xff]
        %v1056 = vld [vmem:[#allocation11 + $0xb8] sm:$0xff]
        %v1057 = vld [vmem:[#allocation11 + $0xc0] sm:$0xff]
        %v1058 = vld [vmem:[#allocation11 + $0xc8] sm:$0xff]
        %v1059 = vld [vmem:[#allocation11 + $0xd0] sm:$0xff]
        %v1060 = vld [vmem:[#allocation11 + $0xd8] sm:$0xff]
        %v1061 = vld [vmem:[#allocation11 + $0xe0] sm:$0xff]
        %v1062 = vld [vmem:[#allocation11 + $0xe8] sm:$0xff]
        %v1063 = vld [vmem:[#allocation11 + $0xf0] sm:$0xff]
        %v1064 = vld [vmem:[#allocation11 + $0xf8] sm:$0xff]
        %v1065 = vld [vmem:[#allocation13] sm:$0x3]
        %v1067 = vlaneseq
        %v1068 = vshrl.u32 %v1067, 7
        %v1069 = vsub.s32 0, %v1068
        %v1070 = vrot.slane %v1065, %v1069
        %v1071 = vlaneseq
        %v1072 = vshrl.u32 %v1071, 7
        %v1073 = vsub.s32 1, %v1072
        %v1074 = vrot.slane %v1065, %v1073
        %1077 = vmatprep.subr.mxu0 %v1064
        %1078 = vmatpush1.msra.mxu0 %v1063
        %1079 = vmatprep.subr.mxu0 %v1062
        %1080 = vmatpush1.msra.mxu0 %v1061
        %1081 = vmatprep.subr.mxu0 %v1060
        %1082 = vmatpush1.msra.mxu0 %v1059
        %1083 = vmatprep.subr.mxu0 %v1058
        %1084 = vmatpush1.msra.mxu0 %v1057
        %1085 = vmatprep.subr.mxu0 %v1056
        %1086 = vmatpush1.msra.mxu0 %v1055
        %1087 = vmatprep.subr.mxu0 %v1054
        %1088 = vmatpush1.msra.mxu0 %v1053
        %1089 = vmatprep.subr.mxu0 %v1052
        %1090 = vmatpush1.msra.mxu0 %v1051
        %1091 = vmatprep.subr.mxu0 %v1050
        %1092 = vmatpush1.msra.mxu0 %v1049
        %1093 = vmatprep.subr.mxu0 %v1048
        %1094 = vmatpush1.msra.mxu0 %v1047
        %1095 = vmatprep.subr.mxu0 %v1046
        %1096 = vmatpush1.msra.mxu0 %v1045
        %1097 = vmatprep.subr.mxu0 %v1044
        %1098 = vmatpush1.msra.mxu0 %v1043
        %1099 = vmatprep.subr.mxu0 %v1042
        %1100 = vmatpush1.msra.mxu0 %v1041
        %1101 = vmatprep.subr.mxu0 %v1040
        %1102 = vmatpush1.msra.mxu0 %v1039
        %1103 = vmatprep.subr.mxu0 %v1038
        %1104 = vmatpush1.msra.mxu0 %v1037
        %1105 = vmatprep.subr.mxu0 %v1036
        %1106 = vmatpush1.msra.mxu0 %v1035
        %1107 = vmatprep.subr.mxu0 %v1034
        %1108 = vmatpush1.msra.mxu0 %v1033
        %1109 = vmatprep.subr.mxu0 0.0
        %1110 = vmatpush2.msra.mxu0 0.0
        %1111 = vmatprep.subr.mxu0 0.0
        %1112 = vmatpush2.msra.mxu0 0.0
        %1113 = vmatprep.subr.mxu0 0.0
        %1114 = vmatpush2.msra.mxu0 0.0
        %1115 = vmatprep.subr.mxu0 0.0
        %1116 = vmatpush2.msra.mxu0 0.0
        %1117 = vmatprep.subr.mxu0 0.0
        %1118 = vmatpush2.msra.mxu0 0.0
        %1119 = vmatprep.subr.mxu0 0.0
        %1120 = vmatpush2.msra.mxu0 0.0
        %1121 = vmatprep.subr.mxu0 0.0
        %1122 = vmatpush2.msra.mxu0 0.0
        %1123 = vmatprep.subr.mxu0 0.0
        %1124 = vmatpush2.msra.mxu0 0.0
        %1125 = vmatprep.subr.mxu0 0.0
        %1126 = vmatpush2.msra.mxu0 0.0
        %1127 = vmatprep.subr.mxu0 0.0
        %1128 = vmatpush2.msra.mxu0 0.0
        %1129 = vmatprep.subr.mxu0 0.0
        %1130 = vmatpush2.msra.mxu0 0.0
        %1131 = vmatprep.subr.mxu0 0.0
        %1132 = vmatpush2.msra.mxu0 0.0
        %1133 = vmatprep.subr.mxu0 0.0
        %1134 = vmatpush2.msra.mxu0 0.0
        %1135 = vmatprep.subr.mxu0 0.0
        %1136 = vmatpush2.msra.mxu0 0.0
        %1137 = vmatprep.subr.mxu0 0.0
        %1138 = vmatpush2.msra.mxu0 0.0
        %1139 = vmatprep.subr.mxu0 0.0
        %1140 = vmatpush2.msra.mxu0 0.0
        %1141 = vmatprep.mubr.f32.mxu0 0.0
        %1142 = vmatmul.mubr.f32.gmra.mxu0 %v1031
        %v1143 = vpop.f32.mrf.mxu0
        %v1144 = vadd.f32 %v1070, %v1143
        %v1145 = vpop.f32.mrf.mxu0
        %v1146 = vadd.f32 %v1074, %v1145
        %1147 = vmatprep.mubr.f32.mxu0 0.0
        %1148 = vmatmul.mubr.f32.gmra.mxu0 %v1032
        %v1149 = vpop.f32.mrf.mxu0
        %v1150 = vadd.f32 %v1070, %v1149
        %v1151 = vpop.f32.mrf.mxu0
        %v1152 = vadd.f32 %v1074, %v1151
        %1153 = vdwg.mxu0
        %v1154 = vrot.slane %v1144, 4
        %v1155 = vadd.f32 %v1144, %v1154
        %v1156 = vrot.slane %v1155, 2
        %v1157 = vadd.f32 %v1155, %v1156
        %v1158 = vrot.slane %v1157, 1
        %v1159 = vadd.f32 %v1157, %v1158
        %v1160 = vrot.slane %v1146, 4
        %v1161 = vadd.f32 %v1146, %v1160
        %v1162 = vrot.slane %v1161, 2
        %v1163 = vadd.f32 %v1161, %v1162
        %v1164 = vrot.slane %v1163, 1
        %v1165 = vadd.f32 %v1163, %v1164
        %v1166 = vrot.slane %v1150, 4
        %v1167 = vadd.f32 %v1150, %v1166
        %v1168 = vrot.slane %v1167, 2
        %v1169 = vadd.f32 %v1167, %v1168
        %v1170 = vrot.slane %v1169, 1
        %v1171 = vadd.f32 %v1169, %v1170
        %v1172 = vrot.slane %v1152, 4
        %v1173 = vadd.f32 %v1152, %v1172
        %v1174 = vrot.slane %v1173, 2
        %v1175 = vadd.f32 %v1173, %v1174
        %v1176 = vrot.slane %v1175, 1
        %v1177 = vadd.f32 %v1175, %v1176
        %v1178 = vmul.f32 %v1159, %v970
        %v1179 = vmul.f32 %v1165, %v970
        %v1180 = vmul.f32 %v1171, %v970
        %v1181 = vmul.f32 %v1177, %v970
        %v1182 = vsub.f32 %v1144, %v1178
        %v1183 = vsub.f32 %v1146, %v1179
        %v1184 = vsub.f32 %v1150, %v1180
        %v1185 = vsub.f32 %v1152, %v1181
        %v1186 = vmul.f32 %v1182, %v1182
        %v1187 = vmul.f32 %v1183, %v1183
        %v1188 = vmul.f32 %v1184, %v1184
        %v1189 = vmul.f32 %v1185, %v1185
        %v1190 = vrot.slane %v1186, 4
        %v1191 = vadd.f32 %v1186, %v1190
        %v1192 = vrot.slane %v1191, 2
        %v1193 = vadd.f32 %v1191, %v1192
        %v1194 = vrot.slane %v1193, 1
        %v1195 = vadd.f32 %v1193, %v1194
        %v1196 = vrot.slane %v1187, 4
        %v1197 = vadd.f32 %v1187, %v1196
        %v1198 = vrot.slane %v1197, 2
        %v1199 = vadd.f32 %v1197, %v1198
        %v1200 = vrot.slane %v1199, 1
        %v1201 = vadd.f32 %v1199, %v1200
        %v1202 = vrot.slane %v1188, 4
        %v1203 = vadd.f32 %v1188, %v1202
        %v1204 = vrot.slane %v1203, 2
        %v1205 = vadd.f32 %v1203, %v1204
        %v1206 = vrot.slane %v1205, 1
        %v1207 = vadd.f32 %v1205, %v1206
        %v1208 = vrot.slane %v1189, 4
        %v1209 = vadd.f32 %v1189, %v1208
        %v1210 = vrot.slane %v1209, 2
        %v1211 = vadd.f32 %v1209, %v1210
        %v1212 = vrot.slane %v1211, 1
        %v1213 = vadd.f32 %v1211, %v1212
        %v1214 = vmul.f32 %v1195, %v970
        %v1215 = vmul.f32 %v1201, %v970
        %v1216 = vmul.f32 %v1207, %v970
        %v1217 = vmul.f32 %v1213, %v970
        %v1218 = vld [vmem:[#allocation14] sm:$0x3]
        %v1219 = vadd.f32 %v1214, 1e-05
        %v1220 = vadd.f32 %v1215, 1e-05
        %v1221 = vadd.f32 %v1216, 1e-05
        %v1222 = vadd.f32 %v1217, 1e-05
        %v1223 = vrsqrt.pop %v1219
        %v1224 = vrsqrt.pop %v1220
        %v1225 = vrsqrt.pop %v1221
        %v1226 = vrsqrt.pop %v1222
        %v1231 = vcombine.low %v1223, %v1224
        %v1233 = vunpack.c.l.s4 1966171168
        %v1234 = vunpack.c.0.s8 %v1233
        %v1235 = vlaneseq
        %v1236 = vshrl.u32 %v1235, 7
        %v1237 = vsub.s32 %v1234, %v1236
        %v1238 = vrot.slane %v1231, %v1237
        %v1240 = vunpack.c.l.s4 1966171168
        %v1241 = vunpack.c.0.s8 %v1240
        %v1242 = vlaneseq
        %v1243 = vshrl.u32 %v1242, 7
        %v1244 = vsub.s32 %v1241, %v1243
        %v1245 = vrot.slane %v1238, %v1244
        %v1246 = vcombine.low %v1225, %v1226
        %v1248 = vunpack.c.l.s4 1966171168
        %v1249 = vunpack.c.0.s8 %v1248
        %v1250 = vlaneseq
        %v1251 = vshrl.u32 %v1250, 7
        %v1252 = vsub.s32 %v1249, %v1251
        %v1253 = vrot.slane %v1246, %v1252
        %v1255 = vunpack.c.l.s4 1966171168
        %v1256 = vunpack.c.0.s8 %v1255
        %v1257 = vlaneseq
        %v1258 = vshrl.u32 %v1257, 7
        %v1259 = vsub.s32 %v1256, %v1258
        %v1260 = vrot.slane %v1253, %v1259
        %v1263 = vmul.f32 %v1218, %v1245
        %v1264 = vmul.f32 %v1218, %v1260
        %v1265 = vld [vmem:[#allocation16] sm:$0x3]
        %v1268 = vlaneseq
        %v1269 = vshrl.u32 %v1268, 7
        %v1270 = vsub.s32 0, %v1269
        %v1271 = vrot.slane %v1263, %v1270
        %v1272 = vlaneseq
        %v1273 = vshrl.u32 %v1272, 7
        %v1274 = vsub.s32 1, %v1273
        %v1275 = vrot.slane %v1263, %v1274
        %v1276 = vlaneseq
        %v1277 = vshrl.u32 %v1276, 7
        %v1278 = vsub.s32 0, %v1277
        %v1279 = vrot.slane %v1264, %v1278
        %v1280 = vlaneseq
        %v1281 = vshrl.u32 %v1280, 7
        %v1282 = vsub.s32 1, %v1281
        %v1283 = vrot.slane %v1264, %v1282
        %v1288 = vmul.f32 %v1178, %v1271
        %v1289 = vmul.f32 %v1179, %v1275
        %v1290 = vmul.f32 %v1180, %v1279
        %v1291 = vmul.f32 %v1181, %v1283
        %v1296 = vcombine.low %v1288, %v1289
        %v1298 = vunpack.c.l.s4 1966171168
        %v1299 = vunpack.c.0.s8 %v1298
        %v1300 = vlaneseq
        %v1301 = vshrl.u32 %v1300, 7
        %v1302 = vsub.s32 %v1299, %v1301
        %v1303 = vrot.slane %v1296, %v1302
        %v1305 = vunpack.c.l.s4 1966171168
        %v1306 = vunpack.c.0.s8 %v1305
        %v1307 = vlaneseq
        %v1308 = vshrl.u32 %v1307, 7
        %v1309 = vsub.s32 %v1306, %v1308
        %v1310 = vrot.slane %v1303, %v1309
        %v1311 = vcombine.low %v1290, %v1291
        %v1313 = vunpack.c.l.s4 1966171168
        %v1314 = vunpack.c.0.s8 %v1313
        %v1315 = vlaneseq
        %v1316 = vshrl.u32 %v1315, 7
        %v1317 = vsub.s32 %v1314, %v1316
        %v1318 = vrot.slane %v1311, %v1317
        %v1320 = vunpack.c.l.s4 1966171168
        %v1321 = vunpack.c.0.s8 %v1320
        %v1322 = vlaneseq
        %v1323 = vshrl.u32 %v1322, 7
        %v1324 = vsub.s32 %v1321, %v1323
        %v1325 = vrot.slane %v1318, %v1324
        %v1328 = vsub.f32 %v1265, %v1310
        %v1329 = vsub.f32 %v1265, %v1325
        %v1330 = vmul.f32 %v1144, %v1271
        %v1331 = vmul.f32 %v1146, %v1275
        %v1332 = vmul.f32 %v1150, %v1279
        %v1333 = vmul.f32 %v1152, %v1283
        %v1336 = vlaneseq
        %v1337 = vshrl.u32 %v1336, 7
        %v1338 = vsub.s32 0, %v1337
        %v1339 = vrot.slane %v1328, %v1338
        %v1340 = vlaneseq
        %v1341 = vshrl.u32 %v1340, 7
        %v1342 = vsub.s32 1, %v1341
        %v1343 = vrot.slane %v1328, %v1342
        %v1344 = vlaneseq
        %v1345 = vshrl.u32 %v1344, 7
        %v1346 = vsub.s32 0, %v1345
        %v1347 = vrot.slane %v1329, %v1346
        %v1348 = vlaneseq
        %v1349 = vshrl.u32 %v1348, 7
        %v1350 = vsub.s32 1, %v1349
        %v1351 = vrot.slane %v1329, %v1350
        %v1356 = vadd.f32 %v1330, %v1339
        %v1357 = vadd.f32 %v1331, %v1343
        %v1358 = vadd.f32 %v1332, %v1347
        %v1359 = vadd.f32 %v1333, %v1351
        %v1360 = vmax.f32 %v1356, 0.0
        %v1361 = vmax.f32 %v1357, 0.0
        %v1362 = vmax.f32 %v1358, 0.0
        %v1363 = vmax.f32 %v1359, 0.0
        %v1364 = vld [vmem:[#allocation17] sm:$0xff]
        %v1365 = vld [vmem:[#allocation17 + $0x8] sm:$0xff]
        %v1366 = vld [vmem:[#allocation17 + $0x10] sm:$0xff]
        %v1367 = vld [vmem:[#allocation17 + $0x18] sm:$0xff]
        %v1368 = vld [vmem:[#allocation17 + $0x20] sm:$0xff]
        %v1369 = vld [vmem:[#allocation17 + $0x28] sm:$0xff]
        %v1370 = vld [vmem:[#allocation17 + $0x30] sm:$0xff]
        %v1371 = vld [vmem:[#allocation17 + $0x38] sm:$0xff]
        %v1372 = vld [vmem:[#allocation17 + $0x40] sm:$0xff]
        %v1373 = vld [vmem:[#allocation17 + $0x48] sm:$0xff]
        %v1374 = vld [vmem:[#allocation17 + $0x50] sm:$0xff]
        %v1375 = vld [vmem:[#allocation17 + $0x58] sm:$0xff]
        %v1376 = vld [vmem:[#allocation17 + $0x60] sm:$0xff]
        %v1377 = vld [vmem:[#allocation17 + $0x68] sm:$0xff]
        %v1378 = vld [vmem:[#allocation17 + $0x70] sm:$0xff]
        %v1379 = vld [vmem:[#allocation17 + $0x78] sm:$0xff]
        %v1380 = vld [vmem:[#allocation17 + $0x80] sm:$0xff]
        %v1381 = vld [vmem:[#allocation17 + $0x88] sm:$0xff]
        %v1382 = vld [vmem:[#allocation17 + $0x90] sm:$0xff]
        %v1383 = vld [vmem:[#allocation17 + $0x98] sm:$0xff]
        %v1384 = vld [vmem:[#allocation17 + $0xa0] sm:$0xff]
        %v1385 = vld [vmem:[#allocation17 + $0xa8] sm:$0xff]
        %v1386 = vld [vmem:[#allocation17 + $0xb0] sm:$0xff]
        %v1387 = vld [vmem:[#allocation17 + $0xb8] sm:$0xff]
        %v1388 = vld [vmem:[#allocation17 + $0xc0] sm:$0xff]
        %v1389 = vld [vmem:[#allocation17 + $0xc8] sm:$0xff]
        %v1390 = vld [vmem:[#allocation17 + $0xd0] sm:$0xff]
        %v1391 = vld [vmem:[#allocation17 + $0xd8] sm:$0xff]
        %v1392 = vld [vmem:[#allocation17 + $0xe0] sm:$0xff]
        %v1393 = vld [vmem:[#allocation17 + $0xe8] sm:$0xff]
        %v1394 = vld [vmem:[#allocation17 + $0xf0] sm:$0xff]
        %v1395 = vld [vmem:[#allocation17 + $0xf8] sm:$0xff]
        %v1396 = vld [vmem:[#allocation17 + $0x100] sm:$0xff]
        %v1397 = vld [vmem:[#allocation17 + $0x108] sm:$0xff]
        %v1398 = vld [vmem:[#allocation17 + $0x110] sm:$0xff]
        %v1399 = vld [vmem:[#allocation17 + $0x118] sm:$0xff]
        %v1400 = vld [vmem:[#allocation17 + $0x120] sm:$0xff]
        %v1401 = vld [vmem:[#allocation17 + $0x128] sm:$0xff]
        %v1402 = vld [vmem:[#allocation17 + $0x130] sm:$0xff]
        %v1403 = vld [vmem:[#allocation17 + $0x138] sm:$0xff]
        %v1404 = vld [vmem:[#allocation17 + $0x140] sm:$0xff]
        %v1405 = vld [vmem:[#allocation17 + $0x148] sm:$0xff]
        %v1406 = vld [vmem:[#allocation17 + $0x150] sm:$0xff]
        %v1407 = vld [vmem:[#allocation17 + $0x158] sm:$0xff]
        %v1408 = vld [vmem:[#allocation17 + $0x160] sm:$0xff]
        %v1409 = vld [vmem:[#allocation17 + $0x168] sm:$0xff]
        %v1410 = vld [vmem:[#allocation17 + $0x170] sm:$0xff]
        %v1411 = vld [vmem:[#allocation17 + $0x178] sm:$0xff]
        %v1412 = vld [vmem:[#allocation17 + $0x180] sm:$0xff]
        %v1413 = vld [vmem:[#allocation17 + $0x188] sm:$0xff]
        %v1414 = vld [vmem:[#allocation17 + $0x190] sm:$0xff]
        %v1415 = vld [vmem:[#allocation17 + $0x198] sm:$0xff]
        %v1416 = vld [vmem:[#allocation17 + $0x1a0] sm:$0xff]
        %v1417 = vld [vmem:[#allocation17 + $0x1a8] sm:$0xff]
        %v1418 = vld [vmem:[#allocation17 + $0x1b0] sm:$0xff]
        %v1419 = vld [vmem:[#allocation17 + $0x1b8] sm:$0xff]
        %v1420 = vld [vmem:[#allocation17 + $0x1c0] sm:$0xff]
        %v1421 = vld [vmem:[#allocation17 + $0x1c8] sm:$0xff]
        %v1422 = vld [vmem:[#allocation17 + $0x1d0] sm:$0xff]
        %v1423 = vld [vmem:[#allocation17 + $0x1d8] sm:$0xff]
        %v1424 = vld [vmem:[#allocation17 + $0x1e0] sm:$0xff]
        %v1425 = vld [vmem:[#allocation17 + $0x1e8] sm:$0xff]
        %v1426 = vld [vmem:[#allocation17 + $0x1f0] sm:$0xff]
        %v1427 = vld [vmem:[#allocation17 + $0x1f8] sm:$0xff]
        %v1428 = vld [vmem:[#allocation17 + $0x200] sm:$0xff]
        %v1429 = vld [vmem:[#allocation17 + $0x208] sm:$0xff]
        %v1430 = vld [vmem:[#allocation17 + $0x210] sm:$0xff]
        %v1431 = vld [vmem:[#allocation17 + $0x218] sm:$0xff]
        %v1432 = vld [vmem:[#allocation17 + $0x220] sm:$0xff]
        %v1433 = vld [vmem:[#allocation17 + $0x228] sm:$0xff]
        %v1434 = vld [vmem:[#allocation17 + $0x230] sm:$0xff]
        %v1435 = vld [vmem:[#allocation17 + $0x238] sm:$0xff]
        %v1436 = vld [vmem:[#allocation17 + $0x240] sm:$0xff]
        %v1437 = vld [vmem:[#allocation17 + $0x248] sm:$0xff]
        %v1438 = vld [vmem:[#allocation17 + $0x250] sm:$0xff]
        %v1439 = vld [vmem:[#allocation17 + $0x258] sm:$0xff]
        %v1440 = vld [vmem:[#allocation17 + $0x260] sm:$0xff]
        %v1441 = vld [vmem:[#allocation17 + $0x268] sm:$0xff]
        %v1442 = vld [vmem:[#allocation17 + $0x270] sm:$0xff]
        %v1443 = vld [vmem:[#allocation17 + $0x278] sm:$0xff]
        %v1444 = vld [vmem:[#allocation17 + $0x280] sm:$0xff]
        %v1445 = vld [vmem:[#allocation17 + $0x288] sm:$0xff]
        %v1446 = vld [vmem:[#allocation17 + $0x290] sm:$0xff]
        %v1447 = vld [vmem:[#allocation17 + $0x298] sm:$0xff]
        %v1448 = vld [vmem:[#allocation17 + $0x2a0] sm:$0xff]
        %v1449 = vld [vmem:[#allocation17 + $0x2a8] sm:$0xff]
        %v1450 = vld [vmem:[#allocation17 + $0x2b0] sm:$0xff]
        %v1451 = vld [vmem:[#allocation17 + $0x2b8] sm:$0xff]
        %v1452 = vld [vmem:[#allocation17 + $0x2c0] sm:$0xff]
        %v1453 = vld [vmem:[#allocation17 + $0x2c8] sm:$0xff]
        %v1454 = vld [vmem:[#allocation17 + $0x2d0] sm:$0xff]
        %v1455 = vld [vmem:[#allocation17 + $0x2d8] sm:$0xff]
        %v1456 = vld [vmem:[#allocation17 + $0x2e0] sm:$0xff]
        %v1457 = vld [vmem:[#allocation17 + $0x2e8] sm:$0xff]
        %v1458 = vld [vmem:[#allocation17 + $0x2f0] sm:$0xff]
        %v1459 = vld [vmem:[#allocation17 + $0x2f8] sm:$0xff]
        %v1460 = vld [vmem:[#allocation17 + $0x300] sm:$0xff]
        %v1461 = vld [vmem:[#allocation17 + $0x308] sm:$0xff]
        %v1462 = vld [vmem:[#allocation17 + $0x310] sm:$0xff]
        %v1463 = vld [vmem:[#allocation17 + $0x318] sm:$0xff]
        %v1464 = vld [vmem:[#allocation17 + $0x320] sm:$0xff]
        %v1465 = vld [vmem:[#allocation17 + $0x328] sm:$0xff]
        %v1466 = vld [vmem:[#allocation17 + $0x330] sm:$0xff]
        %v1467 = vld [vmem:[#allocation17 + $0x338] sm:$0xff]
        %v1468 = vld [vmem:[#allocation17 + $0x340] sm:$0xff]
        %v1469 = vld [vmem:[#allocation17 + $0x348] sm:$0xff]
        %v1470 = vld [vmem:[#allocation17 + $0x350] sm:$0xff]
        %v1471 = vld [vmem:[#allocation17 + $0x358] sm:$0xff]
        %v1472 = vld [vmem:[#allocation17 + $0x360] sm:$0xff]
        %v1473 = vld [vmem:[#allocation17 + $0x368] sm:$0xff]
        %v1474 = vld [vmem:[#allocation17 + $0x370] sm:$0xff]
        %v1475 = vld [vmem:[#allocation17 + $0x378] sm:$0xff]
        %v1476 = vld [vmem:[#allocation17 + $0x380] sm:$0xff]
        %v1477 = vld [vmem:[#allocation17 + $0x388] sm:$0xff]
        %v1478 = vld [vmem:[#allocation17 + $0x390] sm:$0xff]
        %v1479 = vld [vmem:[#allocation17 + $0x398] sm:$0xff]
        %v1480 = vld [vmem:[#allocation17 + $0x3a0] sm:$0xff]
        %v1481 = vld [vmem:[#allocation17 + $0x3a8] sm:$0xff]
        %v1482 = vld [vmem:[#allocation17 + $0x3b0] sm:$0xff]
        %v1483 = vld [vmem:[#allocation17 + $0x3b8] sm:$0xff]
        %v1484 = vld [vmem:[#allocation17 + $0x3c0] sm:$0xff]
        %v1485 = vld [vmem:[#allocation17 + $0x3c8] sm:$0xff]
        %v1486 = vld [vmem:[#allocation17 + $0x3d0] sm:$0xff]
        %v1487 = vld [vmem:[#allocation17 + $0x3d8] sm:$0xff]
        %v1488 = vld [vmem:[#allocation17 + $0x3e0] sm:$0xff]
        %v1489 = vld [vmem:[#allocation17 + $0x3e8] sm:$0xff]
        %v1490 = vld [vmem:[#allocation17 + $0x3f0] sm:$0xff]
        %v1491 = vld [vmem:[#allocation17 + $0x3f8] sm:$0xff]
        %v1492 = vld [vmem:[#allocation19] sm:$0xf]
        %v1494 = vlaneseq
        %v1495 = vshrl.u32 %v1494, 7
        %v1496 = vsub.s32 0, %v1495
        %v1497 = vrot.slane %v1492, %v1496
        %v1498 = vlaneseq
        %v1499 = vshrl.u32 %v1498, 7
        %v1500 = vsub.s32 1, %v1499
        %v1501 = vrot.slane %v1492, %v1500
        %v1502 = vlaneseq
        %v1503 = vshrl.u32 %v1502, 7
        %v1504 = vsub.s32 2, %v1503
        %v1505 = vrot.slane %v1492, %v1504
        %v1506 = vlaneseq
        %v1507 = vshrl.u32 %v1506, 7
        %v1508 = vsub.s32 3, %v1507
        %v1509 = vrot.slane %v1492, %v1508
        %1514 = vmatprep.subr.mxu0 %v1425
        %1515 = vmatpush1.msra.mxu0 %v1424
        %1516 = vmatprep.subr.mxu0 %v1421
        %1517 = vmatpush1.msra.mxu0 %v1420
        %1518 = vmatprep.subr.mxu0 %v1417
        %1519 = vmatpush1.msra.mxu0 %v1416
        %1520 = vmatprep.subr.mxu0 %v1413
        %1521 = vmatpush1.msra.mxu0 %v1412
        %1522 = vmatprep.subr.mxu0 %v1409
        %1523 = vmatpush1.msra.mxu0 %v1408
        %1524 = vmatprep.subr.mxu0 %v1405
        %1525 = vmatpush1.msra.mxu0 %v1404
        %1526 = vmatprep.subr.mxu0 %v1401
        %1527 = vmatpush1.msra.mxu0 %v1400
        %1528 = vmatprep.subr.mxu0 %v1397
        %1529 = vmatpush1.msra.mxu0 %v1396
        %1530 = vmatprep.subr.mxu0 %v1393
        %1531 = vmatpush1.msra.mxu0 %v1392
        %1532 = vmatprep.subr.mxu0 %v1389
        %1533 = vmatpush1.msra.mxu0 %v1388
        %1534 = vmatprep.subr.mxu0 %v1385
        %1535 = vmatpush1.msra.mxu0 %v1384
        %1536 = vmatprep.subr.mxu0 %v1381
        %1537 = vmatpush1.msra.mxu0 %v1380
        %1538 = vmatprep.subr.mxu0 %v1377
        %1539 = vmatpush1.msra.mxu0 %v1376
        %1540 = vmatprep.subr.mxu0 %v1373
        %1541 = vmatpush1.msra.mxu0 %v1372
        %1542 = vmatprep.subr.mxu0 %v1369
        %1543 = vmatpush1.msra.mxu0 %v1368
        %1544 = vmatprep.subr.mxu0 %v1365
        %1545 = vmatpush1.msra.mxu0 %v1364
        %1546 = vmatprep.subr.mxu0 %v1489
        %1547 = vmatpush2.msra.mxu0 %v1488
        %1548 = vmatprep.subr.mxu0 %v1485
        %1549 = vmatpush2.msra.mxu0 %v1484
        %1550 = vmatprep.subr.mxu0 %v1481
        %1551 = vmatpush2.msra.mxu0 %v1480
        %1552 = vmatprep.subr.mxu0 %v1477
        %1553 = vmatpush2.msra.mxu0 %v1476
        %1554 = vmatprep.subr.mxu0 %v1473
        %1555 = vmatpush2.msra.mxu0 %v1472
        %1556 = vmatprep.subr.mxu0 %v1469
        %1557 = vmatpush2.msra.mxu0 %v1468
        %1558 = vmatprep.subr.mxu0 %v1465
        %1559 = vmatpush2.msra.mxu0 %v1464
        %1560 = vmatprep.subr.mxu0 %v1461
        %1561 = vmatpush2.msra.mxu0 %v1460
        %1562 = vmatprep.subr.mxu0 %v1457
        %1563 = vmatpush2.msra.mxu0 %v1456
        %1564 = vmatprep.subr.mxu0 %v1453
        %1565 = vmatpush2.msra.mxu0 %v1452
        %1566 = vmatprep.subr.mxu0 %v1449
        %1567 = vmatpush2.msra.mxu0 %v1448
        %1568 = vmatprep.subr.mxu0 %v1445
        %1569 = vmatpush2.msra.mxu0 %v1444
        %1570 = vmatprep.subr.mxu0 %v1441
        %1571 = vmatpush2.msra.mxu0 %v1440
        %1572 = vmatprep.subr.mxu0 %v1437
        %1573 = vmatpush2.msra.mxu0 %v1436
        %1574 = vmatprep.subr.mxu0 %v1433
        %1575 = vmatpush2.msra.mxu0 %v1432
        %1576 = vmatprep.subr.mxu0 %v1429
        %1577 = vmatpush2.msra.mxu0 %v1428
        %1578 = vmatprep.mubr.f32.mxu0 %v1361
        %1579 = vmatmul.mubr.f32.gmra.mxu0 %v1360
        %v1580 = vpop.f32.mrf.mxu0
        %v1581 = vadd.f32 %v1497, %v1580
        %v1582 = vpop.f32.mrf.mxu0
        %v1583 = vadd.f32 %v1501, %v1582
        %1584 = vmatprep.mubr.f32.mxu0 %v1363
        %1585 = vmatmul.mubr.f32.gmra.mxu0 %v1362
        %v1586 = vpop.f32.mrf.mxu0
        %v1587 = vadd.f32 %v1497, %v1586
        %v1588 = vpop.f32.mrf.mxu0
        %v1589 = vadd.f32 %v1501, %v1588
        %1590 = vdwg.mxu0
        %1591 = vmatprep.subr.mxu0 %v1427
        %1592 = vmatpush1.msra.mxu0 %v1426
        %1593 = vmatprep.subr.mxu0 %v1423
        %1594 = vmatpush1.msra.mxu0 %v1422
        %1595 = vmatprep.subr.mxu0 %v1419
        %1596 = vmatpush1.msra.mxu0 %v1418
        %1597 = vmatprep.subr.mxu0 %v1415
        %1598 = vmatpush1.msra.mxu0 %v1414
        %1599 = vmatprep.subr.mxu0 %v1411
        %1600 = vmatpush1.msra.mxu0 %v1410
        %1601 = vmatprep.subr.mxu0 %v1407
        %1602 = vmatpush1.msra.mxu0 %v1406
        %1603 = vmatprep.subr.mxu0 %v1403
        %1604 = vmatpush1.msra.mxu0 %v1402
        %1605 = vmatprep.subr.mxu0 %v1399
        %1606 = vmatpush1.msra.mxu0 %v1398
        %1607 = vmatprep.subr.mxu0 %v1395
        %1608 = vmatpush1.msra.mxu0 %v1394
        %1609 = vmatprep.subr.mxu0 %v1391
        %1610 = vmatpush1.msra.mxu0 %v1390
        %1611 = vmatprep.subr.mxu0 %v1387
        %1612 = vmatpush1.msra.mxu0 %v1386
        %1613 = vmatprep.subr.mxu0 %v1383
        %1614 = vmatpush1.msra.mxu0 %v1382
        %1615 = vmatprep.subr.mxu0 %v1379
        %1616 = vmatpush1.msra.mxu0 %v1378
        %1617 = vmatprep.subr.mxu0 %v1375
        %1618 = vmatpush1.msra.mxu0 %v1374
        %1619 = vmatprep.subr.mxu0 %v1371
        %1620 = vmatpush1.msra.mxu0 %v1370
        %1621 = vmatprep.subr.mxu0 %v1367
        %1622 = vmatpush1.msra.mxu0 %v1366
        %1623 = vmatprep.subr.mxu0 %v1491
        %1624 = vmatpush2.msra.mxu0 %v1490
        %1625 = vmatprep.subr.mxu0 %v1487
        %1626 = vmatpush2.msra.mxu0 %v1486
        %1627 = vmatprep.subr.mxu0 %v1483
        %1628 = vmatpush2.msra.mxu0 %v1482
        %1629 = vmatprep.subr.mxu0 %v1479
        %1630 = vmatpush2.msra.mxu0 %v1478
        %1631 = vmatprep.subr.mxu0 %v1475
        %1632 = vmatpush2.msra.mxu0 %v1474
        %1633 = vmatprep.subr.mxu0 %v1471
        %1634 = vmatpush2.msra.mxu0 %v1470
        %1635 = vmatprep.subr.mxu0 %v1467
        %1636 = vmatpush2.msra.mxu0 %v1466
        %1637 = vmatprep.subr.mxu0 %v1463
        %1638 = vmatpush2.msra.mxu0 %v1462
        %1639 = vmatprep.subr.mxu0 %v1459
        %1640 = vmatpush2.msra.mxu0 %v1458
        %1641 = vmatprep.subr.mxu0 %v1455
        %1642 = vmatpush2.msra.mxu0 %v1454
        %1643 = vmatprep.subr.mxu0 %v1451
        %1644 = vmatpush2.msra.mxu0 %v1450
        %1645 = vmatprep.subr.mxu0 %v1447
        %1646 = vmatpush2.msra.mxu0 %v1446
        %1647 = vmatprep.subr.mxu0 %v1443
        %1648 = vmatpush2.msra.mxu0 %v1442
        %1649 = vmatprep.subr.mxu0 %v1439
        %1650 = vmatpush2.msra.mxu0 %v1438
        %1651 = vmatprep.subr.mxu0 %v1435
        %1652 = vmatpush2.msra.mxu0 %v1434
        %1653 = vmatprep.subr.mxu0 %v1431
        %1654 = vmatpush2.msra.mxu0 %v1430
        %1655 = vmatprep.mubr.f32.mxu0 %v1361
        %1656 = vmatmul.mubr.f32.gmra.mxu0 %v1360
        %v1657 = vpop.f32.mrf.mxu0
        %v1658 = vadd.f32 %v1505, %v1657
        %v1659 = vpop.f32.mrf.mxu0
        %v1660 = vadd.f32 %v1509, %v1659
        %1661 = vmatprep.mubr.f32.mxu0 %v1363
        %1662 = vmatmul.mubr.f32.gmra.mxu0 %v1362
        %v1663 = vpop.f32.mrf.mxu0
        %v1664 = vadd.f32 %v1505, %v1663
        %v1665 = vpop.f32.mrf.mxu0
        %v1666 = vadd.f32 %v1509, %v1665
        %1667 = vdwg.mxu0
        %v1668 = vrot.slane %v1581, 4
        %v1669 = vadd.f32 %v1581, %v1668
        %v1670 = vrot.slane %v1669, 2
        %v1671 = vadd.f32 %v1669, %v1670
        %v1672 = vrot.slane %v1671, 1
        %v1673 = vadd.f32 %v1671, %v1672
        %v1674 = vrot.slane %v1583, 4
        %v1675 = vadd.f32 %v1583, %v1674
        %v1676 = vrot.slane %v1675, 2
        %v1677 = vadd.f32 %v1675, %v1676
        %v1678 = vrot.slane %v1677, 1
        %v1679 = vadd.f32 %v1677, %v1678
        %v1680 = vrot.slane %v1658, 4
        %v1681 = vadd.f32 %v1658, %v1680
        %v1682 = vrot.slane %v1681, 2
        %v1683 = vadd.f32 %v1681, %v1682
        %v1684 = vrot.slane %v1683, 1
        %v1685 = vadd.f32 %v1683, %v1684
        %v1686 = vrot.slane %v1660, 4
        %v1687 = vadd.f32 %v1660, %v1686
        %v1688 = vrot.slane %v1687, 2
        %v1689 = vadd.f32 %v1687, %v1688
        %v1690 = vrot.slane %v1689, 1
        %v1691 = vadd.f32 %v1689, %v1690
        %v1692 = vrot.slane %v1587, 4
        %v1693 = vadd.f32 %v1587, %v1692
        %v1694 = vrot.slane %v1693, 2
        %v1695 = vadd.f32 %v1693, %v1694
        %v1696 = vrot.slane %v1695, 1
        %v1697 = vadd.f32 %v1695, %v1696
        %v1698 = vrot.slane %v1589, 4
        %v1699 = vadd.f32 %v1589, %v1698
        %v1700 = vrot.slane %v1699, 2
        %v1701 = vadd.f32 %v1699, %v1700
        %v1702 = vrot.slane %v1701, 1
        %v1703 = vadd.f32 %v1701, %v1702
        %v1704 = vrot.slane %v1664, 4
        %v1705 = vadd.f32 %v1664, %v1704
        %v1706 = vrot.slane %v1705, 2
        %v1707 = vadd.f32 %v1705, %v1706
        %v1708 = vrot.slane %v1707, 1
        %v1709 = vadd.f32 %v1707, %v1708
        %v1710 = vrot.slane %v1666, 4
        %v1711 = vadd.f32 %v1666, %v1710
        %v1712 = vrot.slane %v1711, 2
        %v1713 = vadd.f32 %v1711, %v1712
        %v1714 = vrot.slane %v1713, 1
        %v1715 = vadd.f32 %v1713, %v1714
        %v1716 = vmul.f32 %v1673, %v970
        %v1717 = vmul.f32 %v1679, %v970
        %v1718 = vmul.f32 %v1685, %v970
        %v1719 = vmul.f32 %v1691, %v970
        %v1720 = vmul.f32 %v1697, %v970
        %v1721 = vmul.f32 %v1703, %v970
        %v1722 = vmul.f32 %v1709, %v970
        %v1723 = vmul.f32 %v1715, %v970
        %v1724 = vsub.f32 %v1581, %v1716
        %v1725 = vsub.f32 %v1583, %v1717
        %v1726 = vsub.f32 %v1658, %v1718
        %v1727 = vsub.f32 %v1660, %v1719
        %v1728 = vsub.f32 %v1587, %v1720
        %v1729 = vsub.f32 %v1589, %v1721
        %v1730 = vsub.f32 %v1664, %v1722
        %v1731 = vsub.f32 %v1666, %v1723
        %v1732 = vmul.f32 %v1724, %v1724
        %v1733 = vmul.f32 %v1725, %v1725
        %v1734 = vmul.f32 %v1726, %v1726
        %v1735 = vmul.f32 %v1727, %v1727
        %v1736 = vmul.f32 %v1728, %v1728
        %v1737 = vmul.f32 %v1729, %v1729
        %v1738 = vmul.f32 %v1730, %v1730
        %v1739 = vmul.f32 %v1731, %v1731
        %v1740 = vrot.slane %v1732, 4
        %v1741 = vadd.f32 %v1732, %v1740
        %v1742 = vrot.slane %v1741, 2
        %v1743 = vadd.f32 %v1741, %v1742
        %v1744 = vrot.slane %v1743, 1
        %v1745 = vadd.f32 %v1743, %v1744
        %v1746 = vrot.slane %v1733, 4
        %v1747 = vadd.f32 %v1733, %v1746
        %v1748 = vrot.slane %v1747, 2
        %v1749 = vadd.f32 %v1747, %v1748
        %v1750 = vrot.slane %v1749, 1
        %v1751 = vadd.f32 %v1749, %v1750
        %v1752 = vrot.slane %v1734, 4
        %v1753 = vadd.f32 %v1734, %v1752
        %v1754 = vrot.slane %v1753, 2
        %v1755 = vadd.f32 %v1753, %v1754
        %v1756 = vrot.slane %v1755, 1
        %v1757 = vadd.f32 %v1755, %v1756
        %v1758 = vrot.slane %v1735, 4
        %v1759 = vadd.f32 %v1735, %v1758
        %v1760 = vrot.slane %v1759, 2
        %v1761 = vadd.f32 %v1759, %v1760
        %v1762 = vrot.slane %v1761, 1
        %v1763 = vadd.f32 %v1761, %v1762
        %v1764 = vrot.slane %v1736, 4
        %v1765 = vadd.f32 %v1736, %v1764
        %v1766 = vrot.slane %v1765, 2
        %v1767 = vadd.f32 %v1765, %v1766
        %v1768 = vrot.slane %v1767, 1
        %v1769 = vadd.f32 %v1767, %v1768
        %v1770 = vrot.slane %v1737, 4
        %v1771 = vadd.f32 %v1737, %v1770
        %v1772 = vrot.slane %v1771, 2
        %v1773 = vadd.f32 %v1771, %v1772
        %v1774 = vrot.slane %v1773, 1
        %v1775 = vadd.f32 %v1773, %v1774
        %v1776 = vrot.slane %v1738, 4
        %v1777 = vadd.f32 %v1738, %v1776
        %v1778 = vrot.slane %v1777, 2
        %v1779 = vadd.f32 %v1777, %v1778
        %v1780 = vrot.slane %v1779, 1
        %v1781 = vadd.f32 %v1779, %v1780
        %v1782 = vrot.slane %v1739, 4
        %v1783 = vadd.f32 %v1739, %v1782
        %v1784 = vrot.slane %v1783, 2
        %v1785 = vadd.f32 %v1783, %v1784
        %v1786 = vrot.slane %v1785, 1
        %v1787 = vadd.f32 %v1785, %v1786
        %v1788 = vmul.f32 %v1745, %v970
        %v1789 = vmul.f32 %v1751, %v970
        %v1790 = vmul.f32 %v1757, %v970
        %v1791 = vmul.f32 %v1763, %v970
        %v1792 = vmul.f32 %v1769, %v970
        %v1793 = vmul.f32 %v1775, %v970
        %v1794 = vmul.f32 %v1781, %v970
        %v1795 = vmul.f32 %v1787, %v970
        %v1796 = vld [vmem:[#allocation20] sm:$0xf]
        %v1797 = vadd.f32 %v1788, 1e-05
        %v1798 = vadd.f32 %v1789, 1e-05
        %v1799 = vadd.f32 %v1790, 1e-05
        %v1800 = vadd.f32 %v1791, 1e-05
        %v1801 = vadd.f32 %v1792, 1e-05
        %v1802 = vadd.f32 %v1793, 1e-05
        %v1803 = vadd.f32 %v1794, 1e-05
        %v1804 = vadd.f32 %v1795, 1e-05
        %v1805 = vrsqrt.pop %v1797
        %v1806 = vrsqrt.pop %v1798
        %v1807 = vrsqrt.pop %v1799
        %v1808 = vrsqrt.pop %v1800
        %v1809 = vrsqrt.pop %v1801
        %v1810 = vrsqrt.pop %v1802
        %v1811 = vrsqrt.pop %v1803
        %v1812 = vrsqrt.pop %v1804
        %v1821 = vcombine.low %v1805, %v1806
        %v1822 = vcombine.low %v1807, %v1808
        %v1824 = vunpack.c.l.s4 1966171168
        %v1825 = vunpack.c.0.s8 %v1824
        %v1826 = vlaneseq
        %v1827 = vshrl.u32 %v1826, 7
        %v1828 = vsub.s32 %v1825, %v1827
        %v1829 = vrot.slane %v1821, %v1828
        %v1831 = vunpack.c.l.s4 1966171168
        %v1832 = vunpack.c.0.s8 %v1831
        %v1833 = vlaneseq
        %v1834 = vshrl.u32 %v1833, 7
        %v1835 = vsub.s32 %v1832, %v1834
        %v1836 = vrot.slane %v1822, %v1835
        %v1837 = vcombine.low %v1829, %v1836
        %v1839 = vunpack.c.l.s4 1966171168
        %v1840 = vunpack.c.0.s8 %v1839
        %v1841 = vlaneseq
        %v1842 = vshrl.u32 %v1841, 7
        %v1843 = vsub.s32 %v1840, %v1842
        %v1844 = vrot.slane %v1837, %v1843
        %v1845 = vcombine.low %v1809, %v1810
        %v1846 = vcombine.low %v1811, %v1812
        %v1848 = vunpack.c.l.s4 1966171168
        %v1849 = vunpack.c.0.s8 %v1848
        %v1850 = vlaneseq
        %v1851 = vshrl.u32 %v1850, 7
        %v1852 = vsub.s32 %v1849, %v1851
        %v1853 = vrot.slane %v1845, %v1852
        %v1855 = vunpack.c.l.s4 1966171168
        %v1856 = vunpack.c.0.s8 %v1855
        %v1857 = vlaneseq
        %v1858 = vshrl.u32 %v1857, 7
        %v1859 = vsub.s32 %v1856, %v1858
        %v1860 = vrot.slane %v1846, %v1859
        %v1861 = vcombine.low %v1853, %v1860
        %v1863 = vunpack.c.l.s4 1966171168
        %v1864 = vunpack.c.0.s8 %v1863
        %v1865 = vlaneseq
        %v1866 = vshrl.u32 %v1865, 7
        %v1867 = vsub.s32 %v1864, %v1866
        %v1868 = vrot.slane %v1861, %v1867
        %v1871 = vmul.f32 %v1796, %v1844
        %v1872 = vmul.f32 %v1796, %v1868
        %v1873 = vld [vmem:[#allocation22] sm:$0xf]
        %v1876 = vlaneseq
        %v1877 = vshrl.u32 %v1876, 7
        %v1878 = vsub.s32 0, %v1877
        %v1879 = vrot.slane %v1871, %v1878
        %v1880 = vlaneseq
        %v1881 = vshrl.u32 %v1880, 7
        %v1882 = vsub.s32 1, %v1881
        %v1883 = vrot.slane %v1871, %v1882
        %v1884 = vlaneseq
        %v1885 = vshrl.u32 %v1884, 7
        %v1886 = vsub.s32 2, %v1885
        %v1887 = vrot.slane %v1871, %v1886
        %v1888 = vlaneseq
        %v1889 = vshrl.u32 %v1888, 7
        %v1890 = vsub.s32 3, %v1889
        %v1891 = vrot.slane %v1871, %v1890
        %v1892 = vlaneseq
        %v1893 = vshrl.u32 %v1892, 7
        %v1894 = vsub.s32 0, %v1893
        %v1895 = vrot.slane %v1872, %v1894
        %v1896 = vlaneseq
        %v1897 = vshrl.u32 %v1896, 7
        %v1898 = vsub.s32 1, %v1897
        %v1899 = vrot.slane %v1872, %v1898
        %v1900 = vlaneseq
        %v1901 = vshrl.u32 %v1900, 7
        %v1902 = vsub.s32 2, %v1901
        %v1903 = vrot.slane %v1872, %v1902
        %v1904 = vlaneseq
        %v1905 = vshrl.u32 %v1904, 7
        %v1906 = vsub.s32 3, %v1905
        %v1907 = vrot.slane %v1872, %v1906
        %v1916 = vmul.f32 %v1716, %v1879
        %v1917 = vmul.f32 %v1717, %v1883
        %v1918 = vmul.f32 %v1718, %v1887
        %v1919 = vmul.f32 %v1719, %v1891
        %v1920 = vmul.f32 %v1720, %v1895
        %v1921 = vmul.f32 %v1721, %v1899
        %v1922 = vmul.f32 %v1722, %v1903
        %v1923 = vmul.f32 %v1723, %v1907
        %v1932 = vcombine.low %v1916, %v1917
        %v1933 = vcombine.low %v1918, %v1919
        %v1935 = vunpack.c.l.s4 1966171168
        %v1936 = vunpack.c.0.s8 %v1935
        %v1937 = vlaneseq
        %v1938 = vshrl.u32 %v1937, 7
        %v1939 = vsub.s32 %v1936, %v1938
        %v1940 = vrot.slane %v1932, %v1939
        %v1942 = vunpack.c.l.s4 1966171168
        %v1943 = vunpack.c.0.s8 %v1942
        %v1944 = vlaneseq
        %v1945 = vshrl.u32 %v1944, 7
        %v1946 = vsub.s32 %v1943, %v1945
        %v1947 = vrot.slane %v1933, %v1946
        %v1948 = vcombine.low %v1940, %v1947
        %v1950 = vunpack.c.l.s4 1966171168
        %v1951 = vunpack.c.0.s8 %v1950
        %v1952 = vlaneseq
        %v1953 = vshrl.u32 %v1952, 7
        %v1954 = vsub.s32 %v1951, %v1953
        %v1955 = vrot.slane %v1948, %v1954
        %v1956 = vcombine.low %v1920, %v1921
        %v1957 = vcombine.low %v1922, %v1923
        %v1959 = vunpack.c.l.s4 1966171168
        %v1960 = vunpack.c.0.s8 %v1959
        %v1961 = vlaneseq
        %v1962 = vshrl.u32 %v1961, 7
        %v1963 = vsub.s32 %v1960, %v1962
        %v1964 = vrot.slane %v1956, %v1963
        %v1966 = vunpack.c.l.s4 1966171168
        %v1967 = vunpack.c.0.s8 %v1966
        %v1968 = vlaneseq
        %v1969 = vshrl.u32 %v1968, 7
        %v1970 = vsub.s32 %v1967, %v1969
        %v1971 = vrot.slane %v1957, %v1970
        %v1972 = vcombine.low %v1964, %v1971
        %v1974 = vunpack.c.l.s4 1966171168
        %v1975 = vunpack.c.0.s8 %v1974
        %v1976 = vlaneseq
        %v1977 = vshrl.u32 %v1976, 7
        %v1978 = vsub.s32 %v1975, %v1977
        %v1979 = vrot.slane %v1972, %v1978
        %v1982 = vsub.f32 %v1873, %v1955
        %v1983 = vsub.f32 %v1873, %v1979
        %v1984 = vmul.f32 %v1581, %v1879
        %v1985 = vmul.f32 %v1583, %v1883
        %v1986 = vmul.f32 %v1658, %v1887
        %v1987 = vmul.f32 %v1660, %v1891
        %v1988 = vmul.f32 %v1587, %v1895
        %v1989 = vmul.f32 %v1589, %v1899
        %v1990 = vmul.f32 %v1664, %v1903
        %v1991 = vmul.f32 %v1666, %v1907
        %v1994 = vlaneseq
        %v1995 = vshrl.u32 %v1994, 7
        %v1996 = vsub.s32 0, %v1995
        %v1997 = vrot.slane %v1982, %v1996
        %v1998 = vlaneseq
        %v1999 = vshrl.u32 %v1998, 7
        %v2000 = vsub.s32 1, %v1999
        %v2001 = vrot.slane %v1982, %v2000
        %v2002 = vlaneseq
        %v2003 = vshrl.u32 %v2002, 7
        %v2004 = vsub.s32 2, %v2003
        %v2005 = vrot.slane %v1982, %v2004
        %v2006 = vlaneseq
        %v2007 = vshrl.u32 %v2006, 7
        %v2008 = vsub.s32 3, %v2007
        %v2009 = vrot.slane %v1982, %v2008
        %v2010 = vlaneseq
        %v2011 = vshrl.u32 %v2010, 7
        %v2012 = vsub.s32 0, %v2011
        %v2013 = vrot.slane %v1983, %v2012
        %v2014 = vlaneseq
        %v2015 = vshrl.u32 %v2014, 7
        %v2016 = vsub.s32 1, %v2015
        %v2017 = vrot.slane %v1983, %v2016
        %v2018 = vlaneseq
        %v2019 = vshrl.u32 %v2018, 7
        %v2020 = vsub.s32 2, %v2019
        %v2021 = vrot.slane %v1983, %v2020
        %v2022 = vlaneseq
        %v2023 = vshrl.u32 %v2022, 7
        %v2024 = vsub.s32 3, %v2023
        %v2025 = vrot.slane %v1983, %v2024
        %v2034 = vadd.f32 %v1984, %v1997
        %v2035 = vadd.f32 %v1985, %v2001
        %v2036 = vadd.f32 %v1986, %v2005
        %v2037 = vadd.f32 %v1987, %v2009
        %v2038 = vadd.f32 %v1988, %v2013
        %v2039 = vadd.f32 %v1989, %v2017
        %v2040 = vadd.f32 %v1990, %v2021
        %v2041 = vadd.f32 %v1991, %v2025
        %v2042 = vmax.f32 %v2034, 0.0
        %v2043 = vmax.f32 %v2035, 0.0
        %v2044 = vmax.f32 %v2036, 0.0
        %v2045 = vmax.f32 %v2037, 0.0
        %v2046 = vmax.f32 %v2038, 0.0
        %v2047 = vmax.f32 %v2039, 0.0
        %v2048 = vmax.f32 %v2040, 0.0
        %v2049 = vmax.f32 %v2041, 0.0
        %v2050 = vld [vmem:[#allocation23] sm:$0xff]
        %v2051 = vld [vmem:[#allocation23 + $0x8] sm:$0xff]
        %v2052 = vld [vmem:[#allocation23 + $0x10] sm:$0xff]
        %v2053 = vld [vmem:[#allocation23 + $0x18] sm:$0xff]
        %v2054 = vld [vmem:[#allocation23 + $0x20] sm:$0xff]
        %v2055 = vld [vmem:[#allocation23 + $0x28] sm:$0xff]
        %v2056 = vld [vmem:[#allocation23 + $0x30] sm:$0xff]
        %v2057 = vld [vmem:[#allocation23 + $0x38] sm:$0xff]
        %v2058 = vld [vmem:[#allocation23 + $0x40] sm:$0xff]
        %v2059 = vld [vmem:[#allocation23 + $0x48] sm:$0xff]
        %v2060 = vld [vmem:[#allocation23 + $0x50] sm:$0xff]
        %v2061 = vld [vmem:[#allocation23 + $0x58] sm:$0xff]
        %v2062 = vld [vmem:[#allocation23 + $0x60] sm:$0xff]
        %v2063 = vld [vmem:[#allocation23 + $0x68] sm:$0xff]
        %v2064 = vld [vmem:[#allocation23 + $0x70] sm:$0xff]
        %v2065 = vld [vmem:[#allocation23 + $0x78] sm:$0xff]
        %v2066 = vld [vmem:[#allocation23 + $0x80] sm:$0xff]
        %v2067 = vld [vmem:[#allocation23 + $0x88] sm:$0xff]
        %v2068 = vld [vmem:[#allocation23 + $0x90] sm:$0xff]
        %v2069 = vld [vmem:[#allocation23 + $0x98] sm:$0xff]
        %v2070 = vld [vmem:[#allocation23 + $0xa0] sm:$0xff]
        %v2071 = vld [vmem:[#allocation23 + $0xa8] sm:$0xff]
        %v2072 = vld [vmem:[#allocation23 + $0xb0] sm:$0xff]
        %v2073 = vld [vmem:[#allocation23 + $0xb8] sm:$0xff]
        %v2074 = vld [vmem:[#allocation23 + $0xc0] sm:$0xff]
        %v2075 = vld [vmem:[#allocation23 + $0xc8] sm:$0xff]
        %v2076 = vld [vmem:[#allocation23 + $0xd0] sm:$0xff]
        %v2077 = vld [vmem:[#allocation23 + $0xd8] sm:$0xff]
        %v2078 = vld [vmem:[#allocation23 + $0xe0] sm:$0xff]
        %v2079 = vld [vmem:[#allocation23 + $0xe8] sm:$0xff]
        %v2080 = vld [vmem:[#allocation23 + $0xf0] sm:$0xff]
        %v2081 = vld [vmem:[#allocation23 + $0xf8] sm:$0xff]
        %v2082 = vld [vmem:[#allocation23 + $0x100] sm:$0xff]
        %v2083 = vld [vmem:[#allocation23 + $0x108] sm:$0xff]
        %v2084 = vld [vmem:[#allocation23 + $0x110] sm:$0xff]
        %v2085 = vld [vmem:[#allocation23 + $0x118] sm:$0xff]
        %v2086 = vld [vmem:[#allocation23 + $0x120] sm:$0xff]
        %v2087 = vld [vmem:[#allocation23 + $0x128] sm:$0xff]
        %v2088 = vld [vmem:[#allocation23 + $0x130] sm:$0xff]
        %v2089 = vld [vmem:[#allocation23 + $0x138] sm:$0xff]
        %v2090 = vld [vmem:[#allocation23 + $0x140] sm:$0xff]
        %v2091 = vld [vmem:[#allocation23 + $0x148] sm:$0xff]
        %v2092 = vld [vmem:[#allocation23 + $0x150] sm:$0xff]
        %v2093 = vld [vmem:[#allocation23 + $0x158] sm:$0xff]
        %v2094 = vld [vmem:[#allocation23 + $0x160] sm:$0xff]
        %v2095 = vld [vmem:[#allocation23 + $0x168] sm:$0xff]
        %v2096 = vld [vmem:[#allocation23 + $0x170] sm:$0xff]
        %v2097 = vld [vmem:[#allocation23 + $0x178] sm:$0xff]
        %v2098 = vld [vmem:[#allocation23 + $0x180] sm:$0xff]
        %v2099 = vld [vmem:[#allocation23 + $0x188] sm:$0xff]
        %v2100 = vld [vmem:[#allocation23 + $0x190] sm:$0xff]
        %v2101 = vld [vmem:[#allocation23 + $0x198] sm:$0xff]
        %v2102 = vld [vmem:[#allocation23 + $0x1a0] sm:$0xff]
        %v2103 = vld [vmem:[#allocation23 + $0x1a8] sm:$0xff]
        %v2104 = vld [vmem:[#allocation23 + $0x1b0] sm:$0xff]
        %v2105 = vld [vmem:[#allocation23 + $0x1b8] sm:$0xff]
        %v2106 = vld [vmem:[#allocation23 + $0x1c0] sm:$0xff]
        %v2107 = vld [vmem:[#allocation23 + $0x1c8] sm:$0xff]
        %v2108 = vld [vmem:[#allocation23 + $0x1d0] sm:$0xff]
        %v2109 = vld [vmem:[#allocation23 + $0x1d8] sm:$0xff]
        %v2110 = vld [vmem:[#allocation23 + $0x1e0] sm:$0xff]
        %v2111 = vld [vmem:[#allocation23 + $0x1e8] sm:$0xff]
        %v2112 = vld [vmem:[#allocation23 + $0x1f0] sm:$0xff]
        %v2113 = vld [vmem:[#allocation23 + $0x1f8] sm:$0xff]
        %v2114 = vld [vmem:[#allocation23 + $0x200] sm:$0xff]
        %v2115 = vld [vmem:[#allocation23 + $0x208] sm:$0xff]
        %v2116 = vld [vmem:[#allocation23 + $0x210] sm:$0xff]
        %v2117 = vld [vmem:[#allocation23 + $0x218] sm:$0xff]
        %v2118 = vld [vmem:[#allocation23 + $0x220] sm:$0xff]
        %v2119 = vld [vmem:[#allocation23 + $0x228] sm:$0xff]
        %v2120 = vld [vmem:[#allocation23 + $0x230] sm:$0xff]
        %v2121 = vld [vmem:[#allocation23 + $0x238] sm:$0xff]
        %v2122 = vld [vmem:[#allocation23 + $0x240] sm:$0xff]
        %v2123 = vld [vmem:[#allocation23 + $0x248] sm:$0xff]
        %v2124 = vld [vmem:[#allocation23 + $0x250] sm:$0xff]
        %v2125 = vld [vmem:[#allocation23 + $0x258] sm:$0xff]
        %v2126 = vld [vmem:[#allocation23 + $0x260] sm:$0xff]
        %v2127 = vld [vmem:[#allocation23 + $0x268] sm:$0xff]
        %v2128 = vld [vmem:[#allocation23 + $0x270] sm:$0xff]
        %v2129 = vld [vmem:[#allocation23 + $0x278] sm:$0xff]
        %v2130 = vld [vmem:[#allocation23 + $0x280] sm:$0xff]
        %v2131 = vld [vmem:[#allocation23 + $0x288] sm:$0xff]
        %v2132 = vld [vmem:[#allocation23 + $0x290] sm:$0xff]
        %v2133 = vld [vmem:[#allocation23 + $0x298] sm:$0xff]
        %v2134 = vld [vmem:[#allocation23 + $0x2a0] sm:$0xff]
        %v2135 = vld [vmem:[#allocation23 + $0x2a8] sm:$0xff]
        %v2136 = vld [vmem:[#allocation23 + $0x2b0] sm:$0xff]
        %v2137 = vld [vmem:[#allocation23 + $0x2b8] sm:$0xff]
        %v2138 = vld [vmem:[#allocation23 + $0x2c0] sm:$0xff]
        %v2139 = vld [vmem:[#allocation23 + $0x2c8] sm:$0xff]
        %v2140 = vld [vmem:[#allocation23 + $0x2d0] sm:$0xff]
        %v2141 = vld [vmem:[#allocation23 + $0x2d8] sm:$0xff]
        %v2142 = vld [vmem:[#allocation23 + $0x2e0] sm:$0xff]
        %v2143 = vld [vmem:[#allocation23 + $0x2e8] sm:$0xff]
        %v2144 = vld [vmem:[#allocation23 + $0x2f0] sm:$0xff]
        %v2145 = vld [vmem:[#allocation23 + $0x2f8] sm:$0xff]
        %v2146 = vld [vmem:[#allocation23 + $0x300] sm:$0xff]
        %v2147 = vld [vmem:[#allocation23 + $0x308] sm:$0xff]
        %v2148 = vld [vmem:[#allocation23 + $0x310] sm:$0xff]
        %v2149 = vld [vmem:[#allocation23 + $0x318] sm:$0xff]
        %v2150 = vld [vmem:[#allocation23 + $0x320] sm:$0xff]
        %v2151 = vld [vmem:[#allocation23 + $0x328] sm:$0xff]
        %v2152 = vld [vmem:[#allocation23 + $0x330] sm:$0xff]
        %v2153 = vld [vmem:[#allocation23 + $0x338] sm:$0xff]
        %v2154 = vld [vmem:[#allocation23 + $0x340] sm:$0xff]
        %v2155 = vld [vmem:[#allocation23 + $0x348] sm:$0xff]
        %v2156 = vld [vmem:[#allocation23 + $0x350] sm:$0xff]
        %v2157 = vld [vmem:[#allocation23 + $0x358] sm:$0xff]
        %v2158 = vld [vmem:[#allocation23 + $0x360] sm:$0xff]
        %v2159 = vld [vmem:[#allocation23 + $0x368] sm:$0xff]
        %v2160 = vld [vmem:[#allocation23 + $0x370] sm:$0xff]
        %v2161 = vld [vmem:[#allocation23 + $0x378] sm:$0xff]
        %v2162 = vld [vmem:[#allocation23 + $0x380] sm:$0xff]
        %v2163 = vld [vmem:[#allocation23 + $0x388] sm:$0xff]
        %v2164 = vld [vmem:[#allocation23 + $0x390] sm:$0xff]
        %v2165 = vld [vmem:[#allocation23 + $0x398] sm:$0xff]
        %v2166 = vld [vmem:[#allocation23 + $0x3a0] sm:$0xff]
        %v2167 = vld [vmem:[#allocation23 + $0x3a8] sm:$0xff]
        %v2168 = vld [vmem:[#allocation23 + $0x3b0] sm:$0xff]
        %v2169 = vld [vmem:[#allocation23 + $0x3b8] sm:$0xff]
        %v2170 = vld [vmem:[#allocation23 + $0x3c0] sm:$0xff]
        %v2171 = vld [vmem:[#allocation23 + $0x3c8] sm:$0xff]
        %v2172 = vld [vmem:[#allocation23 + $0x3d0] sm:$0xff]
        %v2173 = vld [vmem:[#allocation23 + $0x3d8] sm:$0xff]
        %v2174 = vld [vmem:[#allocation23 + $0x3e0] sm:$0xff]
        %v2175 = vld [vmem:[#allocation23 + $0x3e8] sm:$0xff]
        %v2176 = vld [vmem:[#allocation23 + $0x3f0] sm:$0xff]
        %v2177 = vld [vmem:[#allocation23 + $0x3f8] sm:$0xff]
        %v2178 = vld [vmem:[#allocation23 + $0x400] sm:$0xff]
        %v2179 = vld [vmem:[#allocation23 + $0x408] sm:$0xff]
        %v2180 = vld [vmem:[#allocation23 + $0x410] sm:$0xff]
        %v2181 = vld [vmem:[#allocation23 + $0x418] sm:$0xff]
        %v2182 = vld [vmem:[#allocation23 + $0x420] sm:$0xff]
        %v2183 = vld [vmem:[#allocation23 + $0x428] sm:$0xff]
        %v2184 = vld [vmem:[#allocation23 + $0x430] sm:$0xff]
        %v2185 = vld [vmem:[#allocation23 + $0x438] sm:$0xff]
        %v2186 = vld [vmem:[#allocation23 + $0x440] sm:$0xff]
        %v2187 = vld [vmem:[#allocation23 + $0x448] sm:$0xff]
        %v2188 = vld [vmem:[#allocation23 + $0x450] sm:$0xff]
        %v2189 = vld [vmem:[#allocation23 + $0x458] sm:$0xff]
        %v2190 = vld [vmem:[#allocation23 + $0x460] sm:$0xff]
        %v2191 = vld [vmem:[#allocation23 + $0x468] sm:$0xff]
        %v2192 = vld [vmem:[#allocation23 + $0x470] sm:$0xff]
        %v2193 = vld [vmem:[#allocation23 + $0x478] sm:$0xff]
        %v2194 = vld [vmem:[#allocation23 + $0x480] sm:$0xff]
        %v2195 = vld [vmem:[#allocation23 + $0x488] sm:$0xff]
        %v2196 = vld [vmem:[#allocation23 + $0x490] sm:$0xff]
        %v2197 = vld [vmem:[#allocation23 + $0x498] sm:$0xff]
        %v2198 = vld [vmem:[#allocation23 + $0x4a0] sm:$0xff]
        %v2199 = vld [vmem:[#allocation23 + $0x4a8] sm:$0xff]
        %v2200 = vld [vmem:[#allocation23 + $0x4b0] sm:$0xff]
        %v2201 = vld [vmem:[#allocation23 + $0x4b8] sm:$0xff]
        %v2202 = vld [vmem:[#allocation23 + $0x4c0] sm:$0xff]
        %v2203 = vld [vmem:[#allocation23 + $0x4c8] sm:$0xff]
        %v2204 = vld [vmem:[#allocation23 + $0x4d0] sm:$0xff]
        %v2205 = vld [vmem:[#allocation23 + $0x4d8] sm:$0xff]
        %v2206 = vld [vmem:[#allocation23 + $0x4e0] sm:$0xff]
        %v2207 = vld [vmem:[#allocation23 + $0x4e8] sm:$0xff]
        %v2208 = vld [vmem:[#allocation23 + $0x4f0] sm:$0xff]
        %v2209 = vld [vmem:[#allocation23 + $0x4f8] sm:$0xff]
        %v2210 = vld [vmem:[#allocation23 + $0x500] sm:$0xff]
        %v2211 = vld [vmem:[#allocation23 + $0x508] sm:$0xff]
        %v2212 = vld [vmem:[#allocation23 + $0x510] sm:$0xff]
        %v2213 = vld [vmem:[#allocation23 + $0x518] sm:$0xff]
        %v2214 = vld [vmem:[#allocation23 + $0x520] sm:$0xff]
        %v2215 = vld [vmem:[#allocation23 + $0x528] sm:$0xff]
        %v2216 = vld [vmem:[#allocation23 + $0x530] sm:$0xff]
        %v2217 = vld [vmem:[#allocation23 + $0x538] sm:$0xff]
        %v2218 = vld [vmem:[#allocation23 + $0x540] sm:$0xff]
        %v2219 = vld [vmem:[#allocation23 + $0x548] sm:$0xff]
        %v2220 = vld [vmem:[#allocation23 + $0x550] sm:$0xff]
        %v2221 = vld [vmem:[#allocation23 + $0x558] sm:$0xff]
        %v2222 = vld [vmem:[#allocation23 + $0x560] sm:$0xff]
        %v2223 = vld [vmem:[#allocation23 + $0x568] sm:$0xff]
        %v2224 = vld [vmem:[#allocation23 + $0x570] sm:$0xff]
        %v2225 = vld [vmem:[#allocation23 + $0x578] sm:$0xff]
        %v2226 = vld [vmem:[#allocation23 + $0x580] sm:$0xff]
        %v2227 = vld [vmem:[#allocation23 + $0x588] sm:$0xff]
        %v2228 = vld [vmem:[#allocation23 + $0x590] sm:$0xff]
        %v2229 = vld [vmem:[#allocation23 + $0x598] sm:$0xff]
        %v2230 = vld [vmem:[#allocation23 + $0x5a0] sm:$0xff]
        %v2231 = vld [vmem:[#allocation23 + $0x5a8] sm:$0xff]
        %v2232 = vld [vmem:[#allocation23 + $0x5b0] sm:$0xff]
        %v2233 = vld [vmem:[#allocation23 + $0x5b8] sm:$0xff]
        %v2234 = vld [vmem:[#allocation23 + $0x5c0] sm:$0xff]
        %v2235 = vld [vmem:[#allocation23 + $0x5c8] sm:$0xff]
        %v2236 = vld [vmem:[#allocation23 + $0x5d0] sm:$0xff]
        %v2237 = vld [vmem:[#allocation23 + $0x5d8] sm:$0xff]
        %v2238 = vld [vmem:[#allocation23 + $0x5e0] sm:$0xff]
        %v2239 = vld [vmem:[#allocation23 + $0x5e8] sm:$0xff]
        %v2240 = vld [vmem:[#allocation23 + $0x5f0] sm:$0xff]
        %v2241 = vld [vmem:[#allocation23 + $0x5f8] sm:$0xff]
        %v2242 = vld [vmem:[#allocation23 + $0x600] sm:$0xff]
        %v2243 = vld [vmem:[#allocation23 + $0x608] sm:$0xff]
        %v2244 = vld [vmem:[#allocation23 + $0x610] sm:$0xff]
        %v2245 = vld [vmem:[#allocation23 + $0x618] sm:$0xff]
        %v2246 = vld [vmem:[#allocation23 + $0x620] sm:$0xff]
        %v2247 = vld [vmem:[#allocation23 + $0x628] sm:$0xff]
        %v2248 = vld [vmem:[#allocation23 + $0x630] sm:$0xff]
        %v2249 = vld [vmem:[#allocation23 + $0x638] sm:$0xff]
        %v2250 = vld [vmem:[#allocation23 + $0x640] sm:$0xff]
        %v2251 = vld [vmem:[#allocation23 + $0x648] sm:$0xff]
        %v2252 = vld [vmem:[#allocation23 + $0x650] sm:$0xff]
        %v2253 = vld [vmem:[#allocation23 + $0x658] sm:$0xff]
        %v2254 = vld [vmem:[#allocation23 + $0x660] sm:$0xff]
        %v2255 = vld [vmem:[#allocation23 + $0x668] sm:$0xff]
        %v2256 = vld [vmem:[#allocation23 + $0x670] sm:$0xff]
        %v2257 = vld [vmem:[#allocation23 + $0x678] sm:$0xff]
        %v2258 = vld [vmem:[#allocation23 + $0x680] sm:$0xff]
        %v2259 = vld [vmem:[#allocation23 + $0x688] sm:$0xff]
        %v2260 = vld [vmem:[#allocation23 + $0x690] sm:$0xff]
        %v2261 = vld [vmem:[#allocation23 + $0x698] sm:$0xff]
        %v2262 = vld [vmem:[#allocation23 + $0x6a0] sm:$0xff]
        %v2263 = vld [vmem:[#allocation23 + $0x6a8] sm:$0xff]
        %v2264 = vld [vmem:[#allocation23 + $0x6b0] sm:$0xff]
        %v2265 = vld [vmem:[#allocation23 + $0x6b8] sm:$0xff]
        %v2266 = vld [vmem:[#allocation23 + $0x6c0] sm:$0xff]
        %v2267 = vld [vmem:[#allocation23 + $0x6c8] sm:$0xff]
        %v2268 = vld [vmem:[#allocation23 + $0x6d0] sm:$0xff]
        %v2269 = vld [vmem:[#allocation23 + $0x6d8] sm:$0xff]
        %v2270 = vld [vmem:[#allocation23 + $0x6e0] sm:$0xff]
        %v2271 = vld [vmem:[#allocation23 + $0x6e8] sm:$0xff]
        %v2272 = vld [vmem:[#allocation23 + $0x6f0] sm:$0xff]
        %v2273 = vld [vmem:[#allocation23 + $0x6f8] sm:$0xff]
        %v2274 = vld [vmem:[#allocation23 + $0x700] sm:$0xff]
        %v2275 = vld [vmem:[#allocation23 + $0x708] sm:$0xff]
        %v2276 = vld [vmem:[#allocation23 + $0x710] sm:$0xff]
        %v2277 = vld [vmem:[#allocation23 + $0x718] sm:$0xff]
        %v2278 = vld [vmem:[#allocation23 + $0x720] sm:$0xff]
        %v2279 = vld [vmem:[#allocation23 + $0x728] sm:$0xff]
        %v2280 = vld [vmem:[#allocation23 + $0x730] sm:$0xff]
        %v2281 = vld [vmem:[#allocation23 + $0x738] sm:$0xff]
        %v2282 = vld [vmem:[#allocation23 + $0x740] sm:$0xff]
        %v2283 = vld [vmem:[#allocation23 + $0x748] sm:$0xff]
        %v2284 = vld [vmem:[#allocation23 + $0x750] sm:$0xff]
        %v2285 = vld [vmem:[#allocation23 + $0x758] sm:$0xff]
        %v2286 = vld [vmem:[#allocation23 + $0x760] sm:$0xff]
        %v2287 = vld [vmem:[#allocation23 + $0x768] sm:$0xff]
        %v2288 = vld [vmem:[#allocation23 + $0x770] sm:$0xff]
        %v2289 = vld [vmem:[#allocation23 + $0x778] sm:$0xff]
        %v2290 = vld [vmem:[#allocation23 + $0x780] sm:$0xff]
        %v2291 = vld [vmem:[#allocation23 + $0x788] sm:$0xff]
        %v2292 = vld [vmem:[#allocation23 + $0x790] sm:$0xff]
        %v2293 = vld [vmem:[#allocation23 + $0x798] sm:$0xff]
        %v2294 = vld [vmem:[#allocation23 + $0x7a0] sm:$0xff]
        %v2295 = vld [vmem:[#allocation23 + $0x7a8] sm:$0xff]
        %v2296 = vld [vmem:[#allocation23 + $0x7b0] sm:$0xff]
        %v2297 = vld [vmem:[#allocation23 + $0x7b8] sm:$0xff]
        %v2298 = vld [vmem:[#allocation23 + $0x7c0] sm:$0xff]
        %v2299 = vld [vmem:[#allocation23 + $0x7c8] sm:$0xff]
        %v2300 = vld [vmem:[#allocation23 + $0x7d0] sm:$0xff]
        %v2301 = vld [vmem:[#allocation23 + $0x7d8] sm:$0xff]
        %v2302 = vld [vmem:[#allocation23 + $0x7e0] sm:$0xff]
        %v2303 = vld [vmem:[#allocation23 + $0x7e8] sm:$0xff]
        %v2304 = vld [vmem:[#allocation23 + $0x7f0] sm:$0xff]
        %v2305 = vld [vmem:[#allocation23 + $0x7f8] sm:$0xff]
        %v2306 = vld [vmem:[#allocation23 + $0x800] sm:$0xff]
        %v2307 = vld [vmem:[#allocation23 + $0x808] sm:$0xff]
        %v2308 = vld [vmem:[#allocation23 + $0x810] sm:$0xff]
        %v2309 = vld [vmem:[#allocation23 + $0x818] sm:$0xff]
        %v2310 = vld [vmem:[#allocation23 + $0x820] sm:$0xff]
        %v2311 = vld [vmem:[#allocation23 + $0x828] sm:$0xff]
        %v2312 = vld [vmem:[#allocation23 + $0x830] sm:$0xff]
        %v2313 = vld [vmem:[#allocation23 + $0x838] sm:$0xff]
        %v2314 = vld [vmem:[#allocation23 + $0x840] sm:$0xff]
        %v2315 = vld [vmem:[#allocation23 + $0x848] sm:$0xff]
        %v2316 = vld [vmem:[#allocation23 + $0x850] sm:$0xff]
        %v2317 = vld [vmem:[#allocation23 + $0x858] sm:$0xff]
        %v2318 = vld [vmem:[#allocation23 + $0x860] sm:$0xff]
        %v2319 = vld [vmem:[#allocation23 + $0x868] sm:$0xff]
        %v2320 = vld [vmem:[#allocation23 + $0x870] sm:$0xff]
        %v2321 = vld [vmem:[#allocation23 + $0x878] sm:$0xff]
        %v2322 = vld [vmem:[#allocation23 + $0x880] sm:$0xff]
        %v2323 = vld [vmem:[#allocation23 + $0x888] sm:$0xff]
        %v2324 = vld [vmem:[#allocation23 + $0x890] sm:$0xff]
        %v2325 = vld [vmem:[#allocation23 + $0x898] sm:$0xff]
        %v2326 = vld [vmem:[#allocation23 + $0x8a0] sm:$0xff]
        %v2327 = vld [vmem:[#allocation23 + $0x8a8] sm:$0xff]
        %v2328 = vld [vmem:[#allocation23 + $0x8b0] sm:$0xff]
        %v2329 = vld [vmem:[#allocation23 + $0x8b8] sm:$0xff]
        %v2330 = vld [vmem:[#allocation23 + $0x8c0] sm:$0xff]
        %v2331 = vld [vmem:[#allocation23 + $0x8c8] sm:$0xff]
        %v2332 = vld [vmem:[#allocation23 + $0x8d0] sm:$0xff]
        %v2333 = vld [vmem:[#allocation23 + $0x8d8] sm:$0xff]
        %v2334 = vld [vmem:[#allocation23 + $0x8e0] sm:$0xff]
        %v2335 = vld [vmem:[#allocation23 + $0x8e8] sm:$0xff]
        %v2336 = vld [vmem:[#allocation23 + $0x8f0] sm:$0xff]
        %v2337 = vld [vmem:[#allocation23 + $0x8f8] sm:$0xff]
        %v2338 = vld [vmem:[#allocation23 + $0x900] sm:$0xff]
        %v2339 = vld [vmem:[#allocation23 + $0x908] sm:$0xff]
        %v2340 = vld [vmem:[#allocation23 + $0x910] sm:$0xff]
        %v2341 = vld [vmem:[#allocation23 + $0x918] sm:$0xff]
        %v2342 = vld [vmem:[#allocation23 + $0x920] sm:$0xff]
        %v2343 = vld [vmem:[#allocation23 + $0x928] sm:$0xff]
        %v2344 = vld [vmem:[#allocation23 + $0x930] sm:$0xff]
        %v2345 = vld [vmem:[#allocation23 + $0x938] sm:$0xff]
        %v2346 = vld [vmem:[#allocation23 + $0x940] sm:$0xff]
        %v2347 = vld [vmem:[#allocation23 + $0x948] sm:$0xff]
        %v2348 = vld [vmem:[#allocation23 + $0x950] sm:$0xff]
        %v2349 = vld [vmem:[#allocation23 + $0x958] sm:$0xff]
        %v2350 = vld [vmem:[#allocation23 + $0x960] sm:$0xff]
        %v2351 = vld [vmem:[#allocation23 + $0x968] sm:$0xff]
        %v2352 = vld [vmem:[#allocation23 + $0x970] sm:$0xff]
        %v2353 = vld [vmem:[#allocation23 + $0x978] sm:$0xff]
        %v2354 = vld [vmem:[#allocation23 + $0x980] sm:$0xff]
        %v2355 = vld [vmem:[#allocation23 + $0x988] sm:$0xff]
        %v2356 = vld [vmem:[#allocation23 + $0x990] sm:$0xff]
        %v2357 = vld [vmem:[#allocation23 + $0x998] sm:$0xff]
        %v2358 = vld [vmem:[#allocation23 + $0x9a0] sm:$0xff]
        %v2359 = vld [vmem:[#allocation23 + $0x9a8] sm:$0xff]
        %v2360 = vld [vmem:[#allocation23 + $0x9b0] sm:$0xff]
        %v2361 = vld [vmem:[#allocation23 + $0x9b8] sm:$0xff]
        %v2362 = vld [vmem:[#allocation23 + $0x9c0] sm:$0xff]
        %v2363 = vld [vmem:[#allocation23 + $0x9c8] sm:$0xff]
        %v2364 = vld [vmem:[#allocation23 + $0x9d0] sm:$0xff]
        %v2365 = vld [vmem:[#allocation23 + $0x9d8] sm:$0xff]
        %v2366 = vld [vmem:[#allocation23 + $0x9e0] sm:$0xff]
        %v2367 = vld [vmem:[#allocation23 + $0x9e8] sm:$0xff]
        %v2368 = vld [vmem:[#allocation23 + $0x9f0] sm:$0xff]
        %v2369 = vld [vmem:[#allocation23 + $0x9f8] sm:$0xff]
        %v2370 = vld [vmem:[#allocation23 + $0xa00] sm:$0xff]
        %v2371 = vld [vmem:[#allocation23 + $0xa08] sm:$0xff]
        %v2372 = vld [vmem:[#allocation23 + $0xa10] sm:$0xff]
        %v2373 = vld [vmem:[#allocation23 + $0xa18] sm:$0xff]
        %v2374 = vld [vmem:[#allocation23 + $0xa20] sm:$0xff]
        %v2375 = vld [vmem:[#allocation23 + $0xa28] sm:$0xff]
        %v2376 = vld [vmem:[#allocation23 + $0xa30] sm:$0xff]
        %v2377 = vld [vmem:[#allocation23 + $0xa38] sm:$0xff]
        %v2378 = vld [vmem:[#allocation23 + $0xa40] sm:$0xff]
        %v2379 = vld [vmem:[#allocation23 + $0xa48] sm:$0xff]
        %v2380 = vld [vmem:[#allocation23 + $0xa50] sm:$0xff]
        %v2381 = vld [vmem:[#allocation23 + $0xa58] sm:$0xff]
        %v2382 = vld [vmem:[#allocation23 + $0xa60] sm:$0xff]
        %v2383 = vld [vmem:[#allocation23 + $0xa68] sm:$0xff]
        %v2384 = vld [vmem:[#allocation23 + $0xa70] sm:$0xff]
        %v2385 = vld [vmem:[#allocation23 + $0xa78] sm:$0xff]
        %v2386 = vld [vmem:[#allocation23 + $0xa80] sm:$0xff]
        %v2387 = vld [vmem:[#allocation23 + $0xa88] sm:$0xff]
        %v2388 = vld [vmem:[#allocation23 + $0xa90] sm:$0xff]
        %v2389 = vld [vmem:[#allocation23 + $0xa98] sm:$0xff]
        %v2390 = vld [vmem:[#allocation23 + $0xaa0] sm:$0xff]
        %v2391 = vld [vmem:[#allocation23 + $0xaa8] sm:$0xff]
        %v2392 = vld [vmem:[#allocation23 + $0xab0] sm:$0xff]
        %v2393 = vld [vmem:[#allocation23 + $0xab8] sm:$0xff]
        %v2394 = vld [vmem:[#allocation23 + $0xac0] sm:$0xff]
        %v2395 = vld [vmem:[#allocation23 + $0xac8] sm:$0xff]
        %v2396 = vld [vmem:[#allocation23 + $0xad0] sm:$0xff]
        %v2397 = vld [vmem:[#allocation23 + $0xad8] sm:$0xff]
        %v2398 = vld [vmem:[#allocation23 + $0xae0] sm:$0xff]
        %v2399 = vld [vmem:[#allocation23 + $0xae8] sm:$0xff]
        %v2400 = vld [vmem:[#allocation23 + $0xaf0] sm:$0xff]
        %v2401 = vld [vmem:[#allocation23 + $0xaf8] sm:$0xff]
        %v2402 = vld [vmem:[#allocation23 + $0xb00] sm:$0xff]
        %v2403 = vld [vmem:[#allocation23 + $0xb08] sm:$0xff]
        %v2404 = vld [vmem:[#allocation23 + $0xb10] sm:$0xff]
        %v2405 = vld [vmem:[#allocation23 + $0xb18] sm:$0xff]
        %v2406 = vld [vmem:[#allocation23 + $0xb20] sm:$0xff]
        %v2407 = vld [vmem:[#allocation23 + $0xb28] sm:$0xff]
        %v2408 = vld [vmem:[#allocation23 + $0xb30] sm:$0xff]
        %v2409 = vld [vmem:[#allocation23 + $0xb38] sm:$0xff]
        %v2410 = vld [vmem:[#allocation23 + $0xb40] sm:$0xff]
        %v2411 = vld [vmem:[#allocation23 + $0xb48] sm:$0xff]
        %v2412 = vld [vmem:[#allocation23 + $0xb50] sm:$0xff]
        %v2413 = vld [vmem:[#allocation23 + $0xb58] sm:$0xff]
        %v2414 = vld [vmem:[#allocation23 + $0xb60] sm:$0xff]
        %v2415 = vld [vmem:[#allocation23 + $0xb68] sm:$0xff]
        %v2416 = vld [vmem:[#allocation23 + $0xb70] sm:$0xff]
        %v2417 = vld [vmem:[#allocation23 + $0xb78] sm:$0xff]
        %v2418 = vld [vmem:[#allocation23 + $0xb80] sm:$0xff]
        %v2419 = vld [vmem:[#allocation23 + $0xb88] sm:$0xff]
        %v2420 = vld [vmem:[#allocation23 + $0xb90] sm:$0xff]
        %v2421 = vld [vmem:[#allocation23 + $0xb98] sm:$0xff]
        %v2422 = vld [vmem:[#allocation23 + $0xba0] sm:$0xff]
        %v2423 = vld [vmem:[#allocation23 + $0xba8] sm:$0xff]
        %v2424 = vld [vmem:[#allocation23 + $0xbb0] sm:$0xff]
        %v2425 = vld [vmem:[#allocation23 + $0xbb8] sm:$0xff]
        %v2426 = vld [vmem:[#allocation23 + $0xbc0] sm:$0xff]
        %v2427 = vld [vmem:[#allocation23 + $0xbc8] sm:$0xff]
        %v2428 = vld [vmem:[#allocation23 + $0xbd0] sm:$0xff]
        %v2429 = vld [vmem:[#allocation23 + $0xbd8] sm:$0xff]
        %v2430 = vld [vmem:[#allocation23 + $0xbe0] sm:$0xff]
        %v2431 = vld [vmem:[#allocation23 + $0xbe8] sm:$0xff]
        %v2432 = vld [vmem:[#allocation23 + $0xbf0] sm:$0xff]
        %v2433 = vld [vmem:[#allocation23 + $0xbf8] sm:$0xff]
        %v2434 = vld [vmem:[#allocation23 + $0xc00] sm:$0xff]
        %v2435 = vld [vmem:[#allocation23 + $0xc08] sm:$0xff]
        %v2436 = vld [vmem:[#allocation23 + $0xc10] sm:$0xff]
        %v2437 = vld [vmem:[#allocation23 + $0xc18] sm:$0xff]
        %v2438 = vld [vmem:[#allocation23 + $0xc20] sm:$0xff]
        %v2439 = vld [vmem:[#allocation23 + $0xc28] sm:$0xff]
        %v2440 = vld [vmem:[#allocation23 + $0xc30] sm:$0xff]
        %v2441 = vld [vmem:[#allocation23 + $0xc38] sm:$0xff]
        %v2442 = vld [vmem:[#allocation23 + $0xc40] sm:$0xff]
        %v2443 = vld [vmem:[#allocation23 + $0xc48] sm:$0xff]
        %v2444 = vld [vmem:[#allocation23 + $0xc50] sm:$0xff]
        %v2445 = vld [vmem:[#allocation23 + $0xc58] sm:$0xff]
        %v2446 = vld [vmem:[#allocation23 + $0xc60] sm:$0xff]
        %v2447 = vld [vmem:[#allocation23 + $0xc68] sm:$0xff]
        %v2448 = vld [vmem:[#allocation23 + $0xc70] sm:$0xff]
        %v2449 = vld [vmem:[#allocation23 + $0xc78] sm:$0xff]
        %v2450 = vld [vmem:[#allocation23 + $0xc80] sm:$0xff]
        %v2451 = vld [vmem:[#allocation23 + $0xc88] sm:$0xff]
        %v2452 = vld [vmem:[#allocation23 + $0xc90] sm:$0xff]
        %v2453 = vld [vmem:[#allocation23 + $0xc98] sm:$0xff]
        %v2454 = vld [vmem:[#allocation23 + $0xca0] sm:$0xff]
        %v2455 = vld [vmem:[#allocation23 + $0xca8] sm:$0xff]
        %v2456 = vld [vmem:[#allocation23 + $0xcb0] sm:$0xff]
        %v2457 = vld [vmem:[#allocation23 + $0xcb8] sm:$0xff]
        %v2458 = vld [vmem:[#allocation23 + $0xcc0] sm:$0xff]
        %v2459 = vld [vmem:[#allocation23 + $0xcc8] sm:$0xff]
        %v2460 = vld [vmem:[#allocation23 + $0xcd0] sm:$0xff]
        %v2461 = vld [vmem:[#allocation23 + $0xcd8] sm:$0xff]
        %v2462 = vld [vmem:[#allocation23 + $0xce0] sm:$0xff]
        %v2463 = vld [vmem:[#allocation23 + $0xce8] sm:$0xff]
        %v2464 = vld [vmem:[#allocation23 + $0xcf0] sm:$0xff]
        %v2465 = vld [vmem:[#allocation23 + $0xcf8] sm:$0xff]
        %v2466 = vld [vmem:[#allocation23 + $0xd00] sm:$0xff]
        %v2467 = vld [vmem:[#allocation23 + $0xd08] sm:$0xff]
        %v2468 = vld [vmem:[#allocation23 + $0xd10] sm:$0xff]
        %v2469 = vld [vmem:[#allocation23 + $0xd18] sm:$0xff]
        %v2470 = vld [vmem:[#allocation23 + $0xd20] sm:$0xff]
        %v2471 = vld [vmem:[#allocation23 + $0xd28] sm:$0xff]
        %v2472 = vld [vmem:[#allocation23 + $0xd30] sm:$0xff]
        %v2473 = vld [vmem:[#allocation23 + $0xd38] sm:$0xff]
        %v2474 = vld [vmem:[#allocation23 + $0xd40] sm:$0xff]
        %v2475 = vld [vmem:[#allocation23 + $0xd48] sm:$0xff]
        %v2476 = vld [vmem:[#allocation23 + $0xd50] sm:$0xff]
        %v2477 = vld [vmem:[#allocation23 + $0xd58] sm:$0xff]
        %v2478 = vld [vmem:[#allocation23 + $0xd60] sm:$0xff]
        %v2479 = vld [vmem:[#allocation23 + $0xd68] sm:$0xff]
        %v2480 = vld [vmem:[#allocation23 + $0xd70] sm:$0xff]
        %v2481 = vld [vmem:[#allocation23 + $0xd78] sm:$0xff]
        %v2482 = vld [vmem:[#allocation23 + $0xd80] sm:$0xff]
        %v2483 = vld [vmem:[#allocation23 + $0xd88] sm:$0xff]
        %v2484 = vld [vmem:[#allocation23 + $0xd90] sm:$0xff]
        %v2485 = vld [vmem:[#allocation23 + $0xd98] sm:$0xff]
        %v2486 = vld [vmem:[#allocation23 + $0xda0] sm:$0xff]
        %v2487 = vld [vmem:[#allocation23 + $0xda8] sm:$0xff]
        %v2488 = vld [vmem:[#allocation23 + $0xdb0] sm:$0xff]
        %v2489 = vld [vmem:[#allocation23 + $0xdb8] sm:$0xff]
        %v2490 = vld [vmem:[#allocation23 + $0xdc0] sm:$0xff]
        %v2491 = vld [vmem:[#allocation23 + $0xdc8] sm:$0xff]
        %v2492 = vld [vmem:[#allocation23 + $0xdd0] sm:$0xff]
        %v2493 = vld [vmem:[#allocation23 + $0xdd8] sm:$0xff]
        %v2494 = vld [vmem:[#allocation23 + $0xde0] sm:$0xff]
        %v2495 = vld [vmem:[#allocation23 + $0xde8] sm:$0xff]
        %v2496 = vld [vmem:[#allocation23 + $0xdf0] sm:$0xff]
        %v2497 = vld [vmem:[#allocation23 + $0xdf8] sm:$0xff]
        %v2498 = vld [vmem:[#allocation23 + $0xe00] sm:$0xff]
        %v2499 = vld [vmem:[#allocation23 + $0xe08] sm:$0xff]
        %v2500 = vld [vmem:[#allocation23 + $0xe10] sm:$0xff]
        %v2501 = vld [vmem:[#allocation23 + $0xe18] sm:$0xff]
        %v2502 = vld [vmem:[#allocation23 + $0xe20] sm:$0xff]
        %v2503 = vld [vmem:[#allocation23 + $0xe28] sm:$0xff]
        %v2504 = vld [vmem:[#allocation23 + $0xe30] sm:$0xff]
        %v2505 = vld [vmem:[#allocation23 + $0xe38] sm:$0xff]
        %v2506 = vld [vmem:[#allocation23 + $0xe40] sm:$0xff]
        %v2507 = vld [vmem:[#allocation23 + $0xe48] sm:$0xff]
        %v2508 = vld [vmem:[#allocation23 + $0xe50] sm:$0xff]
        %v2509 = vld [vmem:[#allocation23 + $0xe58] sm:$0xff]
        %v2510 = vld [vmem:[#allocation23 + $0xe60] sm:$0xff]
        %v2511 = vld [vmem:[#allocation23 + $0xe68] sm:$0xff]
        %v2512 = vld [vmem:[#allocation23 + $0xe70] sm:$0xff]
        %v2513 = vld [vmem:[#allocation23 + $0xe78] sm:$0xff]
        %v2514 = vld [vmem:[#allocation23 + $0xe80] sm:$0xff]
        %v2515 = vld [vmem:[#allocation23 + $0xe88] sm:$0xff]
        %v2516 = vld [vmem:[#allocation23 + $0xe90] sm:$0xff]
        %v2517 = vld [vmem:[#allocation23 + $0xe98] sm:$0xff]
        %v2518 = vld [vmem:[#allocation23 + $0xea0] sm:$0xff]
        %v2519 = vld [vmem:[#allocation23 + $0xea8] sm:$0xff]
        %v2520 = vld [vmem:[#allocation23 + $0xeb0] sm:$0xff]
        %v2521 = vld [vmem:[#allocation23 + $0xeb8] sm:$0xff]
        %v2522 = vld [vmem:[#allocation23 + $0xec0] sm:$0xff]
        %v2523 = vld [vmem:[#allocation23 + $0xec8] sm:$0xff]
        %v2524 = vld [vmem:[#allocation23 + $0xed0] sm:$0xff]
        %v2525 = vld [vmem:[#allocation23 + $0xed8] sm:$0xff]
        %v2526 = vld [vmem:[#allocation23 + $0xee0] sm:$0xff]
        %v2527 = vld [vmem:[#allocation23 + $0xee8] sm:$0xff]
        %v2528 = vld [vmem:[#allocation23 + $0xef0] sm:$0xff]
        %v2529 = vld [vmem:[#allocation23 + $0xef8] sm:$0xff]
        %v2530 = vld [vmem:[#allocation23 + $0xf00] sm:$0xff]
        %v2531 = vld [vmem:[#allocation23 + $0xf08] sm:$0xff]
        %v2532 = vld [vmem:[#allocation23 + $0xf10] sm:$0xff]
        %v2533 = vld [vmem:[#allocation23 + $0xf18] sm:$0xff]
        %v2534 = vld [vmem:[#allocation23 + $0xf20] sm:$0xff]
        %v2535 = vld [vmem:[#allocation23 + $0xf28] sm:$0xff]
        %v2536 = vld [vmem:[#allocation23 + $0xf30] sm:$0xff]
        %v2537 = vld [vmem:[#allocation23 + $0xf38] sm:$0xff]
        %v2538 = vld [vmem:[#allocation23 + $0xf40] sm:$0xff]
        %v2539 = vld [vmem:[#allocation23 + $0xf48] sm:$0xff]
        %v2540 = vld [vmem:[#allocation23 + $0xf50] sm:$0xff]
        %v2541 = vld [vmem:[#allocation23 + $0xf58] sm:$0xff]
        %v2542 = vld [vmem:[#allocation23 + $0xf60] sm:$0xff]
        %v2543 = vld [vmem:[#allocation23 + $0xf68] sm:$0xff]
        %v2544 = vld [vmem:[#allocation23 + $0xf70] sm:$0xff]
        %v2545 = vld [vmem:[#allocation23 + $0xf78] sm:$0xff]
        %v2546 = vld [vmem:[#allocation23 + $0xf80] sm:$0xff]
        %v2547 = vld [vmem:[#allocation23 + $0xf88] sm:$0xff]
        %v2548 = vld [vmem:[#allocation23 + $0xf90] sm:$0xff]
        %v2549 = vld [vmem:[#allocation23 + $0xf98] sm:$0xff]
        %v2550 = vld [vmem:[#allocation23 + $0xfa0] sm:$0xff]
        %v2551 = vld [vmem:[#allocation23 + $0xfa8] sm:$0xff]
        %v2552 = vld [vmem:[#allocation23 + $0xfb0] sm:$0xff]
        %v2553 = vld [vmem:[#allocation23 + $0xfb8] sm:$0xff]
        %v2554 = vld [vmem:[#allocation23 + $0xfc0] sm:$0xff]
        %v2555 = vld [vmem:[#allocation23 + $0xfc8] sm:$0xff]
        %v2556 = vld [vmem:[#allocation23 + $0xfd0] sm:$0xff]
        %v2557 = vld [vmem:[#allocation23 + $0xfd8] sm:$0xff]
        %v2558 = vld [vmem:[#allocation23 + $0xfe0] sm:$0xff]
        %v2559 = vld [vmem:[#allocation23 + $0xfe8] sm:$0xff]
        %v2560 = vld [vmem:[#allocation23 + $0xff0] sm:$0xff]
        %v2561 = vld [vmem:[#allocation23 + $0xff8] sm:$0xff]
        %v2562 = vld [vmem:[#allocation25] sm:$0xff]
        %v2564 = vlaneseq
        %v2565 = vshrl.u32 %v2564, 7
        %v2566 = vsub.s32 0, %v2565
        %v2567 = vrot.slane %v2562, %v2566
        %v2568 = vlaneseq
        %v2569 = vshrl.u32 %v2568, 7
        %v2570 = vsub.s32 1, %v2569
        %v2571 = vrot.slane %v2562, %v2570
        %v2572 = vlaneseq
        %v2573 = vshrl.u32 %v2572, 7
        %v2574 = vsub.s32 2, %v2573
        %v2575 = vrot.slane %v2562, %v2574
        %v2576 = vlaneseq
        %v2577 = vshrl.u32 %v2576, 7
        %v2578 = vsub.s32 3, %v2577
        %v2579 = vrot.slane %v2562, %v2578
        %v2580 = vlaneseq
        %v2581 = vshrl.u32 %v2580, 7
        %v2582 = vsub.s32 4, %v2581
        %v2583 = vrot.slane %v2562, %v2582
        %v2584 = vlaneseq
        %v2585 = vshrl.u32 %v2584, 7
        %v2586 = vsub.s32 5, %v2585
        %v2587 = vrot.slane %v2562, %v2586
        %v2588 = vlaneseq
        %v2589 = vshrl.u32 %v2588, 7
        %v2590 = vsub.s32 6, %v2589
        %v2591 = vrot.slane %v2562, %v2590
        %v2592 = vlaneseq
        %v2593 = vshrl.u32 %v2592, 7
        %v2594 = vsub.s32 7, %v2593
        %v2595 = vrot.slane %v2562, %v2594
        %2604 = vmatprep.subr.mxu0 %v2171
        %2605 = vmatpush1.msra.mxu0 %v2170
        %2606 = vmatprep.subr.mxu0 %v2163
        %2607 = vmatpush1.msra.mxu0 %v2162
        %2608 = vmatprep.subr.mxu0 %v2155
        %2609 = vmatpush1.msra.mxu0 %v2154
        %2610 = vmatprep.subr.mxu0 %v2147
        %2611 = vmatpush1.msra.mxu0 %v2146
        %2612 = vmatprep.subr.mxu0 %v2139
        %2613 = vmatpush1.msra.mxu0 %v2138
        %2614 = vmatprep.subr.mxu0 %v2131
        %2615 = vmatpush1.msra.mxu0 %v2130
        %2616 = vmatprep.subr.mxu0 %v2123
        %2617 = vmatpush1.msra.mxu0 %v2122
        %2618 = vmatprep.subr.mxu0 %v2115
        %2619 = vmatpush1.msra.mxu0 %v2114
        %2620 = vmatprep.subr.mxu0 %v2107
        %2621 = vmatpush1.msra.mxu0 %v2106
        %2622 = vmatprep.subr.mxu0 %v2099
        %2623 = vmatpush1.msra.mxu0 %v2098
        %2624 = vmatprep.subr.mxu0 %v2091
        %2625 = vmatpush1.msra.mxu0 %v2090
        %2626 = vmatprep.subr.mxu0 %v2083
        %2627 = vmatpush1.msra.mxu0 %v2082
        %2628 = vmatprep.subr.mxu0 %v2075
        %2629 = vmatpush1.msra.mxu0 %v2074
        %2630 = vmatprep.subr.mxu0 %v2067
        %2631 = vmatpush1.msra.mxu0 %v2066
        %2632 = vmatprep.subr.mxu0 %v2059
        %2633 = vmatpush1.msra.mxu0 %v2058
        %2634 = vmatprep.subr.mxu0 %v2051
        %2635 = vmatpush1.msra.mxu0 %v2050
        %2636 = vmatprep.subr.mxu0 %v2299
        %2637 = vmatpush2.msra.mxu0 %v2298
        %2638 = vmatprep.subr.mxu0 %v2291
        %2639 = vmatpush2.msra.mxu0 %v2290
        %2640 = vmatprep.subr.mxu0 %v2283
        %2641 = vmatpush2.msra.mxu0 %v2282
        %2642 = vmatprep.subr.mxu0 %v2275
        %2643 = vmatpush2.msra.mxu0 %v2274
        %2644 = vmatprep.subr.mxu0 %v2267
        %2645 = vmatpush2.msra.mxu0 %v2266
        %2646 = vmatprep.subr.mxu0 %v2259
        %2647 = vmatpush2.msra.mxu0 %v2258
        %2648 = vmatprep.subr.mxu0 %v2251
        %2649 = vmatpush2.msra.mxu0 %v2250
        %2650 = vmatprep.subr.mxu0 %v2243
        %2651 = vmatpush2.msra.mxu0 %v2242
        %2652 = vmatprep.subr.mxu0 %v2235
        %2653 = vmatpush2.msra.mxu0 %v2234
        %2654 = vmatprep.subr.mxu0 %v2227
        %2655 = vmatpush2.msra.mxu0 %v2226
        %2656 = vmatprep.subr.mxu0 %v2219
        %2657 = vmatpush2.msra.mxu0 %v2218
        %2658 = vmatprep.subr.mxu0 %v2211
        %2659 = vmatpush2.msra.mxu0 %v2210
        %2660 = vmatprep.subr.mxu0 %v2203
        %2661 = vmatpush2.msra.mxu0 %v2202
        %2662 = vmatprep.subr.mxu0 %v2195
        %2663 = vmatpush2.msra.mxu0 %v2194
        %2664 = vmatprep.subr.mxu0 %v2187
        %2665 = vmatpush2.msra.mxu0 %v2186
        %2666 = vmatprep.subr.mxu0 %v2179
        %2667 = vmatpush2.msra.mxu0 %v2178
        %2668 = vmatprep.mubr.f32.mxu0 %v2043
        %2669 = vmatmul.mubr.f32.gmra.mxu0 %v2042
        %v2670 = vpop.f32.mrf.mxu0
        %v2671 = vadd.f32 %v2567, %v2670
        %v2672 = vpop.f32.mrf.mxu0
        %v2673 = vadd.f32 %v2571, %v2672
        %2674 = vmatprep.mubr.f32.mxu0 %v2047
        %2675 = vmatmul.mubr.f32.gmra.mxu0 %v2046
        %v2676 = vpop.f32.mrf.mxu0
        %v2677 = vadd.f32 %v2567, %v2676
        %v2678 = vpop.f32.mrf.mxu0
        %v2679 = vadd.f32 %v2571, %v2678
        %2680 = vdwg.mxu0
        %2681 = vmatprep.subr.mxu0 %v2427
        %2682 = vmatpush1.msra.mxu0 %v2426
        %2683 = vmatprep.subr.mxu0 %v2419
        %2684 = vmatpush1.msra.mxu0 %v2418
        %2685 = vmatprep.subr.mxu0 %v2411
        %2686 = vmatpush1.msra.mxu0 %v2410
        %2687 = vmatprep.subr.mxu0 %v2403
        %2688 = vmatpush1.msra.mxu0 %v2402
        %2689 = vmatprep.subr.mxu0 %v2395
        %2690 = vmatpush1.msra.mxu0 %v2394
        %2691 = vmatprep.subr.mxu0 %v2387
        %2692 = vmatpush1.msra.mxu0 %v2386
        %2693 = vmatprep.subr.mxu0 %v2379
        %2694 = vmatpush1.msra.mxu0 %v2378
        %2695 = vmatprep.subr.mxu0 %v2371
        %2696 = vmatpush1.msra.mxu0 %v2370
        %2697 = vmatprep.subr.mxu0 %v2363
        %2698 = vmatpush1.msra.mxu0 %v2362
        %2699 = vmatprep.subr.mxu0 %v2355
        %2700 = vmatpush1.msra.mxu0 %v2354
        %2701 = vmatprep.subr.mxu0 %v2347
        %2702 = vmatpush1.msra.mxu0 %v2346
        %2703 = vmatprep.subr.mxu0 %v2339
        %2704 = vmatpush1.msra.mxu0 %v2338
        %2705 = vmatprep.subr.mxu0 %v2331
        %2706 = vmatpush1.msra.mxu0 %v2330
        %2707 = vmatprep.subr.mxu0 %v2323
        %2708 = vmatpush1.msra.mxu0 %v2322
        %2709 = vmatprep.subr.mxu0 %v2315
        %2710 = vmatpush1.msra.mxu0 %v2314
        %2711 = vmatprep.subr.mxu0 %v2307
        %2712 = vmatpush1.msra.mxu0 %v2306
        %2713 = vmatprep.subr.mxu0 %v2555
        %2714 = vmatpush2.msra.mxu0 %v2554
        %2715 = vmatprep.subr.mxu0 %v2547
        %2716 = vmatpush2.msra.mxu0 %v2546
        %2717 = vmatprep.subr.mxu0 %v2539
        %2718 = vmatpush2.msra.mxu0 %v2538
        %2719 = vmatprep.subr.mxu0 %v2531
        %2720 = vmatpush2.msra.mxu0 %v2530
        %2721 = vmatprep.subr.mxu0 %v2523
        %2722 = vmatpush2.msra.mxu0 %v2522
        %2723 = vmatprep.subr.mxu0 %v2515
        %2724 = vmatpush2.msra.mxu0 %v2514
        %2725 = vmatprep.subr.mxu0 %v2507
        %2726 = vmatpush2.msra.mxu0 %v2506
        %2727 = vmatprep.subr.mxu0 %v2499
        %2728 = vmatpush2.msra.mxu0 %v2498
        %2729 = vmatprep.subr.mxu0 %v2491
        %2730 = vmatpush2.msra.mxu0 %v2490
        %2731 = vmatprep.subr.mxu0 %v2483
        %2732 = vmatpush2.msra.mxu0 %v2482
        %2733 = vmatprep.subr.mxu0 %v2475
        %2734 = vmatpush2.msra.mxu0 %v2474
        %2735 = vmatprep.subr.mxu0 %v2467
        %2736 = vmatpush2.msra.mxu0 %v2466
        %2737 = vmatprep.subr.mxu0 %v2459
        %2738 = vmatpush2.msra.mxu0 %v2458
        %2739 = vmatprep.subr.mxu0 %v2451
        %2740 = vmatpush2.msra.mxu0 %v2450
        %2741 = vmatprep.subr.mxu0 %v2443
        %2742 = vmatpush2.msra.mxu0 %v2442
        %2743 = vmatprep.subr.mxu0 %v2435
        %2744 = vmatpush2.msra.mxu0 %v2434
        %2745 = vmatprep.mubr.f32.mxu0 %v2045
        %2746 = vmatmul.mubr.f32.gmra.mxu0 %v2044
        %v2747 = vpop.f32.mrf.mxu0
        %v2748 = vadd.f32 %v2671, %v2747
        %v2749 = vpop.f32.mrf.mxu0
        %v2750 = vadd.f32 %v2673, %v2749
        %2751 = vmatprep.mubr.f32.mxu0 %v2049
        %2752 = vmatmul.mubr.f32.gmra.mxu0 %v2048
        %v2753 = vpop.f32.mrf.mxu0
        %v2754 = vadd.f32 %v2677, %v2753
        %v2755 = vpop.f32.mrf.mxu0
        %v2756 = vadd.f32 %v2679, %v2755
        %2757 = vdwg.mxu0
        %2758 = vmatprep.subr.mxu0 %v2173
        %2759 = vmatpush1.msra.mxu0 %v2172
        %2760 = vmatprep.subr.mxu0 %v2165
        %2761 = vmatpush1.msra.mxu0 %v2164
        %2762 = vmatprep.subr.mxu0 %v2157
        %2763 = vmatpush1.msra.mxu0 %v2156
        %2764 = vmatprep.subr.mxu0 %v2149
        %2765 = vmatpush1.msra.mxu0 %v2148
        %2766 = vmatprep.subr.mxu0 %v2141
        %2767 = vmatpush1.msra.mxu0 %v2140
        %2768 = vmatprep.subr.mxu0 %v2133
        %2769 = vmatpush1.msra.mxu0 %v2132
        %2770 = vmatprep.subr.mxu0 %v2125
        %2771 = vmatpush1.msra.mxu0 %v2124
        %2772 = vmatprep.subr.mxu0 %v2117
        %2773 = vmatpush1.msra.mxu0 %v2116
        %2774 = vmatprep.subr.mxu0 %v2109
        %2775 = vmatpush1.msra.mxu0 %v2108
        %2776 = vmatprep.subr.mxu0 %v2101
        %2777 = vmatpush1.msra.mxu0 %v2100
        %2778 = vmatprep.subr.mxu0 %v2093
        %2779 = vmatpush1.msra.mxu0 %v2092
        %2780 = vmatprep.subr.mxu0 %v2085
        %2781 = vmatpush1.msra.mxu0 %v2084
        %2782 = vmatprep.subr.mxu0 %v2077
        %2783 = vmatpush1.msra.mxu0 %v2076
        %2784 = vmatprep.subr.mxu0 %v2069
        %2785 = vmatpush1.msra.mxu0 %v2068
        %2786 = vmatprep.subr.mxu0 %v2061
        %2787 = vmatpush1.msra.mxu0 %v2060
        %2788 = vmatprep.subr.mxu0 %v2053
        %2789 = vmatpush1.msra.mxu0 %v2052
        %2790 = vmatprep.subr.mxu0 %v2301
        %2791 = vmatpush2.msra.mxu0 %v2300
        %2792 = vmatprep.subr.mxu0 %v2293
        %2793 = vmatpush2.msra.mxu0 %v2292
        %2794 = vmatprep.subr.mxu0 %v2285
        %2795 = vmatpush2.msra.mxu0 %v2284
        %2796 = vmatprep.subr.mxu0 %v2277
        %2797 = vmatpush2.msra.mxu0 %v2276
        %2798 = vmatprep.subr.mxu0 %v2269
        %2799 = vmatpush2.msra.mxu0 %v2268
        %2800 = vmatprep.subr.mxu0 %v2261
        %2801 = vmatpush2.msra.mxu0 %v2260
        %2802 = vmatprep.subr.mxu0 %v2253
        %2803 = vmatpush2.msra.mxu0 %v2252
        %2804 = vmatprep.subr.mxu0 %v2245
        %2805 = vmatpush2.msra.mxu0 %v2244
        %2806 = vmatprep.subr.mxu0 %v2237
        %2807 = vmatpush2.msra.mxu0 %v2236
        %2808 = vmatprep.subr.mxu0 %v2229
        %2809 = vmatpush2.msra.mxu0 %v2228
        %2810 = vmatprep.subr.mxu0 %v2221
        %2811 = vmatpush2.msra.mxu0 %v2220
        %2812 = vmatprep.subr.mxu0 %v2213
        %2813 = vmatpush2.msra.mxu0 %v2212
        %2814 = vmatprep.subr.mxu0 %v2205
        %2815 = vmatpush2.msra.mxu0 %v2204
        %2816 = vmatprep.subr.mxu0 %v2197
        %2817 = vmatpush2.msra.mxu0 %v2196
        %2818 = vmatprep.subr.mxu0 %v2189
        %2819 = vmatpush2.msra.mxu0 %v2188
        %2820 = vmatprep.subr.mxu0 %v2181
        %2821 = vmatpush2.msra.mxu0 %v2180
        %2822 = vmatprep.mubr.f32.mxu0 %v2043
        %2823 = vmatmul.mubr.f32.gmra.mxu0 %v2042
        %v2824 = vpop.f32.mrf.mxu0
        %v2825 = vadd.f32 %v2575, %v2824
        %v2826 = vpop.f32.mrf.mxu0
        %v2827 = vadd.f32 %v2579, %v2826
        %2828 = vmatprep.mubr.f32.mxu0 %v2047
        %2829 = vmatmul.mubr.f32.gmra.mxu0 %v2046
        %v2830 = vpop.f32.mrf.mxu0
        %v2831 = vadd.f32 %v2575, %v2830
        %v2832 = vpop.f32.mrf.mxu0
        %v2833 = vadd.f32 %v2579, %v2832
        %2834 = vdwg.mxu0
        %2835 = vmatprep.subr.mxu0 %v2429
        %2836 = vmatpush1.msra.mxu0 %v2428
        %2837 = vmatprep.subr.mxu0 %v2421
        %2838 = vmatpush1.msra.mxu0 %v2420
        %2839 = vmatprep.subr.mxu0 %v2413
        %2840 = vmatpush1.msra.mxu0 %v2412
        %2841 = vmatprep.subr.mxu0 %v2405
        %2842 = vmatpush1.msra.mxu0 %v2404
        %2843 = vmatprep.subr.mxu0 %v2397
        %2844 = vmatpush1.msra.mxu0 %v2396
        %2845 = vmatprep.subr.mxu0 %v2389
        %2846 = vmatpush1.msra.mxu0 %v2388
        %2847 = vmatprep.subr.mxu0 %v2381
        %2848 = vmatpush1.msra.mxu0 %v2380
        %2849 = vmatprep.subr.mxu0 %v2373
        %2850 = vmatpush1.msra.mxu0 %v2372
        %2851 = vmatprep.subr.mxu0 %v2365
        %2852 = vmatpush1.msra.mxu0 %v2364
        %2853 = vmatprep.subr.mxu0 %v2357
        %2854 = vmatpush1.msra.mxu0 %v2356
        %2855 = vmatprep.subr.mxu0 %v2349
        %2856 = vmatpush1.msra.mxu0 %v2348
        %2857 = vmatprep.subr.mxu0 %v2341
        %2858 = vmatpush1.msra.mxu0 %v2340
        %2859 = vmatprep.subr.mxu0 %v2333
        %2860 = vmatpush1.msra.mxu0 %v2332
        %2861 = vmatprep.subr.mxu0 %v2325
        %2862 = vmatpush1.msra.mxu0 %v2324
        %2863 = vmatprep.subr.mxu0 %v2317
        %2864 = vmatpush1.msra.mxu0 %v2316
        %2865 = vmatprep.subr.mxu0 %v2309
        %2866 = vmatpush1.msra.mxu0 %v2308
        %2867 = vmatprep.subr.mxu0 %v2557
        %2868 = vmatpush2.msra.mxu0 %v2556
        %2869 = vmatprep.subr.mxu0 %v2549
        %2870 = vmatpush2.msra.mxu0 %v2548
        %2871 = vmatprep.subr.mxu0 %v2541
        %2872 = vmatpush2.msra.mxu0 %v2540
        %2873 = vmatprep.subr.mxu0 %v2533
        %2874 = vmatpush2.msra.mxu0 %v2532
        %2875 = vmatprep.subr.mxu0 %v2525
        %2876 = vmatpush2.msra.mxu0 %v2524
        %2877 = vmatprep.subr.mxu0 %v2517
        %2878 = vmatpush2.msra.mxu0 %v2516
        %2879 = vmatprep.subr.mxu0 %v2509
        %2880 = vmatpush2.msra.mxu0 %v2508
        %2881 = vmatprep.subr.mxu0 %v2501
        %2882 = vmatpush2.msra.mxu0 %v2500
        %2883 = vmatprep.subr.mxu0 %v2493
        %2884 = vmatpush2.msra.mxu0 %v2492
        %2885 = vmatprep.subr.mxu0 %v2485
        %2886 = vmatpush2.msra.mxu0 %v2484
        %2887 = vmatprep.subr.mxu0 %v2477
        %2888 = vmatpush2.msra.mxu0 %v2476
        %2889 = vmatprep.subr.mxu0 %v2469
        %2890 = vmatpush2.msra.mxu0 %v2468
        %2891 = vmatprep.subr.mxu0 %v2461
        %2892 = vmatpush2.msra.mxu0 %v2460
        %2893 = vmatprep.subr.mxu0 %v2453
        %2894 = vmatpush2.msra.mxu0 %v2452
        %2895 = vmatprep.subr.mxu0 %v2445
        %2896 = vmatpush2.msra.mxu0 %v2444
        %2897 = vmatprep.subr.mxu0 %v2437
        %2898 = vmatpush2.msra.mxu0 %v2436
        %2899 = vmatprep.mubr.f32.mxu0 %v2045
        %2900 = vmatmul.mubr.f32.gmra.mxu0 %v2044
        %v2901 = vpop.f32.mrf.mxu0
        %v2902 = vadd.f32 %v2825, %v2901
        %v2903 = vpop.f32.mrf.mxu0
        %v2904 = vadd.f32 %v2827, %v2903
        %2905 = vmatprep.mubr.f32.mxu0 %v2049
        %2906 = vmatmul.mubr.f32.gmra.mxu0 %v2048
        %v2907 = vpop.f32.mrf.mxu0
        %v2908 = vadd.f32 %v2831, %v2907
        %v2909 = vpop.f32.mrf.mxu0
        %v2910 = vadd.f32 %v2833, %v2909
        %2911 = vdwg.mxu0
        %2912 = vmatprep.subr.mxu0 %v2175
        %2913 = vmatpush1.msra.mxu0 %v2174
        %2914 = vmatprep.subr.mxu0 %v2167
        %2915 = vmatpush1.msra.mxu0 %v2166
        %2916 = vmatprep.subr.mxu0 %v2159
        %2917 = vmatpush1.msra.mxu0 %v2158
        %2918 = vmatprep.subr.mxu0 %v2151
        %2919 = vmatpush1.msra.mxu0 %v2150
        %2920 = vmatprep.subr.mxu0 %v2143
        %2921 = vmatpush1.msra.mxu0 %v2142
        %2922 = vmatprep.subr.mxu0 %v2135
        %2923 = vmatpush1.msra.mxu0 %v2134
        %2924 = vmatprep.subr.mxu0 %v2127
        %2925 = vmatpush1.msra.mxu0 %v2126
        %2926 = vmatprep.subr.mxu0 %v2119
        %2927 = vmatpush1.msra.mxu0 %v2118
        %2928 = vmatprep.subr.mxu0 %v2111
        %2929 = vmatpush1.msra.mxu0 %v2110
        %2930 = vmatprep.subr.mxu0 %v2103
        %2931 = vmatpush1.msra.mxu0 %v2102
        %2932 = vmatprep.subr.mxu0 %v2095
        %2933 = vmatpush1.msra.mxu0 %v2094
        %2934 = vmatprep.subr.mxu0 %v2087
        %2935 = vmatpush1.msra.mxu0 %v2086
        %2936 = vmatprep.subr.mxu0 %v2079
        %2937 = vmatpush1.msra.mxu0 %v2078
        %2938 = vmatprep.subr.mxu0 %v2071
        %2939 = vmatpush1.msra.mxu0 %v2070
        %2940 = vmatprep.subr.mxu0 %v2063
        %2941 = vmatpush1.msra.mxu0 %v2062
        %2942 = vmatprep.subr.mxu0 %v2055
        %2943 = vmatpush1.msra.mxu0 %v2054
        %2944 = vmatprep.subr.mxu0 %v2303
        %2945 = vmatpush2.msra.mxu0 %v2302
        %2946 = vmatprep.subr.mxu0 %v2295
        %2947 = vmatpush2.msra.mxu0 %v2294
        %2948 = vmatprep.subr.mxu0 %v2287
        %2949 = vmatpush2.msra.mxu0 %v2286
        %2950 = vmatprep.subr.mxu0 %v2279
        %2951 = vmatpush2.msra.mxu0 %v2278
        %2952 = vmatprep.subr.mxu0 %v2271
        %2953 = vmatpush2.msra.mxu0 %v2270
        %2954 = vmatprep.subr.mxu0 %v2263
        %2955 = vmatpush2.msra.mxu0 %v2262
        %2956 = vmatprep.subr.mxu0 %v2255
        %2957 = vmatpush2.msra.mxu0 %v2254
        %2958 = vmatprep.subr.mxu0 %v2247
        %2959 = vmatpush2.msra.mxu0 %v2246
        %2960 = vmatprep.subr.mxu0 %v2239
        %2961 = vmatpush2.msra.mxu0 %v2238
        %2962 = vmatprep.subr.mxu0 %v2231
        %2963 = vmatpush2.msra.mxu0 %v2230
        %2964 = vmatprep.subr.mxu0 %v2223
        %2965 = vmatpush2.msra.mxu0 %v2222
        %2966 = vmatprep.subr.mxu0 %v2215
        %2967 = vmatpush2.msra.mxu0 %v2214
        %2968 = vmatprep.subr.mxu0 %v2207
        %2969 = vmatpush2.msra.mxu0 %v2206
        %2970 = vmatprep.subr.mxu0 %v2199
        %2971 = vmatpush2.msra.mxu0 %v2198
        %2972 = vmatprep.subr.mxu0 %v2191
        %2973 = vmatpush2.msra.mxu0 %v2190
        %2974 = vmatprep.subr.mxu0 %v2183
        %2975 = vmatpush2.msra.mxu0 %v2182
        %2976 = vmatprep.mubr.f32.mxu0 %v2043
        %2977 = vmatmul.mubr.f32.gmra.mxu0 %v2042
        %v2978 = vpop.f32.mrf.mxu0
        %v2979 = vadd.f32 %v2583, %v2978
        %v2980 = vpop.f32.mrf.mxu0
        %v2981 = vadd.f32 %v2587, %v2980
        %2982 = vmatprep.mubr.f32.mxu0 %v2047
        %2983 = vmatmul.mubr.f32.gmra.mxu0 %v2046
        %v2984 = vpop.f32.mrf.mxu0
        %v2985 = vadd.f32 %v2583, %v2984
        %v2986 = vpop.f32.mrf.mxu0
        %v2987 = vadd.f32 %v2587, %v2986
        %2988 = vdwg.mxu0
        %2989 = vmatprep.subr.mxu0 %v2431
        %2990 = vmatpush1.msra.mxu0 %v2430
        %2991 = vmatprep.subr.mxu0 %v2423
        %2992 = vmatpush1.msra.mxu0 %v2422
        %2993 = vmatprep.subr.mxu0 %v2415
        %2994 = vmatpush1.msra.mxu0 %v2414
        %2995 = vmatprep.subr.mxu0 %v2407
        %2996 = vmatpush1.msra.mxu0 %v2406
        %2997 = vmatprep.subr.mxu0 %v2399
        %2998 = vmatpush1.msra.mxu0 %v2398
        %2999 = vmatprep.subr.mxu0 %v2391
        %3000 = vmatpush1.msra.mxu0 %v2390
        %3001 = vmatprep.subr.mxu0 %v2383
        %3002 = vmatpush1.msra.mxu0 %v2382
        %3003 = vmatprep.subr.mxu0 %v2375
        %3004 = vmatpush1.msra.mxu0 %v2374
        %3005 = vmatprep.subr.mxu0 %v2367
        %3006 = vmatpush1.msra.mxu0 %v2366
        %3007 = vmatprep.subr.mxu0 %v2359
        %3008 = vmatpush1.msra.mxu0 %v2358
        %3009 = vmatprep.subr.mxu0 %v2351
        %3010 = vmatpush1.msra.mxu0 %v2350
        %3011 = vmatprep.subr.mxu0 %v2343
        %3012 = vmatpush1.msra.mxu0 %v2342
        %3013 = vmatprep.subr.mxu0 %v2335
        %3014 = vmatpush1.msra.mxu0 %v2334
        %3015 = vmatprep.subr.mxu0 %v2327
        %3016 = vmatpush1.msra.mxu0 %v2326
        %3017 = vmatprep.subr.mxu0 %v2319
        %3018 = vmatpush1.msra.mxu0 %v2318
        %3019 = vmatprep.subr.mxu0 %v2311
        %3020 = vmatpush1.msra.mxu0 %v2310
        %3021 = vmatprep.subr.mxu0 %v2559
        %3022 = vmatpush2.msra.mxu0 %v2558
        %3023 = vmatprep.subr.mxu0 %v2551
        %3024 = vmatpush2.msra.mxu0 %v2550
        %3025 = vmatprep.subr.mxu0 %v2543
        %3026 = vmatpush2.msra.mxu0 %v2542
        %3027 = vmatprep.subr.mxu0 %v2535
        %3028 = vmatpush2.msra.mxu0 %v2534
        %3029 = vmatprep.subr.mxu0 %v2527
        %3030 = vmatpush2.msra.mxu0 %v2526
        %3031 = vmatprep.subr.mxu0 %v2519
        %3032 = vmatpush2.msra.mxu0 %v2518
        %3033 = vmatprep.subr.mxu0 %v2511
        %3034 = vmatpush2.msra.mxu0 %v2510
        %3035 = vmatprep.subr.mxu0 %v2503
        %3036 = vmatpush2.msra.mxu0 %v2502
        %3037 = vmatprep.subr.mxu0 %v2495
        %3038 = vmatpush2.msra.mxu0 %v2494
        %3039 = vmatprep.subr.mxu0 %v2487
        %3040 = vmatpush2.msra.mxu0 %v2486
        %3041 = vmatprep.subr.mxu0 %v2479
        %3042 = vmatpush2.msra.mxu0 %v2478
        %3043 = vmatprep.subr.mxu0 %v2471
        %3044 = vmatpush2.msra.mxu0 %v2470
        %3045 = vmatprep.subr.mxu0 %v2463
        %3046 = vmatpush2.msra.mxu0 %v2462
        %3047 = vmatprep.subr.mxu0 %v2455
        %3048 = vmatpush2.msra.mxu0 %v2454
        %3049 = vmatprep.subr.mxu0 %v2447
        %3050 = vmatpush2.msra.mxu0 %v2446
        %3051 = vmatprep.subr.mxu0 %v2439
        %3052 = vmatpush2.msra.mxu0 %v2438
        %3053 = vmatprep.mubr.f32.mxu0 %v2045
        %3054 = vmatmul.mubr.f32.gmra.mxu0 %v2044
        %v3055 = vpop.f32.mrf.mxu0
        %v3056 = vadd.f32 %v2979, %v3055
        %v3057 = vpop.f32.mrf.mxu0
        %v3058 = vadd.f32 %v2981, %v3057
        %3059 = vmatprep.mubr.f32.mxu0 %v2049
        %3060 = vmatmul.mubr.f32.gmra.mxu0 %v2048
        %v3061 = vpop.f32.mrf.mxu0
        %v3062 = vadd.f32 %v2985, %v3061
        %v3063 = vpop.f32.mrf.mxu0
        %v3064 = vadd.f32 %v2987, %v3063
        %3065 = vdwg.mxu0
        %3066 = vmatprep.subr.mxu0 %v2177
        %3067 = vmatpush1.msra.mxu0 %v2176
        %3068 = vmatprep.subr.mxu0 %v2169
        %3069 = vmatpush1.msra.mxu0 %v2168
        %3070 = vmatprep.subr.mxu0 %v2161
        %3071 = vmatpush1.msra.mxu0 %v2160
        %3072 = vmatprep.subr.mxu0 %v2153
        %3073 = vmatpush1.msra.mxu0 %v2152
        %3074 = vmatprep.subr.mxu0 %v2145
        %3075 = vmatpush1.msra.mxu0 %v2144
        %3076 = vmatprep.subr.mxu0 %v2137
        %3077 = vmatpush1.msra.mxu0 %v2136
        %3078 = vmatprep.subr.mxu0 %v2129
        %3079 = vmatpush1.msra.mxu0 %v2128
        %3080 = vmatprep.subr.mxu0 %v2121
        %3081 = vmatpush1.msra.mxu0 %v2120
        %3082 = vmatprep.subr.mxu0 %v2113
        %3083 = vmatpush1.msra.mxu0 %v2112
        %3084 = vmatprep.subr.mxu0 %v2105
        %3085 = vmatpush1.msra.mxu0 %v2104
        %3086 = vmatprep.subr.mxu0 %v2097
        %3087 = vmatpush1.msra.mxu0 %v2096
        %3088 = vmatprep.subr.mxu0 %v2089
        %3089 = vmatpush1.msra.mxu0 %v2088
        %3090 = vmatprep.subr.mxu0 %v2081
        %3091 = vmatpush1.msra.mxu0 %v2080
        %3092 = vmatprep.subr.mxu0 %v2073
        %3093 = vmatpush1.msra.mxu0 %v2072
        %3094 = vmatprep.subr.mxu0 %v2065
        %3095 = vmatpush1.msra.mxu0 %v2064
        %3096 = vmatprep.subr.mxu0 %v2057
        %3097 = vmatpush1.msra.mxu0 %v2056
        %3098 = vmatprep.subr.mxu0 %v2305
        %3099 = vmatpush2.msra.mxu0 %v2304
        %3100 = vmatprep.subr.mxu0 %v2297
        %3101 = vmatpush2.msra.mxu0 %v2296
        %3102 = vmatprep.subr.mxu0 %v2289
        %3103 = vmatpush2.msra.mxu0 %v2288
        %3104 = vmatprep.subr.mxu0 %v2281
        %3105 = vmatpush2.msra.mxu0 %v2280
        %3106 = vmatprep.subr.mxu0 %v2273
        %3107 = vmatpush2.msra.mxu0 %v2272
        %3108 = vmatprep.subr.mxu0 %v2265
        %3109 = vmatpush2.msra.mxu0 %v2264
        %3110 = vmatprep.subr.mxu0 %v2257
        %3111 = vmatpush2.msra.mxu0 %v2256
        %3112 = vmatprep.subr.mxu0 %v2249
        %3113 = vmatpush2.msra.mxu0 %v2248
        %3114 = vmatprep.subr.mxu0 %v2241
        %3115 = vmatpush2.msra.mxu0 %v2240
        %3116 = vmatprep.subr.mxu0 %v2233
        %3117 = vmatpush2.msra.mxu0 %v2232
        %3118 = vmatprep.subr.mxu0 %v2225
        %3119 = vmatpush2.msra.mxu0 %v2224
        %3120 = vmatprep.subr.mxu0 %v2217
        %3121 = vmatpush2.msra.mxu0 %v2216
        %3122 = vmatprep.subr.mxu0 %v2209
        %3123 = vmatpush2.msra.mxu0 %v2208
        %3124 = vmatprep.subr.mxu0 %v2201
        %3125 = vmatpush2.msra.mxu0 %v2200
        %3126 = vmatprep.subr.mxu0 %v2193
        %3127 = vmatpush2.msra.mxu0 %v2192
        %3128 = vmatprep.subr.mxu0 %v2185
        %3129 = vmatpush2.msra.mxu0 %v2184
        %3130 = vmatprep.mubr.f32.mxu0 %v2043
        %3131 = vmatmul.mubr.f32.gmra.mxu0 %v2042
        %v3132 = vpop.f32.mrf.mxu0
        %v3133 = vadd.f32 %v2591, %v3132
        %v3134 = vpop.f32.mrf.mxu0
        %v3135 = vadd.f32 %v2595, %v3134
        %3136 = vmatprep.mubr.f32.mxu0 %v2047
        %3137 = vmatmul.mubr.f32.gmra.mxu0 %v2046
        %v3138 = vpop.f32.mrf.mxu0
        %v3139 = vadd.f32 %v2591, %v3138
        %v3140 = vpop.f32.mrf.mxu0
        %v3141 = vadd.f32 %v2595, %v3140
        %3142 = vdwg.mxu0
        %3143 = vmatprep.subr.mxu0 %v2433
        %3144 = vmatpush1.msra.mxu0 %v2432
        %3145 = vmatprep.subr.mxu0 %v2425
        %3146 = vmatpush1.msra.mxu0 %v2424
        %3147 = vmatprep.subr.mxu0 %v2417
        %3148 = vmatpush1.msra.mxu0 %v2416
        %3149 = vmatprep.subr.mxu0 %v2409
        %3150 = vmatpush1.msra.mxu0 %v2408
        %3151 = vmatprep.subr.mxu0 %v2401
        %3152 = vmatpush1.msra.mxu0 %v2400
        %3153 = vmatprep.subr.mxu0 %v2393
        %3154 = vmatpush1.msra.mxu0 %v2392
        %3155 = vmatprep.subr.mxu0 %v2385
        %3156 = vmatpush1.msra.mxu0 %v2384
        %3157 = vmatprep.subr.mxu0 %v2377
        %3158 = vmatpush1.msra.mxu0 %v2376
        %3159 = vmatprep.subr.mxu0 %v2369
        %3160 = vmatpush1.msra.mxu0 %v2368
        %3161 = vmatprep.subr.mxu0 %v2361
        %3162 = vmatpush1.msra.mxu0 %v2360
        %3163 = vmatprep.subr.mxu0 %v2353
        %3164 = vmatpush1.msra.mxu0 %v2352
        %3165 = vmatprep.subr.mxu0 %v2345
        %3166 = vmatpush1.msra.mxu0 %v2344
        %3167 = vmatprep.subr.mxu0 %v2337
        %3168 = vmatpush1.msra.mxu0 %v2336
        %3169 = vmatprep.subr.mxu0 %v2329
        %3170 = vmatpush1.msra.mxu0 %v2328
        %3171 = vmatprep.subr.mxu0 %v2321
        %3172 = vmatpush1.msra.mxu0 %v2320
        %3173 = vmatprep.subr.mxu0 %v2313
        %3174 = vmatpush1.msra.mxu0 %v2312
        %3175 = vmatprep.subr.mxu0 %v2561
        %3176 = vmatpush2.msra.mxu0 %v2560
        %3177 = vmatprep.subr.mxu0 %v2553
        %3178 = vmatpush2.msra.mxu0 %v2552
        %3179 = vmatprep.subr.mxu0 %v2545
        %3180 = vmatpush2.msra.mxu0 %v2544
        %3181 = vmatprep.subr.mxu0 %v2537
        %3182 = vmatpush2.msra.mxu0 %v2536
        %3183 = vmatprep.subr.mxu0 %v2529
        %3184 = vmatpush2.msra.mxu0 %v2528
        %3185 = vmatprep.subr.mxu0 %v2521
        %3186 = vmatpush2.msra.mxu0 %v2520
        %3187 = vmatprep.subr.mxu0 %v2513
        %3188 = vmatpush2.msra.mxu0 %v2512
        %3189 = vmatprep.subr.mxu0 %v2505
        %3190 = vmatpush2.msra.mxu0 %v2504
        %3191 = vmatprep.subr.mxu0 %v2497
        %3192 = vmatpush2.msra.mxu0 %v2496
        %3193 = vmatprep.subr.mxu0 %v2489
        %3194 = vmatpush2.msra.mxu0 %v2488
        %3195 = vmatprep.subr.mxu0 %v2481
        %3196 = vmatpush2.msra.mxu0 %v2480
        %3197 = vmatprep.subr.mxu0 %v2473
        %3198 = vmatpush2.msra.mxu0 %v2472
        %3199 = vmatprep.subr.mxu0 %v2465
        %3200 = vmatpush2.msra.mxu0 %v2464
        %3201 = vmatprep.subr.mxu0 %v2457
        %3202 = vmatpush2.msra.mxu0 %v2456
        %3203 = vmatprep.subr.mxu0 %v2449
        %3204 = vmatpush2.msra.mxu0 %v2448
        %3205 = vmatprep.subr.mxu0 %v2441
        %3206 = vmatpush2.msra.mxu0 %v2440
        %3207 = vmatprep.mubr.f32.mxu0 %v2045
        %3208 = vmatmul.mubr.f32.gmra.mxu0 %v2044
        %v3209 = vpop.f32.mrf.mxu0
        %v3210 = vadd.f32 %v3133, %v3209
        %v3211 = vpop.f32.mrf.mxu0
        %v3212 = vadd.f32 %v3135, %v3211
        %3213 = vmatprep.mubr.f32.mxu0 %v2049
        %3214 = vmatmul.mubr.f32.gmra.mxu0 %v2048
        %v3215 = vpop.f32.mrf.mxu0
        %v3216 = vadd.f32 %v3139, %v3215
        %v3217 = vpop.f32.mrf.mxu0
        %v3218 = vadd.f32 %v3141, %v3217
        %3219 = vdwg.mxu0
        %v3220 = vrot.slane %v2748, 4
        %v3221 = vadd.f32 %v2748, %v3220
        %v3222 = vrot.slane %v3221, 2
        %v3223 = vadd.f32 %v3221, %v3222
        %v3224 = vrot.slane %v3223, 1
        %v3225 = vadd.f32 %v3223, %v3224
        %v3226 = vrot.slane %v2750, 4
        %v3227 = vadd.f32 %v2750, %v3226
        %v3228 = vrot.slane %v3227, 2
        %v3229 = vadd.f32 %v3227, %v3228
        %v3230 = vrot.slane %v3229, 1
        %v3231 = vadd.f32 %v3229, %v3230
        %v3232 = vrot.slane %v2902, 4
        %v3233 = vadd.f32 %v2902, %v3232
        %v3234 = vrot.slane %v3233, 2
        %v3235 = vadd.f32 %v3233, %v3234
        %v3236 = vrot.slane %v3235, 1
        %v3237 = vadd.f32 %v3235, %v3236
        %v3238 = vrot.slane %v2904, 4
        %v3239 = vadd.f32 %v2904, %v3238
        %v3240 = vrot.slane %v3239, 2
        %v3241 = vadd.f32 %v3239, %v3240
        %v3242 = vrot.slane %v3241, 1
        %v3243 = vadd.f32 %v3241, %v3242
        %v3244 = vrot.slane %v3056, 4
        %v3245 = vadd.f32 %v3056, %v3244
        %v3246 = vrot.slane %v3245, 2
        %v3247 = vadd.f32 %v3245, %v3246
        %v3248 = vrot.slane %v3247, 1
        %v3249 = vadd.f32 %v3247, %v3248
        %v3250 = vrot.slane %v3058, 4
        %v3251 = vadd.f32 %v3058, %v3250
        %v3252 = vrot.slane %v3251, 2
        %v3253 = vadd.f32 %v3251, %v3252
        %v3254 = vrot.slane %v3253, 1
        %v3255 = vadd.f32 %v3253, %v3254
        %v3256 = vrot.slane %v3210, 4
        %v3257 = vadd.f32 %v3210, %v3256
        %v3258 = vrot.slane %v3257, 2
        %v3259 = vadd.f32 %v3257, %v3258
        %v3260 = vrot.slane %v3259, 1
        %v3261 = vadd.f32 %v3259, %v3260
        %v3262 = vrot.slane %v3212, 4
        %v3263 = vadd.f32 %v3212, %v3262
        %v3264 = vrot.slane %v3263, 2
        %v3265 = vadd.f32 %v3263, %v3264
        %v3266 = vrot.slane %v3265, 1
        %v3267 = vadd.f32 %v3265, %v3266
        %v3268 = vrot.slane %v2754, 4
        %v3269 = vadd.f32 %v2754, %v3268
        %v3270 = vrot.slane %v3269, 2
        %v3271 = vadd.f32 %v3269, %v3270
        %v3272 = vrot.slane %v3271, 1
        %v3273 = vadd.f32 %v3271, %v3272
        %v3274 = vrot.slane %v2756, 4
        %v3275 = vadd.f32 %v2756, %v3274
        %v3276 = vrot.slane %v3275, 2
        %v3277 = vadd.f32 %v3275, %v3276
        %v3278 = vrot.slane %v3277, 1
        %v3279 = vadd.f32 %v3277, %v3278
        %v3280 = vrot.slane %v2908, 4
        %v3281 = vadd.f32 %v2908, %v3280
        %v3282 = vrot.slane %v3281, 2
        %v3283 = vadd.f32 %v3281, %v3282
        %v3284 = vrot.slane %v3283, 1
        %v3285 = vadd.f32 %v3283, %v3284
        %v3286 = vrot.slane %v2910, 4
        %v3287 = vadd.f32 %v2910, %v3286
        %v3288 = vrot.slane %v3287, 2
        %v3289 = vadd.f32 %v3287, %v3288
        %v3290 = vrot.slane %v3289, 1
        %v3291 = vadd.f32 %v3289, %v3290
        %v3292 = vrot.slane %v3062, 4
        %v3293 = vadd.f32 %v3062, %v3292
        %v3294 = vrot.slane %v3293, 2
        %v3295 = vadd.f32 %v3293, %v3294
        %v3296 = vrot.slane %v3295, 1
        %v3297 = vadd.f32 %v3295, %v3296
        %v3298 = vrot.slane %v3064, 4
        %v3299 = vadd.f32 %v3064, %v3298
        %v3300 = vrot.slane %v3299, 2
        %v3301 = vadd.f32 %v3299, %v3300
        %v3302 = vrot.slane %v3301, 1
        %v3303 = vadd.f32 %v3301, %v3302
        %v3304 = vrot.slane %v3216, 4
        %v3305 = vadd.f32 %v3216, %v3304
        %v3306 = vrot.slane %v3305, 2
        %v3307 = vadd.f32 %v3305, %v3306
        %v3308 = vrot.slane %v3307, 1
        %v3309 = vadd.f32 %v3307, %v3308
        %v3310 = vrot.slane %v3218, 4
        %v3311 = vadd.f32 %v3218, %v3310
        %v3312 = vrot.slane %v3311, 2
        %v3313 = vadd.f32 %v3311, %v3312
        %v3314 = vrot.slane %v3313, 1
        %v3315 = vadd.f32 %v3313, %v3314
        %v3316 = vmul.f32 %v3225, %v970
        %v3317 = vmul.f32 %v3231, %v970
        %v3318 = vmul.f32 %v3237, %v970
        %v3319 = vmul.f32 %v3243, %v970
        %v3320 = vmul.f32 %v3249, %v970
        %v3321 = vmul.f32 %v3255, %v970
        %v3322 = vmul.f32 %v3261, %v970
        %v3323 = vmul.f32 %v3267, %v970
        %v3324 = vmul.f32 %v3273, %v970
        %v3325 = vmul.f32 %v3279, %v970
        %v3326 = vmul.f32 %v3285, %v970
        %v3327 = vmul.f32 %v3291, %v970
        %v3328 = vmul.f32 %v3297, %v970
        %v3329 = vmul.f32 %v3303, %v970
        %v3330 = vmul.f32 %v3309, %v970
        %v3331 = vmul.f32 %v3315, %v970
        %v3332 = vsub.f32 %v2748, %v3316
        %v3333 = vsub.f32 %v2750, %v3317
        %v3334 = vsub.f32 %v2902, %v3318
        %v3335 = vsub.f32 %v2904, %v3319
        %v3336 = vsub.f32 %v3056, %v3320
        %v3337 = vsub.f32 %v3058, %v3321
        %v3338 = vsub.f32 %v3210, %v3322
        %v3339 = vsub.f32 %v3212, %v3323
        %v3340 = vsub.f32 %v2754, %v3324
        %v3341 = vsub.f32 %v2756, %v3325
        %v3342 = vsub.f32 %v2908, %v3326
        %v3343 = vsub.f32 %v2910, %v3327
        %v3344 = vsub.f32 %v3062, %v3328
        %v3345 = vsub.f32 %v3064, %v3329
        %v3346 = vsub.f32 %v3216, %v3330
        %v3347 = vsub.f32 %v3218, %v3331
        %v3348 = vmul.f32 %v3332, %v3332
        %v3349 = vmul.f32 %v3333, %v3333
        %v3350 = vmul.f32 %v3334, %v3334
        %v3351 = vmul.f32 %v3335, %v3335
        %v3352 = vmul.f32 %v3336, %v3336
        %v3353 = vmul.f32 %v3337, %v3337
        %v3354 = vmul.f32 %v3338, %v3338
        %v3355 = vmul.f32 %v3339, %v3339
        %v3356 = vmul.f32 %v3340, %v3340
        %v3357 = vmul.f32 %v3341, %v3341
        %v3358 = vmul.f32 %v3342, %v3342
        %v3359 = vmul.f32 %v3343, %v3343
        %v3360 = vmul.f32 %v3344, %v3344
        %v3361 = vmul.f32 %v3345, %v3345
        %v3362 = vmul.f32 %v3346, %v3346
        %v3363 = vmul.f32 %v3347, %v3347
        %v3364 = vrot.slane %v3348, 4
        %v3365 = vadd.f32 %v3348, %v3364
        %v3366 = vrot.slane %v3365, 2
        %v3367 = vadd.f32 %v3365, %v3366
        %v3368 = vrot.slane %v3367, 1
        %v3369 = vadd.f32 %v3367, %v3368
        %v3370 = vrot.slane %v3349, 4
        %v3371 = vadd.f32 %v3349, %v3370
        %v3372 = vrot.slane %v3371, 2
        %v3373 = vadd.f32 %v3371, %v3372
        %v3374 = vrot.slane %v3373, 1
        %v3375 = vadd.f32 %v3373, %v3374
        %v3376 = vrot.slane %v3350, 4
        %v3377 = vadd.f32 %v3350, %v3376
        %v3378 = vrot.slane %v3377, 2
        %v3379 = vadd.f32 %v3377, %v3378
        %v3380 = vrot.slane %v3379, 1
        %v3381 = vadd.f32 %v3379, %v3380
        %v3382 = vrot.slane %v3351, 4
        %v3383 = vadd.f32 %v3351, %v3382
        %v3384 = vrot.slane %v3383, 2
        %v3385 = vadd.f32 %v3383, %v3384
        %v3386 = vrot.slane %v3385, 1
        %v3387 = vadd.f32 %v3385, %v3386
        %v3388 = vrot.slane %v3352, 4
        %v3389 = vadd.f32 %v3352, %v3388
        %v3390 = vrot.slane %v3389, 2
        %v3391 = vadd.f32 %v3389, %v3390
        %v3392 = vrot.slane %v3391, 1
        %v3393 = vadd.f32 %v3391, %v3392
        %v3394 = vrot.slane %v3353, 4
        %v3395 = vadd.f32 %v3353, %v3394
        %v3396 = vrot.slane %v3395, 2
        %v3397 = vadd.f32 %v3395, %v3396
        %v3398 = vrot.slane %v3397, 1
        %v3399 = vadd.f32 %v3397, %v3398
        %v3400 = vrot.slane %v3354, 4
        %v3401 = vadd.f32 %v3354, %v3400
        %v3402 = vrot.slane %v3401, 2
        %v3403 = vadd.f32 %v3401, %v3402
        %v3404 = vrot.slane %v3403, 1
        %v3405 = vadd.f32 %v3403, %v3404
        %v3406 = vrot.slane %v3355, 4
        %v3407 = vadd.f32 %v3355, %v3406
        %v3408 = vrot.slane %v3407, 2
        %v3409 = vadd.f32 %v3407, %v3408
        %v3410 = vrot.slane %v3409, 1
        %v3411 = vadd.f32 %v3409, %v3410
        %v3412 = vrot.slane %v3356, 4
        %v3413 = vadd.f32 %v3356, %v3412
        %v3414 = vrot.slane %v3413, 2
        %v3415 = vadd.f32 %v3413, %v3414
        %v3416 = vrot.slane %v3415, 1
        %v3417 = vadd.f32 %v3415, %v3416
        %v3418 = vrot.slane %v3357, 4
        %v3419 = vadd.f32 %v3357, %v3418
        %v3420 = vrot.slane %v3419, 2
        %v3421 = vadd.f32 %v3419, %v3420
        %v3422 = vrot.slane %v3421, 1
        %v3423 = vadd.f32 %v3421, %v3422
        %v3424 = vrot.slane %v3358, 4
        %v3425 = vadd.f32 %v3358, %v3424
        %v3426 = vrot.slane %v3425, 2
        %v3427 = vadd.f32 %v3425, %v3426
        %v3428 = vrot.slane %v3427, 1
        %v3429 = vadd.f32 %v3427, %v3428
        %v3430 = vrot.slane %v3359, 4
        %v3431 = vadd.f32 %v3359, %v3430
        %v3432 = vrot.slane %v3431, 2
        %v3433 = vadd.f32 %v3431, %v3432
        %v3434 = vrot.slane %v3433, 1
        %v3435 = vadd.f32 %v3433, %v3434
        %v3436 = vrot.slane %v3360, 4
        %v3437 = vadd.f32 %v3360, %v3436
        %v3438 = vrot.slane %v3437, 2
        %v3439 = vadd.f32 %v3437, %v3438
        %v3440 = vrot.slane %v3439, 1
        %v3441 = vadd.f32 %v3439, %v3440
        %v3442 = vrot.slane %v3361, 4
        %v3443 = vadd.f32 %v3361, %v3442
        %v3444 = vrot.slane %v3443, 2
        %v3445 = vadd.f32 %v3443, %v3444
        %v3446 = vrot.slane %v3445, 1
        %v3447 = vadd.f32 %v3445, %v3446
        %v3448 = vrot.slane %v3362, 4
        %v3449 = vadd.f32 %v3362, %v3448
        %v3450 = vrot.slane %v3449, 2
        %v3451 = vadd.f32 %v3449, %v3450
        %v3452 = vrot.slane %v3451, 1
        %v3453 = vadd.f32 %v3451, %v3452
        %v3454 = vrot.slane %v3363, 4
        %v3455 = vadd.f32 %v3363, %v3454
        %v3456 = vrot.slane %v3455, 2
        %v3457 = vadd.f32 %v3455, %v3456
        %v3458 = vrot.slane %v3457, 1
        %v3459 = vadd.f32 %v3457, %v3458
        %v3460 = vmul.f32 %v3369, %v970
        %v3461 = vmul.f32 %v3375, %v970
        %v3462 = vmul.f32 %v3381, %v970
        %v3463 = vmul.f32 %v3387, %v970
        %v3464 = vmul.f32 %v3393, %v970
        %v3465 = vmul.f32 %v3399, %v970
        %v3466 = vmul.f32 %v3405, %v970
        %v3467 = vmul.f32 %v3411, %v970
        %v3468 = vmul.f32 %v3417, %v970
        %v3469 = vmul.f32 %v3423, %v970
        %v3470 = vmul.f32 %v3429, %v970
        %v3471 = vmul.f32 %v3435, %v970
        %v3472 = vmul.f32 %v3441, %v970
        %v3473 = vmul.f32 %v3447, %v970
        %v3474 = vmul.f32 %v3453, %v970
        %v3475 = vmul.f32 %v3459, %v970
        %v3476 = vld [vmem:[#allocation26] sm:$0xff]
        %v3477 = vadd.f32 %v3460, 1e-05
        %v3478 = vadd.f32 %v3461, 1e-05
        %v3479 = vadd.f32 %v3462, 1e-05
        %v3480 = vadd.f32 %v3463, 1e-05
        %v3481 = vadd.f32 %v3464, 1e-05
        %v3482 = vadd.f32 %v3465, 1e-05
        %v3483 = vadd.f32 %v3466, 1e-05
        %v3484 = vadd.f32 %v3467, 1e-05
        %v3485 = vadd.f32 %v3468, 1e-05
        %v3486 = vadd.f32 %v3469, 1e-05
        %v3487 = vadd.f32 %v3470, 1e-05
        %v3488 = vadd.f32 %v3471, 1e-05
        %v3489 = vadd.f32 %v3472, 1e-05
        %v3490 = vadd.f32 %v3473, 1e-05
        %v3491 = vadd.f32 %v3474, 1e-05
        %v3492 = vadd.f32 %v3475, 1e-05
        %v3493 = vrsqrt.pop %v3477
        %v3494 = vrsqrt.pop %v3478
        %v3495 = vrsqrt.pop %v3479
        %v3496 = vrsqrt.pop %v3480
        %v3497 = vrsqrt.pop %v3481
        %v3498 = vrsqrt.pop %v3482
        %v3499 = vrsqrt.pop %v3483
        %v3500 = vrsqrt.pop %v3484
        %v3501 = vrsqrt.pop %v3485
        %v3502 = vrsqrt.pop %v3486
        %v3503 = vrsqrt.pop %v3487
        %v3504 = vrsqrt.pop %v3488
        %v3505 = vrsqrt.pop %v3489
        %v3506 = vrsqrt.pop %v3490
        %v3507 = vrsqrt.pop %v3491
        %v3508 = vrsqrt.pop %v3492
        %v3525 = vcombine.low %v3493, %v3494
        %v3526 = vcombine.low %v3495, %v3496
        %v3527 = vcombine.low %v3497, %v3498
        %v3528 = vcombine.low %v3499, %v3500
        %v3530 = vunpack.c.l.s4 1966171168
        %v3531 = vunpack.c.0.s8 %v3530
        %v3532 = vlaneseq
        %v3533 = vshrl.u32 %v3532, 7
        %v3534 = vsub.s32 %v3531, %v3533
        %v3535 = vrot.slane %v3525, %v3534
        %v3537 = vunpack.c.l.s4 1966171168
        %v3538 = vunpack.c.0.s8 %v3537
        %v3539 = vlaneseq
        %v3540 = vshrl.u32 %v3539, 7
        %v3541 = vsub.s32 %v3538, %v3540
        %v3542 = vrot.slane %v3526, %v3541
        %v3544 = vunpack.c.l.s4 1966171168
        %v3545 = vunpack.c.0.s8 %v3544
        %v3546 = vlaneseq
        %v3547 = vshrl.u32 %v3546, 7
        %v3548 = vsub.s32 %v3545, %v3547
        %v3549 = vrot.slane %v3527, %v3548
        %v3551 = vunpack.c.l.s4 1966171168
        %v3552 = vunpack.c.0.s8 %v3551
        %v3553 = vlaneseq
        %v3554 = vshrl.u32 %v3553, 7
        %v3555 = vsub.s32 %v3552, %v3554
        %v3556 = vrot.slane %v3528, %v3555
        %v3557 = vcombine.low %v3535, %v3542
        %v3558 = vcombine.low %v3549, %v3556
        %v3560 = vunpack.c.l.s4 1966171168
        %v3561 = vunpack.c.0.s8 %v3560
        %v3562 = vlaneseq
        %v3563 = vshrl.u32 %v3562, 7
        %v3564 = vsub.s32 %v3561, %v3563
        %v3565 = vrot.slane %v3557, %v3564
        %v3567 = vunpack.c.l.s4 1966171168
        %v3568 = vunpack.c.0.s8 %v3567
        %v3569 = vlaneseq
        %v3570 = vshrl.u32 %v3569, 7
        %v3571 = vsub.s32 %v3568, %v3570
        %v3572 = vrot.slane %v3558, %v3571
        %v3573 = vcombine.low %v3565, %v3572
        %v3574 = vcombine.low %v3501, %v3502
        %v3575 = vcombine.low %v3503, %v3504
        %v3576 = vcombine.low %v3505, %v3506
        %v3577 = vcombine.low %v3507, %v3508
        %v3579 = vunpack.c.l.s4 1966171168
        %v3580 = vunpack.c.0.s8 %v3579
        %v3581 = vlaneseq
        %v3582 = vshrl.u32 %v3581, 7
        %v3583 = vsub.s32 %v3580, %v3582
        %v3584 = vrot.slane %v3574, %v3583
        %v3586 = vunpack.c.l.s4 1966171168
        %v3587 = vunpack.c.0.s8 %v3586
        %v3588 = vlaneseq
        %v3589 = vshrl.u32 %v3588, 7
        %v3590 = vsub.s32 %v3587, %v3589
        %v3591 = vrot.slane %v3575, %v3590
        %v3593 = vunpack.c.l.s4 1966171168
        %v3594 = vunpack.c.0.s8 %v3593
        %v3595 = vlaneseq
        %v3596 = vshrl.u32 %v3595, 7
        %v3597 = vsub.s32 %v3594, %v3596
        %v3598 = vrot.slane %v3576, %v3597
        %v3600 = vunpack.c.l.s4 1966171168
        %v3601 = vunpack.c.0.s8 %v3600
        %v3602 = vlaneseq
        %v3603 = vshrl.u32 %v3602, 7
        %v3604 = vsub.s32 %v3601, %v3603
        %v3605 = vrot.slane %v3577, %v3604
        %v3606 = vcombine.low %v3584, %v3591
        %v3607 = vcombine.low %v3598, %v3605
        %v3609 = vunpack.c.l.s4 1966171168
        %v3610 = vunpack.c.0.s8 %v3609
        %v3611 = vlaneseq
        %v3612 = vshrl.u32 %v3611, 7
        %v3613 = vsub.s32 %v3610, %v3612
        %v3614 = vrot.slane %v3606, %v3613
        %v3616 = vunpack.c.l.s4 1966171168
        %v3617 = vunpack.c.0.s8 %v3616
        %v3618 = vlaneseq
        %v3619 = vshrl.u32 %v3618, 7
        %v3620 = vsub.s32 %v3617, %v3619
        %v3621 = vrot.slane %v3607, %v3620
        %v3622 = vcombine.low %v3614, %v3621
        %v3625 = vmul.f32 %v3476, %v3573
        %v3626 = vmul.f32 %v3476, %v3622
        %v3627 = vld [vmem:[#allocation28] sm:$0xff]
        %v3630 = vlaneseq
        %v3631 = vshrl.u32 %v3630, 7
        %v3632 = vsub.s32 0, %v3631
        %v3633 = vrot.slane %v3625, %v3632
        %v3634 = vlaneseq
        %v3635 = vshrl.u32 %v3634, 7
        %v3636 = vsub.s32 1, %v3635
        %v3637 = vrot.slane %v3625, %v3636
        %v3638 = vlaneseq
        %v3639 = vshrl.u32 %v3638, 7
        %v3640 = vsub.s32 2, %v3639
        %v3641 = vrot.slane %v3625, %v3640
        %v3642 = vlaneseq
        %v3643 = vshrl.u32 %v3642, 7
        %v3644 = vsub.s32 3, %v3643
        %v3645 = vrot.slane %v3625, %v3644
        %v3646 = vlaneseq
        %v3647 = vshrl.u32 %v3646, 7
        %v3648 = vsub.s32 4, %v3647
        %v3649 = vrot.slane %v3625, %v3648
        %v3650 = vlaneseq
        %v3651 = vshrl.u32 %v3650, 7
        %v3652 = vsub.s32 5, %v3651
        %v3653 = vrot.slane %v3625, %v3652
        %v3654 = vlaneseq
        %v3655 = vshrl.u32 %v3654, 7
        %v3656 = vsub.s32 6, %v3655
        %v3657 = vrot.slane %v3625, %v3656
        %v3658 = vlaneseq
        %v3659 = vshrl.u32 %v3658, 7
        %v3660 = vsub.s32 7, %v3659
        %v3661 = vrot.slane %v3625, %v3660
        %v3662 = vlaneseq
        %v3663 = vshrl.u32 %v3662, 7
        %v3664 = vsub.s32 0, %v3663
        %v3665 = vrot.slane %v3626, %v3664
        %v3666 = vlaneseq
        %v3667 = vshrl.u32 %v3666, 7
        %v3668 = vsub.s32 1, %v3667
        %v3669 = vrot.slane %v3626, %v3668
        %v3670 = vlaneseq
        %v3671 = vshrl.u32 %v3670, 7
        %v3672 = vsub.s32 2, %v3671
        %v3673 = vrot.slane %v3626, %v3672
        %v3674 = vlaneseq
        %v3675 = vshrl.u32 %v3674, 7
        %v3676 = vsub.s32 3, %v3675
        %v3677 = vrot.slane %v3626, %v3676
        %v3678 = vlaneseq
        %v3679 = vshrl.u32 %v3678, 7
        %v3680 = vsub.s32 4, %v3679
        %v3681 = vrot.slane %v3626, %v3680
        %v3682 = vlaneseq
        %v3683 = vshrl.u32 %v3682, 7
        %v3684 = vsub.s32 5, %v3683
        %v3685 = vrot.slane %v3626, %v3684
        %v3686 = vlaneseq
        %v3687 = vshrl.u32 %v3686, 7
        %v3688 = vsub.s32 6, %v3687
        %v3689 = vrot.slane %v3626, %v3688
        %v3690 = vlaneseq
        %v3691 = vshrl.u32 %v3690, 7
        %v3692 = vsub.s32 7, %v3691
        %v3693 = vrot.slane %v3626, %v3692
        %v3710 = vmul.f32 %v3316, %v3633
        %v3711 = vmul.f32 %v3317, %v3637
        %v3712 = vmul.f32 %v3318, %v3641
        %v3713 = vmul.f32 %v3319, %v3645
        %v3714 = vmul.f32 %v3320, %v3649
        %v3715 = vmul.f32 %v3321, %v3653
        %v3716 = vmul.f32 %v3322, %v3657
        %v3717 = vmul.f32 %v3323, %v3661
        %v3718 = vmul.f32 %v3324, %v3665
        %v3719 = vmul.f32 %v3325, %v3669
        %v3720 = vmul.f32 %v3326, %v3673
        %v3721 = vmul.f32 %v3327, %v3677
        %v3722 = vmul.f32 %v3328, %v3681
        %v3723 = vmul.f32 %v3329, %v3685
        %v3724 = vmul.f32 %v3330, %v3689
        %v3725 = vmul.f32 %v3331, %v3693
        %v3742 = vcombine.low %v3710, %v3711
        %v3743 = vcombine.low %v3712, %v3713
        %v3744 = vcombine.low %v3714, %v3715
        %v3745 = vcombine.low %v3716, %v3717
        %v3747 = vunpack.c.l.s4 1966171168
        %v3748 = vunpack.c.0.s8 %v3747
        %v3749 = vlaneseq
        %v3750 = vshrl.u32 %v3749, 7
        %v3751 = vsub.s32 %v3748, %v3750
        %v3752 = vrot.slane %v3742, %v3751
        %v3754 = vunpack.c.l.s4 1966171168
        %v3755 = vunpack.c.0.s8 %v3754
        %v3756 = vlaneseq
        %v3757 = vshrl.u32 %v3756, 7
        %v3758 = vsub.s32 %v3755, %v3757
        %v3759 = vrot.slane %v3743, %v3758
        %v3761 = vunpack.c.l.s4 1966171168
        %v3762 = vunpack.c.0.s8 %v3761
        %v3763 = vlaneseq
        %v3764 = vshrl.u32 %v3763, 7
        %v3765 = vsub.s32 %v3762, %v3764
        %v3766 = vrot.slane %v3744, %v3765
        %v3768 = vunpack.c.l.s4 1966171168
        %v3769 = vunpack.c.0.s8 %v3768
        %v3770 = vlaneseq
        %v3771 = vshrl.u32 %v3770, 7
        %v3772 = vsub.s32 %v3769, %v3771
        %v3773 = vrot.slane %v3745, %v3772
        %v3774 = vcombine.low %v3752, %v3759
        %v3775 = vcombine.low %v3766, %v3773
        %v3777 = vunpack.c.l.s4 1966171168
        %v3778 = vunpack.c.0.s8 %v3777
        %v3779 = vlaneseq
        %v3780 = vshrl.u32 %v3779, 7
        %v3781 = vsub.s32 %v3778, %v3780
        %v3782 = vrot.slane %v3774, %v3781
        %v3784 = vunpack.c.l.s4 1966171168
        %v3785 = vunpack.c.0.s8 %v3784
        %v3786 = vlaneseq
        %v3787 = vshrl.u32 %v3786, 7
        %v3788 = vsub.s32 %v3785, %v3787
        %v3789 = vrot.slane %v3775, %v3788
        %v3790 = vcombine.low %v3782, %v3789
        %v3791 = vcombine.low %v3718, %v3719
        %v3792 = vcombine.low %v3720, %v3721
        %v3793 = vcombine.low %v3722, %v3723
        %v3794 = vcombine.low %v3724, %v3725
        %v3796 = vunpack.c.l.s4 1966171168
        %v3797 = vunpack.c.0.s8 %v3796
        %v3798 = vlaneseq
        %v3799 = vshrl.u32 %v3798, 7
        %v3800 = vsub.s32 %v3797, %v3799
        %v3801 = vrot.slane %v3791, %v3800
        %v3803 = vunpack.c.l.s4 1966171168
        %v3804 = vunpack.c.0.s8 %v3803
        %v3805 = vlaneseq
        %v3806 = vshrl.u32 %v3805, 7
        %v3807 = vsub.s32 %v3804, %v3806
        %v3808 = vrot.slane %v3792, %v3807
        %v3810 = vunpack.c.l.s4 1966171168
        %v3811 = vunpack.c.0.s8 %v3810
        %v3812 = vlaneseq
        %v3813 = vshrl.u32 %v3812, 7
        %v3814 = vsub.s32 %v3811, %v3813
        %v3815 = vrot.slane %v3793, %v3814
        %v3817 = vunpack.c.l.s4 1966171168
        %v3818 = vunpack.c.0.s8 %v3817
        %v3819 = vlaneseq
        %v3820 = vshrl.u32 %v3819, 7
        %v3821 = vsub.s32 %v3818, %v3820
        %v3822 = vrot.slane %v3794, %v3821
        %v3823 = vcombine.low %v3801, %v3808
        %v3824 = vcombine.low %v3815, %v3822
        %v3826 = vunpack.c.l.s4 1966171168
        %v3827 = vunpack.c.0.s8 %v3826
        %v3828 = vlaneseq
        %v3829 = vshrl.u32 %v3828, 7
        %v3830 = vsub.s32 %v3827, %v3829
        %v3831 = vrot.slane %v3823, %v3830
        %v3833 = vunpack.c.l.s4 1966171168
        %v3834 = vunpack.c.0.s8 %v3833
        %v3835 = vlaneseq
        %v3836 = vshrl.u32 %v3835, 7
        %v3837 = vsub.s32 %v3834, %v3836
        %v3838 = vrot.slane %v3824, %v3837
        %v3839 = vcombine.low %v3831, %v3838
        %v3842 = vsub.f32 %v3627, %v3790
        %v3843 = vsub.f32 %v3627, %v3839
        %v3844 = vmul.f32 %v2748, %v3633
        %v3845 = vmul.f32 %v2750, %v3637
        %v3846 = vmul.f32 %v2902, %v3641
        %v3847 = vmul.f32 %v2904, %v3645
        %v3848 = vmul.f32 %v3056, %v3649
        %v3849 = vmul.f32 %v3058, %v3653
        %v3850 = vmul.f32 %v3210, %v3657
        %v3851 = vmul.f32 %v3212, %v3661
        %v3852 = vmul.f32 %v2754, %v3665
        %v3853 = vmul.f32 %v2756, %v3669
        %v3854 = vmul.f32 %v2908, %v3673
        %v3855 = vmul.f32 %v2910, %v3677
        %v3856 = vmul.f32 %v3062, %v3681
        %v3857 = vmul.f32 %v3064, %v3685
        %v3858 = vmul.f32 %v3216, %v3689
        %v3859 = vmul.f32 %v3218, %v3693
        %v3862 = vlaneseq
        %v3863 = vshrl.u32 %v3862, 7
        %v3864 = vsub.s32 0, %v3863
        %v3865 = vrot.slane %v3842, %v3864
        %v3866 = vlaneseq
        %v3867 = vshrl.u32 %v3866, 7
        %v3868 = vsub.s32 1, %v3867
        %v3869 = vrot.slane %v3842, %v3868
        %v3870 = vlaneseq
        %v3871 = vshrl.u32 %v3870, 7
        %v3872 = vsub.s32 2, %v3871
        %v3873 = vrot.slane %v3842, %v3872
        %v3874 = vlaneseq
        %v3875 = vshrl.u32 %v3874, 7
        %v3876 = vsub.s32 3, %v3875
        %v3877 = vrot.slane %v3842, %v3876
        %v3878 = vlaneseq
        %v3879 = vshrl.u32 %v3878, 7
        %v3880 = vsub.s32 4, %v3879
        %v3881 = vrot.slane %v3842, %v3880
        %v3882 = vlaneseq
        %v3883 = vshrl.u32 %v3882, 7
        %v3884 = vsub.s32 5, %v3883
        %v3885 = vrot.slane %v3842, %v3884
        %v3886 = vlaneseq
        %v3887 = vshrl.u32 %v3886, 7
        %v3888 = vsub.s32 6, %v3887
        %v3889 = vrot.slane %v3842, %v3888
        %v3890 = vlaneseq
        %v3891 = vshrl.u32 %v3890, 7
        %v3892 = vsub.s32 7, %v3891
        %v3893 = vrot.slane %v3842, %v3892
        %v3894 = vlaneseq
        %v3895 = vshrl.u32 %v3894, 7
        %v3896 = vsub.s32 0, %v3895
        %v3897 = vrot.slane %v3843, %v3896
        %v3898 = vlaneseq
        %v3899 = vshrl.u32 %v3898, 7
        %v3900 = vsub.s32 1, %v3899
        %v3901 = vrot.slane %v3843, %v3900
        %v3902 = vlaneseq
        %v3903 = vshrl.u32 %v3902, 7
        %v3904 = vsub.s32 2, %v3903
        %v3905 = vrot.slane %v3843, %v3904
        %v3906 = vlaneseq
        %v3907 = vshrl.u32 %v3906, 7
        %v3908 = vsub.s32 3, %v3907
        %v3909 = vrot.slane %v3843, %v3908
        %v3910 = vlaneseq
        %v3911 = vshrl.u32 %v3910, 7
        %v3912 = vsub.s32 4, %v3911
        %v3913 = vrot.slane %v3843, %v3912
        %v3914 = vlaneseq
        %v3915 = vshrl.u32 %v3914, 7
        %v3916 = vsub.s32 5, %v3915
        %v3917 = vrot.slane %v3843, %v3916
        %v3918 = vlaneseq
        %v3919 = vshrl.u32 %v3918, 7
        %v3920 = vsub.s32 6, %v3919
        %v3921 = vrot.slane %v3843, %v3920
        %v3922 = vlaneseq
        %v3923 = vshrl.u32 %v3922, 7
        %v3924 = vsub.s32 7, %v3923
        %v3925 = vrot.slane %v3843, %v3924
        %v3942 = vadd.f32 %v3844, %v3865
        %v3943 = vadd.f32 %v3845, %v3869
        %v3944 = vadd.f32 %v3846, %v3873
        %v3945 = vadd.f32 %v3847, %v3877
        %v3946 = vadd.f32 %v3848, %v3881
        %v3947 = vadd.f32 %v3849, %v3885
        %v3948 = vadd.f32 %v3850, %v3889
        %v3949 = vadd.f32 %v3851, %v3893
        %v3950 = vadd.f32 %v3852, %v3897
        %v3951 = vadd.f32 %v3853, %v3901
        %v3952 = vadd.f32 %v3854, %v3905
        %v3953 = vadd.f32 %v3855, %v3909
        %v3954 = vadd.f32 %v3856, %v3913
        %v3955 = vadd.f32 %v3857, %v3917
        %v3956 = vadd.f32 %v3858, %v3921
        %v3957 = vadd.f32 %v3859, %v3925
        %v3958 = vmax.f32 %v3942, 0.0
        %v3959 = vmax.f32 %v3943, 0.0
        %v3960 = vmax.f32 %v3944, 0.0
        %v3961 = vmax.f32 %v3945, 0.0
        %v3962 = vmax.f32 %v3946, 0.0
        %v3963 = vmax.f32 %v3947, 0.0
        %v3964 = vmax.f32 %v3948, 0.0
        %v3965 = vmax.f32 %v3949, 0.0
        %v3966 = vmax.f32 %v3950, 0.0
        %v3967 = vmax.f32 %v3951, 0.0
        %v3968 = vmax.f32 %v3952, 0.0
        %v3969 = vmax.f32 %v3953, 0.0
        %v3970 = vmax.f32 %v3954, 0.0
        %v3971 = vmax.f32 %v3955, 0.0
        %v3972 = vmax.f32 %v3956, 0.0
        %v3973 = vmax.f32 %v3957, 0.0
        %v3974 = vld [vmem:[#allocation29] sm:$0xff]
        %v3975 = vld [vmem:[#allocation29 + $0x8] sm:$0xff]
        %v3976 = vld [vmem:[#allocation29 + $0x10] sm:$0xff]
        %v3977 = vld [vmem:[#allocation29 + $0x18] sm:$0xff]
        %v3978 = vld [vmem:[#allocation29 + $0x20] sm:$0xff]
        %v3979 = vld [vmem:[#allocation29 + $0x28] sm:$0xff]
        %v3980 = vld [vmem:[#allocation29 + $0x30] sm:$0xff]
        %v3981 = vld [vmem:[#allocation29 + $0x38] sm:$0xff]
        %v3982 = vld [vmem:[#allocation29 + $0x40] sm:$0xff]
        %v3983 = vld [vmem:[#allocation29 + $0x48] sm:$0xff]
        %v3984 = vld [vmem:[#allocation29 + $0x50] sm:$0xff]
        %v3985 = vld [vmem:[#allocation29 + $0x58] sm:$0xff]
        %v3986 = vld [vmem:[#allocation29 + $0x60] sm:$0xff]
        %v3987 = vld [vmem:[#allocation29 + $0x68] sm:$0xff]
        %v3988 = vld [vmem:[#allocation29 + $0x70] sm:$0xff]
        %v3989 = vld [vmem:[#allocation29 + $0x78] sm:$0xff]
        %v3990 = vld [vmem:[#allocation29 + $0x80] sm:$0xff]
        %v3991 = vld [vmem:[#allocation29 + $0x88] sm:$0xff]
        %v3992 = vld [vmem:[#allocation29 + $0x90] sm:$0xff]
        %v3993 = vld [vmem:[#allocation29 + $0x98] sm:$0xff]
        %v3994 = vld [vmem:[#allocation29 + $0xa0] sm:$0xff]
        %v3995 = vld [vmem:[#allocation29 + $0xa8] sm:$0xff]
        %v3996 = vld [vmem:[#allocation29 + $0xb0] sm:$0xff]
        %v3997 = vld [vmem:[#allocation29 + $0xb8] sm:$0xff]
        %v3998 = vld [vmem:[#allocation29 + $0xc0] sm:$0xff]
        %v3999 = vld [vmem:[#allocation29 + $0xc8] sm:$0xff]
        %v4000 = vld [vmem:[#allocation29 + $0xd0] sm:$0xff]
        %v4001 = vld [vmem:[#allocation29 + $0xd8] sm:$0xff]
        %v4002 = vld [vmem:[#allocation29 + $0xe0] sm:$0xff]
        %v4003 = vld [vmem:[#allocation29 + $0xe8] sm:$0xff]
        %v4004 = vld [vmem:[#allocation29 + $0xf0] sm:$0xff]
        %v4005 = vld [vmem:[#allocation29 + $0xf8] sm:$0xff]
        %v4006 = vld [vmem:[#allocation29 + $0x100] sm:$0xff]
        %v4007 = vld [vmem:[#allocation29 + $0x108] sm:$0xff]
        %v4008 = vld [vmem:[#allocation29 + $0x110] sm:$0xff]
        %v4009 = vld [vmem:[#allocation29 + $0x118] sm:$0xff]
        %v4010 = vld [vmem:[#allocation29 + $0x120] sm:$0xff]
        %v4011 = vld [vmem:[#allocation29 + $0x128] sm:$0xff]
        %v4012 = vld [vmem:[#allocation29 + $0x130] sm:$0xff]
        %v4013 = vld [vmem:[#allocation29 + $0x138] sm:$0xff]
        %v4014 = vld [vmem:[#allocation29 + $0x140] sm:$0xff]
        %v4015 = vld [vmem:[#allocation29 + $0x148] sm:$0xff]
        %v4016 = vld [vmem:[#allocation29 + $0x150] sm:$0xff]
        %v4017 = vld [vmem:[#allocation29 + $0x158] sm:$0xff]
        %v4018 = vld [vmem:[#allocation29 + $0x160] sm:$0xff]
        %v4019 = vld [vmem:[#allocation29 + $0x168] sm:$0xff]
        %v4020 = vld [vmem:[#allocation29 + $0x170] sm:$0xff]
        %v4021 = vld [vmem:[#allocation29 + $0x178] sm:$0xff]
        %v4022 = vld [vmem:[#allocation29 + $0x180] sm:$0xff]
        %v4023 = vld [vmem:[#allocation29 + $0x188] sm:$0xff]
        %v4024 = vld [vmem:[#allocation29 + $0x190] sm:$0xff]
        %v4025 = vld [vmem:[#allocation29 + $0x198] sm:$0xff]
        %v4026 = vld [vmem:[#allocation29 + $0x1a0] sm:$0xff]
        %v4027 = vld [vmem:[#allocation29 + $0x1a8] sm:$0xff]
        %v4028 = vld [vmem:[#allocation29 + $0x1b0] sm:$0xff]
        %v4029 = vld [vmem:[#allocation29 + $0x1b8] sm:$0xff]
        %v4030 = vld [vmem:[#allocation29 + $0x1c0] sm:$0xff]
        %v4031 = vld [vmem:[#allocation29 + $0x1c8] sm:$0xff]
        %v4032 = vld [vmem:[#allocation29 + $0x1d0] sm:$0xff]
        %v4033 = vld [vmem:[#allocation29 + $0x1d8] sm:$0xff]
        %v4034 = vld [vmem:[#allocation29 + $0x1e0] sm:$0xff]
        %v4035 = vld [vmem:[#allocation29 + $0x1e8] sm:$0xff]
        %v4036 = vld [vmem:[#allocation29 + $0x1f0] sm:$0xff]
        %v4037 = vld [vmem:[#allocation29 + $0x1f8] sm:$0xff]
        %v4038 = vld [vmem:[#allocation29 + $0x200] sm:$0xff]
        %v4039 = vld [vmem:[#allocation29 + $0x208] sm:$0xff]
        %v4040 = vld [vmem:[#allocation29 + $0x210] sm:$0xff]
        %v4041 = vld [vmem:[#allocation29 + $0x218] sm:$0xff]
        %v4042 = vld [vmem:[#allocation29 + $0x220] sm:$0xff]
        %v4043 = vld [vmem:[#allocation29 + $0x228] sm:$0xff]
        %v4044 = vld [vmem:[#allocation29 + $0x230] sm:$0xff]
        %v4045 = vld [vmem:[#allocation29 + $0x238] sm:$0xff]
        %v4046 = vld [vmem:[#allocation29 + $0x240] sm:$0xff]
        %v4047 = vld [vmem:[#allocation29 + $0x248] sm:$0xff]
        %v4048 = vld [vmem:[#allocation29 + $0x250] sm:$0xff]
        %v4049 = vld [vmem:[#allocation29 + $0x258] sm:$0xff]
        %v4050 = vld [vmem:[#allocation29 + $0x260] sm:$0xff]
        %v4051 = vld [vmem:[#allocation29 + $0x268] sm:$0xff]
        %v4052 = vld [vmem:[#allocation29 + $0x270] sm:$0xff]
        %v4053 = vld [vmem:[#allocation29 + $0x278] sm:$0xff]
        %v4054 = vld [vmem:[#allocation29 + $0x280] sm:$0xff]
        %v4055 = vld [vmem:[#allocation29 + $0x288] sm:$0xff]
        %v4056 = vld [vmem:[#allocation29 + $0x290] sm:$0xff]
        %v4057 = vld [vmem:[#allocation29 + $0x298] sm:$0xff]
        %v4058 = vld [vmem:[#allocation29 + $0x2a0] sm:$0xff]
        %v4059 = vld [vmem:[#allocation29 + $0x2a8] sm:$0xff]
        %v4060 = vld [vmem:[#allocation29 + $0x2b0] sm:$0xff]
        %v4061 = vld [vmem:[#allocation29 + $0x2b8] sm:$0xff]
        %v4062 = vld [vmem:[#allocation29 + $0x2c0] sm:$0xff]
        %v4063 = vld [vmem:[#allocation29 + $0x2c8] sm:$0xff]
        %v4064 = vld [vmem:[#allocation29 + $0x2d0] sm:$0xff]
        %v4065 = vld [vmem:[#allocation29 + $0x2d8] sm:$0xff]
        %v4066 = vld [vmem:[#allocation29 + $0x2e0] sm:$0xff]
        %v4067 = vld [vmem:[#allocation29 + $0x2e8] sm:$0xff]
        %v4068 = vld [vmem:[#allocation29 + $0x2f0] sm:$0xff]
        %v4069 = vld [vmem:[#allocation29 + $0x2f8] sm:$0xff]
        %v4070 = vld [vmem:[#allocation29 + $0x300] sm:$0xff]
        %v4071 = vld [vmem:[#allocation29 + $0x308] sm:$0xff]
        %v4072 = vld [vmem:[#allocation29 + $0x310] sm:$0xff]
        %v4073 = vld [vmem:[#allocation29 + $0x318] sm:$0xff]
        %v4074 = vld [vmem:[#allocation29 + $0x320] sm:$0xff]
        %v4075 = vld [vmem:[#allocation29 + $0x328] sm:$0xff]
        %v4076 = vld [vmem:[#allocation29 + $0x330] sm:$0xff]
        %v4077 = vld [vmem:[#allocation29 + $0x338] sm:$0xff]
        %v4078 = vld [vmem:[#allocation29 + $0x340] sm:$0xff]
        %v4079 = vld [vmem:[#allocation29 + $0x348] sm:$0xff]
        %v4080 = vld [vmem:[#allocation29 + $0x350] sm:$0xff]
        %v4081 = vld [vmem:[#allocation29 + $0x358] sm:$0xff]
        %v4082 = vld [vmem:[#allocation29 + $0x360] sm:$0xff]
        %v4083 = vld [vmem:[#allocation29 + $0x368] sm:$0xff]
        %v4084 = vld [vmem:[#allocation29 + $0x370] sm:$0xff]
        %v4085 = vld [vmem:[#allocation29 + $0x378] sm:$0xff]
        %v4086 = vld [vmem:[#allocation29 + $0x380] sm:$0xff]
        %v4087 = vld [vmem:[#allocation29 + $0x388] sm:$0xff]
        %v4088 = vld [vmem:[#allocation29 + $0x390] sm:$0xff]
        %v4089 = vld [vmem:[#allocation29 + $0x398] sm:$0xff]
        %v4090 = vld [vmem:[#allocation29 + $0x3a0] sm:$0xff]
        %v4091 = vld [vmem:[#allocation29 + $0x3a8] sm:$0xff]
        %v4092 = vld [vmem:[#allocation29 + $0x3b0] sm:$0xff]
        %v4093 = vld [vmem:[#allocation29 + $0x3b8] sm:$0xff]
        %v4094 = vld [vmem:[#allocation29 + $0x3c0] sm:$0xff]
        %v4095 = vld [vmem:[#allocation29 + $0x3c8] sm:$0xff]
        %v4096 = vld [vmem:[#allocation29 + $0x3d0] sm:$0xff]
        %v4097 = vld [vmem:[#allocation29 + $0x3d8] sm:$0xff]
        %v4098 = vld [vmem:[#allocation29 + $0x3e0] sm:$0xff]
        %v4099 = vld [vmem:[#allocation29 + $0x3e8] sm:$0xff]
        %v4100 = vld [vmem:[#allocation29 + $0x3f0] sm:$0xff]
        %v4101 = vld [vmem:[#allocation29 + $0x3f8] sm:$0xff]
        %v4102 = vld [vmem:[#allocation31] sm:$0x1]
        %v4104 = vlaneseq
        %v4105 = vshrl.u32 %v4104, 7
        %v4106 = vsub.s32 0, %v4105
        %v4107 = vrot.slane %v4102, %v4106
        %4109 = vmatprep.subr.mxu0 0.0
        %4110 = vmatpush1.msra.mxu0 %v3989
        %4111 = vmatprep.subr.mxu0 0.0
        %4112 = vmatpush1.msra.mxu0 %v3988
        %4113 = vmatprep.subr.mxu0 0.0
        %4114 = vmatpush1.msra.mxu0 %v3987
        %4115 = vmatprep.subr.mxu0 0.0
        %4116 = vmatpush1.msra.mxu0 %v3986
        %4117 = vmatprep.subr.mxu0 0.0
        %4118 = vmatpush1.msra.mxu0 %v3985
        %4119 = vmatprep.subr.mxu0 0.0
        %4120 = vmatpush1.msra.mxu0 %v3984
        %4121 = vmatprep.subr.mxu0 0.0
        %4122 = vmatpush1.msra.mxu0 %v3983
        %4123 = vmatprep.subr.mxu0 0.0
        %4124 = vmatpush1.msra.mxu0 %v3982
        %4125 = vmatprep.subr.mxu0 0.0
        %4126 = vmatpush1.msra.mxu0 %v3981
        %4127 = vmatprep.subr.mxu0 0.0
        %4128 = vmatpush1.msra.mxu0 %v3980
        %4129 = vmatprep.subr.mxu0 0.0
        %4130 = vmatpush1.msra.mxu0 %v3979
        %4131 = vmatprep.subr.mxu0 0.0
        %4132 = vmatpush1.msra.mxu0 %v3978
        %4133 = vmatprep.subr.mxu0 0.0
        %4134 = vmatpush1.msra.mxu0 %v3977
        %4135 = vmatprep.subr.mxu0 0.0
        %4136 = vmatpush1.msra.mxu0 %v3976
        %4137 = vmatprep.subr.mxu0 0.0
        %4138 = vmatpush1.msra.mxu0 %v3975
        %4139 = vmatprep.subr.mxu0 0.0
        %4140 = vmatpush1.msra.mxu0 %v3974
        %4141 = vmatprep.subr.mxu0 0.0
        %4142 = vmatpush2.msra.mxu0 %v4005
        %4143 = vmatprep.subr.mxu0 0.0
        %4144 = vmatpush2.msra.mxu0 %v4004
        %4145 = vmatprep.subr.mxu0 0.0
        %4146 = vmatpush2.msra.mxu0 %v4003
        %4147 = vmatprep.subr.mxu0 0.0
        %4148 = vmatpush2.msra.mxu0 %v4002
        %4149 = vmatprep.subr.mxu0 0.0
        %4150 = vmatpush2.msra.mxu0 %v4001
        %4151 = vmatprep.subr.mxu0 0.0
        %4152 = vmatpush2.msra.mxu0 %v4000
        %4153 = vmatprep.subr.mxu0 0.0
        %4154 = vmatpush2.msra.mxu0 %v3999
        %4155 = vmatprep.subr.mxu0 0.0
        %4156 = vmatpush2.msra.mxu0 %v3998
        %4157 = vmatprep.subr.mxu0 0.0
        %4158 = vmatpush2.msra.mxu0 %v3997
        %4159 = vmatprep.subr.mxu0 0.0
        %4160 = vmatpush2.msra.mxu0 %v3996
        %4161 = vmatprep.subr.mxu0 0.0
        %4162 = vmatpush2.msra.mxu0 %v3995
        %4163 = vmatprep.subr.mxu0 0.0
        %4164 = vmatpush2.msra.mxu0 %v3994
        %4165 = vmatprep.subr.mxu0 0.0
        %4166 = vmatpush2.msra.mxu0 %v3993
        %4167 = vmatprep.subr.mxu0 0.0
        %4168 = vmatpush2.msra.mxu0 %v3992
        %4169 = vmatprep.subr.mxu0 0.0
        %4170 = vmatpush2.msra.mxu0 %v3991
        %4171 = vmatprep.subr.mxu0 0.0
        %4172 = vmatpush2.msra.mxu0 %v3990
        %4173 = vmatprep.mubr.f32.mxu0 %v3959
        %4174 = vmatmul.mubr.f32.gmra.mxu0 %v3958
        %v4175 = vpop.f32.mrf.mxu0
        %v4176 = vadd.f32 %v4107, %v4175
        %v4177 = vpop.f32.mrf.mxu0
        %4178 = vmatprep.mubr.f32.mxu0 %v3967
        %4179 = vmatmul.mubr.f32.gmra.mxu0 %v3966
        %v4180 = vpop.f32.mrf.mxu0
        %v4181 = vadd.f32 %v4107, %v4180
        %v4182 = vpop.f32.mrf.mxu0
        %4183 = vdwg.mxu0
        %4184 = vmatprep.subr.mxu0 0.0
        %4185 = vmatpush1.msra.mxu0 %v4021
        %4186 = vmatprep.subr.mxu0 0.0
        %4187 = vmatpush1.msra.mxu0 %v4020
        %4188 = vmatprep.subr.mxu0 0.0
        %4189 = vmatpush1.msra.mxu0 %v4019
        %4190 = vmatprep.subr.mxu0 0.0
        %4191 = vmatpush1.msra.mxu0 %v4018
        %4192 = vmatprep.subr.mxu0 0.0
        %4193 = vmatpush1.msra.mxu0 %v4017
        %4194 = vmatprep.subr.mxu0 0.0
        %4195 = vmatpush1.msra.mxu0 %v4016
        %4196 = vmatprep.subr.mxu0 0.0
        %4197 = vmatpush1.msra.mxu0 %v4015
        %4198 = vmatprep.subr.mxu0 0.0
        %4199 = vmatpush1.msra.mxu0 %v4014
        %4200 = vmatprep.subr.mxu0 0.0
        %4201 = vmatpush1.msra.mxu0 %v4013
        %4202 = vmatprep.subr.mxu0 0.0
        %4203 = vmatpush1.msra.mxu0 %v4012
        %4204 = vmatprep.subr.mxu0 0.0
        %4205 = vmatpush1.msra.mxu0 %v4011
        %4206 = vmatprep.subr.mxu0 0.0
        %4207 = vmatpush1.msra.mxu0 %v4010
        %4208 = vmatprep.subr.mxu0 0.0
        %4209 = vmatpush1.msra.mxu0 %v4009
        %4210 = vmatprep.subr.mxu0 0.0
        %4211 = vmatpush1.msra.mxu0 %v4008
        %4212 = vmatprep.subr.mxu0 0.0
        %4213 = vmatpush1.msra.mxu0 %v4007
        %4214 = vmatprep.subr.mxu0 0.0
        %4215 = vmatpush1.msra.mxu0 %v4006
        %4216 = vmatprep.subr.mxu0 0.0
        %4217 = vmatpush2.msra.mxu0 %v4037
        %4218 = vmatprep.subr.mxu0 0.0
        %4219 = vmatpush2.msra.mxu0 %v4036
        %4220 = vmatprep.subr.mxu0 0.0
        %4221 = vmatpush2.msra.mxu0 %v4035
        %4222 = vmatprep.subr.mxu0 0.0
        %4223 = vmatpush2.msra.mxu0 %v4034
        %4224 = vmatprep.subr.mxu0 0.0
        %4225 = vmatpush2.msra.mxu0 %v4033
        %4226 = vmatprep.subr.mxu0 0.0
        %4227 = vmatpush2.msra.mxu0 %v4032
        %4228 = vmatprep.subr.mxu0 0.0
        %4229 = vmatpush2.msra.mxu0 %v4031
        %4230 = vmatprep.subr.mxu0 0.0
        %4231 = vmatpush2.msra.mxu0 %v4030
        %4232 = vmatprep.subr.mxu0 0.0
        %4233 = vmatpush2.msra.mxu0 %v4029
        %4234 = vmatprep.subr.mxu0 0.0
        %4235 = vmatpush2.msra.mxu0 %v4028
        %4236 = vmatprep.subr.mxu0 0.0
        %4237 = vmatpush2.msra.mxu0 %v4027
        %4238 = vmatprep.subr.mxu0 0.0
        %4239 = vmatpush2.msra.mxu0 %v4026
        %4240 = vmatprep.subr.mxu0 0.0
        %4241 = vmatpush2.msra.mxu0 %v4025
        %4242 = vmatprep.subr.mxu0 0.0
        %4243 = vmatpush2.msra.mxu0 %v4024
        %4244 = vmatprep.subr.mxu0 0.0
        %4245 = vmatpush2.msra.mxu0 %v4023
        %4246 = vmatprep.subr.mxu0 0.0
        %4247 = vmatpush2.msra.mxu0 %v4022
        %4248 = vmatprep.mubr.f32.mxu0 %v3961
        %4249 = vmatmul.mubr.f32.gmra.mxu0 %v3960
        %v4250 = vpop.f32.mrf.mxu0
        %v4251 = vadd.f32 %v4176, %v4250
        %v4252 = vpop.f32.mrf.mxu0
        %4253 = vmatprep.mubr.f32.mxu0 %v3969
        %4254 = vmatmul.mubr.f32.gmra.mxu0 %v3968
        %v4255 = vpop.f32.mrf.mxu0
        %v4256 = vadd.f32 %v4181, %v4255
        %v4257 = vpop.f32.mrf.mxu0
        %4258 = vdwg.mxu0
        %4259 = vmatprep.subr.mxu0 0.0
        %4260 = vmatpush1.msra.mxu0 %v4053
        %4261 = vmatprep.subr.mxu0 0.0
        %4262 = vmatpush1.msra.mxu0 %v4052
        %4263 = vmatprep.subr.mxu0 0.0
        %4264 = vmatpush1.msra.mxu0 %v4051
        %4265 = vmatprep.subr.mxu0 0.0
        %4266 = vmatpush1.msra.mxu0 %v4050
        %4267 = vmatprep.subr.mxu0 0.0
        %4268 = vmatpush1.msra.mxu0 %v4049
        %4269 = vmatprep.subr.mxu0 0.0
        %4270 = vmatpush1.msra.mxu0 %v4048
        %4271 = vmatprep.subr.mxu0 0.0
        %4272 = vmatpush1.msra.mxu0 %v4047
        %4273 = vmatprep.subr.mxu0 0.0
        %4274 = vmatpush1.msra.mxu0 %v4046
        %4275 = vmatprep.subr.mxu0 0.0
        %4276 = vmatpush1.msra.mxu0 %v4045
        %4277 = vmatprep.subr.mxu0 0.0
        %4278 = vmatpush1.msra.mxu0 %v4044
        %4279 = vmatprep.subr.mxu0 0.0
        %4280 = vmatpush1.msra.mxu0 %v4043
        %4281 = vmatprep.subr.mxu0 0.0
        %4282 = vmatpush1.msra.mxu0 %v4042
        %4283 = vmatprep.subr.mxu0 0.0
        %4284 = vmatpush1.msra.mxu0 %v4041
        %4285 = vmatprep.subr.mxu0 0.0
        %4286 = vmatpush1.msra.mxu0 %v4040
        %4287 = vmatprep.subr.mxu0 0.0
        %4288 = vmatpush1.msra.mxu0 %v4039
        %4289 = vmatprep.subr.mxu0 0.0
        %4290 = vmatpush1.msra.mxu0 %v4038
        %4291 = vmatprep.subr.mxu0 0.0
        %4292 = vmatpush2.msra.mxu0 %v4069
        %4293 = vmatprep.subr.mxu0 0.0
        %4294 = vmatpush2.msra.mxu0 %v4068
        %4295 = vmatprep.subr.mxu0 0.0
        %4296 = vmatpush2.msra.mxu0 %v4067
        %4297 = vmatprep.subr.mxu0 0.0
        %4298 = vmatpush2.msra.mxu0 %v4066
        %4299 = vmatprep.subr.mxu0 0.0
        %4300 = vmatpush2.msra.mxu0 %v4065
        %4301 = vmatprep.subr.mxu0 0.0
        %4302 = vmatpush2.msra.mxu0 %v4064
        %4303 = vmatprep.subr.mxu0 0.0
        %4304 = vmatpush2.msra.mxu0 %v4063
        %4305 = vmatprep.subr.mxu0 0.0
        %4306 = vmatpush2.msra.mxu0 %v4062
        %4307 = vmatprep.subr.mxu0 0.0
        %4308 = vmatpush2.msra.mxu0 %v4061
        %4309 = vmatprep.subr.mxu0 0.0
        %4310 = vmatpush2.msra.mxu0 %v4060
        %4311 = vmatprep.subr.mxu0 0.0
        %4312 = vmatpush2.msra.mxu0 %v4059
        %4313 = vmatprep.subr.mxu0 0.0
        %4314 = vmatpush2.msra.mxu0 %v4058
        %4315 = vmatprep.subr.mxu0 0.0
        %4316 = vmatpush2.msra.mxu0 %v4057
        %4317 = vmatprep.subr.mxu0 0.0
        %4318 = vmatpush2.msra.mxu0 %v4056
        %4319 = vmatprep.subr.mxu0 0.0
        %4320 = vmatpush2.msra.mxu0 %v4055
        %4321 = vmatprep.subr.mxu0 0.0
        %4322 = vmatpush2.msra.mxu0 %v4054
        %4323 = vmatprep.mubr.f32.mxu0 %v3963
        %4324 = vmatmul.mubr.f32.gmra.mxu0 %v3962
        %v4325 = vpop.f32.mrf.mxu0
        %v4326 = vadd.f32 %v4251, %v4325
        %v4327 = vpop.f32.mrf.mxu0
        %4328 = vmatprep.mubr.f32.mxu0 %v3971
        %4329 = vmatmul.mubr.f32.gmra.mxu0 %v3970
        %v4330 = vpop.f32.mrf.mxu0
        %v4331 = vadd.f32 %v4256, %v4330
        %v4332 = vpop.f32.mrf.mxu0
        %4333 = vdwg.mxu0
        %4334 = vmatprep.subr.mxu0 0.0
        %4335 = vmatpush1.msra.mxu0 %v4085
        %4336 = vmatprep.subr.mxu0 0.0
        %4337 = vmatpush1.msra.mxu0 %v4084
        %4338 = vmatprep.subr.mxu0 0.0
        %4339 = vmatpush1.msra.mxu0 %v4083
        %4340 = vmatprep.subr.mxu0 0.0
        %4341 = vmatpush1.msra.mxu0 %v4082
        %4342 = vmatprep.subr.mxu0 0.0
        %4343 = vmatpush1.msra.mxu0 %v4081
        %4344 = vmatprep.subr.mxu0 0.0
        %4345 = vmatpush1.msra.mxu0 %v4080
        %4346 = vmatprep.subr.mxu0 0.0
        %4347 = vmatpush1.msra.mxu0 %v4079
        %4348 = vmatprep.subr.mxu0 0.0
        %4349 = vmatpush1.msra.mxu0 %v4078
        %4350 = vmatprep.subr.mxu0 0.0
        %4351 = vmatpush1.msra.mxu0 %v4077
        %4352 = vmatprep.subr.mxu0 0.0
        %4353 = vmatpush1.msra.mxu0 %v4076
        %4354 = vmatprep.subr.mxu0 0.0
        %4355 = vmatpush1.msra.mxu0 %v4075
        %4356 = vmatprep.subr.mxu0 0.0
        %4357 = vmatpush1.msra.mxu0 %v4074
        %4358 = vmatprep.subr.mxu0 0.0
        %4359 = vmatpush1.msra.mxu0 %v4073
        %4360 = vmatprep.subr.mxu0 0.0
        %4361 = vmatpush1.msra.mxu0 %v4072
        %4362 = vmatprep.subr.mxu0 0.0
        %4363 = vmatpush1.msra.mxu0 %v4071
        %4364 = vmatprep.subr.mxu0 0.0
        %4365 = vmatpush1.msra.mxu0 %v4070
        %4366 = vmatprep.subr.mxu0 0.0
        %4367 = vmatpush2.msra.mxu0 %v4101
        %4368 = vmatprep.subr.mxu0 0.0
        %4369 = vmatpush2.msra.mxu0 %v4100
        %4370 = vmatprep.subr.mxu0 0.0
        %4371 = vmatpush2.msra.mxu0 %v4099
        %4372 = vmatprep.subr.mxu0 0.0
        %4373 = vmatpush2.msra.mxu0 %v4098
        %4374 = vmatprep.subr.mxu0 0.0
        %4375 = vmatpush2.msra.mxu0 %v4097
        %4376 = vmatprep.subr.mxu0 0.0
        %4377 = vmatpush2.msra.mxu0 %v4096
        %4378 = vmatprep.subr.mxu0 0.0
        %4379 = vmatpush2.msra.mxu0 %v4095
        %4380 = vmatprep.subr.mxu0 0.0
        %4381 = vmatpush2.msra.mxu0 %v4094
        %4382 = vmatprep.subr.mxu0 0.0
        %4383 = vmatpush2.msra.mxu0 %v4093
        %4384 = vmatprep.subr.mxu0 0.0
        %4385 = vmatpush2.msra.mxu0 %v4092
        %4386 = vmatprep.subr.mxu0 0.0
        %4387 = vmatpush2.msra.mxu0 %v4091
        %4388 = vmatprep.subr.mxu0 0.0
        %4389 = vmatpush2.msra.mxu0 %v4090
        %4390 = vmatprep.subr.mxu0 0.0
        %4391 = vmatpush2.msra.mxu0 %v4089
        %4392 = vmatprep.subr.mxu0 0.0
        %4393 = vmatpush2.msra.mxu0 %v4088
        %4394 = vmatprep.subr.mxu0 0.0
        %4395 = vmatpush2.msra.mxu0 %v4087
        %4396 = vmatprep.subr.mxu0 0.0
        %4397 = vmatpush2.msra.mxu0 %v4086
        %4398 = vmatprep.mubr.f32.mxu0 %v3965
        %4399 = vmatmul.mubr.f32.gmra.mxu0 %v3964
        %v4400 = vpop.f32.mrf.mxu0
        %v4401 = vadd.f32 %v4326, %v4400
        %v4402 = vpop.f32.mrf.mxu0
        %4403 = vmatprep.mubr.f32.mxu0 %v3973
        %4404 = vmatmul.mubr.f32.gmra.mxu0 %v3972
        %v4405 = vpop.f32.mrf.mxu0
        %v4406 = vadd.f32 %v4331, %v4405
        %v4407 = vpop.f32.mrf.mxu0
        %4408 = vdwg.mxu0
        %v4409 = vmul.f32 %v4401, 0.5
        %v4410 = vmul.f32 %v4406, 0.5
        %v4411 = vtanh.pop %v4409
        %v4412 = vtanh.pop %v4410
        %v4413 = vadd.f32 %v4411, 1.0
        %v4414 = vadd.f32 %v4412, 1.0
        %v4415 = vmul.f32 %v4413, 0.5
        %v4416 = vmul.f32 %v4414, 0.5
        %4417 = vst [vmem:[%s855] sm:$0xff] %v4415
        %4418 = vst [vmem:[%s855 + $0x8] sm:$0xff] %v4416
        %s4419 = sand.u32 %s457, 1
        %s4420 = scalar_lea.sflag [#allocation4], %s4419
        %s4421 = sand.u32 %s457, 1
        %s4422 = smul.addr %s4421, 16
        %s4423 = scalar_lea.vmem [#allocation32], %s4422
        // Predicated region
        $region173: #{tpu_custom_call.1} parent=95 // pred_check
          %p4424 = pneg %p467
        $region174: #{tpu_custom_call.1} parent=95 // pred_check_branch
          %4426 = sbr.rel (%p4424) target = $region176
        $region175: #{tpu_custom_call.1} parent=95 // pred_region
          %s4427 = smul.u32 2, %s45
          %s4429 = ssub.s32 256, 256
          %4430 = vsyncadd %s4420, %s4429
          %s4431 = smul.addr %s4427, 128
          %s4432 = scalar_lea.hbm %s19, %s4431
          %s4433 = sshll.u32 %s4423, 4
          %s4434 = int_to_ptr.vmem [resolvable:$true] %s4433
          %4439 = dma.vmem_to_hbm [thread:$0]  %s4434, 256, %s4432, %s4420, 128, 128, 8
        $region176: #{tpu_custom_call.1} parent=95 // pred_fallthru
          _
      $region96: #{tpu_custom_call.1} parent=5 // pred_fallthru
        _
      %p4440 = scmp.le.s32.totalorder 2, %s40
      // Predicated region
      $region177: #{tpu_custom_call.1} parent=5 // pred_check
        %p4441 = pneg %p4440
      $region178: #{tpu_custom_call.1} parent=5 // pred_check_branch
        %4443 = sbr.rel (%p4441) target = $region180
      $region179: #{tpu_custom_call.1} parent=5 // pred_region
        %s4444 = ssub.s32 %s40, 2
        // Predicated region
        $region181: #{tpu_custom_call.1} parent=179 // pred_check
          %p4445 = pneg %p473
        $region182: #{tpu_custom_call.1} parent=179 // pred_check_branch
          %4447 = sbr.rel (%p4445) target = $region184
        $region183: #{tpu_custom_call.1} parent=179 // pred_region
          %s4448 = sand.u32 %s458, 1
          %s4449 = scalar_lea.sflag [#allocation4], %s4448
          %s4450 = sand.u32 %s458, 1
          %s4451 = smul.addr %s4450, 16
          %s4452 = scalar_lea.vmem [#allocation32], %s4451
          %4453 = dma.done %s4449, 256
        $region184: #{tpu_custom_call.1} parent=179 // pred_fallthru
          _
      $region180: #{tpu_custom_call.1} parent=5 // pred_fallthru
        _
    $region6: #{tpu_custom_call.1} parent=1 // loop_footer
      %s44 = sadd.s32 1, %s40
    $region7: #{tpu_custom_call.1} parent=1 // loop_footer_branch
      %39 = sbr.rel target = $region3
    $region8: #{tpu_custom_call.1} parent=1 // loop_exit
      _
    %4454 = vsyncpa [#allocation3], 1
    %s4455 = scalar_lea.sflag [#allocation3], 1
    %4456 = vsyncpa %s4455, 1
    %4457 = vsyncpa [#allocation6], 1
    %4458 = vsyncpa [#allocation9], 1
    %4459 = vsyncpa [#allocation12], 1
    %4460 = vsyncpa [#allocation15], 1
    %4461 = vsyncpa [#allocation18], 1
    %4462 = vsyncpa [#allocation21], 1
    %4463 = vsyncpa [#allocation24], 1
    %4464 = vsyncpa [#allocation27], 1
    %4465 = vsyncpa [#allocation30], 1
    %4466 = vsyncpa [#allocation4], 1
    %s4467 = scalar_lea.sflag [#allocation4], 1
    %4468 = vsyncpa %s4467, 1

</llo_original>
